<compile_context>
chip_gen: v6e
topology: v6e:2x2x1
jax: 0.10.0
libtpu: 0.0.40
codegen_flags: <defaults>
</compile_context>

<pallas_src>
import jax
import jax.numpy as jnp
from jax import lax
from jax.experimental import pallas as pl
from jax.experimental.pallas import tpu as pltpu


# ------------------------------- helpers ------------------------------------

def _round_up(x, m):
    return (x + m - 1) // m * m


def _pick_divisor(n, max_tile, step):
    """Largest multiple of `step` that is <= max_tile and divides n (or n itself)."""
    if n <= max_tile:
        return n
    t = (max_tile // step) * step
    while t >= step:
        if n % t == 0:
            return t
        t -= step
    return n


def _tpu_vmem_capacity():
    """Physical VMEM bytes of the local TPU (128 MiB v5e/v6e, 64 MiB v7x)."""
    try:
        return int(pltpu.get_tpu_info().vmem_capacity_bytes)
    except Exception:
        return 64 << 20          # conservative fallback (safe on every generation)


def _vmem_limit_bytes(resident_bytes, cap):
    """Generation-aware scoped-VMEM limit: headroom over resident, below physical."""
    hi = (cap * 7) // 8
    return int(min(max(int(1.5 * resident_bytes) + (4 << 20), 32 << 20), hi))


def _select_batch_block(Np, batch_block, prefer_split):
    """Pick the batch block. prefer_split keeps >=2 blocks (when Np allows) so the
    'parallel' grid axis can be sharded across v7x's two TensorCores; it is a no-op
    for parallelism on single-TC v5e/v6e (pass prefer_split=False there if desired)."""
    if prefer_split and Np >= 16:
        target = min(batch_block, max(8, _round_up(Np // 2, 8)))
    else:
        target = batch_block
    return _pick_divisor(Np, target, step=8)


# ----------------------------- Pallas kernels -------------------------------

def _linear_kernel(x_ref, w_ref, b_ref, o_ref):
    """o = x @ w + b for one (tm, tn) output tile.  x:(tm,K) w:(K,tn) b:(1,tn)."""
    o_ref[...] = (
        jnp.dot(x_ref[...], w_ref[...], preferred_element_type=jnp.float32)
        + b_ref[...]
    ).astype(o_ref.dtype)


def _lstm_chunk_kernel(x_ref, wih_ref, whh_ref, bias_ref, h0_ref, c0_ref,
                       out_ref, hn_ref, cn_ref, h_sc, c_sc, gx_sc):
    """Fused LSTM layer over one (batch-block, time-chunk) grid cell.

    x_ref:   (Tc, NB, Ein) bf16   layer input for this chunk
    wih_ref: (Ein, 4Hp)    bf16   input-to-hidden weights (pre-transposed, resident)
    whh_ref: (Hp, 4Hp)     bf16   hidden-to-hidden weights (pre-transposed, resident)
    bias:    (1, 4Hp)      f32    pre-summed b_ih + b_hh
    h0/c0:   (NB, Hp)      f32    initial state for this batch block
    out_ref: (Tc, NB, Hp)  bf16   per-timestep hidden states
    hn/cn:   (NB, Hp)      f32    final state (written on the last time chunk)
    h_sc (bf16) / c_sc (f32): recurrent state carried across time chunks.
    gx_sc:   (Tc*NB, 4Hp)  f32    chunk-local input projection (never touches HBM).
    Gate order follows PyTorch nn.LSTM: i, f, g, o (each slice Hp lanes, lane-aligned).
    """
    Tc, NB, _ = x_ref.shape
    Hp = h_sc.shape[-1]

    @pl.when(pl.program_id(1) == 0)
    def _():
        h_sc[...] = h0_ref[...].astype(h_sc.dtype)
        c_sc[...] = c0_ref[...]

    # Hoisted input projection for the whole chunk: independent of the recurrence, so
    # these MXU pushes overlap the serial h-chain below (everything is one basic block).
    for t in range(Tc):
        gx_sc[t * NB:(t + 1) * NB, :] = (
            jnp.dot(x_ref[t], wih_ref[...], preferred_element_type=jnp.float32)
            + bias_ref[...])

    # Recurrence: state carried in values (no per-step scratch round trip); h in bf16.
    h = h_sc[...]                      # bf16
    c = c_sc[...]                      # f32
    for t in range(Tc):                # statically unrolled
        gates = gx_sc[t * NB:(t + 1) * NB, :] + jnp.dot(
            h, whh_ref[...], preferred_element_type=jnp.float32)       # (NB, 4Hp) f32
        i_g = jax.nn.sigmoid(gates[:, 0:Hp])
        f_g = jax.nn.sigmoid(gates[:, Hp:2 * Hp])
        g_g = jnp.tanh(gates[:, 2 * Hp:3 * Hp])
        o_g = jax.nn.sigmoid(gates[:, 3 * Hp:4 * Hp])
        c = f_g * c + i_g * g_g
        h = (o_g * jnp.tanh(c)).astype(jnp.bfloat16)   # single cast: output + next matmul
        out_ref[t] = h
    h_sc[...] = h
    c_sc[...] = c

    @pl.when(pl.program_id(1) == pl.num_programs(1) - 1)
    def _():
        hn_ref[...] = h_sc[...].astype(hn_ref.dtype)
        cn_ref[...] = c_sc[...]


# ------------------------------- wrappers ------------------------------------

def tiled_linear(x, w, b, *, out_dtype=jnp.float32, tm_max=1024, tn_max=512,
                 resident_w_bytes=8 << 20):
    """Tiled, pipelined y = x @ w + b.  x:(M,K) w:(K,N) b:(1,N) -> (M,N).

    The weight is kept fully resident (single block, fetched once) when small; otherwise
    it is tiled along N with lane-dense tiles, while the x block stays resident across
    the inner N sweep (its block index does not change), minimizing HBM re-streaming.
    """
    M, K = x.shape
    _, N = w.shape
    n_orig = N
    cap = _tpu_vmem_capacity()
    budget = (cap * 3) // 4

    if K * N * w.dtype.itemsize <= resident_w_bytes:
        tn = N                                           # whole weight resident
    else:
        tn = _pick_divisor(N, tn_max, step=128)
        if tn > tn_max:
            # No 128-multiple divisor <= tn_max: pad N up instead of a full-N tile.
            n_pad = _round_up(N, tn_max)
            w = jnp.pad(w, ((0, 0), (0, n_pad - N)))
            b = jnp.pad(b, ((0, 0), (0, n_pad - N)))
            N, tn = n_pad, tn_max

    tm = min(tm_max, _round_up(M, 8))

    def resident(tm_, tn_):
        return (2 * tm_ * K * x.dtype.itemsize
                + 2 * K * tn_ * w.dtype.itemsize
                + 2 * tn_ * b.dtype.itemsize
                + 2 * tm_ * tn_ * jnp.dtype(out_dtype).itemsize)

    while resident(tm, tn) > budget and tm > 8:
        tm = max(8, _round_up(tm // 2, 8))

    Mp = _round_up(M, tm)
    if Mp != M:
        x = jnp.pad(x, ((0, Mp - M), (0, 0)))
    grid = (Mp // tm, N // tn)

    out = pl.pallas_call(
        _linear_kernel,
        out_shape=jax.ShapeDtypeStruct((Mp, N), out_dtype),
        grid_spec=pltpu.PrefetchScalarGridSpec(
            num_scalar_prefetch=0,
            grid=grid,
            in_specs=[
                pl.BlockSpec((tm, K), lambda i, j: (i, 0)),
                pl.BlockSpec((K, tn), lambda i, j: (0, j)),
                pl.BlockSpec((1, tn), lambda i, j: (0, j)),
            ],
            out_specs=pl.BlockSpec((tm, tn), lambda i, j: (i, j)),
        ),
        compiler_params=pltpu.CompilerParams(
            dimension_semantics=("parallel", "parallel"),
            vmem_limit_bytes=_vmem_limit_bytes(resident(tm, tn), cap)),
    )(x, w, b)
    return out[:M, :n_orig]


def lstm_layer(x, wih_t, whh_t, bias, h0, c0, *, time_chunk=16, batch_block=128,
               prefer_split_batch=True):
    """One fused LSTM layer.
    x:(T,Np,Ein) bf16, wih_t:(Ein,4Hp) bf16, whh_t:(Hp,4Hp) bf16, bias:(1,4Hp) f32,
    h0/c0:(Np,Hp) f32 -> (out (T,Np,Hp) bf16, h_n (Np,Hp) f32, c_n (Np,Hp) f32)."""
    T, Np, Ein = x.shape
    Hp, G = whh_t.shape
    cap = _tpu_vmem_capacity()
    budget = (cap * 3) // 4

    NB = _select_batch_block(Np, batch_block, prefer_split_batch)
    Tc = _pick_divisor(T, time_chunk, step=1)

    def resident(tc):
        return (2 * tc * NB * Ein * 2            # x blocks (bf16, double-buffered)
                + 2 * tc * NB * Hp * 2           # out blocks (bf16, double-buffered)
                + 2 * (Ein * G + Hp * G) * 2     # resident weights (count 2x buffers)
                + 2 * G * 4                      # bias
                + 4 * NB * Hp * 4                # h0/c0/hn/cn blocks
                + NB * Hp * (2 + 4)              # h_sc (bf16) + c_sc (f32)
                + tc * NB * G * 4)               # gx scratch (f32)

    while resident(Tc) > budget and Tc > 1:      # shrink the time chunk to fit VMEM
        new_tc = _pick_divisor(T, max(1, Tc // 2), step=1)
        if new_tc >= Tc:
            break
        Tc = new_tc

    grid = (Np // NB, T // Tc)
    out_shapes = (
        jax.ShapeDtypeStruct((T, Np, Hp), jnp.bfloat16),
        jax.ShapeDtypeStruct((Np, Hp), jnp.float32),
        jax.ShapeDtypeStruct((Np, Hp), jnp.float32),
    )
    return pl.pallas_call(
        _lstm_chunk_kernel,
        out_shape=out_shapes,
        grid_spec=pltpu.PrefetchScalarGridSpec(
            num_scalar_prefetch=0,
            grid=grid,
            in_specs=[
                pl.BlockSpec((Tc, NB, Ein), lambda b, t: (t, b, 0)),
                pl.BlockSpec((Ein, G), lambda b, t: (0, 0)),   # resident, fetched once
                pl.BlockSpec((Hp, G), lambda b, t: (0, 0)),    # resident, fetched once
                pl.BlockSpec((1, G), lambda b, t: (0, 0)),
                pl.BlockSpec((NB, Hp), lambda b, t: (b, 0)),
                pl.BlockSpec((NB, Hp), lambda b, t: (b, 0)),
            ],
            out_specs=(
                pl.BlockSpec((Tc, NB, Hp), lambda b, t: (t, b, 0)),
                pl.BlockSpec((NB, Hp), lambda b, t: (b, 0)),
                pl.BlockSpec((NB, Hp), lambda b, t: (b, 0)),
            ),
            scratch_shapes=[
                pltpu.VMEM((NB, Hp), jnp.bfloat16),            # h state across chunks
                pltpu.VMEM((NB, Hp), jnp.float32),             # c state across chunks
                pltpu.VMEM((Tc * NB, G), jnp.float32),         # chunk input projection
            ],
        ),
        compiler_params=pltpu.CompilerParams(
            dimension_semantics=("parallel", "arbitrary"),
            vmem_limit_bytes=_vmem_limit_bytes(resident(Tc), cap)),
    )(x, wih_t, whh_t, bias, h0, c0)


# --------------------------- parameter handling ------------------------------

def init_params(key, vocab_size, embed_size, hidden_size, num_layers):
    """Deterministic synthetic parameters mirroring TorchRNNLM.__init__ shapes."""
    keys = jax.random.split(key, 2 + 4 * num_layers)
    # init_weights(): uniform(-0.1, 0.1) for embed.weight and dist.weight, zeros bias.
    embed_w = jax.random.uniform(keys[0], (vocab_size, embed_size),
                                 minval=-0.1, maxval=0.1, dtype=jnp.float32)
    dist_w = jax.random.uniform(keys[1], (vocab_size, hidden_size),
                                minval=-0.1, maxval=0.1, dtype=jnp.float32)
    dist_b = jnp.zeros((vocab_size,), jnp.float32)
    # nn.LSTM default init: uniform(-1/sqrt(H), 1/sqrt(H)).
    k = 1.0 / jnp.sqrt(jnp.float32(hidden_size))
    lstm = []
    for layer in range(num_layers):
        in_dim = embed_size if layer == 0 else hidden_size
        kk = keys[2 + 4 * layer: 2 + 4 * (layer + 1)]
        w_ih = jax.random.uniform(kk[0], (4 * hidden_size, in_dim),
                                  minval=-k, maxval=k, dtype=jnp.float32)
        w_hh = jax.random.uniform(kk[1], (4 * hidden_size, hidden_size),
                                  minval=-k, maxval=k, dtype=jnp.float32)
        b_ih = jax.random.uniform(kk[2], (4 * hidden_size,),
                                  minval=-k, maxval=k, dtype=jnp.float32)
        b_hh = jax.random.uniform(kk[3], (4 * hidden_size,),
                                  minval=-k, maxval=k, dtype=jnp.float32)
        lstm.append(dict(w_ih=w_ih, w_hh=w_hh, b_ih=b_ih, b_hh=b_hh))
    return dict(embed_w=embed_w, dist_w=dist_w, dist_b=dist_b, lstm=lstm)


def _pad_gate_rows(w, H, Hp):
    """w: (4H, in) with [i,f,g,o] stacked -> (4Hp, in), each gate block padded H->Hp."""
    blocks = [jnp.pad(w[k * H:(k + 1) * H], ((0, Hp - H), (0, 0))) for k in range(4)]
    return jnp.concatenate(blocks, axis=0)


def _pad_gate_vec(b, H, Hp):
    blocks = [jnp.pad(b[k * H:(k + 1) * H], (0, Hp - H)) for k in range(4)]
    return jnp.concatenate(blocks)


def prepare_params(params):
    """One-time transform to kernel-ready params: pad E/H/V to 128 lanes (V additionally
    to a 512 multiple for large vocabs so a 512-wide tile always exists), pre-transpose,
    pre-sum LSTM biases, pre-cast MXU weights and the embedding table to bf16."""
    H = params["lstm"][0]["w_hh"].shape[-1]
    E = params["embed_w"].shape[-1]
    V = params["dist_w"].shape[0]
    Hp = _round_up(H, 128)
    Ep = _round_up(E, 128)
    Vp = _round_up(V, 128) if V <= 512 else _round_up(V, 512)

    layers = []
    for l, p in enumerate(params["lstm"]):
        in_dim = p["w_ih"].shape[-1]
        in_pad = Ep if l == 0 else Hp
        w_ih = _pad_gate_rows(p["w_ih"], H, Hp)                      # (4Hp, in_dim)
        w_ih = jnp.pad(w_ih, ((0, 0), (0, in_pad - in_dim)))         # (4Hp, in_pad)
        w_hh = _pad_gate_rows(p["w_hh"], H, Hp)                      # (4Hp, H)
        w_hh = jnp.pad(w_hh, ((0, 0), (0, Hp - H)))                  # (4Hp, Hp)
        bias = _pad_gate_vec(p["b_ih"] + p["b_hh"], H, Hp)           # (4Hp,) pre-summed
        layers.append(dict(
            wih_t=jnp.transpose(w_ih).astype(jnp.bfloat16),          # (in_pad, 4Hp)
            whh_t=jnp.transpose(w_hh).astype(jnp.bfloat16),          # (Hp, 4Hp)
            bias=bias.reshape(1, -1).astype(jnp.float32),            # (1, 4Hp)
        ))

    embed_w = jnp.pad(params["embed_w"], ((0, 0), (0, Ep - E)))      # (V, Ep)
    dist_w = jnp.pad(params["dist_w"], ((0, Vp - V), (0, Hp - H)))   # (Vp, Hp)
    dist_b = jnp.pad(params["dist_b"], (0, Vp - V))                  # (Vp,)
    return dict(
        embed_w=embed_w.astype(jnp.bfloat16),                        # bf16 gather table
        layers=layers,
        dist_w_t=jnp.transpose(dist_w).astype(jnp.bfloat16),         # (Hp, Vp)
        dist_b=dist_b.reshape(1, -1).astype(jnp.float32),            # (1, Vp)
        hidden_size=H, hidden_pad=Hp, vocab_size=V, vocab_pad=Vp,
        embed_size=E, embed_pad=Ep,
    )


# -------------------------------- forward ------------------------------------

def rnn_lm_forward(token, kparams, hidden=None):
    """TorchRNNLM.forward: token (N, T) int32 -> (logits (N, T, V), (h_n, c_n))."""
    N, T = token.shape
    H, Hp = kparams["hidden_size"], kparams["hidden_pad"]
    V = kparams["vocab_size"]
    layers = kparams["layers"]
    L = len(layers)
    Np = _round_up(N, 8)                       # pad batch to a full sublane group

    # Embedding lookup (glue; embed_drop is identity at inference). Table is bf16.
    emb = jnp.take(kparams["embed_w"], token, axis=0)                 # (N, T, Ep) bf16
    x = jnp.transpose(emb, (1, 0, 2))                                 # (T, N, Ep)
    x = jnp.pad(x, ((0, 0), (0, Np - N), (0, 0)))                     # (T, Np, Ep)

    if hidden is None:
        h0 = jnp.zeros((L, Np, Hp), jnp.float32)
        c0 = jnp.zeros((L, Np, Hp), jnp.float32)
    else:
        h_in, c_in = hidden
        pad = ((0, 0), (0, Np - h_in.shape[1]), (0, Hp - h_in.shape[2]))
        h0 = jnp.pad(h_in.astype(jnp.float32), pad)
        c0 = jnp.pad(c_in.astype(jnp.float32), pad)

    hn_list, cn_list = [], []
    for l, lp in enumerate(layers):
        # Fused kernel: chunk-level input projection + recurrence (no gx HBM round trip).
        x, h_n, c_n = lstm_layer(x, lp["wih_t"], lp["whh_t"], lp["bias"], h0[l], c0[l])
        hn_list.append(h_n[:N, :H])
        cn_list.append(c_n[:N, :H])
        # TODO(synk): inter-layer dropout (p=0.2) is a no-op at inference; not modeled.

    # Reorder the small (T, Np, Hp) slab to batch-major before the projection so the
    # much larger (.., V) logits slab never needs a transpose.  (pred_drop is identity.)
    out_bm = jnp.transpose(x, (1, 0, 2)).reshape(Np * T, Hp)
    # TODO(synk): logits kept in f32 for module fidelity; emit bf16 (or fuse
    # log_softmax) here if the downstream consumer permits to halve the dominant write.
    logits_flat = tiled_linear(out_bm, kparams["dist_w_t"], kparams["dist_b"],
                               out_dtype=jnp.float32, tm_max=1024, tn_max=512)
    logits = logits_flat.reshape(Np, T, -1)[:N, :, :V]                # (N, T, V)

    hidden_out = (jnp.stack(hn_list, axis=0), jnp.stack(cn_list, axis=0))
    return logits, hidden_out


# ------------------------------- reference -----------------------------------

def rnn_lm_forward_ref(token, params, hidden=None):
    """Pure-JAX f32 reference (for correctness checking against the kernels)."""
    N, T = token.shape
    num_layers = len(params["lstm"])
    H = params["lstm"][0]["w_hh"].shape[-1]
    emb = jnp.take(params["embed_w"], token, axis=0)
    x = jnp.transpose(emb, (1, 0, 2)).astype(jnp.float32)
    if hidden is None:
        h0 = jnp.zeros((num_layers, N, H), jnp.float32)
        c0 = jnp.zeros((num_layers, N, H), jnp.float32)
    else:
        h0, c0 = hidden
    hn_list, cn_list = [], []
    for layer, p in enumerate(params["lstm"]):
        def step(carry, x_t, p=p):
            h, c = carry
            gates = (x_t @ p["w_ih"].T + h @ p["w_hh"].T + p["b_ih"] + p["b_hh"])
            i = jax.nn.sigmoid(gates[:, 0:H])
            f = jax.nn.sigmoid(gates[:, H:2 * H])
            g = jnp.tanh(gates[:, 2 * H:3 * H])
            o = jax.nn.sigmoid(gates[:, 3 * H:4 * H])
            c = f * c + i * g
            h = o * jnp.tanh(c)
            return (h, c), h
        (h_n, c_n), x = lax.scan(step, (h0[layer], c0[layer]), x)
        hn_list.append(h_n)
        cn_list.append(c_n)
    out = jnp.transpose(x, (1, 0, 2))
    logits = out @ params["dist_w"].T + params["dist_b"]
    return logits, (jnp.stack(hn_list), jnp.stack(cn_list))


# --------------------------------- main ---------------------------------------

if __name__ == "__main__":
    # Small shapes consistent with the module defaults (scaled down).
    N, T = 2, 16
    vocab_size, embed_size, hidden_size, num_layers = 40, 32, 32, 3

    key = jax.random.PRNGKey(0)
    pkey, tkey = jax.random.split(key)
    params = init_params(pkey, vocab_size, embed_size, hidden_size, num_layers)
    kparams = prepare_params(params)                 # one-time pad/transpose/cast
    token = jax.random.randint(tkey, (N, T), 0, vocab_size, dtype=jnp.int32)

    logits, (h_n, c_n) = rnn_lm_forward(token, kparams)
    jax.block_until_ready((logits, h_n, c_n))

    # Sanity check against pure-JAX f32 reference (bf16 MXU inputs -> relaxed atol).
    logits_ref, (h_ref, c_ref) = rnn_lm_forward_ref(token, params)
    assert logits.shape == (N, T, vocab_size)
    assert h_n.shape == (num_layers, N, hidden_size)
    assert c_n.shape == (num_layers, N, hidden_size)
    assert jnp.allclose(logits, logits_ref, atol=3e-2), "logits mismatch"
    assert jnp.allclose(h_n, h_ref, atol=3e-2), "h_n mismatch"
    assert jnp.allclose(c_n, c_ref, atol=3e-2), "c_n mismatch"

    print("KERNEL_OK")
</pallas_src>

<mosaic_0001>
module attributes {stable_mosaic.version = 11 : i64} {
  func.func @_lstm_chunk_kernel(%arg0: i32, %arg1: i32, %arg2: memref<16x8x128xbf16, #tpu.memory_space<vmem>>, %arg3: memref<128x512xbf16, #tpu.memory_space<vmem>>, %arg4: memref<128x512xbf16, #tpu.memory_space<vmem>>, %arg5: memref<1x512xf32, #tpu.memory_space<vmem>>, %arg6: memref<8x128xf32, #tpu.memory_space<vmem>>, %arg7: memref<8x128xf32, #tpu.memory_space<vmem>>, %arg8: memref<16x8x128xbf16, #tpu.memory_space<vmem>>, %arg9: memref<8x128xf32, #tpu.memory_space<vmem>>, %arg10: memref<8x128xf32, #tpu.memory_space<vmem>>, %arg11: memref<8x128xbf16, #tpu.memory_space<vmem>>, %arg12: memref<8x128xf32, #tpu.memory_space<vmem>>, %arg13: memref<128x512xf32, #tpu.memory_space<vmem>>) attributes {dimension_semantics = [#tpu.dimension_semantics<parallel>, #tpu.dimension_semantics<arbitrary>], iteration_bounds = array<i64: 1, 1>, scalar_prefetch = 0 : i64, scratch_operands = 3 : i64, tpu.core_type = #tpu.core_type<tc>, window_params = [{transform_indices = @transform_0, window_bounds = array<i64: 16, 8, 128>}, {pipeline_mode = #tpu.pipeline_mode<synchronous>, transform_indices = @transform_1, window_bounds = array<i64: 128, 512>}, {pipeline_mode = #tpu.pipeline_mode<synchronous>, transform_indices = @transform_2, window_bounds = array<i64: 128, 512>}, {pipeline_mode = #tpu.pipeline_mode<synchronous>, transform_indices = @transform_3, window_bounds = array<i64: 1, 512>}, {transform_indices = @transform_4, window_bounds = array<i64: 8, 128>}, {transform_indices = @transform_5, window_bounds = array<i64: 8, 128>}, {transform_indices = @transform_6, window_bounds = array<i64: 16, 8, 128>}, {transform_indices = @transform_7, window_bounds = array<i64: 8, 128>}, {transform_indices = @transform_8, window_bounds = array<i64: 8, 128>}]} {
    %c0_i32 = arith.constant 0 : i32
    %0 = arith.cmpi eq, %arg1, %c0_i32 : i32
    %1 = arith.extui %0 : i1 to i32
    %c0_i32_0 = arith.constant 0 : i32
    %2 = arith.cmpi ne, %1, %c0_i32_0 : i32
    scf.if %2 {
      %c0_316 = arith.constant 0 : index
      %c0_317 = arith.constant 0 : index
      %666 = vector.load %arg6[%c0_316, %c0_317] : memref<8x128xf32, #tpu.memory_space<vmem>>, vector<8x128xf32>
      %667 = arith.truncf %666 : vector<8x128xf32> to vector<8x128xbf16>
      %c0_318 = arith.constant 0 : index
      %c0_319 = arith.constant 0 : index
      %668 = vector.load %arg11[%c0_318, %c0_319] : memref<8x128xbf16, #tpu.memory_space<vmem>>, vector<8x128xbf16>
      tpu.vector_store %arg11[%c0_318, %c0_319], %667 {strides = array<i32>} : memref<8x128xbf16, #tpu.memory_space<vmem>>, vector<8x128xbf16>,
      %c0_320 = arith.constant 0 : index
      %c0_321 = arith.constant 0 : index
      %669 = vector.load %arg7[%c0_320, %c0_321] : memref<8x128xf32, #tpu.memory_space<vmem>>, vector<8x128xf32>
      %c0_322 = arith.constant 0 : index
      %c0_323 = arith.constant 0 : index
      %670 = vector.load %arg12[%c0_322, %c0_323] : memref<8x128xf32, #tpu.memory_space<vmem>>, vector<8x128xf32>
      tpu.vector_store %arg12[%c0_322, %c0_323], %669 {strides = array<i32>} : memref<8x128xf32, #tpu.memory_space<vmem>>, vector<8x128xf32>,
    } else {
    }
    %c0 = arith.constant 0 : index
    %c0_1 = arith.constant 0 : index
    %c0_2 = arith.constant 0 : index
    %3 = vector.load %arg2[%c0, %c0_1, %c0_2] : memref<16x8x128xbf16, #tpu.memory_space<vmem>>, vector<1x8x128xbf16>
    %4 = vector.shape_cast %3 : vector<1x8x128xbf16> to vector<8x128xbf16>
    %c0_3 = arith.constant 0 : index
    %c0_4 = arith.constant 0 : index
    %5 = vector.load %arg3[%c0_3, %c0_4] : memref<128x512xbf16, #tpu.memory_space<vmem>>, vector<128x512xbf16>
    %cst = arith.constant dense<0.000000e+00> : vector<8x512xf32>
    %6 = tpu.matmul %4, %5, %cst {dimension_numbers = #tpu.dot_dimension_numbers<[1], [0], [0], [1], [0, 0, 1, 1], [], []>} : vector<8x128xbf16>, vector<128x512xbf16>, vector<8x512xf32> -> vector<8x512xf32>
    %c0_5 = arith.constant 0 : index
    %c0_6 = arith.constant 0 : index
    %7 = vector.load %arg5[%c0_5, %c0_6] : memref<1x512xf32, #tpu.memory_space<vmem>>, vector<1x512xf32>
    %8 = vector.broadcast %7 : vector<1x512xf32> to vector<8x512xf32>
    %9 = arith.addf %6, %8 : vector<8x512xf32>
    %c0_7 = arith.constant 0 : index
    %c0_8 = arith.constant 0 : index
    %10 = vector.load %arg13[%c0_7, %c0_8] : memref<128x512xf32, #tpu.memory_space<vmem>>, vector<8x512xf32>
    tpu.vector_store %arg13[%c0_7, %c0_8], %9 {strides = array<i32>} : memref<128x512xf32, #tpu.memory_space<vmem>>, vector<8x512xf32>,
    %c1 = arith.constant 1 : index
    %c0_9 = arith.constant 0 : index
    %c0_10 = arith.constant 0 : index
    %11 = vector.load %arg2[%c1, %c0_9, %c0_10] : memref<16x8x128xbf16, #tpu.memory_space<vmem>>, vector<1x8x128xbf16>
    %12 = vector.shape_cast %11 : vector<1x8x128xbf16> to vector<8x128xbf16>
    %c0_11 = arith.constant 0 : index
    %c0_12 = arith.constant 0 : index
    %13 = vector.load %arg3[%c0_11, %c0_12] : memref<128x512xbf16, #tpu.memory_space<vmem>>, vector<128x512xbf16>
    %cst_13 = arith.constant dense<0.000000e+00> : vector<8x512xf32>
    %14 = tpu.matmul %12, %13, %cst_13 {dimension_numbers = #tpu.dot_dimension_numbers<[1], [0], [0], [1], [0, 0, 1, 1], [], []>} : vector<8x128xbf16>, vector<128x512xbf16>, vector<8x512xf32> -> vector<8x512xf32>
    %c0_14 = arith.constant 0 : index
    %c0_15 = arith.constant 0 : index
    %15 = vector.load %arg5[%c0_14, %c0_15] : memref<1x512xf32, #tpu.memory_space<vmem>>, vector<1x512xf32>
    %16 = vector.broadcast %15 : vector<1x512xf32> to vector<8x512xf32>
    %17 = arith.addf %14, %16 : vector<8x512xf32>
    %c8 = arith.constant 8 : index
    %c0_16 = arith.constant 0 : index
    %18 = vector.load %arg13[%c8, %c0_16] : memref<128x512xf32, #tpu.memory_space<vmem>>, vector<8x512xf32>
    tpu.vector_store %arg13[%c8, %c0_16], %17 {strides = array<i32>} : memref<128x512xf32, #tpu.memory_space<vmem>>, vector<8x512xf32>,
    %c2 = arith.constant 2 : index
    %c0_17 = arith.constant 0 : index
    %c0_18 = arith.constant 0 : index
    %19 = vector.load %arg2[%c2, %c0_17, %c0_18] : memref<16x8x128xbf16, #tpu.memory_space<vmem>>, vector<1x8x128xbf16>
    %20 = vector.shape_cast %19 : vector<1x8x128xbf16> to vector<8x128xbf16>
    %c0_19 = arith.constant 0 : index
    %c0_20 = arith.constant 0 : index
    %21 = vector.load %arg3[%c0_19, %c0_20] : memref<128x512xbf16, #tpu.memory_space<vmem>>, vector<128x512xbf16>
    %cst_21 = arith.constant dense<0.000000e+00> : vector<8x512xf32>
    %22 = tpu.matmul %20, %21, %cst_21 {dimension_numbers = #tpu.dot_dimension_numbers<[1], [0], [0], [1], [0, 0, 1, 1], [], []>} : vector<8x128xbf16>, vector<128x512xbf16>, vector<8x512xf32> -> vector<8x512xf32>
    %c0_22 = arith.constant 0 : index
    %c0_23 = arith.constant 0 : index
    %23 = vector.load %arg5[%c0_22, %c0_23] : memref<1x512xf32, #tpu.memory_space<vmem>>, vector<1x512xf32>
    %24 = vector.broadcast %23 : vector<1x512xf32> to vector<8x512xf32>
    %25 = arith.addf %22, %24 : vector<8x512xf32>
    %c16 = arith.constant 16 : index
    %c0_24 = arith.constant 0 : index
    %26 = vector.load %arg13[%c16, %c0_24] : memref<128x512xf32, #tpu.memory_space<vmem>>, vector<8x512xf32>
    tpu.vector_store %arg13[%c16, %c0_24], %25 {strides = array<i32>} : memref<128x512xf32, #tpu.memory_space<vmem>>, vector<8x512xf32>,
    %c3 = arith.constant 3 : index
    %c0_25 = arith.constant 0 : index
    %c0_26 = arith.constant 0 : index
    %27 = vector.load %arg2[%c3, %c0_25, %c0_26] : memref<16x8x128xbf16, #tpu.memory_space<vmem>>, vector<1x8x128xbf16>
    %28 = vector.shape_cast %27 : vector<1x8x128xbf16> to vector<8x128xbf16>
    %c0_27 = arith.constant 0 : index
    %c0_28 = arith.constant 0 : index
    %29 = vector.load %arg3[%c0_27, %c0_28] : memref<128x512xbf16, #tpu.memory_space<vmem>>, vector<128x512xbf16>
    %cst_29 = arith.constant dense<0.000000e+00> : vector<8x512xf32>
    %30 = tpu.matmul %28, %29, %cst_29 {dimension_numbers = #tpu.dot_dimension_numbers<[1], [0], [0], [1], [0, 0, 1, 1], [], []>} : vector<8x128xbf16>, vector<128x512xbf16>, vector<8x512xf32> -> vector<8x512xf32>
    %c0_30 = arith.constant 0 : index
    %c0_31 = arith.constant 0 : index
    %31 = vector.load %arg5[%c0_30, %c0_31] : memref<1x512xf32, #tpu.memory_space<vmem>>, vector<1x512xf32>
    %32 = vector.broadcast %31 : vector<1x512xf32> to vector<8x512xf32>
    %33 = arith.addf %30, %32 : vector<8x512xf32>
    %c24 = arith.constant 24 : index
    %c0_32 = arith.constant 0 : index
    %34 = vector.load %arg13[%c24, %c0_32] : memref<128x512xf32, #tpu.memory_space<vmem>>, vector<8x512xf32>
    tpu.vector_store %arg13[%c24, %c0_32], %33 {strides = array<i32>} : memref<128x512xf32, #tpu.memory_space<vmem>>, vector<8x512xf32>,
    %c4 = arith.constant 4 : index
    %c0_33 = arith.constant 0 : index
    %c0_34 = arith.constant 0 : index
    %35 = vector.load %arg2[%c4, %c0_33, %c0_34] : memref<16x8x128xbf16, #tpu.memory_space<vmem>>, vector<1x8x128xbf16>
    %36 = vector.shape_cast %35 : vector<1x8x128xbf16> to vector<8x128xbf16>
    %c0_35 = arith.constant 0 : index
    %c0_36 = arith.constant 0 : index
    %37 = vector.load %arg3[%c0_35, %c0_36] : memref<128x512xbf16, #tpu.memory_space<vmem>>, vector<128x512xbf16>
    %cst_37 = arith.constant dense<0.000000e+00> : vector<8x512xf32>
    %38 = tpu.matmul %36, %37, %cst_37 {dimension_numbers = #tpu.dot_dimension_numbers<[1], [0], [0], [1], [0, 0, 1, 1], [], []>} : vector<8x128xbf16>, vector<128x512xbf16>, vector<8x512xf32> -> vector<8x512xf32>
    %c0_38 = arith.constant 0 : index
    %c0_39 = arith.constant 0 : index
    %39 = vector.load %arg5[%c0_38, %c0_39] : memref<1x512xf32, #tpu.memory_space<vmem>>, vector<1x512xf32>
    %40 = vector.broadcast %39 : vector<1x512xf32> to vector<8x512xf32>
    %41 = arith.addf %38, %40 : vector<8x512xf32>
    %c32 = arith.constant 32 : index
    %c0_40 = arith.constant 0 : index
    %42 = vector.load %arg13[%c32, %c0_40] : memref<128x512xf32, #tpu.memory_space<vmem>>, vector<8x512xf32>
    tpu.vector_store %arg13[%c32, %c0_40], %41 {strides = array<i32>} : memref<128x512xf32, #tpu.memory_space<vmem>>, vector<8x512xf32>,
    %c5 = arith.constant 5 : index
    %c0_41 = arith.constant 0 : index
    %c0_42 = arith.constant 0 : index
    %43 = vector.load %arg2[%c5, %c0_41, %c0_42] : memref<16x8x128xbf16, #tpu.memory_space<vmem>>, vector<1x8x128xbf16>
    %44 = vector.shape_cast %43 : vector<1x8x128xbf16> to vector<8x128xbf16>
    %c0_43 = arith.constant 0 : index
    %c0_44 = arith.constant 0 : index
    %45 = vector.load %arg3[%c0_43, %c0_44] : memref<128x512xbf16, #tpu.memory_space<vmem>>, vector<128x512xbf16>
    %cst_45 = arith.constant dense<0.000000e+00> : vector<8x512xf32>
    %46 = tpu.matmul %44, %45, %cst_45 {dimension_numbers = #tpu.dot_dimension_numbers<[1], [0], [0], [1], [0, 0, 1, 1], [], []>} : vector<8x128xbf16>, vector<128x512xbf16>, vector<8x512xf32> -> vector<8x512xf32>
    %c0_46 = arith.constant 0 : index
    %c0_47 = arith.constant 0 : index
    %47 = vector.load %arg5[%c0_46, %c0_47] : memref<1x512xf32, #tpu.memory_space<vmem>>, vector<1x512xf32>
    %48 = vector.broadcast %47 : vector<1x512xf32> to vector<8x512xf32>
    %49 = arith.addf %46, %48 : vector<8x512xf32>
    %c40 = arith.constant 40 : index
    %c0_48 = arith.constant 0 : index
    %50 = vector.load %arg13[%c40, %c0_48] : memref<128x512xf32, #tpu.memory_space<vmem>>, vector<8x512xf32>
    tpu.vector_store %arg13[%c40, %c0_48], %49 {strides = array<i32>} : memref<128x512xf32, #tpu.memory_space<vmem>>, vector<8x512xf32>,
    %c6 = arith.constant 6 : index
    %c0_49 = arith.constant 0 : index
    %c0_50 = arith.constant 0 : index
    %51 = vector.load %arg2[%c6, %c0_49, %c0_50] : memref<16x8x128xbf16, #tpu.memory_space<vmem>>, vector<1x8x128xbf16>
    %52 = vector.shape_cast %51 : vector<1x8x128xbf16> to vector<8x128xbf16>
    %c0_51 = arith.constant 0 : index
    %c0_52 = arith.constant 0 : index
    %53 = vector.load %arg3[%c0_51, %c0_52] : memref<128x512xbf16, #tpu.memory_space<vmem>>, vector<128x512xbf16>
    %cst_53 = arith.constant dense<0.000000e+00> : vector<8x512xf32>
    %54 = tpu.matmul %52, %53, %cst_53 {dimension_numbers = #tpu.dot_dimension_numbers<[1], [0], [0], [1], [0, 0, 1, 1], [], []>} : vector<8x128xbf16>, vector<128x512xbf16>, vector<8x512xf32> -> vector<8x512xf32>
    %c0_54 = arith.constant 0 : index
    %c0_55 = arith.constant 0 : index
    %55 = vector.load %arg5[%c0_54, %c0_55] : memref<1x512xf32, #tpu.memory_space<vmem>>, vector<1x512xf32>
    %56 = vector.broadcast %55 : vector<1x512xf32> to vector<8x512xf32>
    %57 = arith.addf %54, %56 : vector<8x512xf32>
    %c48 = arith.constant 48 : index
    %c0_56 = arith.constant 0 : index
    %58 = vector.load %arg13[%c48, %c0_56] : memref<128x512xf32, #tpu.memory_space<vmem>>, vector<8x512xf32>
    tpu.vector_store %arg13[%c48, %c0_56], %57 {strides = array<i32>} : memref<128x512xf32, #tpu.memory_space<vmem>>, vector<8x512xf32>,
    %c7 = arith.constant 7 : index
    %c0_57 = arith.constant 0 : index
    %c0_58 = arith.constant 0 : index
    %59 = vector.load %arg2[%c7, %c0_57, %c0_58] : memref<16x8x128xbf16, #tpu.memory_space<vmem>>, vector<1x8x128xbf16>
    %60 = vector.shape_cast %59 : vector<1x8x128xbf16> to vector<8x128xbf16>
    %c0_59 = arith.constant 0 : index
    %c0_60 = arith.constant 0 : index
    %61 = vector.load %arg3[%c0_59, %c0_60] : memref<128x512xbf16, #tpu.memory_space<vmem>>, vector<128x512xbf16>
    %cst_61 = arith.constant dense<0.000000e+00> : vector<8x512xf32>
    %62 = tpu.matmul %60, %61, %cst_61 {dimension_numbers = #tpu.dot_dimension_numbers<[1], [0], [0], [1], [0, 0, 1, 1], [], []>} : vector<8x128xbf16>, vector<128x512xbf16>, vector<8x512xf32> -> vector<8x512xf32>
    %c0_62 = arith.constant 0 : index
    %c0_63 = arith.constant 0 : index
    %63 = vector.load %arg5[%c0_62, %c0_63] : memref<1x512xf32, #tpu.memory_space<vmem>>, vector<1x512xf32>
    %64 = vector.broadcast %63 : vector<1x512xf32> to vector<8x512xf32>
    %65 = arith.addf %62, %64 : vector<8x512xf32>
    %c56 = arith.constant 56 : index
    %c0_64 = arith.constant 0 : index
    %66 = vector.load %arg13[%c56, %c0_64] : memref<128x512xf32, #tpu.memory_space<vmem>>, vector<8x512xf32>
    tpu.vector_store %arg13[%c56, %c0_64], %65 {strides = array<i32>} : memref<128x512xf32, #tpu.memory_space<vmem>>, vector<8x512xf32>,
    %c8_65 = arith.constant 8 : index
    %c0_66 = arith.constant 0 : index
    %c0_67 = arith.constant 0 : index
    %67 = vector.load %arg2[%c8_65, %c0_66, %c0_67] : memref<16x8x128xbf16, #tpu.memory_space<vmem>>, vector<1x8x128xbf16>
    %68 = vector.shape_cast %67 : vector<1x8x128xbf16> to vector<8x128xbf16>
    %c0_68 = arith.constant 0 : index
    %c0_69 = arith.constant 0 : index
    %69 = vector.load %arg3[%c0_68, %c0_69] : memref<128x512xbf16, #tpu.memory_space<vmem>>, vector<128x512xbf16>
    %cst_70 = arith.constant dense<0.000000e+00> : vector<8x512xf32>
    %70 = tpu.matmul %68, %69, %cst_70 {dimension_numbers = #tpu.dot_dimension_numbers<[1], [0], [0], [1], [0, 0, 1, 1], [], []>} : vector<8x128xbf16>, vector<128x512xbf16>, vector<8x512xf32> -> vector<8x512xf32>
    %c0_71 = arith.constant 0 : index
    %c0_72 = arith.constant 0 : index
    %71 = vector.load %arg5[%c0_71, %c0_72] : memref<1x512xf32, #tpu.memory_space<vmem>>, vector<1x512xf32>
    %72 = vector.broadcast %71 : vector<1x512xf32> to vector<8x512xf32>
    %73 = arith.addf %70, %72 : vector<8x512xf32>
    %c64 = arith.constant 64 : index
    %c0_73 = arith.constant 0 : index
    %74 = vector.load %arg13[%c64, %c0_73] : memref<128x512xf32, #tpu.memory_space<vmem>>, vector<8x512xf32>
    tpu.vector_store %arg13[%c64, %c0_73], %73 {strides = array<i32>} : memref<128x512xf32, #tpu.memory_space<vmem>>, vector<8x512xf32>,
    %c9 = arith.constant 9 : index
    %c0_74 = arith.constant 0 : index
    %c0_75 = arith.constant 0 : index
    %75 = vector.load %arg2[%c9, %c0_74, %c0_75] : memref<16x8x128xbf16, #tpu.memory_space<vmem>>, vector<1x8x128xbf16>
    %76 = vector.shape_cast %75 : vector<1x8x128xbf16> to vector<8x128xbf16>
    %c0_76 = arith.constant 0 : index
    %c0_77 = arith.constant 0 : index
    %77 = vector.load %arg3[%c0_76, %c0_77] : memref<128x512xbf16, #tpu.memory_space<vmem>>, vector<128x512xbf16>
    %cst_78 = arith.constant dense<0.000000e+00> : vector<8x512xf32>
    %78 = tpu.matmul %76, %77, %cst_78 {dimension_numbers = #tpu.dot_dimension_numbers<[1], [0], [0], [1], [0, 0, 1, 1], [], []>} : vector<8x128xbf16>, vector<128x512xbf16>, vector<8x512xf32> -> vector<8x512xf32>
    %c0_79 = arith.constant 0 : index
    %c0_80 = arith.constant 0 : index
    %79 = vector.load %arg5[%c0_79, %c0_80] : memref<1x512xf32, #tpu.memory_space<vmem>>, vector<1x512xf32>
    %80 = vector.broadcast %79 : vector<1x512xf32> to vector<8x512xf32>
    %81 = arith.addf %78, %80 : vector<8x512xf32>
    %c72 = arith.constant 72 : index
    %c0_81 = arith.constant 0 : index
    %82 = vector.load %arg13[%c72, %c0_81] : memref<128x512xf32, #tpu.memory_space<vmem>>, vector<8x512xf32>
    tpu.vector_store %arg13[%c72, %c0_81], %81 {strides = array<i32>} : memref<128x512xf32, #tpu.memory_space<vmem>>, vector<8x512xf32>,
    %c10 = arith.constant 10 : index
    %c0_82 = arith.constant 0 : index
    %c0_83 = arith.constant 0 : index
    %83 = vector.load %arg2[%c10, %c0_82, %c0_83] : memref<16x8x128xbf16, #tpu.memory_space<vmem>>, vector<1x8x128xbf16>
    %84 = vector.shape_cast %83 : vector<1x8x128xbf16> to vector<8x128xbf16>
    %c0_84 = arith.constant 0 : index
    %c0_85 = arith.constant 0 : index
    %85 = vector.load %arg3[%c0_84, %c0_85] : memref<128x512xbf16, #tpu.memory_space<vmem>>, vector<128x512xbf16>
    %cst_86 = arith.constant dense<0.000000e+00> : vector<8x512xf32>
    %86 = tpu.matmul %84, %85, %cst_86 {dimension_numbers = #tpu.dot_dimension_numbers<[1], [0], [0], [1], [0, 0, 1, 1], [], []>} : vector<8x128xbf16>, vector<128x512xbf16>, vector<8x512xf32> -> vector<8x512xf32>
    %c0_87 = arith.constant 0 : index
    %c0_88 = arith.constant 0 : index
    %87 = vector.load %arg5[%c0_87, %c0_88] : memref<1x512xf32, #tpu.memory_space<vmem>>, vector<1x512xf32>
    %88 = vector.broadcast %87 : vector<1x512xf32> to vector<8x512xf32>
    %89 = arith.addf %86, %88 : vector<8x512xf32>
    %c80 = arith.constant 80 : index
    %c0_89 = arith.constant 0 : index
    %90 = vector.load %arg13[%c80, %c0_89] : memref<128x512xf32, #tpu.memory_space<vmem>>, vector<8x512xf32>
    tpu.vector_store %arg13[%c80, %c0_89], %89 {strides = array<i32>} : memref<128x512xf32, #tpu.memory_space<vmem>>, vector<8x512xf32>,
    %c11 = arith.constant 11 : index
    %c0_90 = arith.constant 0 : index
    %c0_91 = arith.constant 0 : index
    %91 = vector.load %arg2[%c11, %c0_90, %c0_91] : memref<16x8x128xbf16, #tpu.memory_space<vmem>>, vector<1x8x128xbf16>
    %92 = vector.shape_cast %91 : vector<1x8x128xbf16> to vector<8x128xbf16>
    %c0_92 = arith.constant 0 : index
    %c0_93 = arith.constant 0 : index
    %93 = vector.load %arg3[%c0_92, %c0_93] : memref<128x512xbf16, #tpu.memory_space<vmem>>, vector<128x512xbf16>
    %cst_94 = arith.constant dense<0.000000e+00> : vector<8x512xf32>
    %94 = tpu.matmul %92, %93, %cst_94 {dimension_numbers = #tpu.dot_dimension_numbers<[1], [0], [0], [1], [0, 0, 1, 1], [], []>} : vector<8x128xbf16>, vector<128x512xbf16>, vector<8x512xf32> -> vector<8x512xf32>
    %c0_95 = arith.constant 0 : index
    %c0_96 = arith.constant 0 : index
    %95 = vector.load %arg5[%c0_95, %c0_96] : memref<1x512xf32, #tpu.memory_space<vmem>>, vector<1x512xf32>
    %96 = vector.broadcast %95 : vector<1x512xf32> to vector<8x512xf32>
    %97 = arith.addf %94, %96 : vector<8x512xf32>
    %c88 = arith.constant 88 : index
    %c0_97 = arith.constant 0 : index
    %98 = vector.load %arg13[%c88, %c0_97] : memref<128x512xf32, #tpu.memory_space<vmem>>, vector<8x512xf32>
    tpu.vector_store %arg13[%c88, %c0_97], %97 {strides = array<i32>} : memref<128x512xf32, #tpu.memory_space<vmem>>, vector<8x512xf32>,
    %c12 = arith.constant 12 : index
    %c0_98 = arith.constant 0 : index
    %c0_99 = arith.constant 0 : index
    %99 = vector.load %arg2[%c12, %c0_98, %c0_99] : memref<16x8x128xbf16, #tpu.memory_space<vmem>>, vector<1x8x128xbf16>
    %100 = vector.shape_cast %99 : vector<1x8x128xbf16> to vector<8x128xbf16>
    %c0_100 = arith.constant 0 : index
    %c0_101 = arith.constant 0 : index
    %101 = vector.load %arg3[%c0_100, %c0_101] : memref<128x512xbf16, #tpu.memory_space<vmem>>, vector<128x512xbf16>
    %cst_102 = arith.constant dense<0.000000e+00> : vector<8x512xf32>
    %102 = tpu.matmul %100, %101, %cst_102 {dimension_numbers = #tpu.dot_dimension_numbers<[1], [0], [0], [1], [0, 0, 1, 1], [], []>} : vector<8x128xbf16>, vector<128x512xbf16>, vector<8x512xf32> -> vector<8x512xf32>
    %c0_103 = arith.constant 0 : index
    %c0_104 = arith.constant 0 : index
    %103 = vector.load %arg5[%c0_103, %c0_104] : memref<1x512xf32, #tpu.memory_space<vmem>>, vector<1x512xf32>
    %104 = vector.broadcast %103 : vector<1x512xf32> to vector<8x512xf32>
    %105 = arith.addf %102, %104 : vector<8x512xf32>
    %c96 = arith.constant 96 : index
    %c0_105 = arith.constant 0 : index
    %106 = vector.load %arg13[%c96, %c0_105] : memref<128x512xf32, #tpu.memory_space<vmem>>, vector<8x512xf32>
    tpu.vector_store %arg13[%c96, %c0_105], %105 {strides = array<i32>} : memref<128x512xf32, #tpu.memory_space<vmem>>, vector<8x512xf32>,
    %c13 = arith.constant 13 : index
    %c0_106 = arith.constant 0 : index
    %c0_107 = arith.constant 0 : index
    %107 = vector.load %arg2[%c13, %c0_106, %c0_107] : memref<16x8x128xbf16, #tpu.memory_space<vmem>>, vector<1x8x128xbf16>
    %108 = vector.shape_cast %107 : vector<1x8x128xbf16> to vector<8x128xbf16>
    %c0_108 = arith.constant 0 : index
    %c0_109 = arith.constant 0 : index
    %109 = vector.load %arg3[%c0_108, %c0_109] : memref<128x512xbf16, #tpu.memory_space<vmem>>, vector<128x512xbf16>
    %cst_110 = arith.constant dense<0.000000e+00> : vector<8x512xf32>
    %110 = tpu.matmul %108, %109, %cst_110 {dimension_numbers = #tpu.dot_dimension_numbers<[1], [0], [0], [1], [0, 0, 1, 1], [], []>} : vector<8x128xbf16>, vector<128x512xbf16>, vector<8x512xf32> -> vector<8x512xf32>
    %c0_111 = arith.constant 0 : index
    %c0_112 = arith.constant 0 : index
    %111 = vector.load %arg5[%c0_111, %c0_112] : memref<1x512xf32, #tpu.memory_space<vmem>>, vector<1x512xf32>
    %112 = vector.broadcast %111 : vector<1x512xf32> to vector<8x512xf32>
    %113 = arith.addf %110, %112 : vector<8x512xf32>
    %c104 = arith.constant 104 : index
    %c0_113 = arith.constant 0 : index
    %114 = vector.load %arg13[%c104, %c0_113] : memref<128x512xf32, #tpu.memory_space<vmem>>, vector<8x512xf32>
    tpu.vector_store %arg13[%c104, %c0_113], %113 {strides = array<i32>} : memref<128x512xf32, #tpu.memory_space<vmem>>, vector<8x512xf32>,
    %c14 = arith.constant 14 : index
    %c0_114 = arith.constant 0 : index
    %c0_115 = arith.constant 0 : index
    %115 = vector.load %arg2[%c14, %c0_114, %c0_115] : memref<16x8x128xbf16, #tpu.memory_space<vmem>>, vector<1x8x128xbf16>
    %116 = vector.shape_cast %115 : vector<1x8x128xbf16> to vector<8x128xbf16>
    %c0_116 = arith.constant 0 : index
    %c0_117 = arith.constant 0 : index
    %117 = vector.load %arg3[%c0_116, %c0_117] : memref<128x512xbf16, #tpu.memory_space<vmem>>, vector<128x512xbf16>
    %cst_118 = arith.constant dense<0.000000e+00> : vector<8x512xf32>
    %118 = tpu.matmul %116, %117, %cst_118 {dimension_numbers = #tpu.dot_dimension_numbers<[1], [0], [0], [1], [0, 0, 1, 1], [], []>} : vector<8x128xbf16>, vector<128x512xbf16>, vector<8x512xf32> -> vector<8x512xf32>
    %c0_119 = arith.constant 0 : index
    %c0_120 = arith.constant 0 : index
    %119 = vector.load %arg5[%c0_119, %c0_120] : memref<1x512xf32, #tpu.memory_space<vmem>>, vector<1x512xf32>
    %120 = vector.broadcast %119 : vector<1x512xf32> to vector<8x512xf32>
    %121 = arith.addf %118, %120 : vector<8x512xf32>
    %c112 = arith.constant 112 : index
    %c0_121 = arith.constant 0 : index
    %122 = vector.load %arg13[%c112, %c0_121] : memref<128x512xf32, #tpu.memory_space<vmem>>, vector<8x512xf32>
    tpu.vector_store %arg13[%c112, %c0_121], %121 {strides = array<i32>} : memref<128x512xf32, #tpu.memory_space<vmem>>, vector<8x512xf32>,
    %c15 = arith.constant 15 : index
    %c0_122 = arith.constant 0 : index
    %c0_123 = arith.constant 0 : index
    %123 = vector.load %arg2[%c15, %c0_122, %c0_123] : memref<16x8x128xbf16, #tpu.memory_space<vmem>>, vector<1x8x128xbf16>
    %124 = vector.shape_cast %123 : vector<1x8x128xbf16> to vector<8x128xbf16>
    %c0_124 = arith.constant 0 : index
    %c0_125 = arith.constant 0 : index
    %125 = vector.load %arg3[%c0_124, %c0_125] : memref<128x512xbf16, #tpu.memory_space<vmem>>, vector<128x512xbf16>
    %cst_126 = arith.constant dense<0.000000e+00> : vector<8x512xf32>
    %126 = tpu.matmul %124, %125, %cst_126 {dimension_numbers = #tpu.dot_dimension_numbers<[1], [0], [0], [1], [0, 0, 1, 1], [], []>} : vector<8x128xbf16>, vector<128x512xbf16>, vector<8x512xf32> -> vector<8x512xf32>
    %c0_127 = arith.constant 0 : index
    %c0_128 = arith.constant 0 : index
    %127 = vector.load %arg5[%c0_127, %c0_128] : memref<1x512xf32, #tpu.memory_space<vmem>>, vector<1x512xf32>
    %128 = vector.broadcast %127 : vector<1x512xf32> to vector<8x512xf32>
    %129 = arith.addf %126, %128 : vector<8x512xf32>
    %c120 = arith.constant 120 : index
    %c0_129 = arith.constant 0 : index
    %130 = vector.load %arg13[%c120, %c0_129] : memref<128x512xf32, #tpu.memory_space<vmem>>, vector<8x512xf32>
    tpu.vector_store %arg13[%c120, %c0_129], %129 {strides = array<i32>} : memref<128x512xf32, #tpu.memory_space<vmem>>, vector<8x512xf32>,
    %c0_130 = arith.constant 0 : index
    %c0_131 = arith.constant 0 : index
    %131 = vector.load %arg11[%c0_130, %c0_131] : memref<8x128xbf16, #tpu.memory_space<vmem>>, vector<8x128xbf16>
    %c0_132 = arith.constant 0 : index
    %c0_133 = arith.constant 0 : index
    %132 = vector.load %arg12[%c0_132, %c0_133] : memref<8x128xf32, #tpu.memory_space<vmem>>, vector<8x128xf32>
    %c0_134 = arith.constant 0 : index
    %c0_135 = arith.constant 0 : index
    %133 = vector.load %arg13[%c0_134, %c0_135] : memref<128x512xf32, #tpu.memory_space<vmem>>, vector<8x512xf32>
    %c0_136 = arith.constant 0 : index
    %c0_137 = arith.constant 0 : index
    %134 = vector.load %arg4[%c0_136, %c0_137] : memref<128x512xbf16, #tpu.memory_space<vmem>>, vector<128x512xbf16>
    %cst_138 = arith.constant dense<0.000000e+00> : vector<8x512xf32>
    %135 = tpu.matmul %131, %134, %cst_138 {dimension_numbers = #tpu.dot_dimension_numbers<[1], [0], [0], [1], [0, 0, 1, 1], [], []>} : vector<8x128xbf16>, vector<128x512xbf16>, vector<8x512xf32> -> vector<8x512xf32>
    %136 = arith.addf %133, %135 : vector<8x512xf32>
    %137 = vector.extract_strided_slice %136 {offsets = [0, 0], sizes = [8, 128], strides = [1, 1]} : vector<8x512xf32> to vector<8x128xf32>
    %138 = arith.negf %137 : vector<8x128xf32>
    %139 = math.exp %138 : vector<8x128xf32>
    %cst_139 = arith.constant 1.000000e+00 : f32
    %140 = vector.broadcast %cst_139 : f32 to vector<8x128xf32>
    %141 = arith.addf %140, %139 : vector<8x128xf32>
    %142 = arith.divf %140, %141 : vector<8x128xf32>
    %143 = vector.extract_strided_slice %136 {offsets = [0, 128], sizes = [8, 128], strides = [1, 1]} : vector<8x512xf32> to vector<8x128xf32>
    %144 = arith.negf %143 : vector<8x128xf32>
    %145 = math.exp %144 : vector<8x128xf32>
    %cst_140 = arith.constant 1.000000e+00 : f32
    %146 = vector.broadcast %cst_140 : f32 to vector<8x128xf32>
    %147 = arith.addf %146, %145 : vector<8x128xf32>
    %148 = arith.divf %146, %147 : vector<8x128xf32>
    %149 = vector.extract_strided_slice %136 {offsets = [0, 256], sizes = [8, 128], strides = [1, 1]} : vector<8x512xf32> to vector<8x128xf32>
    %150 = math.tanh %149 : vector<8x128xf32>
    %151 = vector.extract_strided_slice %136 {offsets = [0, 384], sizes = [8, 128], strides = [1, 1]} : vector<8x512xf32> to vector<8x128xf32>
    %152 = arith.negf %151 : vector<8x128xf32>
    %153 = math.exp %152 : vector<8x128xf32>
    %cst_141 = arith.constant 1.000000e+00 : f32
    %154 = vector.broadcast %cst_141 : f32 to vector<8x128xf32>
    %155 = arith.addf %154, %153 : vector<8x128xf32>
    %156 = arith.divf %154, %155 : vector<8x128xf32>
    %157 = arith.mulf %148, %132 : vector<8x128xf32>
    %158 = arith.mulf %142, %150 : vector<8x128xf32>
    %159 = arith.addf %157, %158 : vector<8x128xf32>
    %160 = math.tanh %159 : vector<8x128xf32>
    %161 = arith.mulf %156, %160 : vector<8x128xf32>
    %162 = arith.truncf %161 : vector<8x128xf32> to vector<8x128xbf16>
    %c0_142 = arith.constant 0 : index
    %c0_143 = arith.constant 0 : index
    %c0_144 = arith.constant 0 : index
    %163 = vector.load %arg8[%c0_142, %c0_143, %c0_144] : memref<16x8x128xbf16, #tpu.memory_space<vmem>>, vector<1x8x128xbf16>
    %164 = vector.shape_cast %163 : vector<1x8x128xbf16> to vector<8x128xbf16>
    %165 = vector.shape_cast %162 : vector<8x128xbf16> to vector<1x8x128xbf16>
    tpu.vector_store %arg8[%c0_142, %c0_143, %c0_144], %165 {strides = array<i32>} : memref<16x8x128xbf16, #tpu.memory_space<vmem>>, vector<1x8x128xbf16>,
    %c8_145 = arith.constant 8 : index
    %c0_146 = arith.constant 0 : index
    %166 = vector.load %arg13[%c8_145, %c0_146] : memref<128x512xf32, #tpu.memory_space<vmem>>, vector<8x512xf32>
    %c0_147 = arith.constant 0 : index
    %c0_148 = arith.constant 0 : index
    %167 = vector.load %arg4[%c0_147, %c0_148] : memref<128x512xbf16, #tpu.memory_space<vmem>>, vector<128x512xbf16>
    %cst_149 = arith.constant dense<0.000000e+00> : vector<8x512xf32>
    %168 = tpu.matmul %162, %167, %cst_149 {dimension_numbers = #tpu.dot_dimension_numbers<[1], [0], [0], [1], [0, 0, 1, 1], [], []>} : vector<8x128xbf16>, vector<128x512xbf16>, vector<8x512xf32> -> vector<8x512xf32>
    %169 = arith.addf %166, %168 : vector<8x512xf32>
    %170 = vector.extract_strided_slice %169 {offsets = [0, 0], sizes = [8, 128], strides = [1, 1]} : vector<8x512xf32> to vector<8x128xf32>
    %171 = arith.negf %170 : vector<8x128xf32>
    %172 = math.exp %171 : vector<8x128xf32>
    %cst_150 = arith.constant 1.000000e+00 : f32
    %173 = vector.broadcast %cst_150 : f32 to vector<8x128xf32>
    %174 = arith.addf %173, %172 : vector<8x128xf32>
    %175 = arith.divf %173, %174 : vector<8x128xf32>
    %176 = vector.extract_strided_slice %169 {offsets = [0, 128], sizes = [8, 128], strides = [1, 1]} : vector<8x512xf32> to vector<8x128xf32>
    %177 = arith.negf %176 : vector<8x128xf32>
    %178 = math.exp %177 : vector<8x128xf32>
    %cst_151 = arith.constant 1.000000e+00 : f32
    %179 = vector.broadcast %cst_151 : f32 to vector<8x128xf32>
    %180 = arith.addf %179, %178 : vector<8x128xf32>
    %181 = arith.divf %179, %180 : vector<8x128xf32>
    %182 = vector.extract_strided_slice %169 {offsets = [0, 256], sizes = [8, 128], strides = [1, 1]} : vector<8x512xf32> to vector<8x128xf32>
    %183 = math.tanh %182 : vector<8x128xf32>
    %184 = vector.extract_strided_slice %169 {offsets = [0, 384], sizes = [8, 128], strides = [1, 1]} : vector<8x512xf32> to vector<8x128xf32>
    %185 = arith.negf %184 : vector<8x128xf32>
    %186 = math.exp %185 : vector<8x128xf32>
    %cst_152 = arith.constant 1.000000e+00 : f32
    %187 = vector.broadcast %cst_152 : f32 to vector<8x128xf32>
    %188 = arith.addf %187, %186 : vector<8x128xf32>
    %189 = arith.divf %187, %188 : vector<8x128xf32>
    %190 = arith.mulf %181, %159 : vector<8x128xf32>
    %191 = arith.mulf %175, %183 : vector<8x128xf32>
    %192 = arith.addf %190, %191 : vector<8x128xf32>
    %193 = math.tanh %192 : vector<8x128xf32>
    %194 = arith.mulf %189, %193 : vector<8x128xf32>
    %195 = arith.truncf %194 : vector<8x128xf32> to vector<8x128xbf16>
    %c1_153 = arith.constant 1 : index
    %c0_154 = arith.constant 0 : index
    %c0_155 = arith.constant 0 : index
    %196 = vector.load %arg8[%c1_153, %c0_154, %c0_155] : memref<16x8x128xbf16, #tpu.memory_space<vmem>>, vector<1x8x128xbf16>
    %197 = vector.shape_cast %196 : vector<1x8x128xbf16> to vector<8x128xbf16>
    %198 = vector.shape_cast %195 : vector<8x128xbf16> to vector<1x8x128xbf16>
    tpu.vector_store %arg8[%c1_153, %c0_154, %c0_155], %198 {strides = array<i32>} : memref<16x8x128xbf16, #tpu.memory_space<vmem>>, vector<1x8x128xbf16>,
    %c16_156 = arith.constant 16 : index
    %c0_157 = arith.constant 0 : index
    %199 = vector.load %arg13[%c16_156, %c0_157] : memref<128x512xf32, #tpu.memory_space<vmem>>, vector<8x512xf32>
    %c0_158 = arith.constant 0 : index
    %c0_159 = arith.constant 0 : index
    %200 = vector.load %arg4[%c0_158, %c0_159] : memref<128x512xbf16, #tpu.memory_space<vmem>>, vector<128x512xbf16>
    %cst_160 = arith.constant dense<0.000000e+00> : vector<8x512xf32>
    %201 = tpu.matmul %195, %200, %cst_160 {dimension_numbers = #tpu.dot_dimension_numbers<[1], [0], [0], [1], [0, 0, 1, 1], [], []>} : vector<8x128xbf16>, vector<128x512xbf16>, vector<8x512xf32> -> vector<8x512xf32>
    %202 = arith.addf %199, %201 : vector<8x512xf32>
    %203 = vector.extract_strided_slice %202 {offsets = [0, 0], sizes = [8, 128], strides = [1, 1]} : vector<8x512xf32> to vector<8x128xf32>
    %204 = arith.negf %203 : vector<8x128xf32>
    %205 = math.exp %204 : vector<8x128xf32>
    %cst_161 = arith.constant 1.000000e+00 : f32
    %206 = vector.broadcast %cst_161 : f32 to vector<8x128xf32>
    %207 = arith.addf %206, %205 : vector<8x128xf32>
    %208 = arith.divf %206, %207 : vector<8x128xf32>
    %209 = vector.extract_strided_slice %202 {offsets = [0, 128], sizes = [8, 128], strides = [1, 1]} : vector<8x512xf32> to vector<8x128xf32>
    %210 = arith.negf %209 : vector<8x128xf32>
    %211 = math.exp %210 : vector<8x128xf32>
    %cst_162 = arith.constant 1.000000e+00 : f32
    %212 = vector.broadcast %cst_162 : f32 to vector<8x128xf32>
    %213 = arith.addf %212, %211 : vector<8x128xf32>
    %214 = arith.divf %212, %213 : vector<8x128xf32>
    %215 = vector.extract_strided_slice %202 {offsets = [0, 256], sizes = [8, 128], strides = [1, 1]} : vector<8x512xf32> to vector<8x128xf32>
    %216 = math.tanh %215 : vector<8x128xf32>
    %217 = vector.extract_strided_slice %202 {offsets = [0, 384], sizes = [8, 128], strides = [1, 1]} : vector<8x512xf32> to vector<8x128xf32>
    %218 = arith.negf %217 : vector<8x128xf32>
    %219 = math.exp %218 : vector<8x128xf32>
    %cst_163 = arith.constant 1.000000e+00 : f32
    %220 = vector.broadcast %cst_163 : f32 to vector<8x128xf32>
    %221 = arith.addf %220, %219 : vector<8x128xf32>
    %222 = arith.divf %220, %221 : vector<8x128xf32>
    %223 = arith.mulf %214, %192 : vector<8x128xf32>
    %224 = arith.mulf %208, %216 : vector<8x128xf32>
    %225 = arith.addf %223, %224 : vector<8x128xf32>
    %226 = math.tanh %225 : vector<8x128xf32>
    %227 = arith.mulf %222, %226 : vector<8x128xf32>
    %228 = arith.truncf %227 : vector<8x128xf32> to vector<8x128xbf16>
    %c2_164 = arith.constant 2 : index
    %c0_165 = arith.constant 0 : index
    %c0_166 = arith.constant 0 : index
    %229 = vector.load %arg8[%c2_164, %c0_165, %c0_166] : memref<16x8x128xbf16, #tpu.memory_space<vmem>>, vector<1x8x128xbf16>
    %230 = vector.shape_cast %229 : vector<1x8x128xbf16> to vector<8x128xbf16>
    %231 = vector.shape_cast %228 : vector<8x128xbf16> to vector<1x8x128xbf16>
    tpu.vector_store %arg8[%c2_164, %c0_165, %c0_166], %231 {strides = array<i32>} : memref<16x8x128xbf16, #tpu.memory_space<vmem>>, vector<1x8x128xbf16>,
    %c24_167 = arith.constant 24 : index
    %c0_168 = arith.constant 0 : index
    %232 = vector.load %arg13[%c24_167, %c0_168] : memref<128x512xf32, #tpu.memory_space<vmem>>, vector<8x512xf32>
    %c0_169 = arith.constant 0 : index
    %c0_170 = arith.constant 0 : index
    %233 = vector.load %arg4[%c0_169, %c0_170] : memref<128x512xbf16, #tpu.memory_space<vmem>>, vector<128x512xbf16>
    %cst_171 = arith.constant dense<0.000000e+00> : vector<8x512xf32>
    %234 = tpu.matmul %228, %233, %cst_171 {dimension_numbers = #tpu.dot_dimension_numbers<[1], [0], [0], [1], [0, 0, 1, 1], [], []>} : vector<8x128xbf16>, vector<128x512xbf16>, vector<8x512xf32> -> vector<8x512xf32>
    %235 = arith.addf %232, %234 : vector<8x512xf32>
    %236 = vector.extract_strided_slice %235 {offsets = [0, 0], sizes = [8, 128], strides = [1, 1]} : vector<8x512xf32> to vector<8x128xf32>
    %237 = arith.negf %236 : vector<8x128xf32>
    %238 = math.exp %237 : vector<8x128xf32>
    %cst_172 = arith.constant 1.000000e+00 : f32
    %239 = vector.broadcast %cst_172 : f32 to vector<8x128xf32>
    %240 = arith.addf %239, %238 : vector<8x128xf32>
    %241 = arith.divf %239, %240 : vector<8x128xf32>
    %242 = vector.extract_strided_slice %235 {offsets = [0, 128], sizes = [8, 128], strides = [1, 1]} : vector<8x512xf32> to vector<8x128xf32>
    %243 = arith.negf %242 : vector<8x128xf32>
    %244 = math.exp %243 : vector<8x128xf32>
    %cst_173 = arith.constant 1.000000e+00 : f32
    %245 = vector.broadcast %cst_173 : f32 to vector<8x128xf32>
    %246 = arith.addf %245, %244 : vector<8x128xf32>
    %247 = arith.divf %245, %246 : vector<8x128xf32>
    %248 = vector.extract_strided_slice %235 {offsets = [0, 256], sizes = [8, 128], strides = [1, 1]} : vector<8x512xf32> to vector<8x128xf32>
    %249 = math.tanh %248 : vector<8x128xf32>
    %250 = vector.extract_strided_slice %235 {offsets = [0, 384], sizes = [8, 128], strides = [1, 1]} : vector<8x512xf32> to vector<8x128xf32>
    %251 = arith.negf %250 : vector<8x128xf32>
    %252 = math.exp %251 : vector<8x128xf32>
    %cst_174 = arith.constant 1.000000e+00 : f32
    %253 = vector.broadcast %cst_174 : f32 to vector<8x128xf32>
    %254 = arith.addf %253, %252 : vector<8x128xf32>
    %255 = arith.divf %253, %254 : vector<8x128xf32>
    %256 = arith.mulf %247, %225 : vector<8x128xf32>
    %257 = arith.mulf %241, %249 : vector<8x128xf32>
    %258 = arith.addf %256, %257 : vector<8x128xf32>
    %259 = math.tanh %258 : vector<8x128xf32>
    %260 = arith.mulf %255, %259 : vector<8x128xf32>
    %261 = arith.truncf %260 : vector<8x128xf32> to vector<8x128xbf16>
    %c3_175 = arith.constant 3 : index
    %c0_176 = arith.constant 0 : index
    %c0_177 = arith.constant 0 : index
    %262 = vector.load %arg8[%c3_175, %c0_176, %c0_177] : memref<16x8x128xbf16, #tpu.memory_space<vmem>>, vector<1x8x128xbf16>
    %263 = vector.shape_cast %262 : vector<1x8x128xbf16> to vector<8x128xbf16>
    %264 = vector.shape_cast %261 : vector<8x128xbf16> to vector<1x8x128xbf16>
    tpu.vector_store %arg8[%c3_175, %c0_176, %c0_177], %264 {strides = array<i32>} : memref<16x8x128xbf16, #tpu.memory_space<vmem>>, vector<1x8x128xbf16>,
    %c32_178 = arith.constant 32 : index
    %c0_179 = arith.constant 0 : index
    %265 = vector.load %arg13[%c32_178, %c0_179] : memref<128x512xf32, #tpu.memory_space<vmem>>, vector<8x512xf32>
    %c0_180 = arith.constant 0 : index
    %c0_181 = arith.constant 0 : index
    %266 = vector.load %arg4[%c0_180, %c0_181] : memref<128x512xbf16, #tpu.memory_space<vmem>>, vector<128x512xbf16>
    %cst_182 = arith.constant dense<0.000000e+00> : vector<8x512xf32>
    %267 = tpu.matmul %261, %266, %cst_182 {dimension_numbers = #tpu.dot_dimension_numbers<[1], [0], [0], [1], [0, 0, 1, 1], [], []>} : vector<8x128xbf16>, vector<128x512xbf16>, vector<8x512xf32> -> vector<8x512xf32>
    %268 = arith.addf %265, %267 : vector<8x512xf32>
    %269 = vector.extract_strided_slice %268 {offsets = [0, 0], sizes = [8, 128], strides = [1, 1]} : vector<8x512xf32> to vector<8x128xf32>
    %270 = arith.negf %269 : vector<8x128xf32>
    %271 = math.exp %270 : vector<8x128xf32>
    %cst_183 = arith.constant 1.000000e+00 : f32
    %272 = vector.broadcast %cst_183 : f32 to vector<8x128xf32>
    %273 = arith.addf %272, %271 : vector<8x128xf32>
    %274 = arith.divf %272, %273 : vector<8x128xf32>
    %275 = vector.extract_strided_slice %268 {offsets = [0, 128], sizes = [8, 128], strides = [1, 1]} : vector<8x512xf32> to vector<8x128xf32>
    %276 = arith.negf %275 : vector<8x128xf32>
    %277 = math.exp %276 : vector<8x128xf32>
    %cst_184 = arith.constant 1.000000e+00 : f32
    %278 = vector.broadcast %cst_184 : f32 to vector<8x128xf32>
    %279 = arith.addf %278, %277 : vector<8x128xf32>
    %280 = arith.divf %278, %279 : vector<8x128xf32>
    %281 = vector.extract_strided_slice %268 {offsets = [0, 256], sizes = [8, 128], strides = [1, 1]} : vector<8x512xf32> to vector<8x128xf32>
    %282 = math.tanh %281 : vector<8x128xf32>
    %283 = vector.extract_strided_slice %268 {offsets = [0, 384], sizes = [8, 128], strides = [1, 1]} : vector<8x512xf32> to vector<8x128xf32>
    %284 = arith.negf %283 : vector<8x128xf32>
    %285 = math.exp %284 : vector<8x128xf32>
    %cst_185 = arith.constant 1.000000e+00 : f32
    %286 = vector.broadcast %cst_185 : f32 to vector<8x128xf32>
    %287 = arith.addf %286, %285 : vector<8x128xf32>
    %288 = arith.divf %286, %287 : vector<8x128xf32>
    %289 = arith.mulf %280, %258 : vector<8x128xf32>
    %290 = arith.mulf %274, %282 : vector<8x128xf32>
    %291 = arith.addf %289, %290 : vector<8x128xf32>
    %292 = math.tanh %291 : vector<8x128xf32>
    %293 = arith.mulf %288, %292 : vector<8x128xf32>
    %294 = arith.truncf %293 : vector<8x128xf32> to vector<8x128xbf16>
    %c4_186 = arith.constant 4 : index
    %c0_187 = arith.constant 0 : index
    %c0_188 = arith.constant 0 : index
    %295 = vector.load %arg8[%c4_186, %c0_187, %c0_188] : memref<16x8x128xbf16, #tpu.memory_space<vmem>>, vector<1x8x128xbf16>
    %296 = vector.shape_cast %295 : vector<1x8x128xbf16> to vector<8x128xbf16>
    %297 = vector.shape_cast %294 : vector<8x128xbf16> to vector<1x8x128xbf16>
    tpu.vector_store %arg8[%c4_186, %c0_187, %c0_188], %297 {strides = array<i32>} : memref<16x8x128xbf16, #tpu.memory_space<vmem>>, vector<1x8x128xbf16>,
    %c40_189 = arith.constant 40 : index
    %c0_190 = arith.constant 0 : index
    %298 = vector.load %arg13[%c40_189, %c0_190] : memref<128x512xf32, #tpu.memory_space<vmem>>, vector<8x512xf32>
    %c0_191 = arith.constant 0 : index
    %c0_192 = arith.constant 0 : index
    %299 = vector.load %arg4[%c0_191, %c0_192] : memref<128x512xbf16, #tpu.memory_space<vmem>>, vector<128x512xbf16>
    %cst_193 = arith.constant dense<0.000000e+00> : vector<8x512xf32>
    %300 = tpu.matmul %294, %299, %cst_193 {dimension_numbers = #tpu.dot_dimension_numbers<[1], [0], [0], [1], [0, 0, 1, 1], [], []>} : vector<8x128xbf16>, vector<128x512xbf16>, vector<8x512xf32> -> vector<8x512xf32>
    %301 = arith.addf %298, %300 : vector<8x512xf32>
    %302 = vector.extract_strided_slice %301 {offsets = [0, 0], sizes = [8, 128], strides = [1, 1]} : vector<8x512xf32> to vector<8x128xf32>
    %303 = arith.negf %302 : vector<8x128xf32>
    %304 = math.exp %303 : vector<8x128xf32>
    %cst_194 = arith.constant 1.000000e+00 : f32
    %305 = vector.broadcast %cst_194 : f32 to vector<8x128xf32>
    %306 = arith.addf %305, %304 : vector<8x128xf32>
    %307 = arith.divf %305, %306 : vector<8x128xf32>
    %308 = vector.extract_strided_slice %301 {offsets = [0, 128], sizes = [8, 128], strides = [1, 1]} : vector<8x512xf32> to vector<8x128xf32>
    %309 = arith.negf %308 : vector<8x128xf32>
    %310 = math.exp %309 : vector<8x128xf32>
    %cst_195 = arith.constant 1.000000e+00 : f32
    %311 = vector.broadcast %cst_195 : f32 to vector<8x128xf32>
    %312 = arith.addf %311, %310 : vector<8x128xf32>
    %313 = arith.divf %311, %312 : vector<8x128xf32>
    %314 = vector.extract_strided_slice %301 {offsets = [0, 256], sizes = [8, 128], strides = [1, 1]} : vector<8x512xf32> to vector<8x128xf32>
    %315 = math.tanh %314 : vector<8x128xf32>
    %316 = vector.extract_strided_slice %301 {offsets = [0, 384], sizes = [8, 128], strides = [1, 1]} : vector<8x512xf32> to vector<8x128xf32>
    %317 = arith.negf %316 : vector<8x128xf32>
    %318 = math.exp %317 : vector<8x128xf32>
    %cst_196 = arith.constant 1.000000e+00 : f32
    %319 = vector.broadcast %cst_196 : f32 to vector<8x128xf32>
    %320 = arith.addf %319, %318 : vector<8x128xf32>
    %321 = arith.divf %319, %320 : vector<8x128xf32>
    %322 = arith.mulf %313, %291 : vector<8x128xf32>
    %323 = arith.mulf %307, %315 : vector<8x128xf32>
    %324 = arith.addf %322, %323 : vector<8x128xf32>
    %325 = math.tanh %324 : vector<8x128xf32>
    %326 = arith.mulf %321, %325 : vector<8x128xf32>
    %327 = arith.truncf %326 : vector<8x128xf32> to vector<8x128xbf16>
    %c5_197 = arith.constant 5 : index
    %c0_198 = arith.constant 0 : index
    %c0_199 = arith.constant 0 : index
    %328 = vector.load %arg8[%c5_197, %c0_198, %c0_199] : memref<16x8x128xbf16, #tpu.memory_space<vmem>>, vector<1x8x128xbf16>
    %329 = vector.shape_cast %328 : vector<1x8x128xbf16> to vector<8x128xbf16>
    %330 = vector.shape_cast %327 : vector<8x128xbf16> to vector<1x8x128xbf16>
    tpu.vector_store %arg8[%c5_197, %c0_198, %c0_199], %330 {strides = array<i32>} : memref<16x8x128xbf16, #tpu.memory_space<vmem>>, vector<1x8x128xbf16>,
    %c48_200 = arith.constant 48 : index
    %c0_201 = arith.constant 0 : index
    %331 = vector.load %arg13[%c48_200, %c0_201] : memref<128x512xf32, #tpu.memory_space<vmem>>, vector<8x512xf32>
    %c0_202 = arith.constant 0 : index
    %c0_203 = arith.constant 0 : index
    %332 = vector.load %arg4[%c0_202, %c0_203] : memref<128x512xbf16, #tpu.memory_space<vmem>>, vector<128x512xbf16>
    %cst_204 = arith.constant dense<0.000000e+00> : vector<8x512xf32>
    %333 = tpu.matmul %327, %332, %cst_204 {dimension_numbers = #tpu.dot_dimension_numbers<[1], [0], [0], [1], [0, 0, 1, 1], [], []>} : vector<8x128xbf16>, vector<128x512xbf16>, vector<8x512xf32> -> vector<8x512xf32>
    %334 = arith.addf %331, %333 : vector<8x512xf32>
    %335 = vector.extract_strided_slice %334 {offsets = [0, 0], sizes = [8, 128], strides = [1, 1]} : vector<8x512xf32> to vector<8x128xf32>
    %336 = arith.negf %335 : vector<8x128xf32>
    %337 = math.exp %336 : vector<8x128xf32>
    %cst_205 = arith.constant 1.000000e+00 : f32
    %338 = vector.broadcast %cst_205 : f32 to vector<8x128xf32>
    %339 = arith.addf %338, %337 : vector<8x128xf32>
    %340 = arith.divf %338, %339 : vector<8x128xf32>
    %341 = vector.extract_strided_slice %334 {offsets = [0, 128], sizes = [8, 128], strides = [1, 1]} : vector<8x512xf32> to vector<8x128xf32>
    %342 = arith.negf %341 : vector<8x128xf32>
    %343 = math.exp %342 : vector<8x128xf32>
    %cst_206 = arith.constant 1.000000e+00 : f32
    %344 = vector.broadcast %cst_206 : f32 to vector<8x128xf32>
    %345 = arith.addf %344, %343 : vector<8x128xf32>
    %346 = arith.divf %344, %345 : vector<8x128xf32>
    %347 = vector.extract_strided_slice %334 {offsets = [0, 256], sizes = [8, 128], strides = [1, 1]} : vector<8x512xf32> to vector<8x128xf32>
    %348 = math.tanh %347 : vector<8x128xf32>
    %349 = vector.extract_strided_slice %334 {offsets = [0, 384], sizes = [8, 128], strides = [1, 1]} : vector<8x512xf32> to vector<8x128xf32>
    %350 = arith.negf %349 : vector<8x128xf32>
    %351 = math.exp %350 : vector<8x128xf32>
    %cst_207 = arith.constant 1.000000e+00 : f32
    %352 = vector.broadcast %cst_207 : f32 to vector<8x128xf32>
    %353 = arith.addf %352, %351 : vector<8x128xf32>
    %354 = arith.divf %352, %353 : vector<8x128xf32>
    %355 = arith.mulf %346, %324 : vector<8x128xf32>
    %356 = arith.mulf %340, %348 : vector<8x128xf32>
    %357 = arith.addf %355, %356 : vector<8x128xf32>
    %358 = math.tanh %357 : vector<8x128xf32>
    %359 = arith.mulf %354, %358 : vector<8x128xf32>
    %360 = arith.truncf %359 : vector<8x128xf32> to vector<8x128xbf16>
    %c6_208 = arith.constant 6 : index
    %c0_209 = arith.constant 0 : index
    %c0_210 = arith.constant 0 : index
    %361 = vector.load %arg8[%c6_208, %c0_209, %c0_210] : memref<16x8x128xbf16, #tpu.memory_space<vmem>>, vector<1x8x128xbf16>
    %362 = vector.shape_cast %361 : vector<1x8x128xbf16> to vector<8x128xbf16>
    %363 = vector.shape_cast %360 : vector<8x128xbf16> to vector<1x8x128xbf16>
    tpu.vector_store %arg8[%c6_208, %c0_209, %c0_210], %363 {strides = array<i32>} : memref<16x8x128xbf16, #tpu.memory_space<vmem>>, vector<1x8x128xbf16>,
    %c56_211 = arith.constant 56 : index
    %c0_212 = arith.constant 0 : index
    %364 = vector.load %arg13[%c56_211, %c0_212] : memref<128x512xf32, #tpu.memory_space<vmem>>, vector<8x512xf32>
    %c0_213 = arith.constant 0 : index
    %c0_214 = arith.constant 0 : index
    %365 = vector.load %arg4[%c0_213, %c0_214] : memref<128x512xbf16, #tpu.memory_space<vmem>>, vector<128x512xbf16>
    %cst_215 = arith.constant dense<0.000000e+00> : vector<8x512xf32>
    %366 = tpu.matmul %360, %365, %cst_215 {dimension_numbers = #tpu.dot_dimension_numbers<[1], [0], [0], [1], [0, 0, 1, 1], [], []>} : vector<8x128xbf16>, vector<128x512xbf16>, vector<8x512xf32> -> vector<8x512xf32>
    %367 = arith.addf %364, %366 : vector<8x512xf32>
    %368 = vector.extract_strided_slice %367 {offsets = [0, 0], sizes = [8, 128], strides = [1, 1]} : vector<8x512xf32> to vector<8x128xf32>
    %369 = arith.negf %368 : vector<8x128xf32>
    %370 = math.exp %369 : vector<8x128xf32>
    %cst_216 = arith.constant 1.000000e+00 : f32
    %371 = vector.broadcast %cst_216 : f32 to vector<8x128xf32>
    %372 = arith.addf %371, %370 : vector<8x128xf32>
    %373 = arith.divf %371, %372 : vector<8x128xf32>
    %374 = vector.extract_strided_slice %367 {offsets = [0, 128], sizes = [8, 128], strides = [1, 1]} : vector<8x512xf32> to vector<8x128xf32>
    %375 = arith.negf %374 : vector<8x128xf32>
    %376 = math.exp %375 : vector<8x128xf32>
    %cst_217 = arith.constant 1.000000e+00 : f32
    %377 = vector.broadcast %cst_217 : f32 to vector<8x128xf32>
    %378 = arith.addf %377, %376 : vector<8x128xf32>
    %379 = arith.divf %377, %378 : vector<8x128xf32>
    %380 = vector.extract_strided_slice %367 {offsets = [0, 256], sizes = [8, 128], strides = [1, 1]} : vector<8x512xf32> to vector<8x128xf32>
    %381 = math.tanh %380 : vector<8x128xf32>
    %382 = vector.extract_strided_slice %367 {offsets = [0, 384], sizes = [8, 128], strides = [1, 1]} : vector<8x512xf32> to vector<8x128xf32>
    %383 = arith.negf %382 : vector<8x128xf32>
    %384 = math.exp %383 : vector<8x128xf32>
    %cst_218 = arith.constant 1.000000e+00 : f32
    %385 = vector.broadcast %cst_218 : f32 to vector<8x128xf32>
    %386 = arith.addf %385, %384 : vector<8x128xf32>
    %387 = arith.divf %385, %386 : vector<8x128xf32>
    %388 = arith.mulf %379, %357 : vector<8x128xf32>
    %389 = arith.mulf %373, %381 : vector<8x128xf32>
    %390 = arith.addf %388, %389 : vector<8x128xf32>
    %391 = math.tanh %390 : vector<8x128xf32>
    %392 = arith.mulf %387, %391 : vector<8x128xf32>
    %393 = arith.truncf %392 : vector<8x128xf32> to vector<8x128xbf16>
    %c7_219 = arith.constant 7 : index
    %c0_220 = arith.constant 0 : index
    %c0_221 = arith.constant 0 : index
    %394 = vector.load %arg8[%c7_219, %c0_220, %c0_221] : memref<16x8x128xbf16, #tpu.memory_space<vmem>>, vector<1x8x128xbf16>
    %395 = vector.shape_cast %394 : vector<1x8x128xbf16> to vector<8x128xbf16>
    %396 = vector.shape_cast %393 : vector<8x128xbf16> to vector<1x8x128xbf16>
    tpu.vector_store %arg8[%c7_219, %c0_220, %c0_221], %396 {strides = array<i32>} : memref<16x8x128xbf16, #tpu.memory_space<vmem>>, vector<1x8x128xbf16>,
    %c64_222 = arith.constant 64 : index
    %c0_223 = arith.constant 0 : index
    %397 = vector.load %arg13[%c64_222, %c0_223] : memref<128x512xf32, #tpu.memory_space<vmem>>, vector<8x512xf32>
    %c0_224 = arith.constant 0 : index
    %c0_225 = arith.constant 0 : index
    %398 = vector.load %arg4[%c0_224, %c0_225] : memref<128x512xbf16, #tpu.memory_space<vmem>>, vector<128x512xbf16>
    %cst_226 = arith.constant dense<0.000000e+00> : vector<8x512xf32>
    %399 = tpu.matmul %393, %398, %cst_226 {dimension_numbers = #tpu.dot_dimension_numbers<[1], [0], [0], [1], [0, 0, 1, 1], [], []>} : vector<8x128xbf16>, vector<128x512xbf16>, vector<8x512xf32> -> vector<8x512xf32>
    %400 = arith.addf %397, %399 : vector<8x512xf32>
    %401 = vector.extract_strided_slice %400 {offsets = [0, 0], sizes = [8, 128], strides = [1, 1]} : vector<8x512xf32> to vector<8x128xf32>
    %402 = arith.negf %401 : vector<8x128xf32>
    %403 = math.exp %402 : vector<8x128xf32>
    %cst_227 = arith.constant 1.000000e+00 : f32
    %404 = vector.broadcast %cst_227 : f32 to vector<8x128xf32>
    %405 = arith.addf %404, %403 : vector<8x128xf32>
    %406 = arith.divf %404, %405 : vector<8x128xf32>
    %407 = vector.extract_strided_slice %400 {offsets = [0, 128], sizes = [8, 128], strides = [1, 1]} : vector<8x512xf32> to vector<8x128xf32>
    %408 = arith.negf %407 : vector<8x128xf32>
    %409 = math.exp %408 : vector<8x128xf32>
    %cst_228 = arith.constant 1.000000e+00 : f32
    %410 = vector.broadcast %cst_228 : f32 to vector<8x128xf32>
    %411 = arith.addf %410, %409 : vector<8x128xf32>
    %412 = arith.divf %410, %411 : vector<8x128xf32>
    %413 = vector.extract_strided_slice %400 {offsets = [0, 256], sizes = [8, 128], strides = [1, 1]} : vector<8x512xf32> to vector<8x128xf32>
    %414 = math.tanh %413 : vector<8x128xf32>
    %415 = vector.extract_strided_slice %400 {offsets = [0, 384], sizes = [8, 128], strides = [1, 1]} : vector<8x512xf32> to vector<8x128xf32>
    %416 = arith.negf %415 : vector<8x128xf32>
    %417 = math.exp %416 : vector<8x128xf32>
    %cst_229 = arith.constant 1.000000e+00 : f32
    %418 = vector.broadcast %cst_229 : f32 to vector<8x128xf32>
    %419 = arith.addf %418, %417 : vector<8x128xf32>
    %420 = arith.divf %418, %419 : vector<8x128xf32>
    %421 = arith.mulf %412, %390 : vector<8x128xf32>
    %422 = arith.mulf %406, %414 : vector<8x128xf32>
    %423 = arith.addf %421, %422 : vector<8x128xf32>
    %424 = math.tanh %423 : vector<8x128xf32>
    %425 = arith.mulf %420, %424 : vector<8x128xf32>
    %426 = arith.truncf %425 : vector<8x128xf32> to vector<8x128xbf16>
    %c8_230 = arith.constant 8 : index
    %c0_231 = arith.constant 0 : index
    %c0_232 = arith.constant 0 : index
    %427 = vector.load %arg8[%c8_230, %c0_231, %c0_232] : memref<16x8x128xbf16, #tpu.memory_space<vmem>>, vector<1x8x128xbf16>
    %428 = vector.shape_cast %427 : vector<1x8x128xbf16> to vector<8x128xbf16>
    %429 = vector.shape_cast %426 : vector<8x128xbf16> to vector<1x8x128xbf16>
    tpu.vector_store %arg8[%c8_230, %c0_231, %c0_232], %429 {strides = array<i32>} : memref<16x8x128xbf16, #tpu.memory_space<vmem>>, vector<1x8x128xbf16>,
    %c72_233 = arith.constant 72 : index
    %c0_234 = arith.constant 0 : index
    %430 = vector.load %arg13[%c72_233, %c0_234] : memref<128x512xf32, #tpu.memory_space<vmem>>, vector<8x512xf32>
    %c0_235 = arith.constant 0 : index
    %c0_236 = arith.constant 0 : index
    %431 = vector.load %arg4[%c0_235, %c0_236] : memref<128x512xbf16, #tpu.memory_space<vmem>>, vector<128x512xbf16>
    %cst_237 = arith.constant dense<0.000000e+00> : vector<8x512xf32>
    %432 = tpu.matmul %426, %431, %cst_237 {dimension_numbers = #tpu.dot_dimension_numbers<[1], [0], [0], [1], [0, 0, 1, 1], [], []>} : vector<8x128xbf16>, vector<128x512xbf16>, vector<8x512xf32> -> vector<8x512xf32>
    %433 = arith.addf %430, %432 : vector<8x512xf32>
    %434 = vector.extract_strided_slice %433 {offsets = [0, 0], sizes = [8, 128], strides = [1, 1]} : vector<8x512xf32> to vector<8x128xf32>
    %435 = arith.negf %434 : vector<8x128xf32>
    %436 = math.exp %435 : vector<8x128xf32>
    %cst_238 = arith.constant 1.000000e+00 : f32
    %437 = vector.broadcast %cst_238 : f32 to vector<8x128xf32>
    %438 = arith.addf %437, %436 : vector<8x128xf32>
    %439 = arith.divf %437, %438 : vector<8x128xf32>
    %440 = vector.extract_strided_slice %433 {offsets = [0, 128], sizes = [8, 128], strides = [1, 1]} : vector<8x512xf32> to vector<8x128xf32>
    %441 = arith.negf %440 : vector<8x128xf32>
    %442 = math.exp %441 : vector<8x128xf32>
    %cst_239 = arith.constant 1.000000e+00 : f32
    %443 = vector.broadcast %cst_239 : f32 to vector<8x128xf32>
    %444 = arith.addf %443, %442 : vector<8x128xf32>
    %445 = arith.divf %443, %444 : vector<8x128xf32>
    %446 = vector.extract_strided_slice %433 {offsets = [0, 256], sizes = [8, 128], strides = [1, 1]} : vector<8x512xf32> to vector<8x128xf32>
    %447 = math.tanh %446 : vector<8x128xf32>
    %448 = vector.extract_strided_slice %433 {offsets = [0, 384], sizes = [8, 128], strides = [1, 1]} : vector<8x512xf32> to vector<8x128xf32>
    %449 = arith.negf %448 : vector<8x128xf32>
    %450 = math.exp %449 : vector<8x128xf32>
    %cst_240 = arith.constant 1.000000e+00 : f32
    %451 = vector.broadcast %cst_240 : f32 to vector<8x128xf32>
    %452 = arith.addf %451, %450 : vector<8x128xf32>
    %453 = arith.divf %451, %452 : vector<8x128xf32>
    %454 = arith.mulf %445, %423 : vector<8x128xf32>
    %455 = arith.mulf %439, %447 : vector<8x128xf32>
    %456 = arith.addf %454, %455 : vector<8x128xf32>
    %457 = math.tanh %456 : vector<8x128xf32>
    %458 = arith.mulf %453, %457 : vector<8x128xf32>
    %459 = arith.truncf %458 : vector<8x128xf32> to vector<8x128xbf16>
    %c9_241 = arith.constant 9 : index
    %c0_242 = arith.constant 0 : index
    %c0_243 = arith.constant 0 : index
    %460 = vector.load %arg8[%c9_241, %c0_242, %c0_243] : memref<16x8x128xbf16, #tpu.memory_space<vmem>>, vector<1x8x128xbf16>
    %461 = vector.shape_cast %460 : vector<1x8x128xbf16> to vector<8x128xbf16>
    %462 = vector.shape_cast %459 : vector<8x128xbf16> to vector<1x8x128xbf16>
    tpu.vector_store %arg8[%c9_241, %c0_242, %c0_243], %462 {strides = array<i32>} : memref<16x8x128xbf16, #tpu.memory_space<vmem>>, vector<1x8x128xbf16>,
    %c80_244 = arith.constant 80 : index
    %c0_245 = arith.constant 0 : index
    %463 = vector.load %arg13[%c80_244, %c0_245] : memref<128x512xf32, #tpu.memory_space<vmem>>, vector<8x512xf32>
    %c0_246 = arith.constant 0 : index
    %c0_247 = arith.constant 0 : index
    %464 = vector.load %arg4[%c0_246, %c0_247] : memref<128x512xbf16, #tpu.memory_space<vmem>>, vector<128x512xbf16>
    %cst_248 = arith.constant dense<0.000000e+00> : vector<8x512xf32>
    %465 = tpu.matmul %459, %464, %cst_248 {dimension_numbers = #tpu.dot_dimension_numbers<[1], [0], [0], [1], [0, 0, 1, 1], [], []>} : vector<8x128xbf16>, vector<128x512xbf16>, vector<8x512xf32> -> vector<8x512xf32>
    %466 = arith.addf %463, %465 : vector<8x512xf32>
    %467 = vector.extract_strided_slice %466 {offsets = [0, 0], sizes = [8, 128], strides = [1, 1]} : vector<8x512xf32> to vector<8x128xf32>
    %468 = arith.negf %467 : vector<8x128xf32>
    %469 = math.exp %468 : vector<8x128xf32>
    %cst_249 = arith.constant 1.000000e+00 : f32
    %470 = vector.broadcast %cst_249 : f32 to vector<8x128xf32>
    %471 = arith.addf %470, %469 : vector<8x128xf32>
    %472 = arith.divf %470, %471 : vector<8x128xf32>
    %473 = vector.extract_strided_slice %466 {offsets = [0, 128], sizes = [8, 128], strides = [1, 1]} : vector<8x512xf32> to vector<8x128xf32>
    %474 = arith.negf %473 : vector<8x128xf32>
    %475 = math.exp %474 : vector<8x128xf32>
    %cst_250 = arith.constant 1.000000e+00 : f32
    %476 = vector.broadcast %cst_250 : f32 to vector<8x128xf32>
    %477 = arith.addf %476, %475 : vector<8x128xf32>
    %478 = arith.divf %476, %477 : vector<8x128xf32>
    %479 = vector.extract_strided_slice %466 {offsets = [0, 256], sizes = [8, 128], strides = [1, 1]} : vector<8x512xf32> to vector<8x128xf32>
    %480 = math.tanh %479 : vector<8x128xf32>
    %481 = vector.extract_strided_slice %466 {offsets = [0, 384], sizes = [8, 128], strides = [1, 1]} : vector<8x512xf32> to vector<8x128xf32>
    %482 = arith.negf %481 : vector<8x128xf32>
    %483 = math.exp %482 : vector<8x128xf32>
    %cst_251 = arith.constant 1.000000e+00 : f32
    %484 = vector.broadcast %cst_251 : f32 to vector<8x128xf32>
    %485 = arith.addf %484, %483 : vector<8x128xf32>
    %486 = arith.divf %484, %485 : vector<8x128xf32>
    %487 = arith.mulf %478, %456 : vector<8x128xf32>
    %488 = arith.mulf %472, %480 : vector<8x128xf32>
    %489 = arith.addf %487, %488 : vector<8x128xf32>
    %490 = math.tanh %489 : vector<8x128xf32>
    %491 = arith.mulf %486, %490 : vector<8x128xf32>
    %492 = arith.truncf %491 : vector<8x128xf32> to vector<8x128xbf16>
    %c10_252 = arith.constant 10 : index
    %c0_253 = arith.constant 0 : index
    %c0_254 = arith.constant 0 : index
    %493 = vector.load %arg8[%c10_252, %c0_253, %c0_254] : memref<16x8x128xbf16, #tpu.memory_space<vmem>>, vector<1x8x128xbf16>
    %494 = vector.shape_cast %493 : vector<1x8x128xbf16> to vector<8x128xbf16>
    %495 = vector.shape_cast %492 : vector<8x128xbf16> to vector<1x8x128xbf16>
    tpu.vector_store %arg8[%c10_252, %c0_253, %c0_254], %495 {strides = array<i32>} : memref<16x8x128xbf16, #tpu.memory_space<vmem>>, vector<1x8x128xbf16>,
    %c88_255 = arith.constant 88 : index
    %c0_256 = arith.constant 0 : index
    %496 = vector.load %arg13[%c88_255, %c0_256] : memref<128x512xf32, #tpu.memory_space<vmem>>, vector<8x512xf32>
    %c0_257 = arith.constant 0 : index
    %c0_258 = arith.constant 0 : index
    %497 = vector.load %arg4[%c0_257, %c0_258] : memref<128x512xbf16, #tpu.memory_space<vmem>>, vector<128x512xbf16>
    %cst_259 = arith.constant dense<0.000000e+00> : vector<8x512xf32>
    %498 = tpu.matmul %492, %497, %cst_259 {dimension_numbers = #tpu.dot_dimension_numbers<[1], [0], [0], [1], [0, 0, 1, 1], [], []>} : vector<8x128xbf16>, vector<128x512xbf16>, vector<8x512xf32> -> vector<8x512xf32>
    %499 = arith.addf %496, %498 : vector<8x512xf32>
    %500 = vector.extract_strided_slice %499 {offsets = [0, 0], sizes = [8, 128], strides = [1, 1]} : vector<8x512xf32> to vector<8x128xf32>
    %501 = arith.negf %500 : vector<8x128xf32>
    %502 = math.exp %501 : vector<8x128xf32>
    %cst_260 = arith.constant 1.000000e+00 : f32
    %503 = vector.broadcast %cst_260 : f32 to vector<8x128xf32>
    %504 = arith.addf %503, %502 : vector<8x128xf32>
    %505 = arith.divf %503, %504 : vector<8x128xf32>
    %506 = vector.extract_strided_slice %499 {offsets = [0, 128], sizes = [8, 128], strides = [1, 1]} : vector<8x512xf32> to vector<8x128xf32>
    %507 = arith.negf %506 : vector<8x128xf32>
    %508 = math.exp %507 : vector<8x128xf32>
    %cst_261 = arith.constant 1.000000e+00 : f32
    %509 = vector.broadcast %cst_261 : f32 to vector<8x128xf32>
    %510 = arith.addf %509, %508 : vector<8x128xf32>
    %511 = arith.divf %509, %510 : vector<8x128xf32>
    %512 = vector.extract_strided_slice %499 {offsets = [0, 256], sizes = [8, 128], strides = [1, 1]} : vector<8x512xf32> to vector<8x128xf32>
    %513 = math.tanh %512 : vector<8x128xf32>
    %514 = vector.extract_strided_slice %499 {offsets = [0, 384], sizes = [8, 128], strides = [1, 1]} : vector<8x512xf32> to vector<8x128xf32>
    %515 = arith.negf %514 : vector<8x128xf32>
    %516 = math.exp %515 : vector<8x128xf32>
    %cst_262 = arith.constant 1.000000e+00 : f32
    %517 = vector.broadcast %cst_262 : f32 to vector<8x128xf32>
    %518 = arith.addf %517, %516 : vector<8x128xf32>
    %519 = arith.divf %517, %518 : vector<8x128xf32>
    %520 = arith.mulf %511, %489 : vector<8x128xf32>
    %521 = arith.mulf %505, %513 : vector<8x128xf32>
    %522 = arith.addf %520, %521 : vector<8x128xf32>
    %523 = math.tanh %522 : vector<8x128xf32>
    %524 = arith.mulf %519, %523 : vector<8x128xf32>
    %525 = arith.truncf %524 : vector<8x128xf32> to vector<8x128xbf16>
    %c11_263 = arith.constant 11 : index
    %c0_264 = arith.constant 0 : index
    %c0_265 = arith.constant 0 : index
    %526 = vector.load %arg8[%c11_263, %c0_264, %c0_265] : memref<16x8x128xbf16, #tpu.memory_space<vmem>>, vector<1x8x128xbf16>
    %527 = vector.shape_cast %526 : vector<1x8x128xbf16> to vector<8x128xbf16>
    %528 = vector.shape_cast %525 : vector<8x128xbf16> to vector<1x8x128xbf16>
    tpu.vector_store %arg8[%c11_263, %c0_264, %c0_265], %528 {strides = array<i32>} : memref<16x8x128xbf16, #tpu.memory_space<vmem>>, vector<1x8x128xbf16>,
    %c96_266 = arith.constant 96 : index
    %c0_267 = arith.constant 0 : index
    %529 = vector.load %arg13[%c96_266, %c0_267] : memref<128x512xf32, #tpu.memory_space<vmem>>, vector<8x512xf32>
    %c0_268 = arith.constant 0 : index
    %c0_269 = arith.constant 0 : index
    %530 = vector.load %arg4[%c0_268, %c0_269] : memref<128x512xbf16, #tpu.memory_space<vmem>>, vector<128x512xbf16>
    %cst_270 = arith.constant dense<0.000000e+00> : vector<8x512xf32>
    %531 = tpu.matmul %525, %530, %cst_270 {dimension_numbers = #tpu.dot_dimension_numbers<[1], [0], [0], [1], [0, 0, 1, 1], [], []>} : vector<8x128xbf16>, vector<128x512xbf16>, vector<8x512xf32> -> vector<8x512xf32>
    %532 = arith.addf %529, %531 : vector<8x512xf32>
    %533 = vector.extract_strided_slice %532 {offsets = [0, 0], sizes = [8, 128], strides = [1, 1]} : vector<8x512xf32> to vector<8x128xf32>
    %534 = arith.negf %533 : vector<8x128xf32>
    %535 = math.exp %534 : vector<8x128xf32>
    %cst_271 = arith.constant 1.000000e+00 : f32
    %536 = vector.broadcast %cst_271 : f32 to vector<8x128xf32>
    %537 = arith.addf %536, %535 : vector<8x128xf32>
    %538 = arith.divf %536, %537 : vector<8x128xf32>
    %539 = vector.extract_strided_slice %532 {offsets = [0, 128], sizes = [8, 128], strides = [1, 1]} : vector<8x512xf32> to vector<8x128xf32>
    %540 = arith.negf %539 : vector<8x128xf32>
    %541 = math.exp %540 : vector<8x128xf32>
    %cst_272 = arith.constant 1.000000e+00 : f32
    %542 = vector.broadcast %cst_272 : f32 to vector<8x128xf32>
    %543 = arith.addf %542, %541 : vector<8x128xf32>
    %544 = arith.divf %542, %543 : vector<8x128xf32>
    %545 = vector.extract_strided_slice %532 {offsets = [0, 256], sizes = [8, 128], strides = [1, 1]} : vector<8x512xf32> to vector<8x128xf32>
    %546 = math.tanh %545 : vector<8x128xf32>
    %547 = vector.extract_strided_slice %532 {offsets = [0, 384], sizes = [8, 128], strides = [1, 1]} : vector<8x512xf32> to vector<8x128xf32>
    %548 = arith.negf %547 : vector<8x128xf32>
    %549 = math.exp %548 : vector<8x128xf32>
    %cst_273 = arith.constant 1.000000e+00 : f32
    %550 = vector.broadcast %cst_273 : f32 to vector<8x128xf32>
    %551 = arith.addf %550, %549 : vector<8x128xf32>
    %552 = arith.divf %550, %551 : vector<8x128xf32>
    %553 = arith.mulf %544, %522 : vector<8x128xf32>
    %554 = arith.mulf %538, %546 : vector<8x128xf32>
    %555 = arith.addf %553, %554 : vector<8x128xf32>
    %556 = math.tanh %555 : vector<8x128xf32>
    %557 = arith.mulf %552, %556 : vector<8x128xf32>
    %558 = arith.truncf %557 : vector<8x128xf32> to vector<8x128xbf16>
    %c12_274 = arith.constant 12 : index
    %c0_275 = arith.constant 0 : index
    %c0_276 = arith.constant 0 : index
    %559 = vector.load %arg8[%c12_274, %c0_275, %c0_276] : memref<16x8x128xbf16, #tpu.memory_space<vmem>>, vector<1x8x128xbf16>
    %560 = vector.shape_cast %559 : vector<1x8x128xbf16> to vector<8x128xbf16>
    %561 = vector.shape_cast %558 : vector<8x128xbf16> to vector<1x8x128xbf16>
    tpu.vector_store %arg8[%c12_274, %c0_275, %c0_276], %561 {strides = array<i32>} : memref<16x8x128xbf16, #tpu.memory_space<vmem>>, vector<1x8x128xbf16>,
    %c104_277 = arith.constant 104 : index
    %c0_278 = arith.constant 0 : index
    %562 = vector.load %arg13[%c104_277, %c0_278] : memref<128x512xf32, #tpu.memory_space<vmem>>, vector<8x512xf32>
    %c0_279 = arith.constant 0 : index
    %c0_280 = arith.constant 0 : index
    %563 = vector.load %arg4[%c0_279, %c0_280] : memref<128x512xbf16, #tpu.memory_space<vmem>>, vector<128x512xbf16>
    %cst_281 = arith.constant dense<0.000000e+00> : vector<8x512xf32>
    %564 = tpu.matmul %558, %563, %cst_281 {dimension_numbers = #tpu.dot_dimension_numbers<[1], [0], [0], [1], [0, 0, 1, 1], [], []>} : vector<8x128xbf16>, vector<128x512xbf16>, vector<8x512xf32> -> vector<8x512xf32>
    %565 = arith.addf %562, %564 : vector<8x512xf32>
    %566 = vector.extract_strided_slice %565 {offsets = [0, 0], sizes = [8, 128], strides = [1, 1]} : vector<8x512xf32> to vector<8x128xf32>
    %567 = arith.negf %566 : vector<8x128xf32>
    %568 = math.exp %567 : vector<8x128xf32>
    %cst_282 = arith.constant 1.000000e+00 : f32
    %569 = vector.broadcast %cst_282 : f32 to vector<8x128xf32>
    %570 = arith.addf %569, %568 : vector<8x128xf32>
    %571 = arith.divf %569, %570 : vector<8x128xf32>
    %572 = vector.extract_strided_slice %565 {offsets = [0, 128], sizes = [8, 128], strides = [1, 1]} : vector<8x512xf32> to vector<8x128xf32>
    %573 = arith.negf %572 : vector<8x128xf32>
    %574 = math.exp %573 : vector<8x128xf32>
    %cst_283 = arith.constant 1.000000e+00 : f32
    %575 = vector.broadcast %cst_283 : f32 to vector<8x128xf32>
    %576 = arith.addf %575, %574 : vector<8x128xf32>
    %577 = arith.divf %575, %576 : vector<8x128xf32>
    %578 = vector.extract_strided_slice %565 {offsets = [0, 256], sizes = [8, 128], strides = [1, 1]} : vector<8x512xf32> to vector<8x128xf32>
    %579 = math.tanh %578 : vector<8x128xf32>
    %580 = vector.extract_strided_slice %565 {offsets = [0, 384], sizes = [8, 128], strides = [1, 1]} : vector<8x512xf32> to vector<8x128xf32>
    %581 = arith.negf %580 : vector<8x128xf32>
    %582 = math.exp %581 : vector<8x128xf32>
    %cst_284 = arith.constant 1.000000e+00 : f32
    %583 = vector.broadcast %cst_284 : f32 to vector<8x128xf32>
    %584 = arith.addf %583, %582 : vector<8x128xf32>
    %585 = arith.divf %583, %584 : vector<8x128xf32>
    %586 = arith.mulf %577, %555 : vector<8x128xf32>
    %587 = arith.mulf %571, %579 : vector<8x128xf32>
    %588 = arith.addf %586, %587 : vector<8x128xf32>
    %589 = math.tanh %588 : vector<8x128xf32>
    %590 = arith.mulf %585, %589 : vector<8x128xf32>
    %591 = arith.truncf %590 : vector<8x128xf32> to vector<8x128xbf16>
    %c13_285 = arith.constant 13 : index
    %c0_286 = arith.constant 0 : index
    %c0_287 = arith.constant 0 : index
    %592 = vector.load %arg8[%c13_285, %c0_286, %c0_287] : memref<16x8x128xbf16, #tpu.memory_space<vmem>>, vector<1x8x128xbf16>
    %593 = vector.shape_cast %592 : vector<1x8x128xbf16> to vector<8x128xbf16>
    %594 = vector.shape_cast %591 : vector<8x128xbf16> to vector<1x8x128xbf16>
    tpu.vector_store %arg8[%c13_285, %c0_286, %c0_287], %594 {strides = array<i32>} : memref<16x8x128xbf16, #tpu.memory_space<vmem>>, vector<1x8x128xbf16>,
    %c112_288 = arith.constant 112 : index
    %c0_289 = arith.constant 0 : index
    %595 = vector.load %arg13[%c112_288, %c0_289] : memref<128x512xf32, #tpu.memory_space<vmem>>, vector<8x512xf32>
    %c0_290 = arith.constant 0 : index
    %c0_291 = arith.constant 0 : index
    %596 = vector.load %arg4[%c0_290, %c0_291] : memref<128x512xbf16, #tpu.memory_space<vmem>>, vector<128x512xbf16>
    %cst_292 = arith.constant dense<0.000000e+00> : vector<8x512xf32>
    %597 = tpu.matmul %591, %596, %cst_292 {dimension_numbers = #tpu.dot_dimension_numbers<[1], [0], [0], [1], [0, 0, 1, 1], [], []>} : vector<8x128xbf16>, vector<128x512xbf16>, vector<8x512xf32> -> vector<8x512xf32>
    %598 = arith.addf %595, %597 : vector<8x512xf32>
    %599 = vector.extract_strided_slice %598 {offsets = [0, 0], sizes = [8, 128], strides = [1, 1]} : vector<8x512xf32> to vector<8x128xf32>
    %600 = arith.negf %599 : vector<8x128xf32>
    %601 = math.exp %600 : vector<8x128xf32>
    %cst_293 = arith.constant 1.000000e+00 : f32
    %602 = vector.broadcast %cst_293 : f32 to vector<8x128xf32>
    %603 = arith.addf %602, %601 : vector<8x128xf32>
    %604 = arith.divf %602, %603 : vector<8x128xf32>
    %605 = vector.extract_strided_slice %598 {offsets = [0, 128], sizes = [8, 128], strides = [1, 1]} : vector<8x512xf32> to vector<8x128xf32>
    %606 = arith.negf %605 : vector<8x128xf32>
    %607 = math.exp %606 : vector<8x128xf32>
    %cst_294 = arith.constant 1.000000e+00 : f32
    %608 = vector.broadcast %cst_294 : f32 to vector<8x128xf32>
    %609 = arith.addf %608, %607 : vector<8x128xf32>
    %610 = arith.divf %608, %609 : vector<8x128xf32>
    %611 = vector.extract_strided_slice %598 {offsets = [0, 256], sizes = [8, 128], strides = [1, 1]} : vector<8x512xf32> to vector<8x128xf32>
    %612 = math.tanh %611 : vector<8x128xf32>
    %613 = vector.extract_strided_slice %598 {offsets = [0, 384], sizes = [8, 128], strides = [1, 1]} : vector<8x512xf32> to vector<8x128xf32>
    %614 = arith.negf %613 : vector<8x128xf32>
    %615 = math.exp %614 : vector<8x128xf32>
    %cst_295 = arith.constant 1.000000e+00 : f32
    %616 = vector.broadcast %cst_295 : f32 to vector<8x128xf32>
    %617 = arith.addf %616, %615 : vector<8x128xf32>
    %618 = arith.divf %616, %617 : vector<8x128xf32>
    %619 = arith.mulf %610, %588 : vector<8x128xf32>
    %620 = arith.mulf %604, %612 : vector<8x128xf32>
    %621 = arith.addf %619, %620 : vector<8x128xf32>
    %622 = math.tanh %621 : vector<8x128xf32>
    %623 = arith.mulf %618, %622 : vector<8x128xf32>
    %624 = arith.truncf %623 : vector<8x128xf32> to vector<8x128xbf16>
    %c14_296 = arith.constant 14 : index
    %c0_297 = arith.constant 0 : index
    %c0_298 = arith.constant 0 : index
    %625 = vector.load %arg8[%c14_296, %c0_297, %c0_298] : memref<16x8x128xbf16, #tpu.memory_space<vmem>>, vector<1x8x128xbf16>
    %626 = vector.shape_cast %625 : vector<1x8x128xbf16> to vector<8x128xbf16>
    %627 = vector.shape_cast %624 : vector<8x128xbf16> to vector<1x8x128xbf16>
    tpu.vector_store %arg8[%c14_296, %c0_297, %c0_298], %627 {strides = array<i32>} : memref<16x8x128xbf16, #tpu.memory_space<vmem>>, vector<1x8x128xbf16>,
    %c120_299 = arith.constant 120 : index
    %c0_300 = arith.constant 0 : index
    %628 = vector.load %arg13[%c120_299, %c0_300] : memref<128x512xf32, #tpu.memory_space<vmem>>, vector<8x512xf32>
    %c0_301 = arith.constant 0 : index
    %c0_302 = arith.constant 0 : index
    %629 = vector.load %arg4[%c0_301, %c0_302] : memref<128x512xbf16, #tpu.memory_space<vmem>>, vector<128x512xbf16>
    %cst_303 = arith.constant dense<0.000000e+00> : vector<8x512xf32>
    %630 = tpu.matmul %624, %629, %cst_303 {dimension_numbers = #tpu.dot_dimension_numbers<[1], [0], [0], [1], [0, 0, 1, 1], [], []>} : vector<8x128xbf16>, vector<128x512xbf16>, vector<8x512xf32> -> vector<8x512xf32>
    %631 = arith.addf %628, %630 : vector<8x512xf32>
    %632 = vector.extract_strided_slice %631 {offsets = [0, 0], sizes = [8, 128], strides = [1, 1]} : vector<8x512xf32> to vector<8x128xf32>
    %633 = arith.negf %632 : vector<8x128xf32>
    %634 = math.exp %633 : vector<8x128xf32>
    %cst_304 = arith.constant 1.000000e+00 : f32
    %635 = vector.broadcast %cst_304 : f32 to vector<8x128xf32>
    %636 = arith.addf %635, %634 : vector<8x128xf32>
    %637 = arith.divf %635, %636 : vector<8x128xf32>
    %638 = vector.extract_strided_slice %631 {offsets = [0, 128], sizes = [8, 128], strides = [1, 1]} : vector<8x512xf32> to vector<8x128xf32>
    %639 = arith.negf %638 : vector<8x128xf32>
    %640 = math.exp %639 : vector<8x128xf32>
    %cst_305 = arith.constant 1.000000e+00 : f32
    %641 = vector.broadcast %cst_305 : f32 to vector<8x128xf32>
    %642 = arith.addf %641, %640 : vector<8x128xf32>
    %643 = arith.divf %641, %642 : vector<8x128xf32>
    %644 = vector.extract_strided_slice %631 {offsets = [0, 256], sizes = [8, 128], strides = [1, 1]} : vector<8x512xf32> to vector<8x128xf32>
    %645 = math.tanh %644 : vector<8x128xf32>
    %646 = vector.extract_strided_slice %631 {offsets = [0, 384], sizes = [8, 128], strides = [1, 1]} : vector<8x512xf32> to vector<8x128xf32>
    %647 = arith.negf %646 : vector<8x128xf32>
    %648 = math.exp %647 : vector<8x128xf32>
    %cst_306 = arith.constant 1.000000e+00 : f32
    %649 = vector.broadcast %cst_306 : f32 to vector<8x128xf32>
    %650 = arith.addf %649, %648 : vector<8x128xf32>
    %651 = arith.divf %649, %650 : vector<8x128xf32>
    %652 = arith.mulf %643, %621 : vector<8x128xf32>
    %653 = arith.mulf %637, %645 : vector<8x128xf32>
    %654 = arith.addf %652, %653 : vector<8x128xf32>
    %655 = math.tanh %654 : vector<8x128xf32>
    %656 = arith.mulf %651, %655 : vector<8x128xf32>
    %657 = arith.truncf %656 : vector<8x128xf32> to vector<8x128xbf16>
    %c15_307 = arith.constant 15 : index
    %c0_308 = arith.constant 0 : index
    %c0_309 = arith.constant 0 : index
    %658 = vector.load %arg8[%c15_307, %c0_308, %c0_309] : memref<16x8x128xbf16, #tpu.memory_space<vmem>>, vector<1x8x128xbf16>
    %659 = vector.shape_cast %658 : vector<1x8x128xbf16> to vector<8x128xbf16>
    %660 = vector.shape_cast %657 : vector<8x128xbf16> to vector<1x8x128xbf16>
    tpu.vector_store %arg8[%c15_307, %c0_308, %c0_309], %660 {strides = array<i32>} : memref<16x8x128xbf16, #tpu.memory_space<vmem>>, vector<1x8x128xbf16>,
    %c0_310 = arith.constant 0 : index
    %c0_311 = arith.constant 0 : index
    %661 = vector.load %arg11[%c0_310, %c0_311] : memref<8x128xbf16, #tpu.memory_space<vmem>>, vector<8x128xbf16>
    tpu.vector_store %arg11[%c0_310, %c0_311], %657 {strides = array<i32>} : memref<8x128xbf16, #tpu.memory_space<vmem>>, vector<8x128xbf16>,
    %c0_312 = arith.constant 0 : index
    %c0_313 = arith.constant 0 : index
    %662 = vector.load %arg12[%c0_312, %c0_313] : memref<8x128xf32, #tpu.memory_space<vmem>>, vector<8x128xf32>
    tpu.vector_store %arg12[%c0_312, %c0_313], %654 {strides = array<i32>} : memref<8x128xf32, #tpu.memory_space<vmem>>, vector<8x128xf32>,
    %c0_i32_314 = arith.constant 0 : i32
    %663 = arith.cmpi eq, %arg1, %c0_i32_314 : i32
    %664 = arith.extui %663 : i1 to i32
    %c0_i32_315 = arith.constant 0 : i32
    %665 = arith.cmpi ne, %664, %c0_i32_315 : i32
    scf.if %665 {
      %c0_316 = arith.constant 0 : index
      %c0_317 = arith.constant 0 : index
      %666 = vector.load %arg11[%c0_316, %c0_317] : memref<8x128xbf16, #tpu.memory_space<vmem>>, vector<8x128xbf16>
      %667 = arith.extf %666 : vector<8x128xbf16> to vector<8x128xf32>
      %c0_318 = arith.constant 0 : index
      %c0_319 = arith.constant 0 : index
      %668 = vector.load %arg9[%c0_318, %c0_319] : memref<8x128xf32, #tpu.memory_space<vmem>>, vector<8x128xf32>
      tpu.vector_store %arg9[%c0_318, %c0_319], %667 {strides = array<i32>} : memref<8x128xf32, #tpu.memory_space<vmem>>, vector<8x128xf32>,
      %c0_320 = arith.constant 0 : index
      %c0_321 = arith.constant 0 : index
      %669 = vector.load %arg12[%c0_320, %c0_321] : memref<8x128xf32, #tpu.memory_space<vmem>>, vector<8x128xf32>
      %c0_322 = arith.constant 0 : index
      %c0_323 = arith.constant 0 : index
      %670 = vector.load %arg10[%c0_322, %c0_323] : memref<8x128xf32, #tpu.memory_space<vmem>>, vector<8x128xf32>
      tpu.vector_store %arg10[%c0_322, %c0_323], %669 {strides = array<i32>} : memref<8x128xf32, #tpu.memory_space<vmem>>, vector<8x128xf32>,
    } else {
    }
    return
  }
  func.func @transform_0(%arg0: i32, %arg1: i32) -> (i32, i32, i32) {
    %c0_i32 = arith.constant 0 : i32
    %c0_i32_0 = arith.constant 0 : i32
    return %arg1, %arg0, %c0_i32 : i32, i32, i32
  }
  func.func @transform_1(%arg0: i32, %arg1: i32) -> (i32, i32) {
    %c0_i32 = arith.constant 0 : i32
    %c0_i32_0 = arith.constant 0 : i32
    %c0_i32_1 = arith.constant 0 : i32
    return %c0_i32, %c0_i32_0 : i32, i32
  }
  func.func @transform_2(%arg0: i32, %arg1: i32) -> (i32, i32) {
    %c0_i32 = arith.constant 0 : i32
    %c0_i32_0 = arith.constant 0 : i32
    %c0_i32_1 = arith.constant 0 : i32
    return %c0_i32, %c0_i32_0 : i32, i32
  }
  func.func @transform_3(%arg0: i32, %arg1: i32) -> (i32, i32) {
    %c0_i32 = arith.constant 0 : i32
    %c0_i32_0 = arith.constant 0 : i32
    %c0_i32_1 = arith.constant 0 : i32
    return %c0_i32, %c0_i32_0 : i32, i32
  }
  func.func @transform_4(%arg0: i32, %arg1: i32) -> (i32, i32) {
    %c0_i32 = arith.constant 0 : i32
    %c0_i32_0 = arith.constant 0 : i32
    return %arg0, %c0_i32 : i32, i32
  }
  func.func @transform_5(%arg0: i32, %arg1: i32) -> (i32, i32) {
    %c0_i32 = arith.constant 0 : i32
    %c0_i32_0 = arith.constant 0 : i32
    return %arg0, %c0_i32 : i32, i32
  }
  func.func @transform_6(%arg0: i32, %arg1: i32) -> (i32, i32, i32) {
    %c0_i32 = arith.constant 0 : i32
    %c0_i32_0 = arith.constant 0 : i32
    return %arg1, %arg0, %c0_i32 : i32, i32, i32
  }
  func.func @transform_7(%arg0: i32, %arg1: i32) -> (i32, i32) {
    %c0_i32 = arith.constant 0 : i32
    %c0_i32_0 = arith.constant 0 : i32
    return %arg0, %c0_i32 : i32, i32
  }
  func.func @transform_8(%arg0: i32, %arg1: i32) -> (i32, i32) {
    %c0_i32 = arith.constant 0 : i32
    %c0_i32_0 = arith.constant 0 : i32
    return %arg0, %c0_i32 : i32, i32
  }
}

</mosaic_0001>

<llo_original>
// kernel: tpu_custom_call.1
$region0: #{tpu_custom_call.1}
  #allocation0 [shape = 'u32[]', space=smem, size = 0x4, offset = 0x4, fixed_abs, tag = 'smem constant byte address 0x4 - core index']
  #allocation1 [shape = 'u32[144,128]{1,0:T(1,128)}', space=vmem, size = 0x12000, scoped, tag = 'internal scratch']
  #allocation2 [shape = 'bf16[8,128]{1,0:T(8,128)(2,1)}', space=vmem, size = 0x800, scoped, tag = 'scratch operand']
  #allocation3 [shape = 'f32[8,128]{1,0:T(8,128)}', space=vmem, size = 0x1000, scoped, tag = 'scratch operand']
  #allocation4 [shape = 'f32[128,512]{1,0:T(8,128)}', space=vmem, size = 0x40000, scoped, tag = 'scratch operand']
  %s0 = inlined_call_operand.hbm [shape: bf16[16,8,128], index: 0, kind: input, shape index: {}]
  %s1 = inlined_call_operand.hbm [shape: bf16[128,512], index: 1, kind: input, shape index: {}]
  %s2 = inlined_call_operand.hbm [shape: bf16[128,512], index: 2, kind: input, shape index: {}]
  %s3 = inlined_call_operand.hbm [shape: f32[1,512], index: 3, kind: input, shape index: {}]
  %s4 = inlined_call_operand.hbm [shape: f32[8,128], index: 4, kind: input, shape index: {}]
  %s5 = inlined_call_operand.vmem [shape: f32[8,128], index: 5, kind: input, shape index: {}]
  %s6 = inlined_call_operand.hbm [shape: bf16[16,8,128], index: 6, kind: output, shape index: {0}]
  %s7 = inlined_call_operand.hbm [shape: f32[8,128], index: 7, kind: output, shape index: {1}]
  %s8 = inlined_call_operand.hbm [shape: f32[8,128], index: 8, kind: output, shape index: {2}]
  %9 = xla_tuple %s6, %s7, %s8
  %s10 = sld [smem:[#allocation0]]
  $region78: #{tpu_custom_call.1} parent=0
    _
  %s12 = ssub.s32 1, %s10
  %s13 = scalar_select 0, %s12, %s10
  $region1: #{tpu_custom_call.1} parent=0
    #allocation5 [shape = 'u8[32768]{0}', space=vmem, size = 0x8000, scoped, tag = 'input window, operand 0, single buffered']
    #allocation6 [shape = 's32[1]{0}', space=sflag, size = 0x4, scoped, tag = 'scoped memory for tpu_custom_call.1']
    #allocation7 [shape = 's32[1]{0}', space=sflag, size = 0x4, scoped, tag = 'scoped memory for tpu_custom_call.1']
    #allocation8 [shape = 'u8[131072]{0}', space=vmem, size = 0x20000, scoped, tag = 'input window, operand 1, single buffered']
    #allocation9 [shape = 's32[1]{0}', space=sflag, size = 0x4, scoped, tag = 'scoped memory for tpu_custom_call.1']
    #allocation10 [shape = 'u8[131072]{0}', space=vmem, size = 0x20000, scoped, tag = 'input window, operand 2, single buffered']
    #allocation11 [shape = 'u8[2048]{0}', space=vmem, size = 0x800, scoped, tag = 'input window, operand 3, single buffered']
    #allocation12 [shape = 's32[1]{0}', space=sflag, size = 0x4, scoped, tag = 'scoped memory for tpu_custom_call.1']
    #allocation13 [shape = 'u8[4096]{0}', space=vmem, size = 0x1000, scoped, tag = 'input window, operand 4, single buffered']
    #allocation14 [shape = 'u8[32768]{0}', space=vmem, size = 0x8000, scoped, tag = 'output window, operand 0, single buffered']
    #allocation15 [shape = 'u8[4096]{0}', space=vmem, size = 0x1000, scoped, tag = 'output window, operand 1, single buffered']
    #allocation16 [shape = 's32[1]{0}', space=sflag, size = 0x4, scoped, tag = 'scoped memory for tpu_custom_call.1']
    #allocation17 [shape = 'u8[4096]{0}', space=vmem, size = 0x1000, scoped, tag = 'output window, operand 2, single buffered']
    %14 = vsyncpa [#allocation6], 0
    %15 = vsyncpa [#allocation9], 0
    %16 = vsyncpa [#allocation12], 0
    %17 = vsyncpa [#allocation7], 0
    %18 = vsyncpa [#allocation16], 0
    // Predicated region
    $region2: #{tpu_custom_call.1} parent=1 // pred_check
      _
    $region3: #{tpu_custom_call.1} parent=1 // pred_check_branch
      %20 = sbr.rel (0) target = $region5
    $region4: #{tpu_custom_call.1} parent=1 // pred_region
      %s22 = ssub.s32 1024, 1024
      %23 = vsyncadd [#allocation6], %s22
      %s24 = sshll.u32 [#allocation5], 4
      %s25 = int_to_ptr.vmem [resolvable:$true] %s24
      %30 = dma.hbm_to_vmem [thread:$0]  %s0, 1024, %s25, [#allocation6], 64, 64, 4
    $region5: #{tpu_custom_call.1} parent=1 // pred_fallthru
      _
    // Predicated region
    $region6: #{tpu_custom_call.1} parent=1 // pred_check
      _
    $region7: #{tpu_custom_call.1} parent=1 // pred_check_branch
      %32 = sbr.rel (0) target = $region9
    $region8: #{tpu_custom_call.1} parent=1 // pred_region
      %s34 = ssub.s32 4096, 4096
      %35 = vsyncadd [#allocation9], %s34
      %s36 = sshll.u32 [#allocation8], 4
      %s37 = int_to_ptr.vmem [resolvable:$true] %s36
      %42 = dma.hbm_to_vmem [thread:$0]  %s1, 4096, %s37, [#allocation9], 256, 256, 16
    $region9: #{tpu_custom_call.1} parent=1 // pred_fallthru
      _
    // Predicated region
    $region10: #{tpu_custom_call.1} parent=1 // pred_check
      _
    $region11: #{tpu_custom_call.1} parent=1 // pred_check_branch
      %44 = sbr.rel (0) target = $region13
    $region12: #{tpu_custom_call.1} parent=1 // pred_region
      %s46 = ssub.s32 4096, 4096
      %47 = vsyncadd [#allocation9], %s46
      %s48 = sshll.u32 [#allocation10], 4
      %s49 = int_to_ptr.vmem [resolvable:$true] %s48
      %54 = dma.hbm_to_vmem [thread:$0]  %s2, 4096, %s49, [#allocation9], 256, 256, 16
    $region13: #{tpu_custom_call.1} parent=1 // pred_fallthru
      _
    // Predicated region
    $region14: #{tpu_custom_call.1} parent=1 // pred_check
      _
    $region15: #{tpu_custom_call.1} parent=1 // pred_check_branch
      %56 = sbr.rel (0) target = $region17
    $region16: #{tpu_custom_call.1} parent=1 // pred_region
      %s58 = ssub.s32 64, 64
      %59 = vsyncadd [#allocation12], %s58
      %s61 = sshll.u32 [#allocation11], 4
      %s62 = int_to_ptr.vmem [resolvable:$true] %s61
      %64 = dma.hbm_to_vmem [thread:$0]  %s3, 64, %s62, [#allocation12]
    $region17: #{tpu_custom_call.1} parent=1 // pred_fallthru
      _
    // Predicated region
    $region18: #{tpu_custom_call.1} parent=1 // pred_check
      _
    $region19: #{tpu_custom_call.1} parent=1 // pred_check_branch
      %66 = sbr.rel (0) target = $region21
    $region20: #{tpu_custom_call.1} parent=1 // pred_region
      %s68 = ssub.s32 128, 128
      %69 = vsyncadd [#allocation12], %s68
      %s71 = sshll.u32 [#allocation13], 4
      %s72 = int_to_ptr.vmem [resolvable:$true] %s71
      %74 = dma.hbm_to_vmem [thread:$0]  %s4, 128, %s72, [#allocation12]
    $region21: #{tpu_custom_call.1} parent=1 // pred_fallthru
      _
    // Predicated region
    $region22: #{tpu_custom_call.1} parent=1 // pred_check
      _
    $region23: #{tpu_custom_call.1} parent=1 // pred_check_branch
      %76 = sbr.rel (0) target = $region25
    $region24: #{tpu_custom_call.1} parent=1 // pred_region
      _
    $region25: #{tpu_custom_call.1} parent=1 // pred_fallthru
      _
    // Predicated region
    $region26: #{tpu_custom_call.1} parent=1 // pred_check
      _
    $region27: #{tpu_custom_call.1} parent=1 // pred_check_branch
      %78 = sbr.rel (0) target = $region29
    $region28: #{tpu_custom_call.1} parent=1 // pred_region
      %79 = dma.done [#allocation6], 1024
    $region29: #{tpu_custom_call.1} parent=1 // pred_fallthru
      _
    // Predicated region
    $region30: #{tpu_custom_call.1} parent=1 // pred_check
      _
    $region31: #{tpu_custom_call.1} parent=1 // pred_check_branch
      %81 = sbr.rel (0) target = $region33
    $region32: #{tpu_custom_call.1} parent=1 // pred_region
      %82 = dma.done [#allocation9], 4096
    $region33: #{tpu_custom_call.1} parent=1 // pred_fallthru
      _
    // Predicated region
    $region34: #{tpu_custom_call.1} parent=1 // pred_check
      _
    $region35: #{tpu_custom_call.1} parent=1 // pred_check_branch
      %84 = sbr.rel (0) target = $region37
    $region36: #{tpu_custom_call.1} parent=1 // pred_region
      %85 = dma.done [#allocation9], 4096
    $region37: #{tpu_custom_call.1} parent=1 // pred_fallthru
      _
    // Predicated region
    $region38: #{tpu_custom_call.1} parent=1 // pred_check
      _
    $region39: #{tpu_custom_call.1} parent=1 // pred_check_branch
      %87 = sbr.rel (0) target = $region41
    $region40: #{tpu_custom_call.1} parent=1 // pred_region
      %88 = dma.done [#allocation12], 64
    $region41: #{tpu_custom_call.1} parent=1 // pred_fallthru
      _
    // Predicated region
    $region42: #{tpu_custom_call.1} parent=1 // pred_check
      _
    $region43: #{tpu_custom_call.1} parent=1 // pred_check_branch
      %90 = sbr.rel (0) target = $region45
    $region44: #{tpu_custom_call.1} parent=1 // pred_region
      %91 = dma.done [#allocation12], 128
    $region45: #{tpu_custom_call.1} parent=1 // pred_fallthru
      _
    %p93 = scmp.eq.s32.totalorder 0, 0
    // Predicated region
    $region46: #{tpu_custom_call.1} parent=1 // pred_check
      %p94 = pneg %p93
    $region47: #{tpu_custom_call.1} parent=1 // pred_check_branch
      %96 = sbr.rel (%p94) target = $region49
    $region48: #{tpu_custom_call.1} parent=1 // pred_region
      %v97 = vld [vmem:[#allocation13] sm:$0xff]
      %v98 = vpack.c.bf16 %v97, %v97
      %99 = vst [vmem:[#allocation2] sm:$0xf] %v98
      %v100 = vld [vmem:[%s5] sm:$0xff]
      %101 = vst [vmem:[#allocation3] sm:$0xff] %v100
    $region49: #{tpu_custom_call.1} parent=1 // pred_fallthru
      _
    %v102 = vld [vmem:[#allocation5] sm:$0xf]
    %v103 = vld [vmem:[#allocation8] sm:$0xff]
    %v104 = vld [vmem:[#allocation8 + $0x8] sm:$0xff]
    %v105 = vld [vmem:[#allocation8 + $0x10] sm:$0xff]
    %v106 = vld [vmem:[#allocation8 + $0x18] sm:$0xff]
    %v107 = vld [vmem:[#allocation8 + $0x20] sm:$0xff]
    %v108 = vld [vmem:[#allocation8 + $0x28] sm:$0xff]
    %v109 = vld [vmem:[#allocation8 + $0x30] sm:$0xff]
    %v110 = vld [vmem:[#allocation8 + $0x38] sm:$0xff]
    %v111 = vld [vmem:[#allocation8 + $0x40] sm:$0xff]
    %v112 = vld [vmem:[#allocation8 + $0x48] sm:$0xff]
    %v113 = vld [vmem:[#allocation8 + $0x50] sm:$0xff]
    %v114 = vld [vmem:[#allocation8 + $0x58] sm:$0xff]
    %v115 = vld [vmem:[#allocation8 + $0x60] sm:$0xff]
    %v116 = vld [vmem:[#allocation8 + $0x68] sm:$0xff]
    %v117 = vld [vmem:[#allocation8 + $0x70] sm:$0xff]
    %v118 = vld [vmem:[#allocation8 + $0x78] sm:$0xff]
    %v119 = vld [vmem:[#allocation8 + $0x80] sm:$0xff]
    %v120 = vld [vmem:[#allocation8 + $0x88] sm:$0xff]
    %v121 = vld [vmem:[#allocation8 + $0x90] sm:$0xff]
    %v122 = vld [vmem:[#allocation8 + $0x98] sm:$0xff]
    %v123 = vld [vmem:[#allocation8 + $0xa0] sm:$0xff]
    %v124 = vld [vmem:[#allocation8 + $0xa8] sm:$0xff]
    %v125 = vld [vmem:[#allocation8 + $0xb0] sm:$0xff]
    %v126 = vld [vmem:[#allocation8 + $0xb8] sm:$0xff]
    %v127 = vld [vmem:[#allocation8 + $0xc0] sm:$0xff]
    %v128 = vld [vmem:[#allocation8 + $0xc8] sm:$0xff]
    %v129 = vld [vmem:[#allocation8 + $0xd0] sm:$0xff]
    %v130 = vld [vmem:[#allocation8 + $0xd8] sm:$0xff]
    %v131 = vld [vmem:[#allocation8 + $0xe0] sm:$0xff]
    %v132 = vld [vmem:[#allocation8 + $0xe8] sm:$0xff]
    %v133 = vld [vmem:[#allocation8 + $0xf0] sm:$0xff]
    %v134 = vld [vmem:[#allocation8 + $0xf8] sm:$0xff]
    %v135 = vld [vmem:[#allocation11] sm:$0xf]
    %v137 = vlaneseq
    %v138 = vshrl.u32 %v137, 7
    %v139 = vsub.s32 0, %v138
    %v140 = vrot.slane %v135, %v139
    %v141 = vlaneseq
    %v142 = vshrl.u32 %v141, 7
    %v143 = vsub.s32 1, %v142
    %v144 = vrot.slane %v135, %v143
    %v145 = vlaneseq
    %v146 = vshrl.u32 %v145, 7
    %v147 = vsub.s32 2, %v146
    %v148 = vrot.slane %v135, %v147
    %v149 = vlaneseq
    %v150 = vshrl.u32 %v149, 7
    %v151 = vsub.s32 3, %v150
    %v152 = vrot.slane %v135, %v151
    %v189 = vunpack.c.l.b16 %v103
    %v190 = vunpack.c.h.b16 %v103
    %v191 = vunpack.c.l.b16 %v104
    %v192 = vunpack.c.h.b16 %v104
    %v193 = vunpack.c.l.b16 %v105
    %v194 = vunpack.c.h.b16 %v105
    %v195 = vunpack.c.l.b16 %v106
    %v196 = vunpack.c.h.b16 %v106
    %v197 = vunpack.c.l.b16 %v107
    %v198 = vunpack.c.h.b16 %v107
    %v199 = vunpack.c.l.b16 %v108
    %v200 = vunpack.c.h.b16 %v108
    %v201 = vunpack.c.l.b16 %v109
    %v202 = vunpack.c.h.b16 %v109
    %v203 = vunpack.c.l.b16 %v110
    %v204 = vunpack.c.h.b16 %v110
    %v205 = vunpack.c.l.b16 %v111
    %v206 = vunpack.c.h.b16 %v111
    %v207 = vunpack.c.l.b16 %v112
    %v208 = vunpack.c.h.b16 %v112
    %v209 = vunpack.c.l.b16 %v113
    %v210 = vunpack.c.h.b16 %v113
    %v211 = vunpack.c.l.b16 %v114
    %v212 = vunpack.c.h.b16 %v114
    %v213 = vunpack.c.l.b16 %v115
    %v214 = vunpack.c.h.b16 %v115
    %v215 = vunpack.c.l.b16 %v116
    %v216 = vunpack.c.h.b16 %v116
    %v217 = vunpack.c.l.b16 %v117
    %v218 = vunpack.c.h.b16 %v117
    %v219 = vunpack.c.l.b16 %v118
    %v220 = vunpack.c.h.b16 %v118
    %v221 = vunpack.c.l.b16 %v119
    %v222 = vunpack.c.h.b16 %v119
    %v223 = vunpack.c.l.b16 %v120
    %v224 = vunpack.c.h.b16 %v120
    %v225 = vunpack.c.l.b16 %v121
    %v226 = vunpack.c.h.b16 %v121
    %v227 = vunpack.c.l.b16 %v122
    %v228 = vunpack.c.h.b16 %v122
    %v229 = vunpack.c.l.b16 %v123
    %v230 = vunpack.c.h.b16 %v123
    %v231 = vunpack.c.l.b16 %v124
    %v232 = vunpack.c.h.b16 %v124
    %v233 = vunpack.c.l.b16 %v125
    %v234 = vunpack.c.h.b16 %v125
    %v235 = vunpack.c.l.b16 %v126
    %v236 = vunpack.c.h.b16 %v126
    %v237 = vunpack.c.l.b16 %v127
    %v238 = vunpack.c.h.b16 %v127
    %v239 = vunpack.c.l.b16 %v128
    %v240 = vunpack.c.h.b16 %v128
    %v241 = vunpack.c.l.b16 %v129
    %v242 = vunpack.c.h.b16 %v129
    %v243 = vunpack.c.l.b16 %v130
    %v244 = vunpack.c.h.b16 %v130
    %v245 = vunpack.c.l.b16 %v131
    %v246 = vunpack.c.h.b16 %v131
    %v247 = vunpack.c.l.b16 %v132
    %v248 = vunpack.c.h.b16 %v132
    %v249 = vunpack.c.l.b16 %v133
    %v250 = vunpack.c.h.b16 %v133
    %v251 = vunpack.c.l.b16 %v134
    %v252 = vunpack.c.h.b16 %v134
    %v253 = vpack.c.b16 %v193, %v189
    %v254 = vpack.c.b16 %v194, %v190
    %v255 = vpack.c.b16 %v195, %v191
    %v256 = vpack.c.b16 %v196, %v192
    %v257 = vpack.c.b16 %v201, %v197
    %v258 = vpack.c.b16 %v202, %v198
    %v259 = vpack.c.b16 %v203, %v199
    %v260 = vpack.c.b16 %v204, %v200
    %v261 = vpack.c.b16 %v209, %v205
    %v262 = vpack.c.b16 %v210, %v206
    %v263 = vpack.c.b16 %v211, %v207
    %v264 = vpack.c.b16 %v212, %v208
    %v265 = vpack.c.b16 %v217, %v213
    %v266 = vpack.c.b16 %v218, %v214
    %v267 = vpack.c.b16 %v219, %v215
    %v268 = vpack.c.b16 %v220, %v216
    %v269 = vpack.c.b16 %v225, %v221
    %v270 = vpack.c.b16 %v226, %v222
    %v271 = vpack.c.b16 %v227, %v223
    %v272 = vpack.c.b16 %v228, %v224
    %v273 = vpack.c.b16 %v233, %v229
    %v274 = vpack.c.b16 %v234, %v230
    %v275 = vpack.c.b16 %v235, %v231
    %v276 = vpack.c.b16 %v236, %v232
    %v277 = vpack.c.b16 %v241, %v237
    %v278 = vpack.c.b16 %v242, %v238
    %v279 = vpack.c.b16 %v243, %v239
    %v280 = vpack.c.b16 %v244, %v240
    %v281 = vpack.c.b16 %v249, %v245
    %v282 = vpack.c.b16 %v250, %v246
    %v283 = vpack.c.b16 %v251, %v247
    %v284 = vpack.c.b16 %v252, %v248
    %317 = vmatprep.subr.bf16.mxu0 %v282
    %318 = vmatpush1.bf16.msra.mxu0 %v281
    %319 = vmatprep.subr.bf16.mxu0 %v278
    %320 = vmatpush1.bf16.msra.mxu0 %v277
    %321 = vmatprep.subr.bf16.mxu0 %v274
    %322 = vmatpush1.bf16.msra.mxu0 %v273
    %323 = vmatprep.subr.bf16.mxu0 %v270
    %324 = vmatpush1.bf16.msra.mxu0 %v269
    %325 = vmatprep.subr.bf16.mxu0 %v266
    %326 = vmatpush1.bf16.msra.mxu0 %v265
    %327 = vmatprep.subr.bf16.mxu0 %v262
    %328 = vmatpush1.bf16.msra.mxu0 %v261
    %329 = vmatprep.subr.bf16.mxu0 %v258
    %330 = vmatpush1.bf16.msra.mxu0 %v257
    %331 = vmatprep.subr.bf16.mxu0 %v254
    %332 = vmatpush1.bf16.msra.mxu0 %v253
    %333 = vmatprep.subr.bf16.mxu0 0
    %334 = vmatpush2.bf16.msra.mxu0 0
    %335 = vmatprep.subr.bf16.mxu0 0
    %336 = vmatpush2.bf16.msra.mxu0 0
    %337 = vmatprep.subr.bf16.mxu0 0
    %338 = vmatpush2.bf16.msra.mxu0 0
    %339 = vmatprep.subr.bf16.mxu0 0
    %340 = vmatpush2.bf16.msra.mxu0 0
    %341 = vmatprep.subr.bf16.mxu0 0
    %342 = vmatpush2.bf16.msra.mxu0 0
    %343 = vmatprep.subr.bf16.mxu0 0
    %344 = vmatpush2.bf16.msra.mxu0 0
    %345 = vmatprep.subr.bf16.mxu0 0
    %346 = vmatpush2.bf16.msra.mxu0 0
    %347 = vmatprep.subr.bf16.mxu0 0
    %348 = vmatpush2.bf16.msra.mxu0 0
    %349 = vmatprep.mubr.bf16.mxu0 0
    %350 = vmatmul.mubr.bf16.gmra.mxu0 %v102
    %v351 = vpop.f32.mrf.mxu0
    %v352 = vadd.f32 %v140, %v351
    %v353 = vpop.f32.mrf.mxu0
    %v354 = vadd.f32 %v144, %v353
    %v355 = vpop.f32.mrf.mxu0
    %v356 = vpop.f32.mrf.mxu0
    %357 = vdwg.mxu0
    %358 = vmatprep.subr.bf16.mxu0 %v284
    %359 = vmatpush1.bf16.msra.mxu0 %v283
    %360 = vmatprep.subr.bf16.mxu0 %v280
    %361 = vmatpush1.bf16.msra.mxu0 %v279
    %362 = vmatprep.subr.bf16.mxu0 %v276
    %363 = vmatpush1.bf16.msra.mxu0 %v275
    %364 = vmatprep.subr.bf16.mxu0 %v272
    %365 = vmatpush1.bf16.msra.mxu0 %v271
    %366 = vmatprep.subr.bf16.mxu0 %v268
    %367 = vmatpush1.bf16.msra.mxu0 %v267
    %368 = vmatprep.subr.bf16.mxu0 %v264
    %369 = vmatpush1.bf16.msra.mxu0 %v263
    %370 = vmatprep.subr.bf16.mxu0 %v260
    %371 = vmatpush1.bf16.msra.mxu0 %v259
    %372 = vmatprep.subr.bf16.mxu0 %v256
    %373 = vmatpush1.bf16.msra.mxu0 %v255
    %374 = vmatprep.subr.bf16.mxu0 0
    %375 = vmatpush2.bf16.msra.mxu0 0
    %376 = vmatprep.subr.bf16.mxu0 0
    %377 = vmatpush2.bf16.msra.mxu0 0
    %378 = vmatprep.subr.bf16.mxu0 0
    %379 = vmatpush2.bf16.msra.mxu0 0
    %380 = vmatprep.subr.bf16.mxu0 0
    %381 = vmatpush2.bf16.msra.mxu0 0
    %382 = vmatprep.subr.bf16.mxu0 0
    %383 = vmatpush2.bf16.msra.mxu0 0
    %384 = vmatprep.subr.bf16.mxu0 0
    %385 = vmatpush2.bf16.msra.mxu0 0
    %386 = vmatprep.subr.bf16.mxu0 0
    %387 = vmatpush2.bf16.msra.mxu0 0
    %388 = vmatprep.subr.bf16.mxu0 0
    %389 = vmatpush2.bf16.msra.mxu0 0
    %390 = vmatprep.mubr.bf16.mxu0 0
    %391 = vmatmul.mubr.bf16.gmra.mxu0 %v102
    %v392 = vpop.f32.mrf.mxu0
    %v393 = vadd.f32 %v148, %v392
    %v394 = vpop.f32.mrf.mxu0
    %v395 = vadd.f32 %v152, %v394
    %v396 = vpop.f32.mrf.mxu0
    %v397 = vpop.f32.mrf.mxu0
    %398 = vdwg.mxu0
    %399 = vst [vmem:[#allocation4] sm:$0xff] %v352
    %400 = vst [vmem:[#allocation4 + $0x8] sm:$0xff] %v354
    %401 = vst [vmem:[#allocation4 + $0x10] sm:$0xff] %v393
    %402 = vst [vmem:[#allocation4 + $0x18] sm:$0xff] %v395
    %s403 = scalar_lea.vmem [#allocation5], 4
    %v404 = vld [vmem:[%s403] sm:$0xf]
    %v405 = vld [vmem:[#allocation8] sm:$0xff]
    %v406 = vld [vmem:[#allocation8 + $0x8] sm:$0xff]
    %v407 = vld [vmem:[#allocation8 + $0x10] sm:$0xff]
    %v408 = vld [vmem:[#allocation8 + $0x18] sm:$0xff]
    %v409 = vld [vmem:[#allocation8 + $0x20] sm:$0xff]
    %v410 = vld [vmem:[#allocation8 + $0x28] sm:$0xff]
    %v411 = vld [vmem:[#allocation8 + $0x30] sm:$0xff]
    %v412 = vld [vmem:[#allocation8 + $0x38] sm:$0xff]
    %v413 = vld [vmem:[#allocation8 + $0x40] sm:$0xff]
    %v414 = vld [vmem:[#allocation8 + $0x48] sm:$0xff]
    %v415 = vld [vmem:[#allocation8 + $0x50] sm:$0xff]
    %v416 = vld [vmem:[#allocation8 + $0x58] sm:$0xff]
    %v417 = vld [vmem:[#allocation8 + $0x60] sm:$0xff]
    %v418 = vld [vmem:[#allocation8 + $0x68] sm:$0xff]
    %v419 = vld [vmem:[#allocation8 + $0x70] sm:$0xff]
    %v420 = vld [vmem:[#allocation8 + $0x78] sm:$0xff]
    %v421 = vld [vmem:[#allocation8 + $0x80] sm:$0xff]
    %v422 = vld [vmem:[#allocation8 + $0x88] sm:$0xff]
    %v423 = vld [vmem:[#allocation8 + $0x90] sm:$0xff]
    %v424 = vld [vmem:[#allocation8 + $0x98] sm:$0xff]
    %v425 = vld [vmem:[#allocation8 + $0xa0] sm:$0xff]
    %v426 = vld [vmem:[#allocation8 + $0xa8] sm:$0xff]
    %v427 = vld [vmem:[#allocation8 + $0xb0] sm:$0xff]
    %v428 = vld [vmem:[#allocation8 + $0xb8] sm:$0xff]
    %v429 = vld [vmem:[#allocation8 + $0xc0] sm:$0xff]
    %v430 = vld [vmem:[#allocation8 + $0xc8] sm:$0xff]
    %v431 = vld [vmem:[#allocation8 + $0xd0] sm:$0xff]
    %v432 = vld [vmem:[#allocation8 + $0xd8] sm:$0xff]
    %v433 = vld [vmem:[#allocation8 + $0xe0] sm:$0xff]
    %v434 = vld [vmem:[#allocation8 + $0xe8] sm:$0xff]
    %v435 = vld [vmem:[#allocation8 + $0xf0] sm:$0xff]
    %v436 = vld [vmem:[#allocation8 + $0xf8] sm:$0xff]
    %v437 = vld [vmem:[#allocation11] sm:$0xf]
    %v439 = vlaneseq
    %v440 = vshrl.u32 %v439, 7
    %v441 = vsub.s32 0, %v440
    %v442 = vrot.slane %v437, %v441
    %v443 = vlaneseq
    %v444 = vshrl.u32 %v443, 7
    %v445 = vsub.s32 1, %v444
    %v446 = vrot.slane %v437, %v445
    %v447 = vlaneseq
    %v448 = vshrl.u32 %v447, 7
    %v449 = vsub.s32 2, %v448
    %v450 = vrot.slane %v437, %v449
    %v451 = vlaneseq
    %v452 = vshrl.u32 %v451, 7
    %v453 = vsub.s32 3, %v452
    %v454 = vrot.slane %v437, %v453
    %v491 = vunpack.c.l.b16 %v405
    %v492 = vunpack.c.h.b16 %v405
    %v493 = vunpack.c.l.b16 %v406
    %v494 = vunpack.c.h.b16 %v406
    %v495 = vunpack.c.l.b16 %v407
    %v496 = vunpack.c.h.b16 %v407
    %v497 = vunpack.c.l.b16 %v408
    %v498 = vunpack.c.h.b16 %v408
    %v499 = vunpack.c.l.b16 %v409
    %v500 = vunpack.c.h.b16 %v409
    %v501 = vunpack.c.l.b16 %v410
    %v502 = vunpack.c.h.b16 %v410
    %v503 = vunpack.c.l.b16 %v411
    %v504 = vunpack.c.h.b16 %v411
    %v505 = vunpack.c.l.b16 %v412
    %v506 = vunpack.c.h.b16 %v412
    %v507 = vunpack.c.l.b16 %v413
    %v508 = vunpack.c.h.b16 %v413
    %v509 = vunpack.c.l.b16 %v414
    %v510 = vunpack.c.h.b16 %v414
    %v511 = vunpack.c.l.b16 %v415
    %v512 = vunpack.c.h.b16 %v415
    %v513 = vunpack.c.l.b16 %v416
    %v514 = vunpack.c.h.b16 %v416
    %v515 = vunpack.c.l.b16 %v417
    %v516 = vunpack.c.h.b16 %v417
    %v517 = vunpack.c.l.b16 %v418
    %v518 = vunpack.c.h.b16 %v418
    %v519 = vunpack.c.l.b16 %v419
    %v520 = vunpack.c.h.b16 %v419
    %v521 = vunpack.c.l.b16 %v420
    %v522 = vunpack.c.h.b16 %v420
    %v523 = vunpack.c.l.b16 %v421
    %v524 = vunpack.c.h.b16 %v421
    %v525 = vunpack.c.l.b16 %v422
    %v526 = vunpack.c.h.b16 %v422
    %v527 = vunpack.c.l.b16 %v423
    %v528 = vunpack.c.h.b16 %v423
    %v529 = vunpack.c.l.b16 %v424
    %v530 = vunpack.c.h.b16 %v424
    %v531 = vunpack.c.l.b16 %v425
    %v532 = vunpack.c.h.b16 %v425
    %v533 = vunpack.c.l.b16 %v426
    %v534 = vunpack.c.h.b16 %v426
    %v535 = vunpack.c.l.b16 %v427
    %v536 = vunpack.c.h.b16 %v427
    %v537 = vunpack.c.l.b16 %v428
    %v538 = vunpack.c.h.b16 %v428
    %v539 = vunpack.c.l.b16 %v429
    %v540 = vunpack.c.h.b16 %v429
    %v541 = vunpack.c.l.b16 %v430
    %v542 = vunpack.c.h.b16 %v430
    %v543 = vunpack.c.l.b16 %v431
    %v544 = vunpack.c.h.b16 %v431
    %v545 = vunpack.c.l.b16 %v432
    %v546 = vunpack.c.h.b16 %v432
    %v547 = vunpack.c.l.b16 %v433
    %v548 = vunpack.c.h.b16 %v433
    %v549 = vunpack.c.l.b16 %v434
    %v550 = vunpack.c.h.b16 %v434
    %v551 = vunpack.c.l.b16 %v435
    %v552 = vunpack.c.h.b16 %v435
    %v553 = vunpack.c.l.b16 %v436
    %v554 = vunpack.c.h.b16 %v436
    %v555 = vpack.c.b16 %v495, %v491
    %v556 = vpack.c.b16 %v496, %v492
    %v557 = vpack.c.b16 %v497, %v493
    %v558 = vpack.c.b16 %v498, %v494
    %v559 = vpack.c.b16 %v503, %v499
    %v560 = vpack.c.b16 %v504, %v500
    %v561 = vpack.c.b16 %v505, %v501
    %v562 = vpack.c.b16 %v506, %v502
    %v563 = vpack.c.b16 %v511, %v507
    %v564 = vpack.c.b16 %v512, %v508
    %v565 = vpack.c.b16 %v513, %v509
    %v566 = vpack.c.b16 %v514, %v510
    %v567 = vpack.c.b16 %v519, %v515
    %v568 = vpack.c.b16 %v520, %v516
    %v569 = vpack.c.b16 %v521, %v517
    %v570 = vpack.c.b16 %v522, %v518
    %v571 = vpack.c.b16 %v527, %v523
    %v572 = vpack.c.b16 %v528, %v524
    %v573 = vpack.c.b16 %v529, %v525
    %v574 = vpack.c.b16 %v530, %v526
    %v575 = vpack.c.b16 %v535, %v531
    %v576 = vpack.c.b16 %v536, %v532
    %v577 = vpack.c.b16 %v537, %v533
    %v578 = vpack.c.b16 %v538, %v534
    %v579 = vpack.c.b16 %v543, %v539
    %v580 = vpack.c.b16 %v544, %v540
    %v581 = vpack.c.b16 %v545, %v541
    %v582 = vpack.c.b16 %v546, %v542
    %v583 = vpack.c.b16 %v551, %v547
    %v584 = vpack.c.b16 %v552, %v548
    %v585 = vpack.c.b16 %v553, %v549
    %v586 = vpack.c.b16 %v554, %v550
    %619 = vmatprep.subr.bf16.mxu0 %v584
    %620 = vmatpush1.bf16.msra.mxu0 %v583
    %621 = vmatprep.subr.bf16.mxu0 %v580
    %622 = vmatpush1.bf16.msra.mxu0 %v579
    %623 = vmatprep.subr.bf16.mxu0 %v576
    %624 = vmatpush1.bf16.msra.mxu0 %v575
    %625 = vmatprep.subr.bf16.mxu0 %v572
    %626 = vmatpush1.bf16.msra.mxu0 %v571
    %627 = vmatprep.subr.bf16.mxu0 %v568
    %628 = vmatpush1.bf16.msra.mxu0 %v567
    %629 = vmatprep.subr.bf16.mxu0 %v564
    %630 = vmatpush1.bf16.msra.mxu0 %v563
    %631 = vmatprep.subr.bf16.mxu0 %v560
    %632 = vmatpush1.bf16.msra.mxu0 %v559
    %633 = vmatprep.subr.bf16.mxu0 %v556
    %634 = vmatpush1.bf16.msra.mxu0 %v555
    %635 = vmatprep.subr.bf16.mxu0 0
    %636 = vmatpush2.bf16.msra.mxu0 0
    %637 = vmatprep.subr.bf16.mxu0 0
    %638 = vmatpush2.bf16.msra.mxu0 0
    %639 = vmatprep.subr.bf16.mxu0 0
    %640 = vmatpush2.bf16.msra.mxu0 0
    %641 = vmatprep.subr.bf16.mxu0 0
    %642 = vmatpush2.bf16.msra.mxu0 0
    %643 = vmatprep.subr.bf16.mxu0 0
    %644 = vmatpush2.bf16.msra.mxu0 0
    %645 = vmatprep.subr.bf16.mxu0 0
    %646 = vmatpush2.bf16.msra.mxu0 0
    %647 = vmatprep.subr.bf16.mxu0 0
    %648 = vmatpush2.bf16.msra.mxu0 0
    %649 = vmatprep.subr.bf16.mxu0 0
    %650 = vmatpush2.bf16.msra.mxu0 0
    %651 = vmatprep.mubr.bf16.mxu0 0
    %652 = vmatmul.mubr.bf16.gmra.mxu0 %v404
    %v653 = vpop.f32.mrf.mxu0
    %v654 = vadd.f32 %v442, %v653
    %v655 = vpop.f32.mrf.mxu0
    %v656 = vadd.f32 %v446, %v655
    %v657 = vpop.f32.mrf.mxu0
    %v658 = vpop.f32.mrf.mxu0
    %659 = vdwg.mxu0
    %660 = vmatprep.subr.bf16.mxu0 %v586
    %661 = vmatpush1.bf16.msra.mxu0 %v585
    %662 = vmatprep.subr.bf16.mxu0 %v582
    %663 = vmatpush1.bf16.msra.mxu0 %v581
    %664 = vmatprep.subr.bf16.mxu0 %v578
    %665 = vmatpush1.bf16.msra.mxu0 %v577
    %666 = vmatprep.subr.bf16.mxu0 %v574
    %667 = vmatpush1.bf16.msra.mxu0 %v573
    %668 = vmatprep.subr.bf16.mxu0 %v570
    %669 = vmatpush1.bf16.msra.mxu0 %v569
    %670 = vmatprep.subr.bf16.mxu0 %v566
    %671 = vmatpush1.bf16.msra.mxu0 %v565
    %672 = vmatprep.subr.bf16.mxu0 %v562
    %673 = vmatpush1.bf16.msra.mxu0 %v561
    %674 = vmatprep.subr.bf16.mxu0 %v558
    %675 = vmatpush1.bf16.msra.mxu0 %v557
    %676 = vmatprep.subr.bf16.mxu0 0
    %677 = vmatpush2.bf16.msra.mxu0 0
    %678 = vmatprep.subr.bf16.mxu0 0
    %679 = vmatpush2.bf16.msra.mxu0 0
    %680 = vmatprep.subr.bf16.mxu0 0
    %681 = vmatpush2.bf16.msra.mxu0 0
    %682 = vmatprep.subr.bf16.mxu0 0
    %683 = vmatpush2.bf16.msra.mxu0 0
    %684 = vmatprep.subr.bf16.mxu0 0
    %685 = vmatpush2.bf16.msra.mxu0 0
    %686 = vmatprep.subr.bf16.mxu0 0
    %687 = vmatpush2.bf16.msra.mxu0 0
    %688 = vmatprep.subr.bf16.mxu0 0
    %689 = vmatpush2.bf16.msra.mxu0 0
    %690 = vmatprep.subr.bf16.mxu0 0
    %691 = vmatpush2.bf16.msra.mxu0 0
    %692 = vmatprep.mubr.bf16.mxu0 0
    %693 = vmatmul.mubr.bf16.gmra.mxu0 %v404
    %v694 = vpop.f32.mrf.mxu0
    %v695 = vadd.f32 %v450, %v694
    %v696 = vpop.f32.mrf.mxu0
    %v697 = vadd.f32 %v454, %v696
    %v698 = vpop.f32.mrf.mxu0
    %v699 = vpop.f32.mrf.mxu0
    %700 = vdwg.mxu0
    %701 = vst [vmem:[#allocation4 + $0x20] sm:$0xff] %v654
    %702 = vst [vmem:[#allocation4 + $0x28] sm:$0xff] %v656
    %703 = vst [vmem:[#allocation4 + $0x30] sm:$0xff] %v695
    %704 = vst [vmem:[#allocation4 + $0x38] sm:$0xff] %v697
    %s705 = scalar_lea.vmem [#allocation5], 8
    %v706 = vld [vmem:[%s705] sm:$0xf]
    %v707 = vld [vmem:[#allocation8] sm:$0xff]
    %v708 = vld [vmem:[#allocation8 + $0x8] sm:$0xff]
    %v709 = vld [vmem:[#allocation8 + $0x10] sm:$0xff]
    %v710 = vld [vmem:[#allocation8 + $0x18] sm:$0xff]
    %v711 = vld [vmem:[#allocation8 + $0x20] sm:$0xff]
    %v712 = vld [vmem:[#allocation8 + $0x28] sm:$0xff]
    %v713 = vld [vmem:[#allocation8 + $0x30] sm:$0xff]
    %v714 = vld [vmem:[#allocation8 + $0x38] sm:$0xff]
    %v715 = vld [vmem:[#allocation8 + $0x40] sm:$0xff]
    %v716 = vld [vmem:[#allocation8 + $0x48] sm:$0xff]
    %v717 = vld [vmem:[#allocation8 + $0x50] sm:$0xff]
    %v718 = vld [vmem:[#allocation8 + $0x58] sm:$0xff]
    %v719 = vld [vmem:[#allocation8 + $0x60] sm:$0xff]
    %v720 = vld [vmem:[#allocation8 + $0x68] sm:$0xff]
    %v721 = vld [vmem:[#allocation8 + $0x70] sm:$0xff]
    %v722 = vld [vmem:[#allocation8 + $0x78] sm:$0xff]
    %v723 = vld [vmem:[#allocation8 + $0x80] sm:$0xff]
    %v724 = vld [vmem:[#allocation8 + $0x88] sm:$0xff]
    %v725 = vld [vmem:[#allocation8 + $0x90] sm:$0xff]
    %v726 = vld [vmem:[#allocation8 + $0x98] sm:$0xff]
    %v727 = vld [vmem:[#allocation8 + $0xa0] sm:$0xff]
    %v728 = vld [vmem:[#allocation8 + $0xa8] sm:$0xff]
    %v729 = vld [vmem:[#allocation8 + $0xb0] sm:$0xff]
    %v730 = vld [vmem:[#allocation8 + $0xb8] sm:$0xff]
    %v731 = vld [vmem:[#allocation8 + $0xc0] sm:$0xff]
    %v732 = vld [vmem:[#allocation8 + $0xc8] sm:$0xff]
    %v733 = vld [vmem:[#allocation8 + $0xd0] sm:$0xff]
    %v734 = vld [vmem:[#allocation8 + $0xd8] sm:$0xff]
    %v735 = vld [vmem:[#allocation8 + $0xe0] sm:$0xff]
    %v736 = vld [vmem:[#allocation8 + $0xe8] sm:$0xff]
    %v737 = vld [vmem:[#allocation8 + $0xf0] sm:$0xff]
    %v738 = vld [vmem:[#allocation8 + $0xf8] sm:$0xff]
    %v739 = vld [vmem:[#allocation11] sm:$0xf]
    %v741 = vlaneseq
    %v742 = vshrl.u32 %v741, 7
    %v743 = vsub.s32 0, %v742
    %v744 = vrot.slane %v739, %v743
    %v745 = vlaneseq
    %v746 = vshrl.u32 %v745, 7
    %v747 = vsub.s32 1, %v746
    %v748 = vrot.slane %v739, %v747
    %v749 = vlaneseq
    %v750 = vshrl.u32 %v749, 7
    %v751 = vsub.s32 2, %v750
    %v752 = vrot.slane %v739, %v751
    %v753 = vlaneseq
    %v754 = vshrl.u32 %v753, 7
    %v755 = vsub.s32 3, %v754
    %v756 = vrot.slane %v739, %v755
    %v793 = vunpack.c.l.b16 %v707
    %v794 = vunpack.c.h.b16 %v707
    %v795 = vunpack.c.l.b16 %v708
    %v796 = vunpack.c.h.b16 %v708
    %v797 = vunpack.c.l.b16 %v709
    %v798 = vunpack.c.h.b16 %v709
    %v799 = vunpack.c.l.b16 %v710
    %v800 = vunpack.c.h.b16 %v710
    %v801 = vunpack.c.l.b16 %v711
    %v802 = vunpack.c.h.b16 %v711
    %v803 = vunpack.c.l.b16 %v712
    %v804 = vunpack.c.h.b16 %v712
    %v805 = vunpack.c.l.b16 %v713
    %v806 = vunpack.c.h.b16 %v713
    %v807 = vunpack.c.l.b16 %v714
    %v808 = vunpack.c.h.b16 %v714
    %v809 = vunpack.c.l.b16 %v715
    %v810 = vunpack.c.h.b16 %v715
    %v811 = vunpack.c.l.b16 %v716
    %v812 = vunpack.c.h.b16 %v716
    %v813 = vunpack.c.l.b16 %v717
    %v814 = vunpack.c.h.b16 %v717
    %v815 = vunpack.c.l.b16 %v718
    %v816 = vunpack.c.h.b16 %v718
    %v817 = vunpack.c.l.b16 %v719
    %v818 = vunpack.c.h.b16 %v719
    %v819 = vunpack.c.l.b16 %v720
    %v820 = vunpack.c.h.b16 %v720
    %v821 = vunpack.c.l.b16 %v721
    %v822 = vunpack.c.h.b16 %v721
    %v823 = vunpack.c.l.b16 %v722
    %v824 = vunpack.c.h.b16 %v722
    %v825 = vunpack.c.l.b16 %v723
    %v826 = vunpack.c.h.b16 %v723
    %v827 = vunpack.c.l.b16 %v724
    %v828 = vunpack.c.h.b16 %v724
    %v829 = vunpack.c.l.b16 %v725
    %v830 = vunpack.c.h.b16 %v725
    %v831 = vunpack.c.l.b16 %v726
    %v832 = vunpack.c.h.b16 %v726
    %v833 = vunpack.c.l.b16 %v727
    %v834 = vunpack.c.h.b16 %v727
    %v835 = vunpack.c.l.b16 %v728
    %v836 = vunpack.c.h.b16 %v728
    %v837 = vunpack.c.l.b16 %v729
    %v838 = vunpack.c.h.b16 %v729
    %v839 = vunpack.c.l.b16 %v730
    %v840 = vunpack.c.h.b16 %v730
    %v841 = vunpack.c.l.b16 %v731
    %v842 = vunpack.c.h.b16 %v731
    %v843 = vunpack.c.l.b16 %v732
    %v844 = vunpack.c.h.b16 %v732
    %v845 = vunpack.c.l.b16 %v733
    %v846 = vunpack.c.h.b16 %v733
    %v847 = vunpack.c.l.b16 %v734
    %v848 = vunpack.c.h.b16 %v734
    %v849 = vunpack.c.l.b16 %v735
    %v850 = vunpack.c.h.b16 %v735
    %v851 = vunpack.c.l.b16 %v736
    %v852 = vunpack.c.h.b16 %v736
    %v853 = vunpack.c.l.b16 %v737
    %v854 = vunpack.c.h.b16 %v737
    %v855 = vunpack.c.l.b16 %v738
    %v856 = vunpack.c.h.b16 %v738
    %v857 = vpack.c.b16 %v797, %v793
    %v858 = vpack.c.b16 %v798, %v794
    %v859 = vpack.c.b16 %v799, %v795
    %v860 = vpack.c.b16 %v800, %v796
    %v861 = vpack.c.b16 %v805, %v801
    %v862 = vpack.c.b16 %v806, %v802
    %v863 = vpack.c.b16 %v807, %v803
    %v864 = vpack.c.b16 %v808, %v804
    %v865 = vpack.c.b16 %v813, %v809
    %v866 = vpack.c.b16 %v814, %v810
    %v867 = vpack.c.b16 %v815, %v811
    %v868 = vpack.c.b16 %v816, %v812
    %v869 = vpack.c.b16 %v821, %v817
    %v870 = vpack.c.b16 %v822, %v818
    %v871 = vpack.c.b16 %v823, %v819
    %v872 = vpack.c.b16 %v824, %v820
    %v873 = vpack.c.b16 %v829, %v825
    %v874 = vpack.c.b16 %v830, %v826
    %v875 = vpack.c.b16 %v831, %v827
    %v876 = vpack.c.b16 %v832, %v828
    %v877 = vpack.c.b16 %v837, %v833
    %v878 = vpack.c.b16 %v838, %v834
    %v879 = vpack.c.b16 %v839, %v835
    %v880 = vpack.c.b16 %v840, %v836
    %v881 = vpack.c.b16 %v845, %v841
    %v882 = vpack.c.b16 %v846, %v842
    %v883 = vpack.c.b16 %v847, %v843
    %v884 = vpack.c.b16 %v848, %v844
    %v885 = vpack.c.b16 %v853, %v849
    %v886 = vpack.c.b16 %v854, %v850
    %v887 = vpack.c.b16 %v855, %v851
    %v888 = vpack.c.b16 %v856, %v852
    %921 = vmatprep.subr.bf16.mxu0 %v886
    %922 = vmatpush1.bf16.msra.mxu0 %v885
    %923 = vmatprep.subr.bf16.mxu0 %v882
    %924 = vmatpush1.bf16.msra.mxu0 %v881
    %925 = vmatprep.subr.bf16.mxu0 %v878
    %926 = vmatpush1.bf16.msra.mxu0 %v877
    %927 = vmatprep.subr.bf16.mxu0 %v874
    %928 = vmatpush1.bf16.msra.mxu0 %v873
    %929 = vmatprep.subr.bf16.mxu0 %v870
    %930 = vmatpush1.bf16.msra.mxu0 %v869
    %931 = vmatprep.subr.bf16.mxu0 %v866
    %932 = vmatpush1.bf16.msra.mxu0 %v865
    %933 = vmatprep.subr.bf16.mxu0 %v862
    %934 = vmatpush1.bf16.msra.mxu0 %v861
    %935 = vmatprep.subr.bf16.mxu0 %v858
    %936 = vmatpush1.bf16.msra.mxu0 %v857
    %937 = vmatprep.subr.bf16.mxu0 0
    %938 = vmatpush2.bf16.msra.mxu0 0
    %939 = vmatprep.subr.bf16.mxu0 0
    %940 = vmatpush2.bf16.msra.mxu0 0
    %941 = vmatprep.subr.bf16.mxu0 0
    %942 = vmatpush2.bf16.msra.mxu0 0
    %943 = vmatprep.subr.bf16.mxu0 0
    %944 = vmatpush2.bf16.msra.mxu0 0
    %945 = vmatprep.subr.bf16.mxu0 0
    %946 = vmatpush2.bf16.msra.mxu0 0
    %947 = vmatprep.subr.bf16.mxu0 0
    %948 = vmatpush2.bf16.msra.mxu0 0
    %949 = vmatprep.subr.bf16.mxu0 0
    %950 = vmatpush2.bf16.msra.mxu0 0
    %951 = vmatprep.subr.bf16.mxu0 0
    %952 = vmatpush2.bf16.msra.mxu0 0
    %953 = vmatprep.mubr.bf16.mxu0 0
    %954 = vmatmul.mubr.bf16.gmra.mxu0 %v706
    %v955 = vpop.f32.mrf.mxu0
    %v956 = vadd.f32 %v744, %v955
    %v957 = vpop.f32.mrf.mxu0
    %v958 = vadd.f32 %v748, %v957
    %v959 = vpop.f32.mrf.mxu0
    %v960 = vpop.f32.mrf.mxu0
    %961 = vdwg.mxu0
    %962 = vmatprep.subr.bf16.mxu0 %v888
    %963 = vmatpush1.bf16.msra.mxu0 %v887
    %964 = vmatprep.subr.bf16.mxu0 %v884
    %965 = vmatpush1.bf16.msra.mxu0 %v883
    %966 = vmatprep.subr.bf16.mxu0 %v880
    %967 = vmatpush1.bf16.msra.mxu0 %v879
    %968 = vmatprep.subr.bf16.mxu0 %v876
    %969 = vmatpush1.bf16.msra.mxu0 %v875
    %970 = vmatprep.subr.bf16.mxu0 %v872
    %971 = vmatpush1.bf16.msra.mxu0 %v871
    %972 = vmatprep.subr.bf16.mxu0 %v868
    %973 = vmatpush1.bf16.msra.mxu0 %v867
    %974 = vmatprep.subr.bf16.mxu0 %v864
    %975 = vmatpush1.bf16.msra.mxu0 %v863
    %976 = vmatprep.subr.bf16.mxu0 %v860
    %977 = vmatpush1.bf16.msra.mxu0 %v859
    %978 = vmatprep.subr.bf16.mxu0 0
    %979 = vmatpush2.bf16.msra.mxu0 0
    %980 = vmatprep.subr.bf16.mxu0 0
    %981 = vmatpush2.bf16.msra.mxu0 0
    %982 = vmatprep.subr.bf16.mxu0 0
    %983 = vmatpush2.bf16.msra.mxu0 0
    %984 = vmatprep.subr.bf16.mxu0 0
    %985 = vmatpush2.bf16.msra.mxu0 0
    %986 = vmatprep.subr.bf16.mxu0 0
    %987 = vmatpush2.bf16.msra.mxu0 0
    %988 = vmatprep.subr.bf16.mxu0 0
    %989 = vmatpush2.bf16.msra.mxu0 0
    %990 = vmatprep.subr.bf16.mxu0 0
    %991 = vmatpush2.bf16.msra.mxu0 0
    %992 = vmatprep.subr.bf16.mxu0 0
    %993 = vmatpush2.bf16.msra.mxu0 0
    %994 = vmatprep.mubr.bf16.mxu0 0
    %995 = vmatmul.mubr.bf16.gmra.mxu0 %v706
    %v996 = vpop.f32.mrf.mxu0
    %v997 = vadd.f32 %v752, %v996
    %v998 = vpop.f32.mrf.mxu0
    %v999 = vadd.f32 %v756, %v998
    %v1000 = vpop.f32.mrf.mxu0
    %v1001 = vpop.f32.mrf.mxu0
    %1002 = vdwg.mxu0
    %1003 = vst [vmem:[#allocation4 + $0x40] sm:$0xff] %v956
    %1004 = vst [vmem:[#allocation4 + $0x48] sm:$0xff] %v958
    %1005 = vst [vmem:[#allocation4 + $0x50] sm:$0xff] %v997
    %1006 = vst [vmem:[#allocation4 + $0x58] sm:$0xff] %v999
    %s1007 = scalar_lea.vmem [#allocation5], 12
    %v1008 = vld [vmem:[%s1007] sm:$0xf]
    %v1009 = vld [vmem:[#allocation8] sm:$0xff]
    %v1010 = vld [vmem:[#allocation8 + $0x8] sm:$0xff]
    %v1011 = vld [vmem:[#allocation8 + $0x10] sm:$0xff]
    %v1012 = vld [vmem:[#allocation8 + $0x18] sm:$0xff]
    %v1013 = vld [vmem:[#allocation8 + $0x20] sm:$0xff]
    %v1014 = vld [vmem:[#allocation8 + $0x28] sm:$0xff]
    %v1015 = vld [vmem:[#allocation8 + $0x30] sm:$0xff]
    %v1016 = vld [vmem:[#allocation8 + $0x38] sm:$0xff]
    %v1017 = vld [vmem:[#allocation8 + $0x40] sm:$0xff]
    %v1018 = vld [vmem:[#allocation8 + $0x48] sm:$0xff]
    %v1019 = vld [vmem:[#allocation8 + $0x50] sm:$0xff]
    %v1020 = vld [vmem:[#allocation8 + $0x58] sm:$0xff]
    %v1021 = vld [vmem:[#allocation8 + $0x60] sm:$0xff]
    %v1022 = vld [vmem:[#allocation8 + $0x68] sm:$0xff]
    %v1023 = vld [vmem:[#allocation8 + $0x70] sm:$0xff]
    %v1024 = vld [vmem:[#allocation8 + $0x78] sm:$0xff]
    %v1025 = vld [vmem:[#allocation8 + $0x80] sm:$0xff]
    %v1026 = vld [vmem:[#allocation8 + $0x88] sm:$0xff]
    %v1027 = vld [vmem:[#allocation8 + $0x90] sm:$0xff]
    %v1028 = vld [vmem:[#allocation8 + $0x98] sm:$0xff]
    %v1029 = vld [vmem:[#allocation8 + $0xa0] sm:$0xff]
    %v1030 = vld [vmem:[#allocation8 + $0xa8] sm:$0xff]
    %v1031 = vld [vmem:[#allocation8 + $0xb0] sm:$0xff]
    %v1032 = vld [vmem:[#allocation8 + $0xb8] sm:$0xff]
    %v1033 = vld [vmem:[#allocation8 + $0xc0] sm:$0xff]
    %v1034 = vld [vmem:[#allocation8 + $0xc8] sm:$0xff]
    %v1035 = vld [vmem:[#allocation8 + $0xd0] sm:$0xff]
    %v1036 = vld [vmem:[#allocation8 + $0xd8] sm:$0xff]
    %v1037 = vld [vmem:[#allocation8 + $0xe0] sm:$0xff]
    %v1038 = vld [vmem:[#allocation8 + $0xe8] sm:$0xff]
    %v1039 = vld [vmem:[#allocation8 + $0xf0] sm:$0xff]
    %v1040 = vld [vmem:[#allocation8 + $0xf8] sm:$0xff]
    %v1041 = vld [vmem:[#allocation11] sm:$0xf]
    %v1043 = vlaneseq
    %v1044 = vshrl.u32 %v1043, 7
    %v1045 = vsub.s32 0, %v1044
    %v1046 = vrot.slane %v1041, %v1045
    %v1047 = vlaneseq
    %v1048 = vshrl.u32 %v1047, 7
    %v1049 = vsub.s32 1, %v1048
    %v1050 = vrot.slane %v1041, %v1049
    %v1051 = vlaneseq
    %v1052 = vshrl.u32 %v1051, 7
    %v1053 = vsub.s32 2, %v1052
    %v1054 = vrot.slane %v1041, %v1053
    %v1055 = vlaneseq
    %v1056 = vshrl.u32 %v1055, 7
    %v1057 = vsub.s32 3, %v1056
    %v1058 = vrot.slane %v1041, %v1057
    %v1095 = vunpack.c.l.b16 %v1009
    %v1096 = vunpack.c.h.b16 %v1009
    %v1097 = vunpack.c.l.b16 %v1010
    %v1098 = vunpack.c.h.b16 %v1010
    %v1099 = vunpack.c.l.b16 %v1011
    %v1100 = vunpack.c.h.b16 %v1011
    %v1101 = vunpack.c.l.b16 %v1012
    %v1102 = vunpack.c.h.b16 %v1012
    %v1103 = vunpack.c.l.b16 %v1013
    %v1104 = vunpack.c.h.b16 %v1013
    %v1105 = vunpack.c.l.b16 %v1014
    %v1106 = vunpack.c.h.b16 %v1014
    %v1107 = vunpack.c.l.b16 %v1015
    %v1108 = vunpack.c.h.b16 %v1015
    %v1109 = vunpack.c.l.b16 %v1016
    %v1110 = vunpack.c.h.b16 %v1016
    %v1111 = vunpack.c.l.b16 %v1017
    %v1112 = vunpack.c.h.b16 %v1017
    %v1113 = vunpack.c.l.b16 %v1018
    %v1114 = vunpack.c.h.b16 %v1018
    %v1115 = vunpack.c.l.b16 %v1019
    %v1116 = vunpack.c.h.b16 %v1019
    %v1117 = vunpack.c.l.b16 %v1020
    %v1118 = vunpack.c.h.b16 %v1020
    %v1119 = vunpack.c.l.b16 %v1021
    %v1120 = vunpack.c.h.b16 %v1021
    %v1121 = vunpack.c.l.b16 %v1022
    %v1122 = vunpack.c.h.b16 %v1022
    %v1123 = vunpack.c.l.b16 %v1023
    %v1124 = vunpack.c.h.b16 %v1023
    %v1125 = vunpack.c.l.b16 %v1024
    %v1126 = vunpack.c.h.b16 %v1024
    %v1127 = vunpack.c.l.b16 %v1025
    %v1128 = vunpack.c.h.b16 %v1025
    %v1129 = vunpack.c.l.b16 %v1026
    %v1130 = vunpack.c.h.b16 %v1026
    %v1131 = vunpack.c.l.b16 %v1027
    %v1132 = vunpack.c.h.b16 %v1027
    %v1133 = vunpack.c.l.b16 %v1028
    %v1134 = vunpack.c.h.b16 %v1028
    %v1135 = vunpack.c.l.b16 %v1029
    %v1136 = vunpack.c.h.b16 %v1029
    %v1137 = vunpack.c.l.b16 %v1030
    %v1138 = vunpack.c.h.b16 %v1030
    %v1139 = vunpack.c.l.b16 %v1031
    %v1140 = vunpack.c.h.b16 %v1031
    %v1141 = vunpack.c.l.b16 %v1032
    %v1142 = vunpack.c.h.b16 %v1032
    %v1143 = vunpack.c.l.b16 %v1033
    %v1144 = vunpack.c.h.b16 %v1033
    %v1145 = vunpack.c.l.b16 %v1034
    %v1146 = vunpack.c.h.b16 %v1034
    %v1147 = vunpack.c.l.b16 %v1035
    %v1148 = vunpack.c.h.b16 %v1035
    %v1149 = vunpack.c.l.b16 %v1036
    %v1150 = vunpack.c.h.b16 %v1036
    %v1151 = vunpack.c.l.b16 %v1037
    %v1152 = vunpack.c.h.b16 %v1037
    %v1153 = vunpack.c.l.b16 %v1038
    %v1154 = vunpack.c.h.b16 %v1038
    %v1155 = vunpack.c.l.b16 %v1039
    %v1156 = vunpack.c.h.b16 %v1039
    %v1157 = vunpack.c.l.b16 %v1040
    %v1158 = vunpack.c.h.b16 %v1040
    %v1159 = vpack.c.b16 %v1099, %v1095
    %v1160 = vpack.c.b16 %v1100, %v1096
    %v1161 = vpack.c.b16 %v1101, %v1097
    %v1162 = vpack.c.b16 %v1102, %v1098
    %v1163 = vpack.c.b16 %v1107, %v1103
    %v1164 = vpack.c.b16 %v1108, %v1104
    %v1165 = vpack.c.b16 %v1109, %v1105
    %v1166 = vpack.c.b16 %v1110, %v1106
    %v1167 = vpack.c.b16 %v1115, %v1111
    %v1168 = vpack.c.b16 %v1116, %v1112
    %v1169 = vpack.c.b16 %v1117, %v1113
    %v1170 = vpack.c.b16 %v1118, %v1114
    %v1171 = vpack.c.b16 %v1123, %v1119
    %v1172 = vpack.c.b16 %v1124, %v1120
    %v1173 = vpack.c.b16 %v1125, %v1121
    %v1174 = vpack.c.b16 %v1126, %v1122
    %v1175 = vpack.c.b16 %v1131, %v1127
    %v1176 = vpack.c.b16 %v1132, %v1128
    %v1177 = vpack.c.b16 %v1133, %v1129
    %v1178 = vpack.c.b16 %v1134, %v1130
    %v1179 = vpack.c.b16 %v1139, %v1135
    %v1180 = vpack.c.b16 %v1140, %v1136
    %v1181 = vpack.c.b16 %v1141, %v1137
    %v1182 = vpack.c.b16 %v1142, %v1138
    %v1183 = vpack.c.b16 %v1147, %v1143
    %v1184 = vpack.c.b16 %v1148, %v1144
    %v1185 = vpack.c.b16 %v1149, %v1145
    %v1186 = vpack.c.b16 %v1150, %v1146
    %v1187 = vpack.c.b16 %v1155, %v1151
    %v1188 = vpack.c.b16 %v1156, %v1152
    %v1189 = vpack.c.b16 %v1157, %v1153
    %v1190 = vpack.c.b16 %v1158, %v1154
    %1223 = vmatprep.subr.bf16.mxu0 %v1188
    %1224 = vmatpush1.bf16.msra.mxu0 %v1187
    %1225 = vmatprep.subr.bf16.mxu0 %v1184
    %1226 = vmatpush1.bf16.msra.mxu0 %v1183
    %1227 = vmatprep.subr.bf16.mxu0 %v1180
    %1228 = vmatpush1.bf16.msra.mxu0 %v1179
    %1229 = vmatprep.subr.bf16.mxu0 %v1176
    %1230 = vmatpush1.bf16.msra.mxu0 %v1175
    %1231 = vmatprep.subr.bf16.mxu0 %v1172
    %1232 = vmatpush1.bf16.msra.mxu0 %v1171
    %1233 = vmatprep.subr.bf16.mxu0 %v1168
    %1234 = vmatpush1.bf16.msra.mxu0 %v1167
    %1235 = vmatprep.subr.bf16.mxu0 %v1164
    %1236 = vmatpush1.bf16.msra.mxu0 %v1163
    %1237 = vmatprep.subr.bf16.mxu0 %v1160
    %1238 = vmatpush1.bf16.msra.mxu0 %v1159
    %1239 = vmatprep.subr.bf16.mxu0 0
    %1240 = vmatpush2.bf16.msra.mxu0 0
    %1241 = vmatprep.subr.bf16.mxu0 0
    %1242 = vmatpush2.bf16.msra.mxu0 0
    %1243 = vmatprep.subr.bf16.mxu0 0
    %1244 = vmatpush2.bf16.msra.mxu0 0
    %1245 = vmatprep.subr.bf16.mxu0 0
    %1246 = vmatpush2.bf16.msra.mxu0 0
    %1247 = vmatprep.subr.bf16.mxu0 0
    %1248 = vmatpush2.bf16.msra.mxu0 0
    %1249 = vmatprep.subr.bf16.mxu0 0
    %1250 = vmatpush2.bf16.msra.mxu0 0
    %1251 = vmatprep.subr.bf16.mxu0 0
    %1252 = vmatpush2.bf16.msra.mxu0 0
    %1253 = vmatprep.subr.bf16.mxu0 0
    %1254 = vmatpush2.bf16.msra.mxu0 0
    %1255 = vmatprep.mubr.bf16.mxu0 0
    %1256 = vmatmul.mubr.bf16.gmra.mxu0 %v1008
    %v1257 = vpop.f32.mrf.mxu0
    %v1258 = vadd.f32 %v1046, %v1257
    %v1259 = vpop.f32.mrf.mxu0
    %v1260 = vadd.f32 %v1050, %v1259
    %v1261 = vpop.f32.mrf.mxu0
    %v1262 = vpop.f32.mrf.mxu0
    %1263 = vdwg.mxu0
    %1264 = vmatprep.subr.bf16.mxu0 %v1190
    %1265 = vmatpush1.bf16.msra.mxu0 %v1189
    %1266 = vmatprep.subr.bf16.mxu0 %v1186
    %1267 = vmatpush1.bf16.msra.mxu0 %v1185
    %1268 = vmatprep.subr.bf16.mxu0 %v1182
    %1269 = vmatpush1.bf16.msra.mxu0 %v1181
    %1270 = vmatprep.subr.bf16.mxu0 %v1178
    %1271 = vmatpush1.bf16.msra.mxu0 %v1177
    %1272 = vmatprep.subr.bf16.mxu0 %v1174
    %1273 = vmatpush1.bf16.msra.mxu0 %v1173
    %1274 = vmatprep.subr.bf16.mxu0 %v1170
    %1275 = vmatpush1.bf16.msra.mxu0 %v1169
    %1276 = vmatprep.subr.bf16.mxu0 %v1166
    %1277 = vmatpush1.bf16.msra.mxu0 %v1165
    %1278 = vmatprep.subr.bf16.mxu0 %v1162
    %1279 = vmatpush1.bf16.msra.mxu0 %v1161
    %1280 = vmatprep.subr.bf16.mxu0 0
    %1281 = vmatpush2.bf16.msra.mxu0 0
    %1282 = vmatprep.subr.bf16.mxu0 0
    %1283 = vmatpush2.bf16.msra.mxu0 0
    %1284 = vmatprep.subr.bf16.mxu0 0
    %1285 = vmatpush2.bf16.msra.mxu0 0
    %1286 = vmatprep.subr.bf16.mxu0 0
    %1287 = vmatpush2.bf16.msra.mxu0 0
    %1288 = vmatprep.subr.bf16.mxu0 0
    %1289 = vmatpush2.bf16.msra.mxu0 0
    %1290 = vmatprep.subr.bf16.mxu0 0
    %1291 = vmatpush2.bf16.msra.mxu0 0
    %1292 = vmatprep.subr.bf16.mxu0 0
    %1293 = vmatpush2.bf16.msra.mxu0 0
    %1294 = vmatprep.subr.bf16.mxu0 0
    %1295 = vmatpush2.bf16.msra.mxu0 0
    %1296 = vmatprep.mubr.bf16.mxu0 0
    %1297 = vmatmul.mubr.bf16.gmra.mxu0 %v1008
    %v1298 = vpop.f32.mrf.mxu0
    %v1299 = vadd.f32 %v1054, %v1298
    %v1300 = vpop.f32.mrf.mxu0
    %v1301 = vadd.f32 %v1058, %v1300
    %v1302 = vpop.f32.mrf.mxu0
    %v1303 = vpop.f32.mrf.mxu0
    %1304 = vdwg.mxu0
    %1305 = vst [vmem:[#allocation4 + $0x60] sm:$0xff] %v1258
    %1306 = vst [vmem:[#allocation4 + $0x68] sm:$0xff] %v1260
    %1307 = vst [vmem:[#allocation4 + $0x70] sm:$0xff] %v1299
    %1308 = vst [vmem:[#allocation4 + $0x78] sm:$0xff] %v1301
    %s1309 = scalar_lea.vmem [#allocation5], 16
    %v1310 = vld [vmem:[%s1309] sm:$0xf]
    %v1311 = vld [vmem:[#allocation8] sm:$0xff]
    %v1312 = vld [vmem:[#allocation8 + $0x8] sm:$0xff]
    %v1313 = vld [vmem:[#allocation8 + $0x10] sm:$0xff]
    %v1314 = vld [vmem:[#allocation8 + $0x18] sm:$0xff]
    %v1315 = vld [vmem:[#allocation8 + $0x20] sm:$0xff]
    %v1316 = vld [vmem:[#allocation8 + $0x28] sm:$0xff]
    %v1317 = vld [vmem:[#allocation8 + $0x30] sm:$0xff]
    %v1318 = vld [vmem:[#allocation8 + $0x38] sm:$0xff]
    %v1319 = vld [vmem:[#allocation8 + $0x40] sm:$0xff]
    %v1320 = vld [vmem:[#allocation8 + $0x48] sm:$0xff]
    %v1321 = vld [vmem:[#allocation8 + $0x50] sm:$0xff]
    %v1322 = vld [vmem:[#allocation8 + $0x58] sm:$0xff]
    %v1323 = vld [vmem:[#allocation8 + $0x60] sm:$0xff]
    %v1324 = vld [vmem:[#allocation8 + $0x68] sm:$0xff]
    %v1325 = vld [vmem:[#allocation8 + $0x70] sm:$0xff]
    %v1326 = vld [vmem:[#allocation8 + $0x78] sm:$0xff]
    %v1327 = vld [vmem:[#allocation8 + $0x80] sm:$0xff]
    %v1328 = vld [vmem:[#allocation8 + $0x88] sm:$0xff]
    %v1329 = vld [vmem:[#allocation8 + $0x90] sm:$0xff]
    %v1330 = vld [vmem:[#allocation8 + $0x98] sm:$0xff]
    %v1331 = vld [vmem:[#allocation8 + $0xa0] sm:$0xff]
    %v1332 = vld [vmem:[#allocation8 + $0xa8] sm:$0xff]
    %v1333 = vld [vmem:[#allocation8 + $0xb0] sm:$0xff]
    %v1334 = vld [vmem:[#allocation8 + $0xb8] sm:$0xff]
    %v1335 = vld [vmem:[#allocation8 + $0xc0] sm:$0xff]
    %v1336 = vld [vmem:[#allocation8 + $0xc8] sm:$0xff]
    %v1337 = vld [vmem:[#allocation8 + $0xd0] sm:$0xff]
    %v1338 = vld [vmem:[#allocation8 + $0xd8] sm:$0xff]
    %v1339 = vld [vmem:[#allocation8 + $0xe0] sm:$0xff]
    %v1340 = vld [vmem:[#allocation8 + $0xe8] sm:$0xff]
    %v1341 = vld [vmem:[#allocation8 + $0xf0] sm:$0xff]
    %v1342 = vld [vmem:[#allocation8 + $0xf8] sm:$0xff]
    %v1343 = vld [vmem:[#allocation11] sm:$0xf]
    %v1345 = vlaneseq
    %v1346 = vshrl.u32 %v1345, 7
    %v1347 = vsub.s32 0, %v1346
    %v1348 = vrot.slane %v1343, %v1347
    %v1349 = vlaneseq
    %v1350 = vshrl.u32 %v1349, 7
    %v1351 = vsub.s32 1, %v1350
    %v1352 = vrot.slane %v1343, %v1351
    %v1353 = vlaneseq
    %v1354 = vshrl.u32 %v1353, 7
    %v1355 = vsub.s32 2, %v1354
    %v1356 = vrot.slane %v1343, %v1355
    %v1357 = vlaneseq
    %v1358 = vshrl.u32 %v1357, 7
    %v1359 = vsub.s32 3, %v1358
    %v1360 = vrot.slane %v1343, %v1359
    %v1397 = vunpack.c.l.b16 %v1311
    %v1398 = vunpack.c.h.b16 %v1311
    %v1399 = vunpack.c.l.b16 %v1312
    %v1400 = vunpack.c.h.b16 %v1312
    %v1401 = vunpack.c.l.b16 %v1313
    %v1402 = vunpack.c.h.b16 %v1313
    %v1403 = vunpack.c.l.b16 %v1314
    %v1404 = vunpack.c.h.b16 %v1314
    %v1405 = vunpack.c.l.b16 %v1315
    %v1406 = vunpack.c.h.b16 %v1315
    %v1407 = vunpack.c.l.b16 %v1316
    %v1408 = vunpack.c.h.b16 %v1316
    %v1409 = vunpack.c.l.b16 %v1317
    %v1410 = vunpack.c.h.b16 %v1317
    %v1411 = vunpack.c.l.b16 %v1318
    %v1412 = vunpack.c.h.b16 %v1318
    %v1413 = vunpack.c.l.b16 %v1319
    %v1414 = vunpack.c.h.b16 %v1319
    %v1415 = vunpack.c.l.b16 %v1320
    %v1416 = vunpack.c.h.b16 %v1320
    %v1417 = vunpack.c.l.b16 %v1321
    %v1418 = vunpack.c.h.b16 %v1321
    %v1419 = vunpack.c.l.b16 %v1322
    %v1420 = vunpack.c.h.b16 %v1322
    %v1421 = vunpack.c.l.b16 %v1323
    %v1422 = vunpack.c.h.b16 %v1323
    %v1423 = vunpack.c.l.b16 %v1324
    %v1424 = vunpack.c.h.b16 %v1324
    %v1425 = vunpack.c.l.b16 %v1325
    %v1426 = vunpack.c.h.b16 %v1325
    %v1427 = vunpack.c.l.b16 %v1326
    %v1428 = vunpack.c.h.b16 %v1326
    %v1429 = vunpack.c.l.b16 %v1327
    %v1430 = vunpack.c.h.b16 %v1327
    %v1431 = vunpack.c.l.b16 %v1328
    %v1432 = vunpack.c.h.b16 %v1328
    %v1433 = vunpack.c.l.b16 %v1329
    %v1434 = vunpack.c.h.b16 %v1329
    %v1435 = vunpack.c.l.b16 %v1330
    %v1436 = vunpack.c.h.b16 %v1330
    %v1437 = vunpack.c.l.b16 %v1331
    %v1438 = vunpack.c.h.b16 %v1331
    %v1439 = vunpack.c.l.b16 %v1332
    %v1440 = vunpack.c.h.b16 %v1332
    %v1441 = vunpack.c.l.b16 %v1333
    %v1442 = vunpack.c.h.b16 %v1333
    %v1443 = vunpack.c.l.b16 %v1334
    %v1444 = vunpack.c.h.b16 %v1334
    %v1445 = vunpack.c.l.b16 %v1335
    %v1446 = vunpack.c.h.b16 %v1335
    %v1447 = vunpack.c.l.b16 %v1336
    %v1448 = vunpack.c.h.b16 %v1336
    %v1449 = vunpack.c.l.b16 %v1337
    %v1450 = vunpack.c.h.b16 %v1337
    %v1451 = vunpack.c.l.b16 %v1338
    %v1452 = vunpack.c.h.b16 %v1338
    %v1453 = vunpack.c.l.b16 %v1339
    %v1454 = vunpack.c.h.b16 %v1339
    %v1455 = vunpack.c.l.b16 %v1340
    %v1456 = vunpack.c.h.b16 %v1340
    %v1457 = vunpack.c.l.b16 %v1341
    %v1458 = vunpack.c.h.b16 %v1341
    %v1459 = vunpack.c.l.b16 %v1342
    %v1460 = vunpack.c.h.b16 %v1342
    %v1461 = vpack.c.b16 %v1401, %v1397
    %v1462 = vpack.c.b16 %v1402, %v1398
    %v1463 = vpack.c.b16 %v1403, %v1399
    %v1464 = vpack.c.b16 %v1404, %v1400
    %v1465 = vpack.c.b16 %v1409, %v1405
    %v1466 = vpack.c.b16 %v1410, %v1406
    %v1467 = vpack.c.b16 %v1411, %v1407
    %v1468 = vpack.c.b16 %v1412, %v1408
    %v1469 = vpack.c.b16 %v1417, %v1413
    %v1470 = vpack.c.b16 %v1418, %v1414
    %v1471 = vpack.c.b16 %v1419, %v1415
    %v1472 = vpack.c.b16 %v1420, %v1416
    %v1473 = vpack.c.b16 %v1425, %v1421
    %v1474 = vpack.c.b16 %v1426, %v1422
    %v1475 = vpack.c.b16 %v1427, %v1423
    %v1476 = vpack.c.b16 %v1428, %v1424
    %v1477 = vpack.c.b16 %v1433, %v1429
    %v1478 = vpack.c.b16 %v1434, %v1430
    %v1479 = vpack.c.b16 %v1435, %v1431
    %v1480 = vpack.c.b16 %v1436, %v1432
    %v1481 = vpack.c.b16 %v1441, %v1437
    %v1482 = vpack.c.b16 %v1442, %v1438
    %v1483 = vpack.c.b16 %v1443, %v1439
    %v1484 = vpack.c.b16 %v1444, %v1440
    %v1485 = vpack.c.b16 %v1449, %v1445
    %v1486 = vpack.c.b16 %v1450, %v1446
    %v1487 = vpack.c.b16 %v1451, %v1447
    %v1488 = vpack.c.b16 %v1452, %v1448
    %v1489 = vpack.c.b16 %v1457, %v1453
    %v1490 = vpack.c.b16 %v1458, %v1454
    %v1491 = vpack.c.b16 %v1459, %v1455
    %v1492 = vpack.c.b16 %v1460, %v1456
    %1525 = vmatprep.subr.bf16.mxu0 %v1490
    %1526 = vmatpush1.bf16.msra.mxu0 %v1489
    %1527 = vmatprep.subr.bf16.mxu0 %v1486
    %1528 = vmatpush1.bf16.msra.mxu0 %v1485
    %1529 = vmatprep.subr.bf16.mxu0 %v1482
    %1530 = vmatpush1.bf16.msra.mxu0 %v1481
    %1531 = vmatprep.subr.bf16.mxu0 %v1478
    %1532 = vmatpush1.bf16.msra.mxu0 %v1477
    %1533 = vmatprep.subr.bf16.mxu0 %v1474
    %1534 = vmatpush1.bf16.msra.mxu0 %v1473
    %1535 = vmatprep.subr.bf16.mxu0 %v1470
    %1536 = vmatpush1.bf16.msra.mxu0 %v1469
    %1537 = vmatprep.subr.bf16.mxu0 %v1466
    %1538 = vmatpush1.bf16.msra.mxu0 %v1465
    %1539 = vmatprep.subr.bf16.mxu0 %v1462
    %1540 = vmatpush1.bf16.msra.mxu0 %v1461
    %1541 = vmatprep.subr.bf16.mxu0 0
    %1542 = vmatpush2.bf16.msra.mxu0 0
    %1543 = vmatprep.subr.bf16.mxu0 0
    %1544 = vmatpush2.bf16.msra.mxu0 0
    %1545 = vmatprep.subr.bf16.mxu0 0
    %1546 = vmatpush2.bf16.msra.mxu0 0
    %1547 = vmatprep.subr.bf16.mxu0 0
    %1548 = vmatpush2.bf16.msra.mxu0 0
    %1549 = vmatprep.subr.bf16.mxu0 0
    %1550 = vmatpush2.bf16.msra.mxu0 0
    %1551 = vmatprep.subr.bf16.mxu0 0
    %1552 = vmatpush2.bf16.msra.mxu0 0
    %1553 = vmatprep.subr.bf16.mxu0 0
    %1554 = vmatpush2.bf16.msra.mxu0 0
    %1555 = vmatprep.subr.bf16.mxu0 0
    %1556 = vmatpush2.bf16.msra.mxu0 0
    %1557 = vmatprep.mubr.bf16.mxu0 0
    %1558 = vmatmul.mubr.bf16.gmra.mxu0 %v1310
    %v1559 = vpop.f32.mrf.mxu0
    %v1560 = vadd.f32 %v1348, %v1559
    %v1561 = vpop.f32.mrf.mxu0
    %v1562 = vadd.f32 %v1352, %v1561
    %v1563 = vpop.f32.mrf.mxu0
    %v1564 = vpop.f32.mrf.mxu0
    %1565 = vdwg.mxu0
    %1566 = vmatprep.subr.bf16.mxu0 %v1492
    %1567 = vmatpush1.bf16.msra.mxu0 %v1491
    %1568 = vmatprep.subr.bf16.mxu0 %v1488
    %1569 = vmatpush1.bf16.msra.mxu0 %v1487
    %1570 = vmatprep.subr.bf16.mxu0 %v1484
    %1571 = vmatpush1.bf16.msra.mxu0 %v1483
    %1572 = vmatprep.subr.bf16.mxu0 %v1480
    %1573 = vmatpush1.bf16.msra.mxu0 %v1479
    %1574 = vmatprep.subr.bf16.mxu0 %v1476
    %1575 = vmatpush1.bf16.msra.mxu0 %v1475
    %1576 = vmatprep.subr.bf16.mxu0 %v1472
    %1577 = vmatpush1.bf16.msra.mxu0 %v1471
    %1578 = vmatprep.subr.bf16.mxu0 %v1468
    %1579 = vmatpush1.bf16.msra.mxu0 %v1467
    %1580 = vmatprep.subr.bf16.mxu0 %v1464
    %1581 = vmatpush1.bf16.msra.mxu0 %v1463
    %1582 = vmatprep.subr.bf16.mxu0 0
    %1583 = vmatpush2.bf16.msra.mxu0 0
    %1584 = vmatprep.subr.bf16.mxu0 0
    %1585 = vmatpush2.bf16.msra.mxu0 0
    %1586 = vmatprep.subr.bf16.mxu0 0
    %1587 = vmatpush2.bf16.msra.mxu0 0
    %1588 = vmatprep.subr.bf16.mxu0 0
    %1589 = vmatpush2.bf16.msra.mxu0 0
    %1590 = vmatprep.subr.bf16.mxu0 0
    %1591 = vmatpush2.bf16.msra.mxu0 0
    %1592 = vmatprep.subr.bf16.mxu0 0
    %1593 = vmatpush2.bf16.msra.mxu0 0
    %1594 = vmatprep.subr.bf16.mxu0 0
    %1595 = vmatpush2.bf16.msra.mxu0 0
    %1596 = vmatprep.subr.bf16.mxu0 0
    %1597 = vmatpush2.bf16.msra.mxu0 0
    %1598 = vmatprep.mubr.bf16.mxu0 0
    %1599 = vmatmul.mubr.bf16.gmra.mxu0 %v1310
    %v1600 = vpop.f32.mrf.mxu0
    %v1601 = vadd.f32 %v1356, %v1600
    %v1602 = vpop.f32.mrf.mxu0
    %v1603 = vadd.f32 %v1360, %v1602
    %v1604 = vpop.f32.mrf.mxu0
    %v1605 = vpop.f32.mrf.mxu0
    %1606 = vdwg.mxu0
    %1607 = vst [vmem:[#allocation4 + $0x80] sm:$0xff] %v1560
    %1608 = vst [vmem:[#allocation4 + $0x88] sm:$0xff] %v1562
    %1609 = vst [vmem:[#allocation4 + $0x90] sm:$0xff] %v1601
    %1610 = vst [vmem:[#allocation4 + $0x98] sm:$0xff] %v1603
    %s1611 = scalar_lea.vmem [#allocation5], 20
    %v1612 = vld [vmem:[%s1611] sm:$0xf]
    %v1613 = vld [vmem:[#allocation8] sm:$0xff]
    %v1614 = vld [vmem:[#allocation8 + $0x8] sm:$0xff]
    %v1615 = vld [vmem:[#allocation8 + $0x10] sm:$0xff]
    %v1616 = vld [vmem:[#allocation8 + $0x18] sm:$0xff]
    %v1617 = vld [vmem:[#allocation8 + $0x20] sm:$0xff]
    %v1618 = vld [vmem:[#allocation8 + $0x28] sm:$0xff]
    %v1619 = vld [vmem:[#allocation8 + $0x30] sm:$0xff]
    %v1620 = vld [vmem:[#allocation8 + $0x38] sm:$0xff]
    %v1621 = vld [vmem:[#allocation8 + $0x40] sm:$0xff]
    %v1622 = vld [vmem:[#allocation8 + $0x48] sm:$0xff]
    %v1623 = vld [vmem:[#allocation8 + $0x50] sm:$0xff]
    %v1624 = vld [vmem:[#allocation8 + $0x58] sm:$0xff]
    %v1625 = vld [vmem:[#allocation8 + $0x60] sm:$0xff]
    %v1626 = vld [vmem:[#allocation8 + $0x68] sm:$0xff]
    %v1627 = vld [vmem:[#allocation8 + $0x70] sm:$0xff]
    %v1628 = vld [vmem:[#allocation8 + $0x78] sm:$0xff]
    %v1629 = vld [vmem:[#allocation8 + $0x80] sm:$0xff]
    %v1630 = vld [vmem:[#allocation8 + $0x88] sm:$0xff]
    %v1631 = vld [vmem:[#allocation8 + $0x90] sm:$0xff]
    %v1632 = vld [vmem:[#allocation8 + $0x98] sm:$0xff]
    %v1633 = vld [vmem:[#allocation8 + $0xa0] sm:$0xff]
    %v1634 = vld [vmem:[#allocation8 + $0xa8] sm:$0xff]
    %v1635 = vld [vmem:[#allocation8 + $0xb0] sm:$0xff]
    %v1636 = vld [vmem:[#allocation8 + $0xb8] sm:$0xff]
    %v1637 = vld [vmem:[#allocation8 + $0xc0] sm:$0xff]
    %v1638 = vld [vmem:[#allocation8 + $0xc8] sm:$0xff]
    %v1639 = vld [vmem:[#allocation8 + $0xd0] sm:$0xff]
    %v1640 = vld [vmem:[#allocation8 + $0xd8] sm:$0xff]
    %v1641 = vld [vmem:[#allocation8 + $0xe0] sm:$0xff]
    %v1642 = vld [vmem:[#allocation8 + $0xe8] sm:$0xff]
    %v1643 = vld [vmem:[#allocation8 + $0xf0] sm:$0xff]
    %v1644 = vld [vmem:[#allocation8 + $0xf8] sm:$0xff]
    %v1645 = vld [vmem:[#allocation11] sm:$0xf]
    %v1647 = vlaneseq
    %v1648 = vshrl.u32 %v1647, 7
    %v1649 = vsub.s32 0, %v1648
    %v1650 = vrot.slane %v1645, %v1649
    %v1651 = vlaneseq
    %v1652 = vshrl.u32 %v1651, 7
    %v1653 = vsub.s32 1, %v1652
    %v1654 = vrot.slane %v1645, %v1653
    %v1655 = vlaneseq
    %v1656 = vshrl.u32 %v1655, 7
    %v1657 = vsub.s32 2, %v1656
    %v1658 = vrot.slane %v1645, %v1657
    %v1659 = vlaneseq
    %v1660 = vshrl.u32 %v1659, 7
    %v1661 = vsub.s32 3, %v1660
    %v1662 = vrot.slane %v1645, %v1661
    %v1699 = vunpack.c.l.b16 %v1613
    %v1700 = vunpack.c.h.b16 %v1613
    %v1701 = vunpack.c.l.b16 %v1614
    %v1702 = vunpack.c.h.b16 %v1614
    %v1703 = vunpack.c.l.b16 %v1615
    %v1704 = vunpack.c.h.b16 %v1615
    %v1705 = vunpack.c.l.b16 %v1616
    %v1706 = vunpack.c.h.b16 %v1616
    %v1707 = vunpack.c.l.b16 %v1617
    %v1708 = vunpack.c.h.b16 %v1617
    %v1709 = vunpack.c.l.b16 %v1618
    %v1710 = vunpack.c.h.b16 %v1618
    %v1711 = vunpack.c.l.b16 %v1619
    %v1712 = vunpack.c.h.b16 %v1619
    %v1713 = vunpack.c.l.b16 %v1620
    %v1714 = vunpack.c.h.b16 %v1620
    %v1715 = vunpack.c.l.b16 %v1621
    %v1716 = vunpack.c.h.b16 %v1621
    %v1717 = vunpack.c.l.b16 %v1622
    %v1718 = vunpack.c.h.b16 %v1622
    %v1719 = vunpack.c.l.b16 %v1623
    %v1720 = vunpack.c.h.b16 %v1623
    %v1721 = vunpack.c.l.b16 %v1624
    %v1722 = vunpack.c.h.b16 %v1624
    %v1723 = vunpack.c.l.b16 %v1625
    %v1724 = vunpack.c.h.b16 %v1625
    %v1725 = vunpack.c.l.b16 %v1626
    %v1726 = vunpack.c.h.b16 %v1626
    %v1727 = vunpack.c.l.b16 %v1627
    %v1728 = vunpack.c.h.b16 %v1627
    %v1729 = vunpack.c.l.b16 %v1628
    %v1730 = vunpack.c.h.b16 %v1628
    %v1731 = vunpack.c.l.b16 %v1629
    %v1732 = vunpack.c.h.b16 %v1629
    %v1733 = vunpack.c.l.b16 %v1630
    %v1734 = vunpack.c.h.b16 %v1630
    %v1735 = vunpack.c.l.b16 %v1631
    %v1736 = vunpack.c.h.b16 %v1631
    %v1737 = vunpack.c.l.b16 %v1632
    %v1738 = vunpack.c.h.b16 %v1632
    %v1739 = vunpack.c.l.b16 %v1633
    %v1740 = vunpack.c.h.b16 %v1633
    %v1741 = vunpack.c.l.b16 %v1634
    %v1742 = vunpack.c.h.b16 %v1634
    %v1743 = vunpack.c.l.b16 %v1635
    %v1744 = vunpack.c.h.b16 %v1635
    %v1745 = vunpack.c.l.b16 %v1636
    %v1746 = vunpack.c.h.b16 %v1636
    %v1747 = vunpack.c.l.b16 %v1637
    %v1748 = vunpack.c.h.b16 %v1637
    %v1749 = vunpack.c.l.b16 %v1638
    %v1750 = vunpack.c.h.b16 %v1638
    %v1751 = vunpack.c.l.b16 %v1639
    %v1752 = vunpack.c.h.b16 %v1639
    %v1753 = vunpack.c.l.b16 %v1640
    %v1754 = vunpack.c.h.b16 %v1640
    %v1755 = vunpack.c.l.b16 %v1641
    %v1756 = vunpack.c.h.b16 %v1641
    %v1757 = vunpack.c.l.b16 %v1642
    %v1758 = vunpack.c.h.b16 %v1642
    %v1759 = vunpack.c.l.b16 %v1643
    %v1760 = vunpack.c.h.b16 %v1643
    %v1761 = vunpack.c.l.b16 %v1644
    %v1762 = vunpack.c.h.b16 %v1644
    %v1763 = vpack.c.b16 %v1703, %v1699
    %v1764 = vpack.c.b16 %v1704, %v1700
    %v1765 = vpack.c.b16 %v1705, %v1701
    %v1766 = vpack.c.b16 %v1706, %v1702
    %v1767 = vpack.c.b16 %v1711, %v1707
    %v1768 = vpack.c.b16 %v1712, %v1708
    %v1769 = vpack.c.b16 %v1713, %v1709
    %v1770 = vpack.c.b16 %v1714, %v1710
    %v1771 = vpack.c.b16 %v1719, %v1715
    %v1772 = vpack.c.b16 %v1720, %v1716
    %v1773 = vpack.c.b16 %v1721, %v1717
    %v1774 = vpack.c.b16 %v1722, %v1718
    %v1775 = vpack.c.b16 %v1727, %v1723
    %v1776 = vpack.c.b16 %v1728, %v1724
    %v1777 = vpack.c.b16 %v1729, %v1725
    %v1778 = vpack.c.b16 %v1730, %v1726
    %v1779 = vpack.c.b16 %v1735, %v1731
    %v1780 = vpack.c.b16 %v1736, %v1732
    %v1781 = vpack.c.b16 %v1737, %v1733
    %v1782 = vpack.c.b16 %v1738, %v1734
    %v1783 = vpack.c.b16 %v1743, %v1739
    %v1784 = vpack.c.b16 %v1744, %v1740
    %v1785 = vpack.c.b16 %v1745, %v1741
    %v1786 = vpack.c.b16 %v1746, %v1742
    %v1787 = vpack.c.b16 %v1751, %v1747
    %v1788 = vpack.c.b16 %v1752, %v1748
    %v1789 = vpack.c.b16 %v1753, %v1749
    %v1790 = vpack.c.b16 %v1754, %v1750
    %v1791 = vpack.c.b16 %v1759, %v1755
    %v1792 = vpack.c.b16 %v1760, %v1756
    %v1793 = vpack.c.b16 %v1761, %v1757
    %v1794 = vpack.c.b16 %v1762, %v1758
    %1827 = vmatprep.subr.bf16.mxu0 %v1792
    %1828 = vmatpush1.bf16.msra.mxu0 %v1791
    %1829 = vmatprep.subr.bf16.mxu0 %v1788
    %1830 = vmatpush1.bf16.msra.mxu0 %v1787
    %1831 = vmatprep.subr.bf16.mxu0 %v1784
    %1832 = vmatpush1.bf16.msra.mxu0 %v1783
    %1833 = vmatprep.subr.bf16.mxu0 %v1780
    %1834 = vmatpush1.bf16.msra.mxu0 %v1779
    %1835 = vmatprep.subr.bf16.mxu0 %v1776
    %1836 = vmatpush1.bf16.msra.mxu0 %v1775
    %1837 = vmatprep.subr.bf16.mxu0 %v1772
    %1838 = vmatpush1.bf16.msra.mxu0 %v1771
    %1839 = vmatprep.subr.bf16.mxu0 %v1768
    %1840 = vmatpush1.bf16.msra.mxu0 %v1767
    %1841 = vmatprep.subr.bf16.mxu0 %v1764
    %1842 = vmatpush1.bf16.msra.mxu0 %v1763
    %1843 = vmatprep.subr.bf16.mxu0 0
    %1844 = vmatpush2.bf16.msra.mxu0 0
    %1845 = vmatprep.subr.bf16.mxu0 0
    %1846 = vmatpush2.bf16.msra.mxu0 0
    %1847 = vmatprep.subr.bf16.mxu0 0
    %1848 = vmatpush2.bf16.msra.mxu0 0
    %1849 = vmatprep.subr.bf16.mxu0 0
    %1850 = vmatpush2.bf16.msra.mxu0 0
    %1851 = vmatprep.subr.bf16.mxu0 0
    %1852 = vmatpush2.bf16.msra.mxu0 0
    %1853 = vmatprep.subr.bf16.mxu0 0
    %1854 = vmatpush2.bf16.msra.mxu0 0
    %1855 = vmatprep.subr.bf16.mxu0 0
    %1856 = vmatpush2.bf16.msra.mxu0 0
    %1857 = vmatprep.subr.bf16.mxu0 0
    %1858 = vmatpush2.bf16.msra.mxu0 0
    %1859 = vmatprep.mubr.bf16.mxu0 0
    %1860 = vmatmul.mubr.bf16.gmra.mxu0 %v1612
    %v1861 = vpop.f32.mrf.mxu0
    %v1862 = vadd.f32 %v1650, %v1861
    %v1863 = vpop.f32.mrf.mxu0
    %v1864 = vadd.f32 %v1654, %v1863
    %v1865 = vpop.f32.mrf.mxu0
    %v1866 = vpop.f32.mrf.mxu0
    %1867 = vdwg.mxu0
    %1868 = vmatprep.subr.bf16.mxu0 %v1794
    %1869 = vmatpush1.bf16.msra.mxu0 %v1793
    %1870 = vmatprep.subr.bf16.mxu0 %v1790
    %1871 = vmatpush1.bf16.msra.mxu0 %v1789
    %1872 = vmatprep.subr.bf16.mxu0 %v1786
    %1873 = vmatpush1.bf16.msra.mxu0 %v1785
    %1874 = vmatprep.subr.bf16.mxu0 %v1782
    %1875 = vmatpush1.bf16.msra.mxu0 %v1781
    %1876 = vmatprep.subr.bf16.mxu0 %v1778
    %1877 = vmatpush1.bf16.msra.mxu0 %v1777
    %1878 = vmatprep.subr.bf16.mxu0 %v1774
    %1879 = vmatpush1.bf16.msra.mxu0 %v1773
    %1880 = vmatprep.subr.bf16.mxu0 %v1770
    %1881 = vmatpush1.bf16.msra.mxu0 %v1769
    %1882 = vmatprep.subr.bf16.mxu0 %v1766
    %1883 = vmatpush1.bf16.msra.mxu0 %v1765
    %1884 = vmatprep.subr.bf16.mxu0 0
    %1885 = vmatpush2.bf16.msra.mxu0 0
    %1886 = vmatprep.subr.bf16.mxu0 0
    %1887 = vmatpush2.bf16.msra.mxu0 0
    %1888 = vmatprep.subr.bf16.mxu0 0
    %1889 = vmatpush2.bf16.msra.mxu0 0
    %1890 = vmatprep.subr.bf16.mxu0 0
    %1891 = vmatpush2.bf16.msra.mxu0 0
    %1892 = vmatprep.subr.bf16.mxu0 0
    %1893 = vmatpush2.bf16.msra.mxu0 0
    %1894 = vmatprep.subr.bf16.mxu0 0
    %1895 = vmatpush2.bf16.msra.mxu0 0
    %1896 = vmatprep.subr.bf16.mxu0 0
    %1897 = vmatpush2.bf16.msra.mxu0 0
    %1898 = vmatprep.subr.bf16.mxu0 0
    %1899 = vmatpush2.bf16.msra.mxu0 0
    %1900 = vmatprep.mubr.bf16.mxu0 0
    %1901 = vmatmul.mubr.bf16.gmra.mxu0 %v1612
    %v1902 = vpop.f32.mrf.mxu0
    %v1903 = vadd.f32 %v1658, %v1902
    %v1904 = vpop.f32.mrf.mxu0
    %v1905 = vadd.f32 %v1662, %v1904
    %v1906 = vpop.f32.mrf.mxu0
    %v1907 = vpop.f32.mrf.mxu0
    %1908 = vdwg.mxu0
    %1909 = vst [vmem:[#allocation4 + $0xa0] sm:$0xff] %v1862
    %1910 = vst [vmem:[#allocation4 + $0xa8] sm:$0xff] %v1864
    %1911 = vst [vmem:[#allocation4 + $0xb0] sm:$0xff] %v1903
    %1912 = vst [vmem:[#allocation4 + $0xb8] sm:$0xff] %v1905
    %s1913 = scalar_lea.vmem [#allocation5], 24
    %v1914 = vld [vmem:[%s1913] sm:$0xf]
    %v1915 = vld [vmem:[#allocation8] sm:$0xff]
    %v1916 = vld [vmem:[#allocation8 + $0x8] sm:$0xff]
    %v1917 = vld [vmem:[#allocation8 + $0x10] sm:$0xff]
    %v1918 = vld [vmem:[#allocation8 + $0x18] sm:$0xff]
    %v1919 = vld [vmem:[#allocation8 + $0x20] sm:$0xff]
    %v1920 = vld [vmem:[#allocation8 + $0x28] sm:$0xff]
    %v1921 = vld [vmem:[#allocation8 + $0x30] sm:$0xff]
    %v1922 = vld [vmem:[#allocation8 + $0x38] sm:$0xff]
    %v1923 = vld [vmem:[#allocation8 + $0x40] sm:$0xff]
    %v1924 = vld [vmem:[#allocation8 + $0x48] sm:$0xff]
    %v1925 = vld [vmem:[#allocation8 + $0x50] sm:$0xff]
    %v1926 = vld [vmem:[#allocation8 + $0x58] sm:$0xff]
    %v1927 = vld [vmem:[#allocation8 + $0x60] sm:$0xff]
    %v1928 = vld [vmem:[#allocation8 + $0x68] sm:$0xff]
    %v1929 = vld [vmem:[#allocation8 + $0x70] sm:$0xff]
    %v1930 = vld [vmem:[#allocation8 + $0x78] sm:$0xff]
    %v1931 = vld [vmem:[#allocation8 + $0x80] sm:$0xff]
    %v1932 = vld [vmem:[#allocation8 + $0x88] sm:$0xff]
    %v1933 = vld [vmem:[#allocation8 + $0x90] sm:$0xff]
    %v1934 = vld [vmem:[#allocation8 + $0x98] sm:$0xff]
    %v1935 = vld [vmem:[#allocation8 + $0xa0] sm:$0xff]
    %v1936 = vld [vmem:[#allocation8 + $0xa8] sm:$0xff]
    %v1937 = vld [vmem:[#allocation8 + $0xb0] sm:$0xff]
    %v1938 = vld [vmem:[#allocation8 + $0xb8] sm:$0xff]
    %v1939 = vld [vmem:[#allocation8 + $0xc0] sm:$0xff]
    %v1940 = vld [vmem:[#allocation8 + $0xc8] sm:$0xff]
    %v1941 = vld [vmem:[#allocation8 + $0xd0] sm:$0xff]
    %v1942 = vld [vmem:[#allocation8 + $0xd8] sm:$0xff]
    %v1943 = vld [vmem:[#allocation8 + $0xe0] sm:$0xff]
    %v1944 = vld [vmem:[#allocation8 + $0xe8] sm:$0xff]
    %v1945 = vld [vmem:[#allocation8 + $0xf0] sm:$0xff]
    %v1946 = vld [vmem:[#allocation8 + $0xf8] sm:$0xff]
    %v1947 = vld [vmem:[#allocation11] sm:$0xf]
    %v1949 = vlaneseq
    %v1950 = vshrl.u32 %v1949, 7
    %v1951 = vsub.s32 0, %v1950
    %v1952 = vrot.slane %v1947, %v1951
    %v1953 = vlaneseq
    %v1954 = vshrl.u32 %v1953, 7
    %v1955 = vsub.s32 1, %v1954
    %v1956 = vrot.slane %v1947, %v1955
    %v1957 = vlaneseq
    %v1958 = vshrl.u32 %v1957, 7
    %v1959 = vsub.s32 2, %v1958
    %v1960 = vrot.slane %v1947, %v1959
    %v1961 = vlaneseq
    %v1962 = vshrl.u32 %v1961, 7
    %v1963 = vsub.s32 3, %v1962
    %v1964 = vrot.slane %v1947, %v1963
    %v2001 = vunpack.c.l.b16 %v1915
    %v2002 = vunpack.c.h.b16 %v1915
    %v2003 = vunpack.c.l.b16 %v1916
    %v2004 = vunpack.c.h.b16 %v1916
    %v2005 = vunpack.c.l.b16 %v1917
    %v2006 = vunpack.c.h.b16 %v1917
    %v2007 = vunpack.c.l.b16 %v1918
    %v2008 = vunpack.c.h.b16 %v1918
    %v2009 = vunpack.c.l.b16 %v1919
    %v2010 = vunpack.c.h.b16 %v1919
    %v2011 = vunpack.c.l.b16 %v1920
    %v2012 = vunpack.c.h.b16 %v1920
    %v2013 = vunpack.c.l.b16 %v1921
    %v2014 = vunpack.c.h.b16 %v1921
    %v2015 = vunpack.c.l.b16 %v1922
    %v2016 = vunpack.c.h.b16 %v1922
    %v2017 = vunpack.c.l.b16 %v1923
    %v2018 = vunpack.c.h.b16 %v1923
    %v2019 = vunpack.c.l.b16 %v1924
    %v2020 = vunpack.c.h.b16 %v1924
    %v2021 = vunpack.c.l.b16 %v1925
    %v2022 = vunpack.c.h.b16 %v1925
    %v2023 = vunpack.c.l.b16 %v1926
    %v2024 = vunpack.c.h.b16 %v1926
    %v2025 = vunpack.c.l.b16 %v1927
    %v2026 = vunpack.c.h.b16 %v1927
    %v2027 = vunpack.c.l.b16 %v1928
    %v2028 = vunpack.c.h.b16 %v1928
    %v2029 = vunpack.c.l.b16 %v1929
    %v2030 = vunpack.c.h.b16 %v1929
    %v2031 = vunpack.c.l.b16 %v1930
    %v2032 = vunpack.c.h.b16 %v1930
    %v2033 = vunpack.c.l.b16 %v1931
    %v2034 = vunpack.c.h.b16 %v1931
    %v2035 = vunpack.c.l.b16 %v1932
    %v2036 = vunpack.c.h.b16 %v1932
    %v2037 = vunpack.c.l.b16 %v1933
    %v2038 = vunpack.c.h.b16 %v1933
    %v2039 = vunpack.c.l.b16 %v1934
    %v2040 = vunpack.c.h.b16 %v1934
    %v2041 = vunpack.c.l.b16 %v1935
    %v2042 = vunpack.c.h.b16 %v1935
    %v2043 = vunpack.c.l.b16 %v1936
    %v2044 = vunpack.c.h.b16 %v1936
    %v2045 = vunpack.c.l.b16 %v1937
    %v2046 = vunpack.c.h.b16 %v1937
    %v2047 = vunpack.c.l.b16 %v1938
    %v2048 = vunpack.c.h.b16 %v1938
    %v2049 = vunpack.c.l.b16 %v1939
    %v2050 = vunpack.c.h.b16 %v1939
    %v2051 = vunpack.c.l.b16 %v1940
    %v2052 = vunpack.c.h.b16 %v1940
    %v2053 = vunpack.c.l.b16 %v1941
    %v2054 = vunpack.c.h.b16 %v1941
    %v2055 = vunpack.c.l.b16 %v1942
    %v2056 = vunpack.c.h.b16 %v1942
    %v2057 = vunpack.c.l.b16 %v1943
    %v2058 = vunpack.c.h.b16 %v1943
    %v2059 = vunpack.c.l.b16 %v1944
    %v2060 = vunpack.c.h.b16 %v1944
    %v2061 = vunpack.c.l.b16 %v1945
    %v2062 = vunpack.c.h.b16 %v1945
    %v2063 = vunpack.c.l.b16 %v1946
    %v2064 = vunpack.c.h.b16 %v1946
    %v2065 = vpack.c.b16 %v2005, %v2001
    %v2066 = vpack.c.b16 %v2006, %v2002
    %v2067 = vpack.c.b16 %v2007, %v2003
    %v2068 = vpack.c.b16 %v2008, %v2004
    %v2069 = vpack.c.b16 %v2013, %v2009
    %v2070 = vpack.c.b16 %v2014, %v2010
    %v2071 = vpack.c.b16 %v2015, %v2011
    %v2072 = vpack.c.b16 %v2016, %v2012
    %v2073 = vpack.c.b16 %v2021, %v2017
    %v2074 = vpack.c.b16 %v2022, %v2018
    %v2075 = vpack.c.b16 %v2023, %v2019
    %v2076 = vpack.c.b16 %v2024, %v2020
    %v2077 = vpack.c.b16 %v2029, %v2025
    %v2078 = vpack.c.b16 %v2030, %v2026
    %v2079 = vpack.c.b16 %v2031, %v2027
    %v2080 = vpack.c.b16 %v2032, %v2028
    %v2081 = vpack.c.b16 %v2037, %v2033
    %v2082 = vpack.c.b16 %v2038, %v2034
    %v2083 = vpack.c.b16 %v2039, %v2035
    %v2084 = vpack.c.b16 %v2040, %v2036
    %v2085 = vpack.c.b16 %v2045, %v2041
    %v2086 = vpack.c.b16 %v2046, %v2042
    %v2087 = vpack.c.b16 %v2047, %v2043
    %v2088 = vpack.c.b16 %v2048, %v2044
    %v2089 = vpack.c.b16 %v2053, %v2049
    %v2090 = vpack.c.b16 %v2054, %v2050
    %v2091 = vpack.c.b16 %v2055, %v2051
    %v2092 = vpack.c.b16 %v2056, %v2052
    %v2093 = vpack.c.b16 %v2061, %v2057
    %v2094 = vpack.c.b16 %v2062, %v2058
    %v2095 = vpack.c.b16 %v2063, %v2059
    %v2096 = vpack.c.b16 %v2064, %v2060
    %2129 = vmatprep.subr.bf16.mxu0 %v2094
    %2130 = vmatpush1.bf16.msra.mxu0 %v2093
    %2131 = vmatprep.subr.bf16.mxu0 %v2090
    %2132 = vmatpush1.bf16.msra.mxu0 %v2089
    %2133 = vmatprep.subr.bf16.mxu0 %v2086
    %2134 = vmatpush1.bf16.msra.mxu0 %v2085
    %2135 = vmatprep.subr.bf16.mxu0 %v2082
    %2136 = vmatpush1.bf16.msra.mxu0 %v2081
    %2137 = vmatprep.subr.bf16.mxu0 %v2078
    %2138 = vmatpush1.bf16.msra.mxu0 %v2077
    %2139 = vmatprep.subr.bf16.mxu0 %v2074
    %2140 = vmatpush1.bf16.msra.mxu0 %v2073
    %2141 = vmatprep.subr.bf16.mxu0 %v2070
    %2142 = vmatpush1.bf16.msra.mxu0 %v2069
    %2143 = vmatprep.subr.bf16.mxu0 %v2066
    %2144 = vmatpush1.bf16.msra.mxu0 %v2065
    %2145 = vmatprep.subr.bf16.mxu0 0
    %2146 = vmatpush2.bf16.msra.mxu0 0
    %2147 = vmatprep.subr.bf16.mxu0 0
    %2148 = vmatpush2.bf16.msra.mxu0 0
    %2149 = vmatprep.subr.bf16.mxu0 0
    %2150 = vmatpush2.bf16.msra.mxu0 0
    %2151 = vmatprep.subr.bf16.mxu0 0
    %2152 = vmatpush2.bf16.msra.mxu0 0
    %2153 = vmatprep.subr.bf16.mxu0 0
    %2154 = vmatpush2.bf16.msra.mxu0 0
    %2155 = vmatprep.subr.bf16.mxu0 0
    %2156 = vmatpush2.bf16.msra.mxu0 0
    %2157 = vmatprep.subr.bf16.mxu0 0
    %2158 = vmatpush2.bf16.msra.mxu0 0
    %2159 = vmatprep.subr.bf16.mxu0 0
    %2160 = vmatpush2.bf16.msra.mxu0 0
    %2161 = vmatprep.mubr.bf16.mxu0 0
    %2162 = vmatmul.mubr.bf16.gmra.mxu0 %v1914
    %v2163 = vpop.f32.mrf.mxu0
    %v2164 = vadd.f32 %v1952, %v2163
    %v2165 = vpop.f32.mrf.mxu0
    %v2166 = vadd.f32 %v1956, %v2165
    %v2167 = vpop.f32.mrf.mxu0
    %v2168 = vpop.f32.mrf.mxu0
    %2169 = vdwg.mxu0
    %2170 = vmatprep.subr.bf16.mxu0 %v2096
    %2171 = vmatpush1.bf16.msra.mxu0 %v2095
    %2172 = vmatprep.subr.bf16.mxu0 %v2092
    %2173 = vmatpush1.bf16.msra.mxu0 %v2091
    %2174 = vmatprep.subr.bf16.mxu0 %v2088
    %2175 = vmatpush1.bf16.msra.mxu0 %v2087
    %2176 = vmatprep.subr.bf16.mxu0 %v2084
    %2177 = vmatpush1.bf16.msra.mxu0 %v2083
    %2178 = vmatprep.subr.bf16.mxu0 %v2080
    %2179 = vmatpush1.bf16.msra.mxu0 %v2079
    %2180 = vmatprep.subr.bf16.mxu0 %v2076
    %2181 = vmatpush1.bf16.msra.mxu0 %v2075
    %2182 = vmatprep.subr.bf16.mxu0 %v2072
    %2183 = vmatpush1.bf16.msra.mxu0 %v2071
    %2184 = vmatprep.subr.bf16.mxu0 %v2068
    %2185 = vmatpush1.bf16.msra.mxu0 %v2067
    %2186 = vmatprep.subr.bf16.mxu0 0
    %2187 = vmatpush2.bf16.msra.mxu0 0
    %2188 = vmatprep.subr.bf16.mxu0 0
    %2189 = vmatpush2.bf16.msra.mxu0 0
    %2190 = vmatprep.subr.bf16.mxu0 0
    %2191 = vmatpush2.bf16.msra.mxu0 0
    %2192 = vmatprep.subr.bf16.mxu0 0
    %2193 = vmatpush2.bf16.msra.mxu0 0
    %2194 = vmatprep.subr.bf16.mxu0 0
    %2195 = vmatpush2.bf16.msra.mxu0 0
    %2196 = vmatprep.subr.bf16.mxu0 0
    %2197 = vmatpush2.bf16.msra.mxu0 0
    %2198 = vmatprep.subr.bf16.mxu0 0
    %2199 = vmatpush2.bf16.msra.mxu0 0
    %2200 = vmatprep.subr.bf16.mxu0 0
    %2201 = vmatpush2.bf16.msra.mxu0 0
    %2202 = vmatprep.mubr.bf16.mxu0 0
    %2203 = vmatmul.mubr.bf16.gmra.mxu0 %v1914
    %v2204 = vpop.f32.mrf.mxu0
    %v2205 = vadd.f32 %v1960, %v2204
    %v2206 = vpop.f32.mrf.mxu0
    %v2207 = vadd.f32 %v1964, %v2206
    %v2208 = vpop.f32.mrf.mxu0
    %v2209 = vpop.f32.mrf.mxu0
    %2210 = vdwg.mxu0
    %2211 = vst [vmem:[#allocation4 + $0xc0] sm:$0xff] %v2164
    %2212 = vst [vmem:[#allocation4 + $0xc8] sm:$0xff] %v2166
    %2213 = vst [vmem:[#allocation4 + $0xd0] sm:$0xff] %v2205
    %2214 = vst [vmem:[#allocation4 + $0xd8] sm:$0xff] %v2207
    %s2215 = scalar_lea.vmem [#allocation5], 28
    %v2216 = vld [vmem:[%s2215] sm:$0xf]
    %v2217 = vld [vmem:[#allocation8] sm:$0xff]
    %v2218 = vld [vmem:[#allocation8 + $0x8] sm:$0xff]
    %v2219 = vld [vmem:[#allocation8 + $0x10] sm:$0xff]
    %v2220 = vld [vmem:[#allocation8 + $0x18] sm:$0xff]
    %v2221 = vld [vmem:[#allocation8 + $0x20] sm:$0xff]
    %v2222 = vld [vmem:[#allocation8 + $0x28] sm:$0xff]
    %v2223 = vld [vmem:[#allocation8 + $0x30] sm:$0xff]
    %v2224 = vld [vmem:[#allocation8 + $0x38] sm:$0xff]
    %v2225 = vld [vmem:[#allocation8 + $0x40] sm:$0xff]
    %v2226 = vld [vmem:[#allocation8 + $0x48] sm:$0xff]
    %v2227 = vld [vmem:[#allocation8 + $0x50] sm:$0xff]
    %v2228 = vld [vmem:[#allocation8 + $0x58] sm:$0xff]
    %v2229 = vld [vmem:[#allocation8 + $0x60] sm:$0xff]
    %v2230 = vld [vmem:[#allocation8 + $0x68] sm:$0xff]
    %v2231 = vld [vmem:[#allocation8 + $0x70] sm:$0xff]
    %v2232 = vld [vmem:[#allocation8 + $0x78] sm:$0xff]
    %v2233 = vld [vmem:[#allocation8 + $0x80] sm:$0xff]
    %v2234 = vld [vmem:[#allocation8 + $0x88] sm:$0xff]
    %v2235 = vld [vmem:[#allocation8 + $0x90] sm:$0xff]
    %v2236 = vld [vmem:[#allocation8 + $0x98] sm:$0xff]
    %v2237 = vld [vmem:[#allocation8 + $0xa0] sm:$0xff]
    %v2238 = vld [vmem:[#allocation8 + $0xa8] sm:$0xff]
    %v2239 = vld [vmem:[#allocation8 + $0xb0] sm:$0xff]
    %v2240 = vld [vmem:[#allocation8 + $0xb8] sm:$0xff]
    %v2241 = vld [vmem:[#allocation8 + $0xc0] sm:$0xff]
    %v2242 = vld [vmem:[#allocation8 + $0xc8] sm:$0xff]
    %v2243 = vld [vmem:[#allocation8 + $0xd0] sm:$0xff]
    %v2244 = vld [vmem:[#allocation8 + $0xd8] sm:$0xff]
    %v2245 = vld [vmem:[#allocation8 + $0xe0] sm:$0xff]
    %v2246 = vld [vmem:[#allocation8 + $0xe8] sm:$0xff]
    %v2247 = vld [vmem:[#allocation8 + $0xf0] sm:$0xff]
    %v2248 = vld [vmem:[#allocation8 + $0xf8] sm:$0xff]
    %v2249 = vld [vmem:[#allocation11] sm:$0xf]
    %v2251 = vlaneseq
    %v2252 = vshrl.u32 %v2251, 7
    %v2253 = vsub.s32 0, %v2252
    %v2254 = vrot.slane %v2249, %v2253
    %v2255 = vlaneseq
    %v2256 = vshrl.u32 %v2255, 7
    %v2257 = vsub.s32 1, %v2256
    %v2258 = vrot.slane %v2249, %v2257
    %v2259 = vlaneseq
    %v2260 = vshrl.u32 %v2259, 7
    %v2261 = vsub.s32 2, %v2260
    %v2262 = vrot.slane %v2249, %v2261
    %v2263 = vlaneseq
    %v2264 = vshrl.u32 %v2263, 7
    %v2265 = vsub.s32 3, %v2264
    %v2266 = vrot.slane %v2249, %v2265
    %v2303 = vunpack.c.l.b16 %v2217
    %v2304 = vunpack.c.h.b16 %v2217
    %v2305 = vunpack.c.l.b16 %v2218
    %v2306 = vunpack.c.h.b16 %v2218
    %v2307 = vunpack.c.l.b16 %v2219
    %v2308 = vunpack.c.h.b16 %v2219
    %v2309 = vunpack.c.l.b16 %v2220
    %v2310 = vunpack.c.h.b16 %v2220
    %v2311 = vunpack.c.l.b16 %v2221
    %v2312 = vunpack.c.h.b16 %v2221
    %v2313 = vunpack.c.l.b16 %v2222
    %v2314 = vunpack.c.h.b16 %v2222
    %v2315 = vunpack.c.l.b16 %v2223
    %v2316 = vunpack.c.h.b16 %v2223
    %v2317 = vunpack.c.l.b16 %v2224
    %v2318 = vunpack.c.h.b16 %v2224
    %v2319 = vunpack.c.l.b16 %v2225
    %v2320 = vunpack.c.h.b16 %v2225
    %v2321 = vunpack.c.l.b16 %v2226
    %v2322 = vunpack.c.h.b16 %v2226
    %v2323 = vunpack.c.l.b16 %v2227
    %v2324 = vunpack.c.h.b16 %v2227
    %v2325 = vunpack.c.l.b16 %v2228
    %v2326 = vunpack.c.h.b16 %v2228
    %v2327 = vunpack.c.l.b16 %v2229
    %v2328 = vunpack.c.h.b16 %v2229
    %v2329 = vunpack.c.l.b16 %v2230
    %v2330 = vunpack.c.h.b16 %v2230
    %v2331 = vunpack.c.l.b16 %v2231
    %v2332 = vunpack.c.h.b16 %v2231
    %v2333 = vunpack.c.l.b16 %v2232
    %v2334 = vunpack.c.h.b16 %v2232
    %v2335 = vunpack.c.l.b16 %v2233
    %v2336 = vunpack.c.h.b16 %v2233
    %v2337 = vunpack.c.l.b16 %v2234
    %v2338 = vunpack.c.h.b16 %v2234
    %v2339 = vunpack.c.l.b16 %v2235
    %v2340 = vunpack.c.h.b16 %v2235
    %v2341 = vunpack.c.l.b16 %v2236
    %v2342 = vunpack.c.h.b16 %v2236
    %v2343 = vunpack.c.l.b16 %v2237
    %v2344 = vunpack.c.h.b16 %v2237
    %v2345 = vunpack.c.l.b16 %v2238
    %v2346 = vunpack.c.h.b16 %v2238
    %v2347 = vunpack.c.l.b16 %v2239
    %v2348 = vunpack.c.h.b16 %v2239
    %v2349 = vunpack.c.l.b16 %v2240
    %v2350 = vunpack.c.h.b16 %v2240
    %v2351 = vunpack.c.l.b16 %v2241
    %v2352 = vunpack.c.h.b16 %v2241
    %v2353 = vunpack.c.l.b16 %v2242
    %v2354 = vunpack.c.h.b16 %v2242
    %v2355 = vunpack.c.l.b16 %v2243
    %v2356 = vunpack.c.h.b16 %v2243
    %v2357 = vunpack.c.l.b16 %v2244
    %v2358 = vunpack.c.h.b16 %v2244
    %v2359 = vunpack.c.l.b16 %v2245
    %v2360 = vunpack.c.h.b16 %v2245
    %v2361 = vunpack.c.l.b16 %v2246
    %v2362 = vunpack.c.h.b16 %v2246
    %v2363 = vunpack.c.l.b16 %v2247
    %v2364 = vunpack.c.h.b16 %v2247
    %v2365 = vunpack.c.l.b16 %v2248
    %v2366 = vunpack.c.h.b16 %v2248
    %v2367 = vpack.c.b16 %v2307, %v2303
    %v2368 = vpack.c.b16 %v2308, %v2304
    %v2369 = vpack.c.b16 %v2309, %v2305
    %v2370 = vpack.c.b16 %v2310, %v2306
    %v2371 = vpack.c.b16 %v2315, %v2311
    %v2372 = vpack.c.b16 %v2316, %v2312
    %v2373 = vpack.c.b16 %v2317, %v2313
    %v2374 = vpack.c.b16 %v2318, %v2314
    %v2375 = vpack.c.b16 %v2323, %v2319
    %v2376 = vpack.c.b16 %v2324, %v2320
    %v2377 = vpack.c.b16 %v2325, %v2321
    %v2378 = vpack.c.b16 %v2326, %v2322
    %v2379 = vpack.c.b16 %v2331, %v2327
    %v2380 = vpack.c.b16 %v2332, %v2328
    %v2381 = vpack.c.b16 %v2333, %v2329
    %v2382 = vpack.c.b16 %v2334, %v2330
    %v2383 = vpack.c.b16 %v2339, %v2335
    %v2384 = vpack.c.b16 %v2340, %v2336
    %v2385 = vpack.c.b16 %v2341, %v2337
    %v2386 = vpack.c.b16 %v2342, %v2338
    %v2387 = vpack.c.b16 %v2347, %v2343
    %v2388 = vpack.c.b16 %v2348, %v2344
    %v2389 = vpack.c.b16 %v2349, %v2345
    %v2390 = vpack.c.b16 %v2350, %v2346
    %v2391 = vpack.c.b16 %v2355, %v2351
    %v2392 = vpack.c.b16 %v2356, %v2352
    %v2393 = vpack.c.b16 %v2357, %v2353
    %v2394 = vpack.c.b16 %v2358, %v2354
    %v2395 = vpack.c.b16 %v2363, %v2359
    %v2396 = vpack.c.b16 %v2364, %v2360
    %v2397 = vpack.c.b16 %v2365, %v2361
    %v2398 = vpack.c.b16 %v2366, %v2362
    %2431 = vmatprep.subr.bf16.mxu0 %v2396
    %2432 = vmatpush1.bf16.msra.mxu0 %v2395
    %2433 = vmatprep.subr.bf16.mxu0 %v2392
    %2434 = vmatpush1.bf16.msra.mxu0 %v2391
    %2435 = vmatprep.subr.bf16.mxu0 %v2388
    %2436 = vmatpush1.bf16.msra.mxu0 %v2387
    %2437 = vmatprep.subr.bf16.mxu0 %v2384
    %2438 = vmatpush1.bf16.msra.mxu0 %v2383
    %2439 = vmatprep.subr.bf16.mxu0 %v2380
    %2440 = vmatpush1.bf16.msra.mxu0 %v2379
    %2441 = vmatprep.subr.bf16.mxu0 %v2376
    %2442 = vmatpush1.bf16.msra.mxu0 %v2375
    %2443 = vmatprep.subr.bf16.mxu0 %v2372
    %2444 = vmatpush1.bf16.msra.mxu0 %v2371
    %2445 = vmatprep.subr.bf16.mxu0 %v2368
    %2446 = vmatpush1.bf16.msra.mxu0 %v2367
    %2447 = vmatprep.subr.bf16.mxu0 0
    %2448 = vmatpush2.bf16.msra.mxu0 0
    %2449 = vmatprep.subr.bf16.mxu0 0
    %2450 = vmatpush2.bf16.msra.mxu0 0
    %2451 = vmatprep.subr.bf16.mxu0 0
    %2452 = vmatpush2.bf16.msra.mxu0 0
    %2453 = vmatprep.subr.bf16.mxu0 0
    %2454 = vmatpush2.bf16.msra.mxu0 0
    %2455 = vmatprep.subr.bf16.mxu0 0
    %2456 = vmatpush2.bf16.msra.mxu0 0
    %2457 = vmatprep.subr.bf16.mxu0 0
    %2458 = vmatpush2.bf16.msra.mxu0 0
    %2459 = vmatprep.subr.bf16.mxu0 0
    %2460 = vmatpush2.bf16.msra.mxu0 0
    %2461 = vmatprep.subr.bf16.mxu0 0
    %2462 = vmatpush2.bf16.msra.mxu0 0
    %2463 = vmatprep.mubr.bf16.mxu0 0
    %2464 = vmatmul.mubr.bf16.gmra.mxu0 %v2216
    %v2465 = vpop.f32.mrf.mxu0
    %v2466 = vadd.f32 %v2254, %v2465
    %v2467 = vpop.f32.mrf.mxu0
    %v2468 = vadd.f32 %v2258, %v2467
    %v2469 = vpop.f32.mrf.mxu0
    %v2470 = vpop.f32.mrf.mxu0
    %2471 = vdwg.mxu0
    %2472 = vmatprep.subr.bf16.mxu0 %v2398
    %2473 = vmatpush1.bf16.msra.mxu0 %v2397
    %2474 = vmatprep.subr.bf16.mxu0 %v2394
    %2475 = vmatpush1.bf16.msra.mxu0 %v2393
    %2476 = vmatprep.subr.bf16.mxu0 %v2390
    %2477 = vmatpush1.bf16.msra.mxu0 %v2389
    %2478 = vmatprep.subr.bf16.mxu0 %v2386
    %2479 = vmatpush1.bf16.msra.mxu0 %v2385
    %2480 = vmatprep.subr.bf16.mxu0 %v2382
    %2481 = vmatpush1.bf16.msra.mxu0 %v2381
    %2482 = vmatprep.subr.bf16.mxu0 %v2378
    %2483 = vmatpush1.bf16.msra.mxu0 %v2377
    %2484 = vmatprep.subr.bf16.mxu0 %v2374
    %2485 = vmatpush1.bf16.msra.mxu0 %v2373
    %2486 = vmatprep.subr.bf16.mxu0 %v2370
    %2487 = vmatpush1.bf16.msra.mxu0 %v2369
    %2488 = vmatprep.subr.bf16.mxu0 0
    %2489 = vmatpush2.bf16.msra.mxu0 0
    %2490 = vmatprep.subr.bf16.mxu0 0
    %2491 = vmatpush2.bf16.msra.mxu0 0
    %2492 = vmatprep.subr.bf16.mxu0 0
    %2493 = vmatpush2.bf16.msra.mxu0 0
    %2494 = vmatprep.subr.bf16.mxu0 0
    %2495 = vmatpush2.bf16.msra.mxu0 0
    %2496 = vmatprep.subr.bf16.mxu0 0
    %2497 = vmatpush2.bf16.msra.mxu0 0
    %2498 = vmatprep.subr.bf16.mxu0 0
    %2499 = vmatpush2.bf16.msra.mxu0 0
    %2500 = vmatprep.subr.bf16.mxu0 0
    %2501 = vmatpush2.bf16.msra.mxu0 0
    %2502 = vmatprep.subr.bf16.mxu0 0
    %2503 = vmatpush2.bf16.msra.mxu0 0
    %2504 = vmatprep.mubr.bf16.mxu0 0
    %2505 = vmatmul.mubr.bf16.gmra.mxu0 %v2216
    %v2506 = vpop.f32.mrf.mxu0
    %v2507 = vadd.f32 %v2262, %v2506
    %v2508 = vpop.f32.mrf.mxu0
    %v2509 = vadd.f32 %v2266, %v2508
    %v2510 = vpop.f32.mrf.mxu0
    %v2511 = vpop.f32.mrf.mxu0
    %2512 = vdwg.mxu0
    %2513 = vst [vmem:[#allocation4 + $0xe0] sm:$0xff] %v2466
    %2514 = vst [vmem:[#allocation4 + $0xe8] sm:$0xff] %v2468
    %2515 = vst [vmem:[#allocation4 + $0xf0] sm:$0xff] %v2507
    %2516 = vst [vmem:[#allocation4 + $0xf8] sm:$0xff] %v2509
    %s2517 = scalar_lea.vmem [#allocation5], 32
    %v2518 = vld [vmem:[%s2517] sm:$0xf]
    %v2519 = vld [vmem:[#allocation8] sm:$0xff]
    %v2520 = vld [vmem:[#allocation8 + $0x8] sm:$0xff]
    %v2521 = vld [vmem:[#allocation8 + $0x10] sm:$0xff]
    %v2522 = vld [vmem:[#allocation8 + $0x18] sm:$0xff]
    %v2523 = vld [vmem:[#allocation8 + $0x20] sm:$0xff]
    %v2524 = vld [vmem:[#allocation8 + $0x28] sm:$0xff]
    %v2525 = vld [vmem:[#allocation8 + $0x30] sm:$0xff]
    %v2526 = vld [vmem:[#allocation8 + $0x38] sm:$0xff]
    %v2527 = vld [vmem:[#allocation8 + $0x40] sm:$0xff]
    %v2528 = vld [vmem:[#allocation8 + $0x48] sm:$0xff]
    %v2529 = vld [vmem:[#allocation8 + $0x50] sm:$0xff]
    %v2530 = vld [vmem:[#allocation8 + $0x58] sm:$0xff]
    %v2531 = vld [vmem:[#allocation8 + $0x60] sm:$0xff]
    %v2532 = vld [vmem:[#allocation8 + $0x68] sm:$0xff]
    %v2533 = vld [vmem:[#allocation8 + $0x70] sm:$0xff]
    %v2534 = vld [vmem:[#allocation8 + $0x78] sm:$0xff]
    %v2535 = vld [vmem:[#allocation8 + $0x80] sm:$0xff]
    %v2536 = vld [vmem:[#allocation8 + $0x88] sm:$0xff]
    %v2537 = vld [vmem:[#allocation8 + $0x90] sm:$0xff]
    %v2538 = vld [vmem:[#allocation8 + $0x98] sm:$0xff]
    %v2539 = vld [vmem:[#allocation8 + $0xa0] sm:$0xff]
    %v2540 = vld [vmem:[#allocation8 + $0xa8] sm:$0xff]
    %v2541 = vld [vmem:[#allocation8 + $0xb0] sm:$0xff]
    %v2542 = vld [vmem:[#allocation8 + $0xb8] sm:$0xff]
    %v2543 = vld [vmem:[#allocation8 + $0xc0] sm:$0xff]
    %v2544 = vld [vmem:[#allocation8 + $0xc8] sm:$0xff]
    %v2545 = vld [vmem:[#allocation8 + $0xd0] sm:$0xff]
    %v2546 = vld [vmem:[#allocation8 + $0xd8] sm:$0xff]
    %v2547 = vld [vmem:[#allocation8 + $0xe0] sm:$0xff]
    %v2548 = vld [vmem:[#allocation8 + $0xe8] sm:$0xff]
    %v2549 = vld [vmem:[#allocation8 + $0xf0] sm:$0xff]
    %v2550 = vld [vmem:[#allocation8 + $0xf8] sm:$0xff]
    %v2551 = vld [vmem:[#allocation11] sm:$0xf]
    %v2553 = vlaneseq
    %v2554 = vshrl.u32 %v2553, 7
    %v2555 = vsub.s32 0, %v2554
    %v2556 = vrot.slane %v2551, %v2555
    %v2557 = vlaneseq
    %v2558 = vshrl.u32 %v2557, 7
    %v2559 = vsub.s32 1, %v2558
    %v2560 = vrot.slane %v2551, %v2559
    %v2561 = vlaneseq
    %v2562 = vshrl.u32 %v2561, 7
    %v2563 = vsub.s32 2, %v2562
    %v2564 = vrot.slane %v2551, %v2563
    %v2565 = vlaneseq
    %v2566 = vshrl.u32 %v2565, 7
    %v2567 = vsub.s32 3, %v2566
    %v2568 = vrot.slane %v2551, %v2567
    %v2605 = vunpack.c.l.b16 %v2519
    %v2606 = vunpack.c.h.b16 %v2519
    %v2607 = vunpack.c.l.b16 %v2520
    %v2608 = vunpack.c.h.b16 %v2520
    %v2609 = vunpack.c.l.b16 %v2521
    %v2610 = vunpack.c.h.b16 %v2521
    %v2611 = vunpack.c.l.b16 %v2522
    %v2612 = vunpack.c.h.b16 %v2522
    %v2613 = vunpack.c.l.b16 %v2523
    %v2614 = vunpack.c.h.b16 %v2523
    %v2615 = vunpack.c.l.b16 %v2524
    %v2616 = vunpack.c.h.b16 %v2524
    %v2617 = vunpack.c.l.b16 %v2525
    %v2618 = vunpack.c.h.b16 %v2525
    %v2619 = vunpack.c.l.b16 %v2526
    %v2620 = vunpack.c.h.b16 %v2526
    %v2621 = vunpack.c.l.b16 %v2527
    %v2622 = vunpack.c.h.b16 %v2527
    %v2623 = vunpack.c.l.b16 %v2528
    %v2624 = vunpack.c.h.b16 %v2528
    %v2625 = vunpack.c.l.b16 %v2529
    %v2626 = vunpack.c.h.b16 %v2529
    %v2627 = vunpack.c.l.b16 %v2530
    %v2628 = vunpack.c.h.b16 %v2530
    %v2629 = vunpack.c.l.b16 %v2531
    %v2630 = vunpack.c.h.b16 %v2531
    %v2631 = vunpack.c.l.b16 %v2532
    %v2632 = vunpack.c.h.b16 %v2532
    %v2633 = vunpack.c.l.b16 %v2533
    %v2634 = vunpack.c.h.b16 %v2533
    %v2635 = vunpack.c.l.b16 %v2534
    %v2636 = vunpack.c.h.b16 %v2534
    %v2637 = vunpack.c.l.b16 %v2535
    %v2638 = vunpack.c.h.b16 %v2535
    %v2639 = vunpack.c.l.b16 %v2536
    %v2640 = vunpack.c.h.b16 %v2536
    %v2641 = vunpack.c.l.b16 %v2537
    %v2642 = vunpack.c.h.b16 %v2537
    %v2643 = vunpack.c.l.b16 %v2538
    %v2644 = vunpack.c.h.b16 %v2538
    %v2645 = vunpack.c.l.b16 %v2539
    %v2646 = vunpack.c.h.b16 %v2539
    %v2647 = vunpack.c.l.b16 %v2540
    %v2648 = vunpack.c.h.b16 %v2540
    %v2649 = vunpack.c.l.b16 %v2541
    %v2650 = vunpack.c.h.b16 %v2541
    %v2651 = vunpack.c.l.b16 %v2542
    %v2652 = vunpack.c.h.b16 %v2542
    %v2653 = vunpack.c.l.b16 %v2543
    %v2654 = vunpack.c.h.b16 %v2543
    %v2655 = vunpack.c.l.b16 %v2544
    %v2656 = vunpack.c.h.b16 %v2544
    %v2657 = vunpack.c.l.b16 %v2545
    %v2658 = vunpack.c.h.b16 %v2545
    %v2659 = vunpack.c.l.b16 %v2546
    %v2660 = vunpack.c.h.b16 %v2546
    %v2661 = vunpack.c.l.b16 %v2547
    %v2662 = vunpack.c.h.b16 %v2547
    %v2663 = vunpack.c.l.b16 %v2548
    %v2664 = vunpack.c.h.b16 %v2548
    %v2665 = vunpack.c.l.b16 %v2549
    %v2666 = vunpack.c.h.b16 %v2549
    %v2667 = vunpack.c.l.b16 %v2550
    %v2668 = vunpack.c.h.b16 %v2550
    %v2669 = vpack.c.b16 %v2609, %v2605
    %v2670 = vpack.c.b16 %v2610, %v2606
    %v2671 = vpack.c.b16 %v2611, %v2607
    %v2672 = vpack.c.b16 %v2612, %v2608
    %v2673 = vpack.c.b16 %v2617, %v2613
    %v2674 = vpack.c.b16 %v2618, %v2614
    %v2675 = vpack.c.b16 %v2619, %v2615
    %v2676 = vpack.c.b16 %v2620, %v2616
    %v2677 = vpack.c.b16 %v2625, %v2621
    %v2678 = vpack.c.b16 %v2626, %v2622
    %v2679 = vpack.c.b16 %v2627, %v2623
    %v2680 = vpack.c.b16 %v2628, %v2624
    %v2681 = vpack.c.b16 %v2633, %v2629
    %v2682 = vpack.c.b16 %v2634, %v2630
    %v2683 = vpack.c.b16 %v2635, %v2631
    %v2684 = vpack.c.b16 %v2636, %v2632
    %v2685 = vpack.c.b16 %v2641, %v2637
    %v2686 = vpack.c.b16 %v2642, %v2638
    %v2687 = vpack.c.b16 %v2643, %v2639
    %v2688 = vpack.c.b16 %v2644, %v2640
    %v2689 = vpack.c.b16 %v2649, %v2645
    %v2690 = vpack.c.b16 %v2650, %v2646
    %v2691 = vpack.c.b16 %v2651, %v2647
    %v2692 = vpack.c.b16 %v2652, %v2648
    %v2693 = vpack.c.b16 %v2657, %v2653
    %v2694 = vpack.c.b16 %v2658, %v2654
    %v2695 = vpack.c.b16 %v2659, %v2655
    %v2696 = vpack.c.b16 %v2660, %v2656
    %v2697 = vpack.c.b16 %v2665, %v2661
    %v2698 = vpack.c.b16 %v2666, %v2662
    %v2699 = vpack.c.b16 %v2667, %v2663
    %v2700 = vpack.c.b16 %v2668, %v2664
    %2733 = vmatprep.subr.bf16.mxu0 %v2698
    %2734 = vmatpush1.bf16.msra.mxu0 %v2697
    %2735 = vmatprep.subr.bf16.mxu0 %v2694
    %2736 = vmatpush1.bf16.msra.mxu0 %v2693
    %2737 = vmatprep.subr.bf16.mxu0 %v2690
    %2738 = vmatpush1.bf16.msra.mxu0 %v2689
    %2739 = vmatprep.subr.bf16.mxu0 %v2686
    %2740 = vmatpush1.bf16.msra.mxu0 %v2685
    %2741 = vmatprep.subr.bf16.mxu0 %v2682
    %2742 = vmatpush1.bf16.msra.mxu0 %v2681
    %2743 = vmatprep.subr.bf16.mxu0 %v2678
    %2744 = vmatpush1.bf16.msra.mxu0 %v2677
    %2745 = vmatprep.subr.bf16.mxu0 %v2674
    %2746 = vmatpush1.bf16.msra.mxu0 %v2673
    %2747 = vmatprep.subr.bf16.mxu0 %v2670
    %2748 = vmatpush1.bf16.msra.mxu0 %v2669
    %2749 = vmatprep.subr.bf16.mxu0 0
    %2750 = vmatpush2.bf16.msra.mxu0 0
    %2751 = vmatprep.subr.bf16.mxu0 0
    %2752 = vmatpush2.bf16.msra.mxu0 0
    %2753 = vmatprep.subr.bf16.mxu0 0
    %2754 = vmatpush2.bf16.msra.mxu0 0
    %2755 = vmatprep.subr.bf16.mxu0 0
    %2756 = vmatpush2.bf16.msra.mxu0 0
    %2757 = vmatprep.subr.bf16.mxu0 0
    %2758 = vmatpush2.bf16.msra.mxu0 0
    %2759 = vmatprep.subr.bf16.mxu0 0
    %2760 = vmatpush2.bf16.msra.mxu0 0
    %2761 = vmatprep.subr.bf16.mxu0 0
    %2762 = vmatpush2.bf16.msra.mxu0 0
    %2763 = vmatprep.subr.bf16.mxu0 0
    %2764 = vmatpush2.bf16.msra.mxu0 0
    %2765 = vmatprep.mubr.bf16.mxu0 0
    %2766 = vmatmul.mubr.bf16.gmra.mxu0 %v2518
    %v2767 = vpop.f32.mrf.mxu0
    %v2768 = vadd.f32 %v2556, %v2767
    %v2769 = vpop.f32.mrf.mxu0
    %v2770 = vadd.f32 %v2560, %v2769
    %v2771 = vpop.f32.mrf.mxu0
    %v2772 = vpop.f32.mrf.mxu0
    %2773 = vdwg.mxu0
    %2774 = vmatprep.subr.bf16.mxu0 %v2700
    %2775 = vmatpush1.bf16.msra.mxu0 %v2699
    %2776 = vmatprep.subr.bf16.mxu0 %v2696
    %2777 = vmatpush1.bf16.msra.mxu0 %v2695
    %2778 = vmatprep.subr.bf16.mxu0 %v2692
    %2779 = vmatpush1.bf16.msra.mxu0 %v2691
    %2780 = vmatprep.subr.bf16.mxu0 %v2688
    %2781 = vmatpush1.bf16.msra.mxu0 %v2687
    %2782 = vmatprep.subr.bf16.mxu0 %v2684
    %2783 = vmatpush1.bf16.msra.mxu0 %v2683
    %2784 = vmatprep.subr.bf16.mxu0 %v2680
    %2785 = vmatpush1.bf16.msra.mxu0 %v2679
    %2786 = vmatprep.subr.bf16.mxu0 %v2676
    %2787 = vmatpush1.bf16.msra.mxu0 %v2675
    %2788 = vmatprep.subr.bf16.mxu0 %v2672
    %2789 = vmatpush1.bf16.msra.mxu0 %v2671
    %2790 = vmatprep.subr.bf16.mxu0 0
    %2791 = vmatpush2.bf16.msra.mxu0 0
    %2792 = vmatprep.subr.bf16.mxu0 0
    %2793 = vmatpush2.bf16.msra.mxu0 0
    %2794 = vmatprep.subr.bf16.mxu0 0
    %2795 = vmatpush2.bf16.msra.mxu0 0
    %2796 = vmatprep.subr.bf16.mxu0 0
    %2797 = vmatpush2.bf16.msra.mxu0 0
    %2798 = vmatprep.subr.bf16.mxu0 0
    %2799 = vmatpush2.bf16.msra.mxu0 0
    %2800 = vmatprep.subr.bf16.mxu0 0
    %2801 = vmatpush2.bf16.msra.mxu0 0
    %2802 = vmatprep.subr.bf16.mxu0 0
    %2803 = vmatpush2.bf16.msra.mxu0 0
    %2804 = vmatprep.subr.bf16.mxu0 0
    %2805 = vmatpush2.bf16.msra.mxu0 0
    %2806 = vmatprep.mubr.bf16.mxu0 0
    %2807 = vmatmul.mubr.bf16.gmra.mxu0 %v2518
    %v2808 = vpop.f32.mrf.mxu0
    %v2809 = vadd.f32 %v2564, %v2808
    %v2810 = vpop.f32.mrf.mxu0
    %v2811 = vadd.f32 %v2568, %v2810
    %v2812 = vpop.f32.mrf.mxu0
    %v2813 = vpop.f32.mrf.mxu0
    %2814 = vdwg.mxu0
    %2815 = vst [vmem:[#allocation4 + $0x100] sm:$0xff] %v2768
    %2816 = vst [vmem:[#allocation4 + $0x108] sm:$0xff] %v2770
    %2817 = vst [vmem:[#allocation4 + $0x110] sm:$0xff] %v2809
    %2818 = vst [vmem:[#allocation4 + $0x118] sm:$0xff] %v2811
    %s2819 = scalar_lea.vmem [#allocation5], 36
    %v2820 = vld [vmem:[%s2819] sm:$0xf]
    %v2821 = vld [vmem:[#allocation8] sm:$0xff]
    %v2822 = vld [vmem:[#allocation8 + $0x8] sm:$0xff]
    %v2823 = vld [vmem:[#allocation8 + $0x10] sm:$0xff]
    %v2824 = vld [vmem:[#allocation8 + $0x18] sm:$0xff]
    %v2825 = vld [vmem:[#allocation8 + $0x20] sm:$0xff]
    %v2826 = vld [vmem:[#allocation8 + $0x28] sm:$0xff]
    %v2827 = vld [vmem:[#allocation8 + $0x30] sm:$0xff]
    %v2828 = vld [vmem:[#allocation8 + $0x38] sm:$0xff]
    %v2829 = vld [vmem:[#allocation8 + $0x40] sm:$0xff]
    %v2830 = vld [vmem:[#allocation8 + $0x48] sm:$0xff]
    %v2831 = vld [vmem:[#allocation8 + $0x50] sm:$0xff]
    %v2832 = vld [vmem:[#allocation8 + $0x58] sm:$0xff]
    %v2833 = vld [vmem:[#allocation8 + $0x60] sm:$0xff]
    %v2834 = vld [vmem:[#allocation8 + $0x68] sm:$0xff]
    %v2835 = vld [vmem:[#allocation8 + $0x70] sm:$0xff]
    %v2836 = vld [vmem:[#allocation8 + $0x78] sm:$0xff]
    %v2837 = vld [vmem:[#allocation8 + $0x80] sm:$0xff]
    %v2838 = vld [vmem:[#allocation8 + $0x88] sm:$0xff]
    %v2839 = vld [vmem:[#allocation8 + $0x90] sm:$0xff]
    %v2840 = vld [vmem:[#allocation8 + $0x98] sm:$0xff]
    %v2841 = vld [vmem:[#allocation8 + $0xa0] sm:$0xff]
    %v2842 = vld [vmem:[#allocation8 + $0xa8] sm:$0xff]
    %v2843 = vld [vmem:[#allocation8 + $0xb0] sm:$0xff]
    %v2844 = vld [vmem:[#allocation8 + $0xb8] sm:$0xff]
    %v2845 = vld [vmem:[#allocation8 + $0xc0] sm:$0xff]
    %v2846 = vld [vmem:[#allocation8 + $0xc8] sm:$0xff]
    %v2847 = vld [vmem:[#allocation8 + $0xd0] sm:$0xff]
    %v2848 = vld [vmem:[#allocation8 + $0xd8] sm:$0xff]
    %v2849 = vld [vmem:[#allocation8 + $0xe0] sm:$0xff]
    %v2850 = vld [vmem:[#allocation8 + $0xe8] sm:$0xff]
    %v2851 = vld [vmem:[#allocation8 + $0xf0] sm:$0xff]
    %v2852 = vld [vmem:[#allocation8 + $0xf8] sm:$0xff]
    %v2853 = vld [vmem:[#allocation11] sm:$0xf]
    %v2855 = vlaneseq
    %v2856 = vshrl.u32 %v2855, 7
    %v2857 = vsub.s32 0, %v2856
    %v2858 = vrot.slane %v2853, %v2857
    %v2859 = vlaneseq
    %v2860 = vshrl.u32 %v2859, 7
    %v2861 = vsub.s32 1, %v2860
    %v2862 = vrot.slane %v2853, %v2861
    %v2863 = vlaneseq
    %v2864 = vshrl.u32 %v2863, 7
    %v2865 = vsub.s32 2, %v2864
    %v2866 = vrot.slane %v2853, %v2865
    %v2867 = vlaneseq
    %v2868 = vshrl.u32 %v2867, 7
    %v2869 = vsub.s32 3, %v2868
    %v2870 = vrot.slane %v2853, %v2869
    %v2907 = vunpack.c.l.b16 %v2821
    %v2908 = vunpack.c.h.b16 %v2821
    %v2909 = vunpack.c.l.b16 %v2822
    %v2910 = vunpack.c.h.b16 %v2822
    %v2911 = vunpack.c.l.b16 %v2823
    %v2912 = vunpack.c.h.b16 %v2823
    %v2913 = vunpack.c.l.b16 %v2824
    %v2914 = vunpack.c.h.b16 %v2824
    %v2915 = vunpack.c.l.b16 %v2825
    %v2916 = vunpack.c.h.b16 %v2825
    %v2917 = vunpack.c.l.b16 %v2826
    %v2918 = vunpack.c.h.b16 %v2826
    %v2919 = vunpack.c.l.b16 %v2827
    %v2920 = vunpack.c.h.b16 %v2827
    %v2921 = vunpack.c.l.b16 %v2828
    %v2922 = vunpack.c.h.b16 %v2828
    %v2923 = vunpack.c.l.b16 %v2829
    %v2924 = vunpack.c.h.b16 %v2829
    %v2925 = vunpack.c.l.b16 %v2830
    %v2926 = vunpack.c.h.b16 %v2830
    %v2927 = vunpack.c.l.b16 %v2831
    %v2928 = vunpack.c.h.b16 %v2831
    %v2929 = vunpack.c.l.b16 %v2832
    %v2930 = vunpack.c.h.b16 %v2832
    %v2931 = vunpack.c.l.b16 %v2833
    %v2932 = vunpack.c.h.b16 %v2833
    %v2933 = vunpack.c.l.b16 %v2834
    %v2934 = vunpack.c.h.b16 %v2834
    %v2935 = vunpack.c.l.b16 %v2835
    %v2936 = vunpack.c.h.b16 %v2835
    %v2937 = vunpack.c.l.b16 %v2836
    %v2938 = vunpack.c.h.b16 %v2836
    %v2939 = vunpack.c.l.b16 %v2837
    %v2940 = vunpack.c.h.b16 %v2837
    %v2941 = vunpack.c.l.b16 %v2838
    %v2942 = vunpack.c.h.b16 %v2838
    %v2943 = vunpack.c.l.b16 %v2839
    %v2944 = vunpack.c.h.b16 %v2839
    %v2945 = vunpack.c.l.b16 %v2840
    %v2946 = vunpack.c.h.b16 %v2840
    %v2947 = vunpack.c.l.b16 %v2841
    %v2948 = vunpack.c.h.b16 %v2841
    %v2949 = vunpack.c.l.b16 %v2842
    %v2950 = vunpack.c.h.b16 %v2842
    %v2951 = vunpack.c.l.b16 %v2843
    %v2952 = vunpack.c.h.b16 %v2843
    %v2953 = vunpack.c.l.b16 %v2844
    %v2954 = vunpack.c.h.b16 %v2844
    %v2955 = vunpack.c.l.b16 %v2845
    %v2956 = vunpack.c.h.b16 %v2845
    %v2957 = vunpack.c.l.b16 %v2846
    %v2958 = vunpack.c.h.b16 %v2846
    %v2959 = vunpack.c.l.b16 %v2847
    %v2960 = vunpack.c.h.b16 %v2847
    %v2961 = vunpack.c.l.b16 %v2848
    %v2962 = vunpack.c.h.b16 %v2848
    %v2963 = vunpack.c.l.b16 %v2849
    %v2964 = vunpack.c.h.b16 %v2849
    %v2965 = vunpack.c.l.b16 %v2850
    %v2966 = vunpack.c.h.b16 %v2850
    %v2967 = vunpack.c.l.b16 %v2851
    %v2968 = vunpack.c.h.b16 %v2851
    %v2969 = vunpack.c.l.b16 %v2852
    %v2970 = vunpack.c.h.b16 %v2852
    %v2971 = vpack.c.b16 %v2911, %v2907
    %v2972 = vpack.c.b16 %v2912, %v2908
    %v2973 = vpack.c.b16 %v2913, %v2909
    %v2974 = vpack.c.b16 %v2914, %v2910
    %v2975 = vpack.c.b16 %v2919, %v2915
    %v2976 = vpack.c.b16 %v2920, %v2916
    %v2977 = vpack.c.b16 %v2921, %v2917
    %v2978 = vpack.c.b16 %v2922, %v2918
    %v2979 = vpack.c.b16 %v2927, %v2923
    %v2980 = vpack.c.b16 %v2928, %v2924
    %v2981 = vpack.c.b16 %v2929, %v2925
    %v2982 = vpack.c.b16 %v2930, %v2926
    %v2983 = vpack.c.b16 %v2935, %v2931
    %v2984 = vpack.c.b16 %v2936, %v2932
    %v2985 = vpack.c.b16 %v2937, %v2933
    %v2986 = vpack.c.b16 %v2938, %v2934
    %v2987 = vpack.c.b16 %v2943, %v2939
    %v2988 = vpack.c.b16 %v2944, %v2940
    %v2989 = vpack.c.b16 %v2945, %v2941
    %v2990 = vpack.c.b16 %v2946, %v2942
    %v2991 = vpack.c.b16 %v2951, %v2947
    %v2992 = vpack.c.b16 %v2952, %v2948
    %v2993 = vpack.c.b16 %v2953, %v2949
    %v2994 = vpack.c.b16 %v2954, %v2950
    %v2995 = vpack.c.b16 %v2959, %v2955
    %v2996 = vpack.c.b16 %v2960, %v2956
    %v2997 = vpack.c.b16 %v2961, %v2957
    %v2998 = vpack.c.b16 %v2962, %v2958
    %v2999 = vpack.c.b16 %v2967, %v2963
    %v3000 = vpack.c.b16 %v2968, %v2964
    %v3001 = vpack.c.b16 %v2969, %v2965
    %v3002 = vpack.c.b16 %v2970, %v2966
    %3035 = vmatprep.subr.bf16.mxu0 %v3000
    %3036 = vmatpush1.bf16.msra.mxu0 %v2999
    %3037 = vmatprep.subr.bf16.mxu0 %v2996
    %3038 = vmatpush1.bf16.msra.mxu0 %v2995
    %3039 = vmatprep.subr.bf16.mxu0 %v2992
    %3040 = vmatpush1.bf16.msra.mxu0 %v2991
    %3041 = vmatprep.subr.bf16.mxu0 %v2988
    %3042 = vmatpush1.bf16.msra.mxu0 %v2987
    %3043 = vmatprep.subr.bf16.mxu0 %v2984
    %3044 = vmatpush1.bf16.msra.mxu0 %v2983
    %3045 = vmatprep.subr.bf16.mxu0 %v2980
    %3046 = vmatpush1.bf16.msra.mxu0 %v2979
    %3047 = vmatprep.subr.bf16.mxu0 %v2976
    %3048 = vmatpush1.bf16.msra.mxu0 %v2975
    %3049 = vmatprep.subr.bf16.mxu0 %v2972
    %3050 = vmatpush1.bf16.msra.mxu0 %v2971
    %3051 = vmatprep.subr.bf16.mxu0 0
    %3052 = vmatpush2.bf16.msra.mxu0 0
    %3053 = vmatprep.subr.bf16.mxu0 0
    %3054 = vmatpush2.bf16.msra.mxu0 0
    %3055 = vmatprep.subr.bf16.mxu0 0
    %3056 = vmatpush2.bf16.msra.mxu0 0
    %3057 = vmatprep.subr.bf16.mxu0 0
    %3058 = vmatpush2.bf16.msra.mxu0 0
    %3059 = vmatprep.subr.bf16.mxu0 0
    %3060 = vmatpush2.bf16.msra.mxu0 0
    %3061 = vmatprep.subr.bf16.mxu0 0
    %3062 = vmatpush2.bf16.msra.mxu0 0
    %3063 = vmatprep.subr.bf16.mxu0 0
    %3064 = vmatpush2.bf16.msra.mxu0 0
    %3065 = vmatprep.subr.bf16.mxu0 0
    %3066 = vmatpush2.bf16.msra.mxu0 0
    %3067 = vmatprep.mubr.bf16.mxu0 0
    %3068 = vmatmul.mubr.bf16.gmra.mxu0 %v2820
    %v3069 = vpop.f32.mrf.mxu0
    %v3070 = vadd.f32 %v2858, %v3069
    %v3071 = vpop.f32.mrf.mxu0
    %v3072 = vadd.f32 %v2862, %v3071
    %v3073 = vpop.f32.mrf.mxu0
    %v3074 = vpop.f32.mrf.mxu0
    %3075 = vdwg.mxu0
    %3076 = vmatprep.subr.bf16.mxu0 %v3002
    %3077 = vmatpush1.bf16.msra.mxu0 %v3001
    %3078 = vmatprep.subr.bf16.mxu0 %v2998
    %3079 = vmatpush1.bf16.msra.mxu0 %v2997
    %3080 = vmatprep.subr.bf16.mxu0 %v2994
    %3081 = vmatpush1.bf16.msra.mxu0 %v2993
    %3082 = vmatprep.subr.bf16.mxu0 %v2990
    %3083 = vmatpush1.bf16.msra.mxu0 %v2989
    %3084 = vmatprep.subr.bf16.mxu0 %v2986
    %3085 = vmatpush1.bf16.msra.mxu0 %v2985
    %3086 = vmatprep.subr.bf16.mxu0 %v2982
    %3087 = vmatpush1.bf16.msra.mxu0 %v2981
    %3088 = vmatprep.subr.bf16.mxu0 %v2978
    %3089 = vmatpush1.bf16.msra.mxu0 %v2977
    %3090 = vmatprep.subr.bf16.mxu0 %v2974
    %3091 = vmatpush1.bf16.msra.mxu0 %v2973
    %3092 = vmatprep.subr.bf16.mxu0 0
    %3093 = vmatpush2.bf16.msra.mxu0 0
    %3094 = vmatprep.subr.bf16.mxu0 0
    %3095 = vmatpush2.bf16.msra.mxu0 0
    %3096 = vmatprep.subr.bf16.mxu0 0
    %3097 = vmatpush2.bf16.msra.mxu0 0
    %3098 = vmatprep.subr.bf16.mxu0 0
    %3099 = vmatpush2.bf16.msra.mxu0 0
    %3100 = vmatprep.subr.bf16.mxu0 0
    %3101 = vmatpush2.bf16.msra.mxu0 0
    %3102 = vmatprep.subr.bf16.mxu0 0
    %3103 = vmatpush2.bf16.msra.mxu0 0
    %3104 = vmatprep.subr.bf16.mxu0 0
    %3105 = vmatpush2.bf16.msra.mxu0 0
    %3106 = vmatprep.subr.bf16.mxu0 0
    %3107 = vmatpush2.bf16.msra.mxu0 0
    %3108 = vmatprep.mubr.bf16.mxu0 0
    %3109 = vmatmul.mubr.bf16.gmra.mxu0 %v2820
    %v3110 = vpop.f32.mrf.mxu0
    %v3111 = vadd.f32 %v2866, %v3110
    %v3112 = vpop.f32.mrf.mxu0
    %v3113 = vadd.f32 %v2870, %v3112
    %v3114 = vpop.f32.mrf.mxu0
    %v3115 = vpop.f32.mrf.mxu0
    %3116 = vdwg.mxu0
    %3117 = vst [vmem:[#allocation4 + $0x120] sm:$0xff] %v3070
    %3118 = vst [vmem:[#allocation4 + $0x128] sm:$0xff] %v3072
    %3119 = vst [vmem:[#allocation4 + $0x130] sm:$0xff] %v3111
    %3120 = vst [vmem:[#allocation4 + $0x138] sm:$0xff] %v3113
    %s3121 = scalar_lea.vmem [#allocation5], 40
    %v3122 = vld [vmem:[%s3121] sm:$0xf]
    %v3123 = vld [vmem:[#allocation8] sm:$0xff]
    %v3124 = vld [vmem:[#allocation8 + $0x8] sm:$0xff]
    %v3125 = vld [vmem:[#allocation8 + $0x10] sm:$0xff]
    %v3126 = vld [vmem:[#allocation8 + $0x18] sm:$0xff]
    %v3127 = vld [vmem:[#allocation8 + $0x20] sm:$0xff]
    %v3128 = vld [vmem:[#allocation8 + $0x28] sm:$0xff]
    %v3129 = vld [vmem:[#allocation8 + $0x30] sm:$0xff]
    %v3130 = vld [vmem:[#allocation8 + $0x38] sm:$0xff]
    %v3131 = vld [vmem:[#allocation8 + $0x40] sm:$0xff]
    %v3132 = vld [vmem:[#allocation8 + $0x48] sm:$0xff]
    %v3133 = vld [vmem:[#allocation8 + $0x50] sm:$0xff]
    %v3134 = vld [vmem:[#allocation8 + $0x58] sm:$0xff]
    %v3135 = vld [vmem:[#allocation8 + $0x60] sm:$0xff]
    %v3136 = vld [vmem:[#allocation8 + $0x68] sm:$0xff]
    %v3137 = vld [vmem:[#allocation8 + $0x70] sm:$0xff]
    %v3138 = vld [vmem:[#allocation8 + $0x78] sm:$0xff]
    %v3139 = vld [vmem:[#allocation8 + $0x80] sm:$0xff]
    %v3140 = vld [vmem:[#allocation8 + $0x88] sm:$0xff]
    %v3141 = vld [vmem:[#allocation8 + $0x90] sm:$0xff]
    %v3142 = vld [vmem:[#allocation8 + $0x98] sm:$0xff]
    %v3143 = vld [vmem:[#allocation8 + $0xa0] sm:$0xff]
    %v3144 = vld [vmem:[#allocation8 + $0xa8] sm:$0xff]
    %v3145 = vld [vmem:[#allocation8 + $0xb0] sm:$0xff]
    %v3146 = vld [vmem:[#allocation8 + $0xb8] sm:$0xff]
    %v3147 = vld [vmem:[#allocation8 + $0xc0] sm:$0xff]
    %v3148 = vld [vmem:[#allocation8 + $0xc8] sm:$0xff]
    %v3149 = vld [vmem:[#allocation8 + $0xd0] sm:$0xff]
    %v3150 = vld [vmem:[#allocation8 + $0xd8] sm:$0xff]
    %v3151 = vld [vmem:[#allocation8 + $0xe0] sm:$0xff]
    %v3152 = vld [vmem:[#allocation8 + $0xe8] sm:$0xff]
    %v3153 = vld [vmem:[#allocation8 + $0xf0] sm:$0xff]
    %v3154 = vld [vmem:[#allocation8 + $0xf8] sm:$0xff]
    %v3155 = vld [vmem:[#allocation11] sm:$0xf]
    %v3157 = vlaneseq
    %v3158 = vshrl.u32 %v3157, 7
    %v3159 = vsub.s32 0, %v3158
    %v3160 = vrot.slane %v3155, %v3159
    %v3161 = vlaneseq
    %v3162 = vshrl.u32 %v3161, 7
    %v3163 = vsub.s32 1, %v3162
    %v3164 = vrot.slane %v3155, %v3163
    %v3165 = vlaneseq
    %v3166 = vshrl.u32 %v3165, 7
    %v3167 = vsub.s32 2, %v3166
    %v3168 = vrot.slane %v3155, %v3167
    %v3169 = vlaneseq
    %v3170 = vshrl.u32 %v3169, 7
    %v3171 = vsub.s32 3, %v3170
    %v3172 = vrot.slane %v3155, %v3171
    %v3209 = vunpack.c.l.b16 %v3123
    %v3210 = vunpack.c.h.b16 %v3123
    %v3211 = vunpack.c.l.b16 %v3124
    %v3212 = vunpack.c.h.b16 %v3124
    %v3213 = vunpack.c.l.b16 %v3125
    %v3214 = vunpack.c.h.b16 %v3125
    %v3215 = vunpack.c.l.b16 %v3126
    %v3216 = vunpack.c.h.b16 %v3126
    %v3217 = vunpack.c.l.b16 %v3127
    %v3218 = vunpack.c.h.b16 %v3127
    %v3219 = vunpack.c.l.b16 %v3128
    %v3220 = vunpack.c.h.b16 %v3128
    %v3221 = vunpack.c.l.b16 %v3129
    %v3222 = vunpack.c.h.b16 %v3129
    %v3223 = vunpack.c.l.b16 %v3130
    %v3224 = vunpack.c.h.b16 %v3130
    %v3225 = vunpack.c.l.b16 %v3131
    %v3226 = vunpack.c.h.b16 %v3131
    %v3227 = vunpack.c.l.b16 %v3132
    %v3228 = vunpack.c.h.b16 %v3132
    %v3229 = vunpack.c.l.b16 %v3133
    %v3230 = vunpack.c.h.b16 %v3133
    %v3231 = vunpack.c.l.b16 %v3134
    %v3232 = vunpack.c.h.b16 %v3134
    %v3233 = vunpack.c.l.b16 %v3135
    %v3234 = vunpack.c.h.b16 %v3135
    %v3235 = vunpack.c.l.b16 %v3136
    %v3236 = vunpack.c.h.b16 %v3136
    %v3237 = vunpack.c.l.b16 %v3137
    %v3238 = vunpack.c.h.b16 %v3137
    %v3239 = vunpack.c.l.b16 %v3138
    %v3240 = vunpack.c.h.b16 %v3138
    %v3241 = vunpack.c.l.b16 %v3139
    %v3242 = vunpack.c.h.b16 %v3139
    %v3243 = vunpack.c.l.b16 %v3140
    %v3244 = vunpack.c.h.b16 %v3140
    %v3245 = vunpack.c.l.b16 %v3141
    %v3246 = vunpack.c.h.b16 %v3141
    %v3247 = vunpack.c.l.b16 %v3142
    %v3248 = vunpack.c.h.b16 %v3142
    %v3249 = vunpack.c.l.b16 %v3143
    %v3250 = vunpack.c.h.b16 %v3143
    %v3251 = vunpack.c.l.b16 %v3144
    %v3252 = vunpack.c.h.b16 %v3144
    %v3253 = vunpack.c.l.b16 %v3145
    %v3254 = vunpack.c.h.b16 %v3145
    %v3255 = vunpack.c.l.b16 %v3146
    %v3256 = vunpack.c.h.b16 %v3146
    %v3257 = vunpack.c.l.b16 %v3147
    %v3258 = vunpack.c.h.b16 %v3147
    %v3259 = vunpack.c.l.b16 %v3148
    %v3260 = vunpack.c.h.b16 %v3148
    %v3261 = vunpack.c.l.b16 %v3149
    %v3262 = vunpack.c.h.b16 %v3149
    %v3263 = vunpack.c.l.b16 %v3150
    %v3264 = vunpack.c.h.b16 %v3150
    %v3265 = vunpack.c.l.b16 %v3151
    %v3266 = vunpack.c.h.b16 %v3151
    %v3267 = vunpack.c.l.b16 %v3152
    %v3268 = vunpack.c.h.b16 %v3152
    %v3269 = vunpack.c.l.b16 %v3153
    %v3270 = vunpack.c.h.b16 %v3153
    %v3271 = vunpack.c.l.b16 %v3154
    %v3272 = vunpack.c.h.b16 %v3154
    %v3273 = vpack.c.b16 %v3213, %v3209
    %v3274 = vpack.c.b16 %v3214, %v3210
    %v3275 = vpack.c.b16 %v3215, %v3211
    %v3276 = vpack.c.b16 %v3216, %v3212
    %v3277 = vpack.c.b16 %v3221, %v3217
    %v3278 = vpack.c.b16 %v3222, %v3218
    %v3279 = vpack.c.b16 %v3223, %v3219
    %v3280 = vpack.c.b16 %v3224, %v3220
    %v3281 = vpack.c.b16 %v3229, %v3225
    %v3282 = vpack.c.b16 %v3230, %v3226
    %v3283 = vpack.c.b16 %v3231, %v3227
    %v3284 = vpack.c.b16 %v3232, %v3228
    %v3285 = vpack.c.b16 %v3237, %v3233
    %v3286 = vpack.c.b16 %v3238, %v3234
    %v3287 = vpack.c.b16 %v3239, %v3235
    %v3288 = vpack.c.b16 %v3240, %v3236
    %v3289 = vpack.c.b16 %v3245, %v3241
    %v3290 = vpack.c.b16 %v3246, %v3242
    %v3291 = vpack.c.b16 %v3247, %v3243
    %v3292 = vpack.c.b16 %v3248, %v3244
    %v3293 = vpack.c.b16 %v3253, %v3249
    %v3294 = vpack.c.b16 %v3254, %v3250
    %v3295 = vpack.c.b16 %v3255, %v3251
    %v3296 = vpack.c.b16 %v3256, %v3252
    %v3297 = vpack.c.b16 %v3261, %v3257
    %v3298 = vpack.c.b16 %v3262, %v3258
    %v3299 = vpack.c.b16 %v3263, %v3259
    %v3300 = vpack.c.b16 %v3264, %v3260
    %v3301 = vpack.c.b16 %v3269, %v3265
    %v3302 = vpack.c.b16 %v3270, %v3266
    %v3303 = vpack.c.b16 %v3271, %v3267
    %v3304 = vpack.c.b16 %v3272, %v3268
    %3337 = vmatprep.subr.bf16.mxu0 %v3302
    %3338 = vmatpush1.bf16.msra.mxu0 %v3301
    %3339 = vmatprep.subr.bf16.mxu0 %v3298
    %3340 = vmatpush1.bf16.msra.mxu0 %v3297
    %3341 = vmatprep.subr.bf16.mxu0 %v3294
    %3342 = vmatpush1.bf16.msra.mxu0 %v3293
    %3343 = vmatprep.subr.bf16.mxu0 %v3290
    %3344 = vmatpush1.bf16.msra.mxu0 %v3289
    %3345 = vmatprep.subr.bf16.mxu0 %v3286
    %3346 = vmatpush1.bf16.msra.mxu0 %v3285
    %3347 = vmatprep.subr.bf16.mxu0 %v3282
    %3348 = vmatpush1.bf16.msra.mxu0 %v3281
    %3349 = vmatprep.subr.bf16.mxu0 %v3278
    %3350 = vmatpush1.bf16.msra.mxu0 %v3277
    %3351 = vmatprep.subr.bf16.mxu0 %v3274
    %3352 = vmatpush1.bf16.msra.mxu0 %v3273
    %3353 = vmatprep.subr.bf16.mxu0 0
    %3354 = vmatpush2.bf16.msra.mxu0 0
    %3355 = vmatprep.subr.bf16.mxu0 0
    %3356 = vmatpush2.bf16.msra.mxu0 0
    %3357 = vmatprep.subr.bf16.mxu0 0
    %3358 = vmatpush2.bf16.msra.mxu0 0
    %3359 = vmatprep.subr.bf16.mxu0 0
    %3360 = vmatpush2.bf16.msra.mxu0 0
    %3361 = vmatprep.subr.bf16.mxu0 0
    %3362 = vmatpush2.bf16.msra.mxu0 0
    %3363 = vmatprep.subr.bf16.mxu0 0
    %3364 = vmatpush2.bf16.msra.mxu0 0
    %3365 = vmatprep.subr.bf16.mxu0 0
    %3366 = vmatpush2.bf16.msra.mxu0 0
    %3367 = vmatprep.subr.bf16.mxu0 0
    %3368 = vmatpush2.bf16.msra.mxu0 0
    %3369 = vmatprep.mubr.bf16.mxu0 0
    %3370 = vmatmul.mubr.bf16.gmra.mxu0 %v3122
    %v3371 = vpop.f32.mrf.mxu0
    %v3372 = vadd.f32 %v3160, %v3371
    %v3373 = vpop.f32.mrf.mxu0
    %v3374 = vadd.f32 %v3164, %v3373
    %v3375 = vpop.f32.mrf.mxu0
    %v3376 = vpop.f32.mrf.mxu0
    %3377 = vdwg.mxu0
    %3378 = vmatprep.subr.bf16.mxu0 %v3304
    %3379 = vmatpush1.bf16.msra.mxu0 %v3303
    %3380 = vmatprep.subr.bf16.mxu0 %v3300
    %3381 = vmatpush1.bf16.msra.mxu0 %v3299
    %3382 = vmatprep.subr.bf16.mxu0 %v3296
    %3383 = vmatpush1.bf16.msra.mxu0 %v3295
    %3384 = vmatprep.subr.bf16.mxu0 %v3292
    %3385 = vmatpush1.bf16.msra.mxu0 %v3291
    %3386 = vmatprep.subr.bf16.mxu0 %v3288
    %3387 = vmatpush1.bf16.msra.mxu0 %v3287
    %3388 = vmatprep.subr.bf16.mxu0 %v3284
    %3389 = vmatpush1.bf16.msra.mxu0 %v3283
    %3390 = vmatprep.subr.bf16.mxu0 %v3280
    %3391 = vmatpush1.bf16.msra.mxu0 %v3279
    %3392 = vmatprep.subr.bf16.mxu0 %v3276
    %3393 = vmatpush1.bf16.msra.mxu0 %v3275
    %3394 = vmatprep.subr.bf16.mxu0 0
    %3395 = vmatpush2.bf16.msra.mxu0 0
    %3396 = vmatprep.subr.bf16.mxu0 0
    %3397 = vmatpush2.bf16.msra.mxu0 0
    %3398 = vmatprep.subr.bf16.mxu0 0
    %3399 = vmatpush2.bf16.msra.mxu0 0
    %3400 = vmatprep.subr.bf16.mxu0 0
    %3401 = vmatpush2.bf16.msra.mxu0 0
    %3402 = vmatprep.subr.bf16.mxu0 0
    %3403 = vmatpush2.bf16.msra.mxu0 0
    %3404 = vmatprep.subr.bf16.mxu0 0
    %3405 = vmatpush2.bf16.msra.mxu0 0
    %3406 = vmatprep.subr.bf16.mxu0 0
    %3407 = vmatpush2.bf16.msra.mxu0 0
    %3408 = vmatprep.subr.bf16.mxu0 0
    %3409 = vmatpush2.bf16.msra.mxu0 0
    %3410 = vmatprep.mubr.bf16.mxu0 0
    %3411 = vmatmul.mubr.bf16.gmra.mxu0 %v3122
    %v3412 = vpop.f32.mrf.mxu0
    %v3413 = vadd.f32 %v3168, %v3412
    %v3414 = vpop.f32.mrf.mxu0
    %v3415 = vadd.f32 %v3172, %v3414
    %v3416 = vpop.f32.mrf.mxu0
    %v3417 = vpop.f32.mrf.mxu0
    %3418 = vdwg.mxu0
    %3419 = vst [vmem:[#allocation4 + $0x140] sm:$0xff] %v3372
    %3420 = vst [vmem:[#allocation4 + $0x148] sm:$0xff] %v3374
    %3421 = vst [vmem:[#allocation4 + $0x150] sm:$0xff] %v3413
    %3422 = vst [vmem:[#allocation4 + $0x158] sm:$0xff] %v3415
    %s3423 = scalar_lea.vmem [#allocation5], 44
    %v3424 = vld [vmem:[%s3423] sm:$0xf]
    %v3425 = vld [vmem:[#allocation8] sm:$0xff]
    %v3426 = vld [vmem:[#allocation8 + $0x8] sm:$0xff]
    %v3427 = vld [vmem:[#allocation8 + $0x10] sm:$0xff]
    %v3428 = vld [vmem:[#allocation8 + $0x18] sm:$0xff]
    %v3429 = vld [vmem:[#allocation8 + $0x20] sm:$0xff]
    %v3430 = vld [vmem:[#allocation8 + $0x28] sm:$0xff]
    %v3431 = vld [vmem:[#allocation8 + $0x30] sm:$0xff]
    %v3432 = vld [vmem:[#allocation8 + $0x38] sm:$0xff]
    %v3433 = vld [vmem:[#allocation8 + $0x40] sm:$0xff]
    %v3434 = vld [vmem:[#allocation8 + $0x48] sm:$0xff]
    %v3435 = vld [vmem:[#allocation8 + $0x50] sm:$0xff]
    %v3436 = vld [vmem:[#allocation8 + $0x58] sm:$0xff]
    %v3437 = vld [vmem:[#allocation8 + $0x60] sm:$0xff]
    %v3438 = vld [vmem:[#allocation8 + $0x68] sm:$0xff]
    %v3439 = vld [vmem:[#allocation8 + $0x70] sm:$0xff]
    %v3440 = vld [vmem:[#allocation8 + $0x78] sm:$0xff]
    %v3441 = vld [vmem:[#allocation8 + $0x80] sm:$0xff]
    %v3442 = vld [vmem:[#allocation8 + $0x88] sm:$0xff]
    %v3443 = vld [vmem:[#allocation8 + $0x90] sm:$0xff]
    %v3444 = vld [vmem:[#allocation8 + $0x98] sm:$0xff]
    %v3445 = vld [vmem:[#allocation8 + $0xa0] sm:$0xff]
    %v3446 = vld [vmem:[#allocation8 + $0xa8] sm:$0xff]
    %v3447 = vld [vmem:[#allocation8 + $0xb0] sm:$0xff]
    %v3448 = vld [vmem:[#allocation8 + $0xb8] sm:$0xff]
    %v3449 = vld [vmem:[#allocation8 + $0xc0] sm:$0xff]
    %v3450 = vld [vmem:[#allocation8 + $0xc8] sm:$0xff]
    %v3451 = vld [vmem:[#allocation8 + $0xd0] sm:$0xff]
    %v3452 = vld [vmem:[#allocation8 + $0xd8] sm:$0xff]
    %v3453 = vld [vmem:[#allocation8 + $0xe0] sm:$0xff]
    %v3454 = vld [vmem:[#allocation8 + $0xe8] sm:$0xff]
    %v3455 = vld [vmem:[#allocation8 + $0xf0] sm:$0xff]
    %v3456 = vld [vmem:[#allocation8 + $0xf8] sm:$0xff]
    %v3457 = vld [vmem:[#allocation11] sm:$0xf]
    %v3459 = vlaneseq
    %v3460 = vshrl.u32 %v3459, 7
    %v3461 = vsub.s32 0, %v3460
    %v3462 = vrot.slane %v3457, %v3461
    %v3463 = vlaneseq
    %v3464 = vshrl.u32 %v3463, 7
    %v3465 = vsub.s32 1, %v3464
    %v3466 = vrot.slane %v3457, %v3465
    %v3467 = vlaneseq
    %v3468 = vshrl.u32 %v3467, 7
    %v3469 = vsub.s32 2, %v3468
    %v3470 = vrot.slane %v3457, %v3469
    %v3471 = vlaneseq
    %v3472 = vshrl.u32 %v3471, 7
    %v3473 = vsub.s32 3, %v3472
    %v3474 = vrot.slane %v3457, %v3473
    %v3511 = vunpack.c.l.b16 %v3425
    %v3512 = vunpack.c.h.b16 %v3425
    %v3513 = vunpack.c.l.b16 %v3426
    %v3514 = vunpack.c.h.b16 %v3426
    %v3515 = vunpack.c.l.b16 %v3427
    %v3516 = vunpack.c.h.b16 %v3427
    %v3517 = vunpack.c.l.b16 %v3428
    %v3518 = vunpack.c.h.b16 %v3428
    %v3519 = vunpack.c.l.b16 %v3429
    %v3520 = vunpack.c.h.b16 %v3429
    %v3521 = vunpack.c.l.b16 %v3430
    %v3522 = vunpack.c.h.b16 %v3430
    %v3523 = vunpack.c.l.b16 %v3431
    %v3524 = vunpack.c.h.b16 %v3431
    %v3525 = vunpack.c.l.b16 %v3432
    %v3526 = vunpack.c.h.b16 %v3432
    %v3527 = vunpack.c.l.b16 %v3433
    %v3528 = vunpack.c.h.b16 %v3433
    %v3529 = vunpack.c.l.b16 %v3434
    %v3530 = vunpack.c.h.b16 %v3434
    %v3531 = vunpack.c.l.b16 %v3435
    %v3532 = vunpack.c.h.b16 %v3435
    %v3533 = vunpack.c.l.b16 %v3436
    %v3534 = vunpack.c.h.b16 %v3436
    %v3535 = vunpack.c.l.b16 %v3437
    %v3536 = vunpack.c.h.b16 %v3437
    %v3537 = vunpack.c.l.b16 %v3438
    %v3538 = vunpack.c.h.b16 %v3438
    %v3539 = vunpack.c.l.b16 %v3439
    %v3540 = vunpack.c.h.b16 %v3439
    %v3541 = vunpack.c.l.b16 %v3440
    %v3542 = vunpack.c.h.b16 %v3440
    %v3543 = vunpack.c.l.b16 %v3441
    %v3544 = vunpack.c.h.b16 %v3441
    %v3545 = vunpack.c.l.b16 %v3442
    %v3546 = vunpack.c.h.b16 %v3442
    %v3547 = vunpack.c.l.b16 %v3443
    %v3548 = vunpack.c.h.b16 %v3443
    %v3549 = vunpack.c.l.b16 %v3444
    %v3550 = vunpack.c.h.b16 %v3444
    %v3551 = vunpack.c.l.b16 %v3445
    %v3552 = vunpack.c.h.b16 %v3445
    %v3553 = vunpack.c.l.b16 %v3446
    %v3554 = vunpack.c.h.b16 %v3446
    %v3555 = vunpack.c.l.b16 %v3447
    %v3556 = vunpack.c.h.b16 %v3447
    %v3557 = vunpack.c.l.b16 %v3448
    %v3558 = vunpack.c.h.b16 %v3448
    %v3559 = vunpack.c.l.b16 %v3449
    %v3560 = vunpack.c.h.b16 %v3449
    %v3561 = vunpack.c.l.b16 %v3450
    %v3562 = vunpack.c.h.b16 %v3450
    %v3563 = vunpack.c.l.b16 %v3451
    %v3564 = vunpack.c.h.b16 %v3451
    %v3565 = vunpack.c.l.b16 %v3452
    %v3566 = vunpack.c.h.b16 %v3452
    %v3567 = vunpack.c.l.b16 %v3453
    %v3568 = vunpack.c.h.b16 %v3453
    %v3569 = vunpack.c.l.b16 %v3454
    %v3570 = vunpack.c.h.b16 %v3454
    %v3571 = vunpack.c.l.b16 %v3455
    %v3572 = vunpack.c.h.b16 %v3455
    %v3573 = vunpack.c.l.b16 %v3456
    %v3574 = vunpack.c.h.b16 %v3456
    %v3575 = vpack.c.b16 %v3515, %v3511
    %v3576 = vpack.c.b16 %v3516, %v3512
    %v3577 = vpack.c.b16 %v3517, %v3513
    %v3578 = vpack.c.b16 %v3518, %v3514
    %v3579 = vpack.c.b16 %v3523, %v3519
    %v3580 = vpack.c.b16 %v3524, %v3520
    %v3581 = vpack.c.b16 %v3525, %v3521
    %v3582 = vpack.c.b16 %v3526, %v3522
    %v3583 = vpack.c.b16 %v3531, %v3527
    %v3584 = vpack.c.b16 %v3532, %v3528
    %v3585 = vpack.c.b16 %v3533, %v3529
    %v3586 = vpack.c.b16 %v3534, %v3530
    %v3587 = vpack.c.b16 %v3539, %v3535
    %v3588 = vpack.c.b16 %v3540, %v3536
    %v3589 = vpack.c.b16 %v3541, %v3537
    %v3590 = vpack.c.b16 %v3542, %v3538
    %v3591 = vpack.c.b16 %v3547, %v3543
    %v3592 = vpack.c.b16 %v3548, %v3544
    %v3593 = vpack.c.b16 %v3549, %v3545
    %v3594 = vpack.c.b16 %v3550, %v3546
    %v3595 = vpack.c.b16 %v3555, %v3551
    %v3596 = vpack.c.b16 %v3556, %v3552
    %v3597 = vpack.c.b16 %v3557, %v3553
    %v3598 = vpack.c.b16 %v3558, %v3554
    %v3599 = vpack.c.b16 %v3563, %v3559
    %v3600 = vpack.c.b16 %v3564, %v3560
    %v3601 = vpack.c.b16 %v3565, %v3561
    %v3602 = vpack.c.b16 %v3566, %v3562
    %v3603 = vpack.c.b16 %v3571, %v3567
    %v3604 = vpack.c.b16 %v3572, %v3568
    %v3605 = vpack.c.b16 %v3573, %v3569
    %v3606 = vpack.c.b16 %v3574, %v3570
    %3639 = vmatprep.subr.bf16.mxu0 %v3604
    %3640 = vmatpush1.bf16.msra.mxu0 %v3603
    %3641 = vmatprep.subr.bf16.mxu0 %v3600
    %3642 = vmatpush1.bf16.msra.mxu0 %v3599
    %3643 = vmatprep.subr.bf16.mxu0 %v3596
    %3644 = vmatpush1.bf16.msra.mxu0 %v3595
    %3645 = vmatprep.subr.bf16.mxu0 %v3592
    %3646 = vmatpush1.bf16.msra.mxu0 %v3591
    %3647 = vmatprep.subr.bf16.mxu0 %v3588
    %3648 = vmatpush1.bf16.msra.mxu0 %v3587
    %3649 = vmatprep.subr.bf16.mxu0 %v3584
    %3650 = vmatpush1.bf16.msra.mxu0 %v3583
    %3651 = vmatprep.subr.bf16.mxu0 %v3580
    %3652 = vmatpush1.bf16.msra.mxu0 %v3579
    %3653 = vmatprep.subr.bf16.mxu0 %v3576
    %3654 = vmatpush1.bf16.msra.mxu0 %v3575
    %3655 = vmatprep.subr.bf16.mxu0 0
    %3656 = vmatpush2.bf16.msra.mxu0 0
    %3657 = vmatprep.subr.bf16.mxu0 0
    %3658 = vmatpush2.bf16.msra.mxu0 0
    %3659 = vmatprep.subr.bf16.mxu0 0
    %3660 = vmatpush2.bf16.msra.mxu0 0
    %3661 = vmatprep.subr.bf16.mxu0 0
    %3662 = vmatpush2.bf16.msra.mxu0 0
    %3663 = vmatprep.subr.bf16.mxu0 0
    %3664 = vmatpush2.bf16.msra.mxu0 0
    %3665 = vmatprep.subr.bf16.mxu0 0
    %3666 = vmatpush2.bf16.msra.mxu0 0
    %3667 = vmatprep.subr.bf16.mxu0 0
    %3668 = vmatpush2.bf16.msra.mxu0 0
    %3669 = vmatprep.subr.bf16.mxu0 0
    %3670 = vmatpush2.bf16.msra.mxu0 0
    %3671 = vmatprep.mubr.bf16.mxu0 0
    %3672 = vmatmul.mubr.bf16.gmra.mxu0 %v3424
    %v3673 = vpop.f32.mrf.mxu0
    %v3674 = vadd.f32 %v3462, %v3673
    %v3675 = vpop.f32.mrf.mxu0
    %v3676 = vadd.f32 %v3466, %v3675
    %v3677 = vpop.f32.mrf.mxu0
    %v3678 = vpop.f32.mrf.mxu0
    %3679 = vdwg.mxu0
    %3680 = vmatprep.subr.bf16.mxu0 %v3606
    %3681 = vmatpush1.bf16.msra.mxu0 %v3605
    %3682 = vmatprep.subr.bf16.mxu0 %v3602
    %3683 = vmatpush1.bf16.msra.mxu0 %v3601
    %3684 = vmatprep.subr.bf16.mxu0 %v3598
    %3685 = vmatpush1.bf16.msra.mxu0 %v3597
    %3686 = vmatprep.subr.bf16.mxu0 %v3594
    %3687 = vmatpush1.bf16.msra.mxu0 %v3593
    %3688 = vmatprep.subr.bf16.mxu0 %v3590
    %3689 = vmatpush1.bf16.msra.mxu0 %v3589
    %3690 = vmatprep.subr.bf16.mxu0 %v3586
    %3691 = vmatpush1.bf16.msra.mxu0 %v3585
    %3692 = vmatprep.subr.bf16.mxu0 %v3582
    %3693 = vmatpush1.bf16.msra.mxu0 %v3581
    %3694 = vmatprep.subr.bf16.mxu0 %v3578
    %3695 = vmatpush1.bf16.msra.mxu0 %v3577
    %3696 = vmatprep.subr.bf16.mxu0 0
    %3697 = vmatpush2.bf16.msra.mxu0 0
    %3698 = vmatprep.subr.bf16.mxu0 0
    %3699 = vmatpush2.bf16.msra.mxu0 0
    %3700 = vmatprep.subr.bf16.mxu0 0
    %3701 = vmatpush2.bf16.msra.mxu0 0
    %3702 = vmatprep.subr.bf16.mxu0 0
    %3703 = vmatpush2.bf16.msra.mxu0 0
    %3704 = vmatprep.subr.bf16.mxu0 0
    %3705 = vmatpush2.bf16.msra.mxu0 0
    %3706 = vmatprep.subr.bf16.mxu0 0
    %3707 = vmatpush2.bf16.msra.mxu0 0
    %3708 = vmatprep.subr.bf16.mxu0 0
    %3709 = vmatpush2.bf16.msra.mxu0 0
    %3710 = vmatprep.subr.bf16.mxu0 0
    %3711 = vmatpush2.bf16.msra.mxu0 0
    %3712 = vmatprep.mubr.bf16.mxu0 0
    %3713 = vmatmul.mubr.bf16.gmra.mxu0 %v3424
    %v3714 = vpop.f32.mrf.mxu0
    %v3715 = vadd.f32 %v3470, %v3714
    %v3716 = vpop.f32.mrf.mxu0
    %v3717 = vadd.f32 %v3474, %v3716
    %v3718 = vpop.f32.mrf.mxu0
    %v3719 = vpop.f32.mrf.mxu0
    %3720 = vdwg.mxu0
    %3721 = vst [vmem:[#allocation4 + $0x160] sm:$0xff] %v3674
    %3722 = vst [vmem:[#allocation4 + $0x168] sm:$0xff] %v3676
    %3723 = vst [vmem:[#allocation4 + $0x170] sm:$0xff] %v3715
    %3724 = vst [vmem:[#allocation4 + $0x178] sm:$0xff] %v3717
    %s3725 = scalar_lea.vmem [#allocation5], 48
    %v3726 = vld [vmem:[%s3725] sm:$0xf]
    %v3727 = vld [vmem:[#allocation8] sm:$0xff]
    %v3728 = vld [vmem:[#allocation8 + $0x8] sm:$0xff]
    %v3729 = vld [vmem:[#allocation8 + $0x10] sm:$0xff]
    %v3730 = vld [vmem:[#allocation8 + $0x18] sm:$0xff]
    %v3731 = vld [vmem:[#allocation8 + $0x20] sm:$0xff]
    %v3732 = vld [vmem:[#allocation8 + $0x28] sm:$0xff]
    %v3733 = vld [vmem:[#allocation8 + $0x30] sm:$0xff]
    %v3734 = vld [vmem:[#allocation8 + $0x38] sm:$0xff]
    %v3735 = vld [vmem:[#allocation8 + $0x40] sm:$0xff]
    %v3736 = vld [vmem:[#allocation8 + $0x48] sm:$0xff]
    %v3737 = vld [vmem:[#allocation8 + $0x50] sm:$0xff]
    %v3738 = vld [vmem:[#allocation8 + $0x58] sm:$0xff]
    %v3739 = vld [vmem:[#allocation8 + $0x60] sm:$0xff]
    %v3740 = vld [vmem:[#allocation8 + $0x68] sm:$0xff]
    %v3741 = vld [vmem:[#allocation8 + $0x70] sm:$0xff]
    %v3742 = vld [vmem:[#allocation8 + $0x78] sm:$0xff]
    %v3743 = vld [vmem:[#allocation8 + $0x80] sm:$0xff]
    %v3744 = vld [vmem:[#allocation8 + $0x88] sm:$0xff]
    %v3745 = vld [vmem:[#allocation8 + $0x90] sm:$0xff]
    %v3746 = vld [vmem:[#allocation8 + $0x98] sm:$0xff]
    %v3747 = vld [vmem:[#allocation8 + $0xa0] sm:$0xff]
    %v3748 = vld [vmem:[#allocation8 + $0xa8] sm:$0xff]
    %v3749 = vld [vmem:[#allocation8 + $0xb0] sm:$0xff]
    %v3750 = vld [vmem:[#allocation8 + $0xb8] sm:$0xff]
    %v3751 = vld [vmem:[#allocation8 + $0xc0] sm:$0xff]
    %v3752 = vld [vmem:[#allocation8 + $0xc8] sm:$0xff]
    %v3753 = vld [vmem:[#allocation8 + $0xd0] sm:$0xff]
    %v3754 = vld [vmem:[#allocation8 + $0xd8] sm:$0xff]
    %v3755 = vld [vmem:[#allocation8 + $0xe0] sm:$0xff]
    %v3756 = vld [vmem:[#allocation8 + $0xe8] sm:$0xff]
    %v3757 = vld [vmem:[#allocation8 + $0xf0] sm:$0xff]
    %v3758 = vld [vmem:[#allocation8 + $0xf8] sm:$0xff]
    %v3759 = vld [vmem:[#allocation11] sm:$0xf]
    %v3761 = vlaneseq
    %v3762 = vshrl.u32 %v3761, 7
    %v3763 = vsub.s32 0, %v3762
    %v3764 = vrot.slane %v3759, %v3763
    %v3765 = vlaneseq
    %v3766 = vshrl.u32 %v3765, 7
    %v3767 = vsub.s32 1, %v3766
    %v3768 = vrot.slane %v3759, %v3767
    %v3769 = vlaneseq
    %v3770 = vshrl.u32 %v3769, 7
    %v3771 = vsub.s32 2, %v3770
    %v3772 = vrot.slane %v3759, %v3771
    %v3773 = vlaneseq
    %v3774 = vshrl.u32 %v3773, 7
    %v3775 = vsub.s32 3, %v3774
    %v3776 = vrot.slane %v3759, %v3775
    %v3813 = vunpack.c.l.b16 %v3727
    %v3814 = vunpack.c.h.b16 %v3727
    %v3815 = vunpack.c.l.b16 %v3728
    %v3816 = vunpack.c.h.b16 %v3728
    %v3817 = vunpack.c.l.b16 %v3729
    %v3818 = vunpack.c.h.b16 %v3729
    %v3819 = vunpack.c.l.b16 %v3730
    %v3820 = vunpack.c.h.b16 %v3730
    %v3821 = vunpack.c.l.b16 %v3731
    %v3822 = vunpack.c.h.b16 %v3731
    %v3823 = vunpack.c.l.b16 %v3732
    %v3824 = vunpack.c.h.b16 %v3732
    %v3825 = vunpack.c.l.b16 %v3733
    %v3826 = vunpack.c.h.b16 %v3733
    %v3827 = vunpack.c.l.b16 %v3734
    %v3828 = vunpack.c.h.b16 %v3734
    %v3829 = vunpack.c.l.b16 %v3735
    %v3830 = vunpack.c.h.b16 %v3735
    %v3831 = vunpack.c.l.b16 %v3736
    %v3832 = vunpack.c.h.b16 %v3736
    %v3833 = vunpack.c.l.b16 %v3737
    %v3834 = vunpack.c.h.b16 %v3737
    %v3835 = vunpack.c.l.b16 %v3738
    %v3836 = vunpack.c.h.b16 %v3738
    %v3837 = vunpack.c.l.b16 %v3739
    %v3838 = vunpack.c.h.b16 %v3739
    %v3839 = vunpack.c.l.b16 %v3740
    %v3840 = vunpack.c.h.b16 %v3740
    %v3841 = vunpack.c.l.b16 %v3741
    %v3842 = vunpack.c.h.b16 %v3741
    %v3843 = vunpack.c.l.b16 %v3742
    %v3844 = vunpack.c.h.b16 %v3742
    %v3845 = vunpack.c.l.b16 %v3743
    %v3846 = vunpack.c.h.b16 %v3743
    %v3847 = vunpack.c.l.b16 %v3744
    %v3848 = vunpack.c.h.b16 %v3744
    %v3849 = vunpack.c.l.b16 %v3745
    %v3850 = vunpack.c.h.b16 %v3745
    %v3851 = vunpack.c.l.b16 %v3746
    %v3852 = vunpack.c.h.b16 %v3746
    %v3853 = vunpack.c.l.b16 %v3747
    %v3854 = vunpack.c.h.b16 %v3747
    %v3855 = vunpack.c.l.b16 %v3748
    %v3856 = vunpack.c.h.b16 %v3748
    %v3857 = vunpack.c.l.b16 %v3749
    %v3858 = vunpack.c.h.b16 %v3749
    %v3859 = vunpack.c.l.b16 %v3750
    %v3860 = vunpack.c.h.b16 %v3750
    %v3861 = vunpack.c.l.b16 %v3751
    %v3862 = vunpack.c.h.b16 %v3751
    %v3863 = vunpack.c.l.b16 %v3752
    %v3864 = vunpack.c.h.b16 %v3752
    %v3865 = vunpack.c.l.b16 %v3753
    %v3866 = vunpack.c.h.b16 %v3753
    %v3867 = vunpack.c.l.b16 %v3754
    %v3868 = vunpack.c.h.b16 %v3754
    %v3869 = vunpack.c.l.b16 %v3755
    %v3870 = vunpack.c.h.b16 %v3755
    %v3871 = vunpack.c.l.b16 %v3756
    %v3872 = vunpack.c.h.b16 %v3756
    %v3873 = vunpack.c.l.b16 %v3757
    %v3874 = vunpack.c.h.b16 %v3757
    %v3875 = vunpack.c.l.b16 %v3758
    %v3876 = vunpack.c.h.b16 %v3758
    %v3877 = vpack.c.b16 %v3817, %v3813
    %v3878 = vpack.c.b16 %v3818, %v3814
    %v3879 = vpack.c.b16 %v3819, %v3815
    %v3880 = vpack.c.b16 %v3820, %v3816
    %v3881 = vpack.c.b16 %v3825, %v3821
    %v3882 = vpack.c.b16 %v3826, %v3822
    %v3883 = vpack.c.b16 %v3827, %v3823
    %v3884 = vpack.c.b16 %v3828, %v3824
    %v3885 = vpack.c.b16 %v3833, %v3829
    %v3886 = vpack.c.b16 %v3834, %v3830
    %v3887 = vpack.c.b16 %v3835, %v3831
    %v3888 = vpack.c.b16 %v3836, %v3832
    %v3889 = vpack.c.b16 %v3841, %v3837
    %v3890 = vpack.c.b16 %v3842, %v3838
    %v3891 = vpack.c.b16 %v3843, %v3839
    %v3892 = vpack.c.b16 %v3844, %v3840
    %v3893 = vpack.c.b16 %v3849, %v3845
    %v3894 = vpack.c.b16 %v3850, %v3846
    %v3895 = vpack.c.b16 %v3851, %v3847
    %v3896 = vpack.c.b16 %v3852, %v3848
    %v3897 = vpack.c.b16 %v3857, %v3853
    %v3898 = vpack.c.b16 %v3858, %v3854
    %v3899 = vpack.c.b16 %v3859, %v3855
    %v3900 = vpack.c.b16 %v3860, %v3856
    %v3901 = vpack.c.b16 %v3865, %v3861
    %v3902 = vpack.c.b16 %v3866, %v3862
    %v3903 = vpack.c.b16 %v3867, %v3863
    %v3904 = vpack.c.b16 %v3868, %v3864
    %v3905 = vpack.c.b16 %v3873, %v3869
    %v3906 = vpack.c.b16 %v3874, %v3870
    %v3907 = vpack.c.b16 %v3875, %v3871
    %v3908 = vpack.c.b16 %v3876, %v3872
    %3941 = vmatprep.subr.bf16.mxu0 %v3906
    %3942 = vmatpush1.bf16.msra.mxu0 %v3905
    %3943 = vmatprep.subr.bf16.mxu0 %v3902
    %3944 = vmatpush1.bf16.msra.mxu0 %v3901
    %3945 = vmatprep.subr.bf16.mxu0 %v3898
    %3946 = vmatpush1.bf16.msra.mxu0 %v3897
    %3947 = vmatprep.subr.bf16.mxu0 %v3894
    %3948 = vmatpush1.bf16.msra.mxu0 %v3893
    %3949 = vmatprep.subr.bf16.mxu0 %v3890
    %3950 = vmatpush1.bf16.msra.mxu0 %v3889
    %3951 = vmatprep.subr.bf16.mxu0 %v3886
    %3952 = vmatpush1.bf16.msra.mxu0 %v3885
    %3953 = vmatprep.subr.bf16.mxu0 %v3882
    %3954 = vmatpush1.bf16.msra.mxu0 %v3881
    %3955 = vmatprep.subr.bf16.mxu0 %v3878
    %3956 = vmatpush1.bf16.msra.mxu0 %v3877
    %3957 = vmatprep.subr.bf16.mxu0 0
    %3958 = vmatpush2.bf16.msra.mxu0 0
    %3959 = vmatprep.subr.bf16.mxu0 0
    %3960 = vmatpush2.bf16.msra.mxu0 0
    %3961 = vmatprep.subr.bf16.mxu0 0
    %3962 = vmatpush2.bf16.msra.mxu0 0
    %3963 = vmatprep.subr.bf16.mxu0 0
    %3964 = vmatpush2.bf16.msra.mxu0 0
    %3965 = vmatprep.subr.bf16.mxu0 0
    %3966 = vmatpush2.bf16.msra.mxu0 0
    %3967 = vmatprep.subr.bf16.mxu0 0
    %3968 = vmatpush2.bf16.msra.mxu0 0
    %3969 = vmatprep.subr.bf16.mxu0 0
    %3970 = vmatpush2.bf16.msra.mxu0 0
    %3971 = vmatprep.subr.bf16.mxu0 0
    %3972 = vmatpush2.bf16.msra.mxu0 0
    %3973 = vmatprep.mubr.bf16.mxu0 0
    %3974 = vmatmul.mubr.bf16.gmra.mxu0 %v3726
    %v3975 = vpop.f32.mrf.mxu0
    %v3976 = vadd.f32 %v3764, %v3975
    %v3977 = vpop.f32.mrf.mxu0
    %v3978 = vadd.f32 %v3768, %v3977
    %v3979 = vpop.f32.mrf.mxu0
    %v3980 = vpop.f32.mrf.mxu0
    %3981 = vdwg.mxu0
    %3982 = vmatprep.subr.bf16.mxu0 %v3908
    %3983 = vmatpush1.bf16.msra.mxu0 %v3907
    %3984 = vmatprep.subr.bf16.mxu0 %v3904
    %3985 = vmatpush1.bf16.msra.mxu0 %v3903
    %3986 = vmatprep.subr.bf16.mxu0 %v3900
    %3987 = vmatpush1.bf16.msra.mxu0 %v3899
    %3988 = vmatprep.subr.bf16.mxu0 %v3896
    %3989 = vmatpush1.bf16.msra.mxu0 %v3895
    %3990 = vmatprep.subr.bf16.mxu0 %v3892
    %3991 = vmatpush1.bf16.msra.mxu0 %v3891
    %3992 = vmatprep.subr.bf16.mxu0 %v3888
    %3993 = vmatpush1.bf16.msra.mxu0 %v3887
    %3994 = vmatprep.subr.bf16.mxu0 %v3884
    %3995 = vmatpush1.bf16.msra.mxu0 %v3883
    %3996 = vmatprep.subr.bf16.mxu0 %v3880
    %3997 = vmatpush1.bf16.msra.mxu0 %v3879
    %3998 = vmatprep.subr.bf16.mxu0 0
    %3999 = vmatpush2.bf16.msra.mxu0 0
    %4000 = vmatprep.subr.bf16.mxu0 0
    %4001 = vmatpush2.bf16.msra.mxu0 0
    %4002 = vmatprep.subr.bf16.mxu0 0
    %4003 = vmatpush2.bf16.msra.mxu0 0
    %4004 = vmatprep.subr.bf16.mxu0 0
    %4005 = vmatpush2.bf16.msra.mxu0 0
    %4006 = vmatprep.subr.bf16.mxu0 0
    %4007 = vmatpush2.bf16.msra.mxu0 0
    %4008 = vmatprep.subr.bf16.mxu0 0
    %4009 = vmatpush2.bf16.msra.mxu0 0
    %4010 = vmatprep.subr.bf16.mxu0 0
    %4011 = vmatpush2.bf16.msra.mxu0 0
    %4012 = vmatprep.subr.bf16.mxu0 0
    %4013 = vmatpush2.bf16.msra.mxu0 0
    %4014 = vmatprep.mubr.bf16.mxu0 0
    %4015 = vmatmul.mubr.bf16.gmra.mxu0 %v3726
    %v4016 = vpop.f32.mrf.mxu0
    %v4017 = vadd.f32 %v3772, %v4016
    %v4018 = vpop.f32.mrf.mxu0
    %v4019 = vadd.f32 %v3776, %v4018
    %v4020 = vpop.f32.mrf.mxu0
    %v4021 = vpop.f32.mrf.mxu0
    %4022 = vdwg.mxu0
    %4023 = vst [vmem:[#allocation4 + $0x180] sm:$0xff] %v3976
    %4024 = vst [vmem:[#allocation4 + $0x188] sm:$0xff] %v3978
    %4025 = vst [vmem:[#allocation4 + $0x190] sm:$0xff] %v4017
    %4026 = vst [vmem:[#allocation4 + $0x198] sm:$0xff] %v4019
    %s4027 = scalar_lea.vmem [#allocation5], 52
    %v4028 = vld [vmem:[%s4027] sm:$0xf]
    %v4029 = vld [vmem:[#allocation8] sm:$0xff]
    %v4030 = vld [vmem:[#allocation8 + $0x8] sm:$0xff]
    %v4031 = vld [vmem:[#allocation8 + $0x10] sm:$0xff]
    %v4032 = vld [vmem:[#allocation8 + $0x18] sm:$0xff]
    %v4033 = vld [vmem:[#allocation8 + $0x20] sm:$0xff]
    %v4034 = vld [vmem:[#allocation8 + $0x28] sm:$0xff]
    %v4035 = vld [vmem:[#allocation8 + $0x30] sm:$0xff]
    %v4036 = vld [vmem:[#allocation8 + $0x38] sm:$0xff]
    %v4037 = vld [vmem:[#allocation8 + $0x40] sm:$0xff]
    %v4038 = vld [vmem:[#allocation8 + $0x48] sm:$0xff]
    %v4039 = vld [vmem:[#allocation8 + $0x50] sm:$0xff]
    %v4040 = vld [vmem:[#allocation8 + $0x58] sm:$0xff]
    %v4041 = vld [vmem:[#allocation8 + $0x60] sm:$0xff]
    %v4042 = vld [vmem:[#allocation8 + $0x68] sm:$0xff]
    %v4043 = vld [vmem:[#allocation8 + $0x70] sm:$0xff]
    %v4044 = vld [vmem:[#allocation8 + $0x78] sm:$0xff]
    %v4045 = vld [vmem:[#allocation8 + $0x80] sm:$0xff]
    %v4046 = vld [vmem:[#allocation8 + $0x88] sm:$0xff]
    %v4047 = vld [vmem:[#allocation8 + $0x90] sm:$0xff]
    %v4048 = vld [vmem:[#allocation8 + $0x98] sm:$0xff]
    %v4049 = vld [vmem:[#allocation8 + $0xa0] sm:$0xff]
    %v4050 = vld [vmem:[#allocation8 + $0xa8] sm:$0xff]
    %v4051 = vld [vmem:[#allocation8 + $0xb0] sm:$0xff]
    %v4052 = vld [vmem:[#allocation8 + $0xb8] sm:$0xff]
    %v4053 = vld [vmem:[#allocation8 + $0xc0] sm:$0xff]
    %v4054 = vld [vmem:[#allocation8 + $0xc8] sm:$0xff]
    %v4055 = vld [vmem:[#allocation8 + $0xd0] sm:$0xff]
    %v4056 = vld [vmem:[#allocation8 + $0xd8] sm:$0xff]
    %v4057 = vld [vmem:[#allocation8 + $0xe0] sm:$0xff]
    %v4058 = vld [vmem:[#allocation8 + $0xe8] sm:$0xff]
    %v4059 = vld [vmem:[#allocation8 + $0xf0] sm:$0xff]
    %v4060 = vld [vmem:[#allocation8 + $0xf8] sm:$0xff]
    %v4061 = vld [vmem:[#allocation11] sm:$0xf]
    %v4063 = vlaneseq
    %v4064 = vshrl.u32 %v4063, 7
    %v4065 = vsub.s32 0, %v4064
    %v4066 = vrot.slane %v4061, %v4065
    %v4067 = vlaneseq
    %v4068 = vshrl.u32 %v4067, 7
    %v4069 = vsub.s32 1, %v4068
    %v4070 = vrot.slane %v4061, %v4069
    %v4071 = vlaneseq
    %v4072 = vshrl.u32 %v4071, 7
    %v4073 = vsub.s32 2, %v4072
    %v4074 = vrot.slane %v4061, %v4073
    %v4075 = vlaneseq
    %v4076 = vshrl.u32 %v4075, 7
    %v4077 = vsub.s32 3, %v4076
    %v4078 = vrot.slane %v4061, %v4077
    %v4115 = vunpack.c.l.b16 %v4029
    %v4116 = vunpack.c.h.b16 %v4029
    %v4117 = vunpack.c.l.b16 %v4030
    %v4118 = vunpack.c.h.b16 %v4030
    %v4119 = vunpack.c.l.b16 %v4031
    %v4120 = vunpack.c.h.b16 %v4031
    %v4121 = vunpack.c.l.b16 %v4032
    %v4122 = vunpack.c.h.b16 %v4032
    %v4123 = vunpack.c.l.b16 %v4033
    %v4124 = vunpack.c.h.b16 %v4033
    %v4125 = vunpack.c.l.b16 %v4034
    %v4126 = vunpack.c.h.b16 %v4034
    %v4127 = vunpack.c.l.b16 %v4035
    %v4128 = vunpack.c.h.b16 %v4035
    %v4129 = vunpack.c.l.b16 %v4036
    %v4130 = vunpack.c.h.b16 %v4036
    %v4131 = vunpack.c.l.b16 %v4037
    %v4132 = vunpack.c.h.b16 %v4037
    %v4133 = vunpack.c.l.b16 %v4038
    %v4134 = vunpack.c.h.b16 %v4038
    %v4135 = vunpack.c.l.b16 %v4039
    %v4136 = vunpack.c.h.b16 %v4039
    %v4137 = vunpack.c.l.b16 %v4040
    %v4138 = vunpack.c.h.b16 %v4040
    %v4139 = vunpack.c.l.b16 %v4041
    %v4140 = vunpack.c.h.b16 %v4041
    %v4141 = vunpack.c.l.b16 %v4042
    %v4142 = vunpack.c.h.b16 %v4042
    %v4143 = vunpack.c.l.b16 %v4043
    %v4144 = vunpack.c.h.b16 %v4043
    %v4145 = vunpack.c.l.b16 %v4044
    %v4146 = vunpack.c.h.b16 %v4044
    %v4147 = vunpack.c.l.b16 %v4045
    %v4148 = vunpack.c.h.b16 %v4045
    %v4149 = vunpack.c.l.b16 %v4046
    %v4150 = vunpack.c.h.b16 %v4046
    %v4151 = vunpack.c.l.b16 %v4047
    %v4152 = vunpack.c.h.b16 %v4047
    %v4153 = vunpack.c.l.b16 %v4048
    %v4154 = vunpack.c.h.b16 %v4048
    %v4155 = vunpack.c.l.b16 %v4049
    %v4156 = vunpack.c.h.b16 %v4049
    %v4157 = vunpack.c.l.b16 %v4050
    %v4158 = vunpack.c.h.b16 %v4050
    %v4159 = vunpack.c.l.b16 %v4051
    %v4160 = vunpack.c.h.b16 %v4051
    %v4161 = vunpack.c.l.b16 %v4052
    %v4162 = vunpack.c.h.b16 %v4052
    %v4163 = vunpack.c.l.b16 %v4053
    %v4164 = vunpack.c.h.b16 %v4053
    %v4165 = vunpack.c.l.b16 %v4054
    %v4166 = vunpack.c.h.b16 %v4054
    %v4167 = vunpack.c.l.b16 %v4055
    %v4168 = vunpack.c.h.b16 %v4055
    %v4169 = vunpack.c.l.b16 %v4056
    %v4170 = vunpack.c.h.b16 %v4056
    %v4171 = vunpack.c.l.b16 %v4057
    %v4172 = vunpack.c.h.b16 %v4057
    %v4173 = vunpack.c.l.b16 %v4058
    %v4174 = vunpack.c.h.b16 %v4058
    %v4175 = vunpack.c.l.b16 %v4059
    %v4176 = vunpack.c.h.b16 %v4059
    %v4177 = vunpack.c.l.b16 %v4060
    %v4178 = vunpack.c.h.b16 %v4060
    %v4179 = vpack.c.b16 %v4119, %v4115
    %v4180 = vpack.c.b16 %v4120, %v4116
    %v4181 = vpack.c.b16 %v4121, %v4117
    %v4182 = vpack.c.b16 %v4122, %v4118
    %v4183 = vpack.c.b16 %v4127, %v4123
    %v4184 = vpack.c.b16 %v4128, %v4124
    %v4185 = vpack.c.b16 %v4129, %v4125
    %v4186 = vpack.c.b16 %v4130, %v4126
    %v4187 = vpack.c.b16 %v4135, %v4131
    %v4188 = vpack.c.b16 %v4136, %v4132
    %v4189 = vpack.c.b16 %v4137, %v4133
    %v4190 = vpack.c.b16 %v4138, %v4134
    %v4191 = vpack.c.b16 %v4143, %v4139
    %v4192 = vpack.c.b16 %v4144, %v4140
    %v4193 = vpack.c.b16 %v4145, %v4141
    %v4194 = vpack.c.b16 %v4146, %v4142
    %v4195 = vpack.c.b16 %v4151, %v4147
    %v4196 = vpack.c.b16 %v4152, %v4148
    %v4197 = vpack.c.b16 %v4153, %v4149
    %v4198 = vpack.c.b16 %v4154, %v4150
    %v4199 = vpack.c.b16 %v4159, %v4155
    %v4200 = vpack.c.b16 %v4160, %v4156
    %v4201 = vpack.c.b16 %v4161, %v4157
    %v4202 = vpack.c.b16 %v4162, %v4158
    %v4203 = vpack.c.b16 %v4167, %v4163
    %v4204 = vpack.c.b16 %v4168, %v4164
    %v4205 = vpack.c.b16 %v4169, %v4165
    %v4206 = vpack.c.b16 %v4170, %v4166
    %v4207 = vpack.c.b16 %v4175, %v4171
    %v4208 = vpack.c.b16 %v4176, %v4172
    %v4209 = vpack.c.b16 %v4177, %v4173
    %v4210 = vpack.c.b16 %v4178, %v4174
    %4243 = vmatprep.subr.bf16.mxu0 %v4208
    %4244 = vmatpush1.bf16.msra.mxu0 %v4207
    %4245 = vmatprep.subr.bf16.mxu0 %v4204
    %4246 = vmatpush1.bf16.msra.mxu0 %v4203
    %4247 = vmatprep.subr.bf16.mxu0 %v4200
    %4248 = vmatpush1.bf16.msra.mxu0 %v4199
    %4249 = vmatprep.subr.bf16.mxu0 %v4196
    %4250 = vmatpush1.bf16.msra.mxu0 %v4195
    %4251 = vmatprep.subr.bf16.mxu0 %v4192
    %4252 = vmatpush1.bf16.msra.mxu0 %v4191
    %4253 = vmatprep.subr.bf16.mxu0 %v4188
    %4254 = vmatpush1.bf16.msra.mxu0 %v4187
    %4255 = vmatprep.subr.bf16.mxu0 %v4184
    %4256 = vmatpush1.bf16.msra.mxu0 %v4183
    %4257 = vmatprep.subr.bf16.mxu0 %v4180
    %4258 = vmatpush1.bf16.msra.mxu0 %v4179
    %4259 = vmatprep.subr.bf16.mxu0 0
    %4260 = vmatpush2.bf16.msra.mxu0 0
    %4261 = vmatprep.subr.bf16.mxu0 0
    %4262 = vmatpush2.bf16.msra.mxu0 0
    %4263 = vmatprep.subr.bf16.mxu0 0
    %4264 = vmatpush2.bf16.msra.mxu0 0
    %4265 = vmatprep.subr.bf16.mxu0 0
    %4266 = vmatpush2.bf16.msra.mxu0 0
    %4267 = vmatprep.subr.bf16.mxu0 0
    %4268 = vmatpush2.bf16.msra.mxu0 0
    %4269 = vmatprep.subr.bf16.mxu0 0
    %4270 = vmatpush2.bf16.msra.mxu0 0
    %4271 = vmatprep.subr.bf16.mxu0 0
    %4272 = vmatpush2.bf16.msra.mxu0 0
    %4273 = vmatprep.subr.bf16.mxu0 0
    %4274 = vmatpush2.bf16.msra.mxu0 0
    %4275 = vmatprep.mubr.bf16.mxu0 0
    %4276 = vmatmul.mubr.bf16.gmra.mxu0 %v4028
    %v4277 = vpop.f32.mrf.mxu0
    %v4278 = vadd.f32 %v4066, %v4277
    %v4279 = vpop.f32.mrf.mxu0
    %v4280 = vadd.f32 %v4070, %v4279
    %v4281 = vpop.f32.mrf.mxu0
    %v4282 = vpop.f32.mrf.mxu0
    %4283 = vdwg.mxu0
    %4284 = vmatprep.subr.bf16.mxu0 %v4210
    %4285 = vmatpush1.bf16.msra.mxu0 %v4209
    %4286 = vmatprep.subr.bf16.mxu0 %v4206
    %4287 = vmatpush1.bf16.msra.mxu0 %v4205
    %4288 = vmatprep.subr.bf16.mxu0 %v4202
    %4289 = vmatpush1.bf16.msra.mxu0 %v4201
    %4290 = vmatprep.subr.bf16.mxu0 %v4198
    %4291 = vmatpush1.bf16.msra.mxu0 %v4197
    %4292 = vmatprep.subr.bf16.mxu0 %v4194
    %4293 = vmatpush1.bf16.msra.mxu0 %v4193
    %4294 = vmatprep.subr.bf16.mxu0 %v4190
    %4295 = vmatpush1.bf16.msra.mxu0 %v4189
    %4296 = vmatprep.subr.bf16.mxu0 %v4186
    %4297 = vmatpush1.bf16.msra.mxu0 %v4185
    %4298 = vmatprep.subr.bf16.mxu0 %v4182
    %4299 = vmatpush1.bf16.msra.mxu0 %v4181
    %4300 = vmatprep.subr.bf16.mxu0 0
    %4301 = vmatpush2.bf16.msra.mxu0 0
    %4302 = vmatprep.subr.bf16.mxu0 0
    %4303 = vmatpush2.bf16.msra.mxu0 0
    %4304 = vmatprep.subr.bf16.mxu0 0
    %4305 = vmatpush2.bf16.msra.mxu0 0
    %4306 = vmatprep.subr.bf16.mxu0 0
    %4307 = vmatpush2.bf16.msra.mxu0 0
    %4308 = vmatprep.subr.bf16.mxu0 0
    %4309 = vmatpush2.bf16.msra.mxu0 0
    %4310 = vmatprep.subr.bf16.mxu0 0
    %4311 = vmatpush2.bf16.msra.mxu0 0
    %4312 = vmatprep.subr.bf16.mxu0 0
    %4313 = vmatpush2.bf16.msra.mxu0 0
    %4314 = vmatprep.subr.bf16.mxu0 0
    %4315 = vmatpush2.bf16.msra.mxu0 0
    %4316 = vmatprep.mubr.bf16.mxu0 0
    %4317 = vmatmul.mubr.bf16.gmra.mxu0 %v4028
    %v4318 = vpop.f32.mrf.mxu0
    %v4319 = vadd.f32 %v4074, %v4318
    %v4320 = vpop.f32.mrf.mxu0
    %v4321 = vadd.f32 %v4078, %v4320
    %v4322 = vpop.f32.mrf.mxu0
    %v4323 = vpop.f32.mrf.mxu0
    %4324 = vdwg.mxu0
    %4325 = vst [vmem:[#allocation4 + $0x1a0] sm:$0xff] %v4278
    %4326 = vst [vmem:[#allocation4 + $0x1a8] sm:$0xff] %v4280
    %4327 = vst [vmem:[#allocation4 + $0x1b0] sm:$0xff] %v4319
    %4328 = vst [vmem:[#allocation4 + $0x1b8] sm:$0xff] %v4321
    %s4329 = scalar_lea.vmem [#allocation5], 56
    %v4330 = vld [vmem:[%s4329] sm:$0xf]
    %v4331 = vld [vmem:[#allocation8] sm:$0xff]
    %v4332 = vld [vmem:[#allocation8 + $0x8] sm:$0xff]
    %v4333 = vld [vmem:[#allocation8 + $0x10] sm:$0xff]
    %v4334 = vld [vmem:[#allocation8 + $0x18] sm:$0xff]
    %v4335 = vld [vmem:[#allocation8 + $0x20] sm:$0xff]
    %v4336 = vld [vmem:[#allocation8 + $0x28] sm:$0xff]
    %v4337 = vld [vmem:[#allocation8 + $0x30] sm:$0xff]
    %v4338 = vld [vmem:[#allocation8 + $0x38] sm:$0xff]
    %v4339 = vld [vmem:[#allocation8 + $0x40] sm:$0xff]
    %v4340 = vld [vmem:[#allocation8 + $0x48] sm:$0xff]
    %v4341 = vld [vmem:[#allocation8 + $0x50] sm:$0xff]
    %v4342 = vld [vmem:[#allocation8 + $0x58] sm:$0xff]
    %v4343 = vld [vmem:[#allocation8 + $0x60] sm:$0xff]
    %v4344 = vld [vmem:[#allocation8 + $0x68] sm:$0xff]
    %v4345 = vld [vmem:[#allocation8 + $0x70] sm:$0xff]
    %v4346 = vld [vmem:[#allocation8 + $0x78] sm:$0xff]
    %v4347 = vld [vmem:[#allocation8 + $0x80] sm:$0xff]
    %v4348 = vld [vmem:[#allocation8 + $0x88] sm:$0xff]
    %v4349 = vld [vmem:[#allocation8 + $0x90] sm:$0xff]
    %v4350 = vld [vmem:[#allocation8 + $0x98] sm:$0xff]
    %v4351 = vld [vmem:[#allocation8 + $0xa0] sm:$0xff]
    %v4352 = vld [vmem:[#allocation8 + $0xa8] sm:$0xff]
    %v4353 = vld [vmem:[#allocation8 + $0xb0] sm:$0xff]
    %v4354 = vld [vmem:[#allocation8 + $0xb8] sm:$0xff]
    %v4355 = vld [vmem:[#allocation8 + $0xc0] sm:$0xff]
    %v4356 = vld [vmem:[#allocation8 + $0xc8] sm:$0xff]
    %v4357 = vld [vmem:[#allocation8 + $0xd0] sm:$0xff]
    %v4358 = vld [vmem:[#allocation8 + $0xd8] sm:$0xff]
    %v4359 = vld [vmem:[#allocation8 + $0xe0] sm:$0xff]
    %v4360 = vld [vmem:[#allocation8 + $0xe8] sm:$0xff]
    %v4361 = vld [vmem:[#allocation8 + $0xf0] sm:$0xff]
    %v4362 = vld [vmem:[#allocation8 + $0xf8] sm:$0xff]
    %v4363 = vld [vmem:[#allocation11] sm:$0xf]
    %v4365 = vlaneseq
    %v4366 = vshrl.u32 %v4365, 7
    %v4367 = vsub.s32 0, %v4366
    %v4368 = vrot.slane %v4363, %v4367
    %v4369 = vlaneseq
    %v4370 = vshrl.u32 %v4369, 7
    %v4371 = vsub.s32 1, %v4370
    %v4372 = vrot.slane %v4363, %v4371
    %v4373 = vlaneseq
    %v4374 = vshrl.u32 %v4373, 7
    %v4375 = vsub.s32 2, %v4374
    %v4376 = vrot.slane %v4363, %v4375
    %v4377 = vlaneseq
    %v4378 = vshrl.u32 %v4377, 7
    %v4379 = vsub.s32 3, %v4378
    %v4380 = vrot.slane %v4363, %v4379
    %v4417 = vunpack.c.l.b16 %v4331
    %v4418 = vunpack.c.h.b16 %v4331
    %v4419 = vunpack.c.l.b16 %v4332
    %v4420 = vunpack.c.h.b16 %v4332
    %v4421 = vunpack.c.l.b16 %v4333
    %v4422 = vunpack.c.h.b16 %v4333
    %v4423 = vunpack.c.l.b16 %v4334
    %v4424 = vunpack.c.h.b16 %v4334
    %v4425 = vunpack.c.l.b16 %v4335
    %v4426 = vunpack.c.h.b16 %v4335
    %v4427 = vunpack.c.l.b16 %v4336
    %v4428 = vunpack.c.h.b16 %v4336
    %v4429 = vunpack.c.l.b16 %v4337
    %v4430 = vunpack.c.h.b16 %v4337
    %v4431 = vunpack.c.l.b16 %v4338
    %v4432 = vunpack.c.h.b16 %v4338
    %v4433 = vunpack.c.l.b16 %v4339
    %v4434 = vunpack.c.h.b16 %v4339
    %v4435 = vunpack.c.l.b16 %v4340
    %v4436 = vunpack.c.h.b16 %v4340
    %v4437 = vunpack.c.l.b16 %v4341
    %v4438 = vunpack.c.h.b16 %v4341
    %v4439 = vunpack.c.l.b16 %v4342
    %v4440 = vunpack.c.h.b16 %v4342
    %v4441 = vunpack.c.l.b16 %v4343
    %v4442 = vunpack.c.h.b16 %v4343
    %v4443 = vunpack.c.l.b16 %v4344
    %v4444 = vunpack.c.h.b16 %v4344
    %v4445 = vunpack.c.l.b16 %v4345
    %v4446 = vunpack.c.h.b16 %v4345
    %v4447 = vunpack.c.l.b16 %v4346
    %v4448 = vunpack.c.h.b16 %v4346
    %v4449 = vunpack.c.l.b16 %v4347
    %v4450 = vunpack.c.h.b16 %v4347
    %v4451 = vunpack.c.l.b16 %v4348
    %v4452 = vunpack.c.h.b16 %v4348
    %v4453 = vunpack.c.l.b16 %v4349
    %v4454 = vunpack.c.h.b16 %v4349
    %v4455 = vunpack.c.l.b16 %v4350
    %v4456 = vunpack.c.h.b16 %v4350
    %v4457 = vunpack.c.l.b16 %v4351
    %v4458 = vunpack.c.h.b16 %v4351
    %v4459 = vunpack.c.l.b16 %v4352
    %v4460 = vunpack.c.h.b16 %v4352
    %v4461 = vunpack.c.l.b16 %v4353
    %v4462 = vunpack.c.h.b16 %v4353
    %v4463 = vunpack.c.l.b16 %v4354
    %v4464 = vunpack.c.h.b16 %v4354
    %v4465 = vunpack.c.l.b16 %v4355
    %v4466 = vunpack.c.h.b16 %v4355
    %v4467 = vunpack.c.l.b16 %v4356
    %v4468 = vunpack.c.h.b16 %v4356
    %v4469 = vunpack.c.l.b16 %v4357
    %v4470 = vunpack.c.h.b16 %v4357
    %v4471 = vunpack.c.l.b16 %v4358
    %v4472 = vunpack.c.h.b16 %v4358
    %v4473 = vunpack.c.l.b16 %v4359
    %v4474 = vunpack.c.h.b16 %v4359
    %v4475 = vunpack.c.l.b16 %v4360
    %v4476 = vunpack.c.h.b16 %v4360
    %v4477 = vunpack.c.l.b16 %v4361
    %v4478 = vunpack.c.h.b16 %v4361
    %v4479 = vunpack.c.l.b16 %v4362
    %v4480 = vunpack.c.h.b16 %v4362
    %v4481 = vpack.c.b16 %v4421, %v4417
    %v4482 = vpack.c.b16 %v4422, %v4418
    %v4483 = vpack.c.b16 %v4423, %v4419
    %v4484 = vpack.c.b16 %v4424, %v4420
    %v4485 = vpack.c.b16 %v4429, %v4425
    %v4486 = vpack.c.b16 %v4430, %v4426
    %v4487 = vpack.c.b16 %v4431, %v4427
    %v4488 = vpack.c.b16 %v4432, %v4428
    %v4489 = vpack.c.b16 %v4437, %v4433
    %v4490 = vpack.c.b16 %v4438, %v4434
    %v4491 = vpack.c.b16 %v4439, %v4435
    %v4492 = vpack.c.b16 %v4440, %v4436
    %v4493 = vpack.c.b16 %v4445, %v4441
    %v4494 = vpack.c.b16 %v4446, %v4442
    %v4495 = vpack.c.b16 %v4447, %v4443
    %v4496 = vpack.c.b16 %v4448, %v4444
    %v4497 = vpack.c.b16 %v4453, %v4449
    %v4498 = vpack.c.b16 %v4454, %v4450
    %v4499 = vpack.c.b16 %v4455, %v4451
    %v4500 = vpack.c.b16 %v4456, %v4452
    %v4501 = vpack.c.b16 %v4461, %v4457
    %v4502 = vpack.c.b16 %v4462, %v4458
    %v4503 = vpack.c.b16 %v4463, %v4459
    %v4504 = vpack.c.b16 %v4464, %v4460
    %v4505 = vpack.c.b16 %v4469, %v4465
    %v4506 = vpack.c.b16 %v4470, %v4466
    %v4507 = vpack.c.b16 %v4471, %v4467
    %v4508 = vpack.c.b16 %v4472, %v4468
    %v4509 = vpack.c.b16 %v4477, %v4473
    %v4510 = vpack.c.b16 %v4478, %v4474
    %v4511 = vpack.c.b16 %v4479, %v4475
    %v4512 = vpack.c.b16 %v4480, %v4476
    %4545 = vmatprep.subr.bf16.mxu0 %v4510
    %4546 = vmatpush1.bf16.msra.mxu0 %v4509
    %4547 = vmatprep.subr.bf16.mxu0 %v4506
    %4548 = vmatpush1.bf16.msra.mxu0 %v4505
    %4549 = vmatprep.subr.bf16.mxu0 %v4502
    %4550 = vmatpush1.bf16.msra.mxu0 %v4501
    %4551 = vmatprep.subr.bf16.mxu0 %v4498
    %4552 = vmatpush1.bf16.msra.mxu0 %v4497
    %4553 = vmatprep.subr.bf16.mxu0 %v4494
    %4554 = vmatpush1.bf16.msra.mxu0 %v4493
    %4555 = vmatprep.subr.bf16.mxu0 %v4490
    %4556 = vmatpush1.bf16.msra.mxu0 %v4489
    %4557 = vmatprep.subr.bf16.mxu0 %v4486
    %4558 = vmatpush1.bf16.msra.mxu0 %v4485
    %4559 = vmatprep.subr.bf16.mxu0 %v4482
    %4560 = vmatpush1.bf16.msra.mxu0 %v4481
    %4561 = vmatprep.subr.bf16.mxu0 0
    %4562 = vmatpush2.bf16.msra.mxu0 0
    %4563 = vmatprep.subr.bf16.mxu0 0
    %4564 = vmatpush2.bf16.msra.mxu0 0
    %4565 = vmatprep.subr.bf16.mxu0 0
    %4566 = vmatpush2.bf16.msra.mxu0 0
    %4567 = vmatprep.subr.bf16.mxu0 0
    %4568 = vmatpush2.bf16.msra.mxu0 0
    %4569 = vmatprep.subr.bf16.mxu0 0
    %4570 = vmatpush2.bf16.msra.mxu0 0
    %4571 = vmatprep.subr.bf16.mxu0 0
    %4572 = vmatpush2.bf16.msra.mxu0 0
    %4573 = vmatprep.subr.bf16.mxu0 0
    %4574 = vmatpush2.bf16.msra.mxu0 0
    %4575 = vmatprep.subr.bf16.mxu0 0
    %4576 = vmatpush2.bf16.msra.mxu0 0
    %4577 = vmatprep.mubr.bf16.mxu0 0
    %4578 = vmatmul.mubr.bf16.gmra.mxu0 %v4330
    %v4579 = vpop.f32.mrf.mxu0
    %v4580 = vadd.f32 %v4368, %v4579
    %v4581 = vpop.f32.mrf.mxu0
    %v4582 = vadd.f32 %v4372, %v4581
    %v4583 = vpop.f32.mrf.mxu0
    %v4584 = vpop.f32.mrf.mxu0
    %4585 = vdwg.mxu0
    %4586 = vmatprep.subr.bf16.mxu0 %v4512
    %4587 = vmatpush1.bf16.msra.mxu0 %v4511
    %4588 = vmatprep.subr.bf16.mxu0 %v4508
    %4589 = vmatpush1.bf16.msra.mxu0 %v4507
    %4590 = vmatprep.subr.bf16.mxu0 %v4504
    %4591 = vmatpush1.bf16.msra.mxu0 %v4503
    %4592 = vmatprep.subr.bf16.mxu0 %v4500
    %4593 = vmatpush1.bf16.msra.mxu0 %v4499
    %4594 = vmatprep.subr.bf16.mxu0 %v4496
    %4595 = vmatpush1.bf16.msra.mxu0 %v4495
    %4596 = vmatprep.subr.bf16.mxu0 %v4492
    %4597 = vmatpush1.bf16.msra.mxu0 %v4491
    %4598 = vmatprep.subr.bf16.mxu0 %v4488
    %4599 = vmatpush1.bf16.msra.mxu0 %v4487
    %4600 = vmatprep.subr.bf16.mxu0 %v4484
    %4601 = vmatpush1.bf16.msra.mxu0 %v4483
    %4602 = vmatprep.subr.bf16.mxu0 0
    %4603 = vmatpush2.bf16.msra.mxu0 0
    %4604 = vmatprep.subr.bf16.mxu0 0
    %4605 = vmatpush2.bf16.msra.mxu0 0
    %4606 = vmatprep.subr.bf16.mxu0 0
    %4607 = vmatpush2.bf16.msra.mxu0 0
    %4608 = vmatprep.subr.bf16.mxu0 0
    %4609 = vmatpush2.bf16.msra.mxu0 0
    %4610 = vmatprep.subr.bf16.mxu0 0
    %4611 = vmatpush2.bf16.msra.mxu0 0
    %4612 = vmatprep.subr.bf16.mxu0 0
    %4613 = vmatpush2.bf16.msra.mxu0 0
    %4614 = vmatprep.subr.bf16.mxu0 0
    %4615 = vmatpush2.bf16.msra.mxu0 0
    %4616 = vmatprep.subr.bf16.mxu0 0
    %4617 = vmatpush2.bf16.msra.mxu0 0
    %4618 = vmatprep.mubr.bf16.mxu0 0
    %4619 = vmatmul.mubr.bf16.gmra.mxu0 %v4330
    %v4620 = vpop.f32.mrf.mxu0
    %v4621 = vadd.f32 %v4376, %v4620
    %v4622 = vpop.f32.mrf.mxu0
    %v4623 = vadd.f32 %v4380, %v4622
    %v4624 = vpop.f32.mrf.mxu0
    %v4625 = vpop.f32.mrf.mxu0
    %4626 = vdwg.mxu0
    %4627 = vst [vmem:[#allocation4 + $0x1c0] sm:$0xff] %v4580
    %4628 = vst [vmem:[#allocation4 + $0x1c8] sm:$0xff] %v4582
    %4629 = vst [vmem:[#allocation4 + $0x1d0] sm:$0xff] %v4621
    %4630 = vst [vmem:[#allocation4 + $0x1d8] sm:$0xff] %v4623
    %s4631 = scalar_lea.vmem [#allocation5], 60
    %v4632 = vld [vmem:[%s4631] sm:$0xf]
    %v4633 = vld [vmem:[#allocation8] sm:$0xff]
    %v4634 = vld [vmem:[#allocation8 + $0x8] sm:$0xff]
    %v4635 = vld [vmem:[#allocation8 + $0x10] sm:$0xff]
    %v4636 = vld [vmem:[#allocation8 + $0x18] sm:$0xff]
    %v4637 = vld [vmem:[#allocation8 + $0x20] sm:$0xff]
    %v4638 = vld [vmem:[#allocation8 + $0x28] sm:$0xff]
    %v4639 = vld [vmem:[#allocation8 + $0x30] sm:$0xff]
    %v4640 = vld [vmem:[#allocation8 + $0x38] sm:$0xff]
    %v4641 = vld [vmem:[#allocation8 + $0x40] sm:$0xff]
    %v4642 = vld [vmem:[#allocation8 + $0x48] sm:$0xff]
    %v4643 = vld [vmem:[#allocation8 + $0x50] sm:$0xff]
    %v4644 = vld [vmem:[#allocation8 + $0x58] sm:$0xff]
    %v4645 = vld [vmem:[#allocation8 + $0x60] sm:$0xff]
    %v4646 = vld [vmem:[#allocation8 + $0x68] sm:$0xff]
    %v4647 = vld [vmem:[#allocation8 + $0x70] sm:$0xff]
    %v4648 = vld [vmem:[#allocation8 + $0x78] sm:$0xff]
    %v4649 = vld [vmem:[#allocation8 + $0x80] sm:$0xff]
    %v4650 = vld [vmem:[#allocation8 + $0x88] sm:$0xff]
    %v4651 = vld [vmem:[#allocation8 + $0x90] sm:$0xff]
    %v4652 = vld [vmem:[#allocation8 + $0x98] sm:$0xff]
    %v4653 = vld [vmem:[#allocation8 + $0xa0] sm:$0xff]
    %v4654 = vld [vmem:[#allocation8 + $0xa8] sm:$0xff]
    %v4655 = vld [vmem:[#allocation8 + $0xb0] sm:$0xff]
    %v4656 = vld [vmem:[#allocation8 + $0xb8] sm:$0xff]
    %v4657 = vld [vmem:[#allocation8 + $0xc0] sm:$0xff]
    %v4658 = vld [vmem:[#allocation8 + $0xc8] sm:$0xff]
    %v4659 = vld [vmem:[#allocation8 + $0xd0] sm:$0xff]
    %v4660 = vld [vmem:[#allocation8 + $0xd8] sm:$0xff]
    %v4661 = vld [vmem:[#allocation8 + $0xe0] sm:$0xff]
    %v4662 = vld [vmem:[#allocation8 + $0xe8] sm:$0xff]
    %v4663 = vld [vmem:[#allocation8 + $0xf0] sm:$0xff]
    %v4664 = vld [vmem:[#allocation8 + $0xf8] sm:$0xff]
    %v4665 = vld [vmem:[#allocation11] sm:$0xf]
    %v4667 = vlaneseq
    %v4668 = vshrl.u32 %v4667, 7
    %v4669 = vsub.s32 0, %v4668
    %v4670 = vrot.slane %v4665, %v4669
    %v4671 = vlaneseq
    %v4672 = vshrl.u32 %v4671, 7
    %v4673 = vsub.s32 1, %v4672
    %v4674 = vrot.slane %v4665, %v4673
    %v4675 = vlaneseq
    %v4676 = vshrl.u32 %v4675, 7
    %v4677 = vsub.s32 2, %v4676
    %v4678 = vrot.slane %v4665, %v4677
    %v4679 = vlaneseq
    %v4680 = vshrl.u32 %v4679, 7
    %v4681 = vsub.s32 3, %v4680
    %v4682 = vrot.slane %v4665, %v4681
    %v4719 = vunpack.c.l.b16 %v4633
    %v4720 = vunpack.c.h.b16 %v4633
    %v4721 = vunpack.c.l.b16 %v4634
    %v4722 = vunpack.c.h.b16 %v4634
    %v4723 = vunpack.c.l.b16 %v4635
    %v4724 = vunpack.c.h.b16 %v4635
    %v4725 = vunpack.c.l.b16 %v4636
    %v4726 = vunpack.c.h.b16 %v4636
    %v4727 = vunpack.c.l.b16 %v4637
    %v4728 = vunpack.c.h.b16 %v4637
    %v4729 = vunpack.c.l.b16 %v4638
    %v4730 = vunpack.c.h.b16 %v4638
    %v4731 = vunpack.c.l.b16 %v4639
    %v4732 = vunpack.c.h.b16 %v4639
    %v4733 = vunpack.c.l.b16 %v4640
    %v4734 = vunpack.c.h.b16 %v4640
    %v4735 = vunpack.c.l.b16 %v4641
    %v4736 = vunpack.c.h.b16 %v4641
    %v4737 = vunpack.c.l.b16 %v4642
    %v4738 = vunpack.c.h.b16 %v4642
    %v4739 = vunpack.c.l.b16 %v4643
    %v4740 = vunpack.c.h.b16 %v4643
    %v4741 = vunpack.c.l.b16 %v4644
    %v4742 = vunpack.c.h.b16 %v4644
    %v4743 = vunpack.c.l.b16 %v4645
    %v4744 = vunpack.c.h.b16 %v4645
    %v4745 = vunpack.c.l.b16 %v4646
    %v4746 = vunpack.c.h.b16 %v4646
    %v4747 = vunpack.c.l.b16 %v4647
    %v4748 = vunpack.c.h.b16 %v4647
    %v4749 = vunpack.c.l.b16 %v4648
    %v4750 = vunpack.c.h.b16 %v4648
    %v4751 = vunpack.c.l.b16 %v4649
    %v4752 = vunpack.c.h.b16 %v4649
    %v4753 = vunpack.c.l.b16 %v4650
    %v4754 = vunpack.c.h.b16 %v4650
    %v4755 = vunpack.c.l.b16 %v4651
    %v4756 = vunpack.c.h.b16 %v4651
    %v4757 = vunpack.c.l.b16 %v4652
    %v4758 = vunpack.c.h.b16 %v4652
    %v4759 = vunpack.c.l.b16 %v4653
    %v4760 = vunpack.c.h.b16 %v4653
    %v4761 = vunpack.c.l.b16 %v4654
    %v4762 = vunpack.c.h.b16 %v4654
    %v4763 = vunpack.c.l.b16 %v4655
    %v4764 = vunpack.c.h.b16 %v4655
    %v4765 = vunpack.c.l.b16 %v4656
    %v4766 = vunpack.c.h.b16 %v4656
    %v4767 = vunpack.c.l.b16 %v4657
    %v4768 = vunpack.c.h.b16 %v4657
    %v4769 = vunpack.c.l.b16 %v4658
    %v4770 = vunpack.c.h.b16 %v4658
    %v4771 = vunpack.c.l.b16 %v4659
    %v4772 = vunpack.c.h.b16 %v4659
    %v4773 = vunpack.c.l.b16 %v4660
    %v4774 = vunpack.c.h.b16 %v4660
    %v4775 = vunpack.c.l.b16 %v4661
    %v4776 = vunpack.c.h.b16 %v4661
    %v4777 = vunpack.c.l.b16 %v4662
    %v4778 = vunpack.c.h.b16 %v4662
    %v4779 = vunpack.c.l.b16 %v4663
    %v4780 = vunpack.c.h.b16 %v4663
    %v4781 = vunpack.c.l.b16 %v4664
    %v4782 = vunpack.c.h.b16 %v4664
    %v4783 = vpack.c.b16 %v4723, %v4719
    %v4784 = vpack.c.b16 %v4724, %v4720
    %v4785 = vpack.c.b16 %v4725, %v4721
    %v4786 = vpack.c.b16 %v4726, %v4722
    %v4787 = vpack.c.b16 %v4731, %v4727
    %v4788 = vpack.c.b16 %v4732, %v4728
    %v4789 = vpack.c.b16 %v4733, %v4729
    %v4790 = vpack.c.b16 %v4734, %v4730
    %v4791 = vpack.c.b16 %v4739, %v4735
    %v4792 = vpack.c.b16 %v4740, %v4736
    %v4793 = vpack.c.b16 %v4741, %v4737
    %v4794 = vpack.c.b16 %v4742, %v4738
    %v4795 = vpack.c.b16 %v4747, %v4743
    %v4796 = vpack.c.b16 %v4748, %v4744
    %v4797 = vpack.c.b16 %v4749, %v4745
    %v4798 = vpack.c.b16 %v4750, %v4746
    %v4799 = vpack.c.b16 %v4755, %v4751
    %v4800 = vpack.c.b16 %v4756, %v4752
    %v4801 = vpack.c.b16 %v4757, %v4753
    %v4802 = vpack.c.b16 %v4758, %v4754
    %v4803 = vpack.c.b16 %v4763, %v4759
    %v4804 = vpack.c.b16 %v4764, %v4760
    %v4805 = vpack.c.b16 %v4765, %v4761
    %v4806 = vpack.c.b16 %v4766, %v4762
    %v4807 = vpack.c.b16 %v4771, %v4767
    %v4808 = vpack.c.b16 %v4772, %v4768
    %v4809 = vpack.c.b16 %v4773, %v4769
    %v4810 = vpack.c.b16 %v4774, %v4770
    %v4811 = vpack.c.b16 %v4779, %v4775
    %v4812 = vpack.c.b16 %v4780, %v4776
    %v4813 = vpack.c.b16 %v4781, %v4777
    %v4814 = vpack.c.b16 %v4782, %v4778
    %4847 = vmatprep.subr.bf16.mxu0 %v4812
    %4848 = vmatpush1.bf16.msra.mxu0 %v4811
    %4849 = vmatprep.subr.bf16.mxu0 %v4808
    %4850 = vmatpush1.bf16.msra.mxu0 %v4807
    %4851 = vmatprep.subr.bf16.mxu0 %v4804
    %4852 = vmatpush1.bf16.msra.mxu0 %v4803
    %4853 = vmatprep.subr.bf16.mxu0 %v4800
    %4854 = vmatpush1.bf16.msra.mxu0 %v4799
    %4855 = vmatprep.subr.bf16.mxu0 %v4796
    %4856 = vmatpush1.bf16.msra.mxu0 %v4795
    %4857 = vmatprep.subr.bf16.mxu0 %v4792
    %4858 = vmatpush1.bf16.msra.mxu0 %v4791
    %4859 = vmatprep.subr.bf16.mxu0 %v4788
    %4860 = vmatpush1.bf16.msra.mxu0 %v4787
    %4861 = vmatprep.subr.bf16.mxu0 %v4784
    %4862 = vmatpush1.bf16.msra.mxu0 %v4783
    %4863 = vmatprep.subr.bf16.mxu0 0
    %4864 = vmatpush2.bf16.msra.mxu0 0
    %4865 = vmatprep.subr.bf16.mxu0 0
    %4866 = vmatpush2.bf16.msra.mxu0 0
    %4867 = vmatprep.subr.bf16.mxu0 0
    %4868 = vmatpush2.bf16.msra.mxu0 0
    %4869 = vmatprep.subr.bf16.mxu0 0
    %4870 = vmatpush2.bf16.msra.mxu0 0
    %4871 = vmatprep.subr.bf16.mxu0 0
    %4872 = vmatpush2.bf16.msra.mxu0 0
    %4873 = vmatprep.subr.bf16.mxu0 0
    %4874 = vmatpush2.bf16.msra.mxu0 0
    %4875 = vmatprep.subr.bf16.mxu0 0
    %4876 = vmatpush2.bf16.msra.mxu0 0
    %4877 = vmatprep.subr.bf16.mxu0 0
    %4878 = vmatpush2.bf16.msra.mxu0 0
    %4879 = vmatprep.mubr.bf16.mxu0 0
    %4880 = vmatmul.mubr.bf16.gmra.mxu0 %v4632
    %v4881 = vpop.f32.mrf.mxu0
    %v4882 = vadd.f32 %v4670, %v4881
    %v4883 = vpop.f32.mrf.mxu0
    %v4884 = vadd.f32 %v4674, %v4883
    %v4885 = vpop.f32.mrf.mxu0
    %v4886 = vpop.f32.mrf.mxu0
    %4887 = vdwg.mxu0
    %4888 = vmatprep.subr.bf16.mxu0 %v4814
    %4889 = vmatpush1.bf16.msra.mxu0 %v4813
    %4890 = vmatprep.subr.bf16.mxu0 %v4810
    %4891 = vmatpush1.bf16.msra.mxu0 %v4809
    %4892 = vmatprep.subr.bf16.mxu0 %v4806
    %4893 = vmatpush1.bf16.msra.mxu0 %v4805
    %4894 = vmatprep.subr.bf16.mxu0 %v4802
    %4895 = vmatpush1.bf16.msra.mxu0 %v4801
    %4896 = vmatprep.subr.bf16.mxu0 %v4798
    %4897 = vmatpush1.bf16.msra.mxu0 %v4797
    %4898 = vmatprep.subr.bf16.mxu0 %v4794
    %4899 = vmatpush1.bf16.msra.mxu0 %v4793
    %4900 = vmatprep.subr.bf16.mxu0 %v4790
    %4901 = vmatpush1.bf16.msra.mxu0 %v4789
    %4902 = vmatprep.subr.bf16.mxu0 %v4786
    %4903 = vmatpush1.bf16.msra.mxu0 %v4785
    %4904 = vmatprep.subr.bf16.mxu0 0
    %4905 = vmatpush2.bf16.msra.mxu0 0
    %4906 = vmatprep.subr.bf16.mxu0 0
    %4907 = vmatpush2.bf16.msra.mxu0 0
    %4908 = vmatprep.subr.bf16.mxu0 0
    %4909 = vmatpush2.bf16.msra.mxu0 0
    %4910 = vmatprep.subr.bf16.mxu0 0
    %4911 = vmatpush2.bf16.msra.mxu0 0
    %4912 = vmatprep.subr.bf16.mxu0 0
    %4913 = vmatpush2.bf16.msra.mxu0 0
    %4914 = vmatprep.subr.bf16.mxu0 0
    %4915 = vmatpush2.bf16.msra.mxu0 0
    %4916 = vmatprep.subr.bf16.mxu0 0
    %4917 = vmatpush2.bf16.msra.mxu0 0
    %4918 = vmatprep.subr.bf16.mxu0 0
    %4919 = vmatpush2.bf16.msra.mxu0 0
    %4920 = vmatprep.mubr.bf16.mxu0 0
    %4921 = vmatmul.mubr.bf16.gmra.mxu0 %v4632
    %v4922 = vpop.f32.mrf.mxu0
    %v4923 = vadd.f32 %v4678, %v4922
    %v4924 = vpop.f32.mrf.mxu0
    %v4925 = vadd.f32 %v4682, %v4924
    %v4926 = vpop.f32.mrf.mxu0
    %v4927 = vpop.f32.mrf.mxu0
    %4928 = vdwg.mxu0
    %4929 = vst [vmem:[#allocation4 + $0x1e0] sm:$0xff] %v4882
    %4930 = vst [vmem:[#allocation4 + $0x1e8] sm:$0xff] %v4884
    %4931 = vst [vmem:[#allocation4 + $0x1f0] sm:$0xff] %v4923
    %4932 = vst [vmem:[#allocation4 + $0x1f8] sm:$0xff] %v4925
    %v4933 = vld [vmem:[#allocation2] sm:$0xf]
    %v4934 = vld [vmem:[#allocation3] sm:$0xff]
    %v4935 = vld [vmem:[#allocation4] sm:$0xff]
    %v4936 = vld [vmem:[#allocation4 + $0x8] sm:$0xff]
    %v4937 = vld [vmem:[#allocation4 + $0x10] sm:$0xff]
    %v4938 = vld [vmem:[#allocation4 + $0x18] sm:$0xff]
    %v4939 = vld [vmem:[#allocation10] sm:$0xff]
    %v4940 = vld [vmem:[#allocation10 + $0x8] sm:$0xff]
    %v4941 = vld [vmem:[#allocation10 + $0x10] sm:$0xff]
    %v4942 = vld [vmem:[#allocation10 + $0x18] sm:$0xff]
    %v4943 = vld [vmem:[#allocation10 + $0x20] sm:$0xff]
    %v4944 = vld [vmem:[#allocation10 + $0x28] sm:$0xff]
    %v4945 = vld [vmem:[#allocation10 + $0x30] sm:$0xff]
    %v4946 = vld [vmem:[#allocation10 + $0x38] sm:$0xff]
    %v4947 = vld [vmem:[#allocation10 + $0x40] sm:$0xff]
    %v4948 = vld [vmem:[#allocation10 + $0x48] sm:$0xff]
    %v4949 = vld [vmem:[#allocation10 + $0x50] sm:$0xff]
    %v4950 = vld [vmem:[#allocation10 + $0x58] sm:$0xff]
    %v4951 = vld [vmem:[#allocation10 + $0x60] sm:$0xff]
    %v4952 = vld [vmem:[#allocation10 + $0x68] sm:$0xff]
    %v4953 = vld [vmem:[#allocation10 + $0x70] sm:$0xff]
    %v4954 = vld [vmem:[#allocation10 + $0x78] sm:$0xff]
    %v4955 = vld [vmem:[#allocation10 + $0x80] sm:$0xff]
    %v4956 = vld [vmem:[#allocation10 + $0x88] sm:$0xff]
    %v4957 = vld [vmem:[#allocation10 + $0x90] sm:$0xff]
    %v4958 = vld [vmem:[#allocation10 + $0x98] sm:$0xff]
    %v4959 = vld [vmem:[#allocation10 + $0xa0] sm:$0xff]
    %v4960 = vld [vmem:[#allocation10 + $0xa8] sm:$0xff]
    %v4961 = vld [vmem:[#allocation10 + $0xb0] sm:$0xff]
    %v4962 = vld [vmem:[#allocation10 + $0xb8] sm:$0xff]
    %v4963 = vld [vmem:[#allocation10 + $0xc0] sm:$0xff]
    %v4964 = vld [vmem:[#allocation10 + $0xc8] sm:$0xff]
    %v4965 = vld [vmem:[#allocation10 + $0xd0] sm:$0xff]
    %v4966 = vld [vmem:[#allocation10 + $0xd8] sm:$0xff]
    %v4967 = vld [vmem:[#allocation10 + $0xe0] sm:$0xff]
    %v4968 = vld [vmem:[#allocation10 + $0xe8] sm:$0xff]
    %v4969 = vld [vmem:[#allocation10 + $0xf0] sm:$0xff]
    %v4970 = vld [vmem:[#allocation10 + $0xf8] sm:$0xff]
    %v5003 = vunpack.c.l.b16 %v4939
    %v5004 = vunpack.c.h.b16 %v4939
    %v5005 = vunpack.c.l.b16 %v4940
    %v5006 = vunpack.c.h.b16 %v4940
    %v5007 = vunpack.c.l.b16 %v4941
    %v5008 = vunpack.c.h.b16 %v4941
    %v5009 = vunpack.c.l.b16 %v4942
    %v5010 = vunpack.c.h.b16 %v4942
    %v5011 = vunpack.c.l.b16 %v4943
    %v5012 = vunpack.c.h.b16 %v4943
    %v5013 = vunpack.c.l.b16 %v4944
    %v5014 = vunpack.c.h.b16 %v4944
    %v5015 = vunpack.c.l.b16 %v4945
    %v5016 = vunpack.c.h.b16 %v4945
    %v5017 = vunpack.c.l.b16 %v4946
    %v5018 = vunpack.c.h.b16 %v4946
    %v5019 = vunpack.c.l.b16 %v4947
    %v5020 = vunpack.c.h.b16 %v4947
    %v5021 = vunpack.c.l.b16 %v4948
    %v5022 = vunpack.c.h.b16 %v4948
    %v5023 = vunpack.c.l.b16 %v4949
    %v5024 = vunpack.c.h.b16 %v4949
    %v5025 = vunpack.c.l.b16 %v4950
    %v5026 = vunpack.c.h.b16 %v4950
    %v5027 = vunpack.c.l.b16 %v4951
    %v5028 = vunpack.c.h.b16 %v4951
    %v5029 = vunpack.c.l.b16 %v4952
    %v5030 = vunpack.c.h.b16 %v4952
    %v5031 = vunpack.c.l.b16 %v4953
    %v5032 = vunpack.c.h.b16 %v4953
    %v5033 = vunpack.c.l.b16 %v4954
    %v5034 = vunpack.c.h.b16 %v4954
    %v5035 = vunpack.c.l.b16 %v4955
    %v5036 = vunpack.c.h.b16 %v4955
    %v5037 = vunpack.c.l.b16 %v4956
    %v5038 = vunpack.c.h.b16 %v4956
    %v5039 = vunpack.c.l.b16 %v4957
    %v5040 = vunpack.c.h.b16 %v4957
    %v5041 = vunpack.c.l.b16 %v4958
    %v5042 = vunpack.c.h.b16 %v4958
    %v5043 = vunpack.c.l.b16 %v4959
    %v5044 = vunpack.c.h.b16 %v4959
    %v5045 = vunpack.c.l.b16 %v4960
    %v5046 = vunpack.c.h.b16 %v4960
    %v5047 = vunpack.c.l.b16 %v4961
    %v5048 = vunpack.c.h.b16 %v4961
    %v5049 = vunpack.c.l.b16 %v4962
    %v5050 = vunpack.c.h.b16 %v4962
    %v5051 = vunpack.c.l.b16 %v4963
    %v5052 = vunpack.c.h.b16 %v4963
    %v5053 = vunpack.c.l.b16 %v4964
    %v5054 = vunpack.c.h.b16 %v4964
    %v5055 = vunpack.c.l.b16 %v4965
    %v5056 = vunpack.c.h.b16 %v4965
    %v5057 = vunpack.c.l.b16 %v4966
    %v5058 = vunpack.c.h.b16 %v4966
    %v5059 = vunpack.c.l.b16 %v4967
    %v5060 = vunpack.c.h.b16 %v4967
    %v5061 = vunpack.c.l.b16 %v4968
    %v5062 = vunpack.c.h.b16 %v4968
    %v5063 = vunpack.c.l.b16 %v4969
    %v5064 = vunpack.c.h.b16 %v4969
    %v5065 = vunpack.c.l.b16 %v4970
    %v5066 = vunpack.c.h.b16 %v4970
    %v5067 = vpack.c.b16 %v5007, %v5003
    %v5068 = vpack.c.b16 %v5008, %v5004
    %v5069 = vpack.c.b16 %v5009, %v5005
    %v5070 = vpack.c.b16 %v5010, %v5006
    %v5071 = vpack.c.b16 %v5015, %v5011
    %v5072 = vpack.c.b16 %v5016, %v5012
    %v5073 = vpack.c.b16 %v5017, %v5013
    %v5074 = vpack.c.b16 %v5018, %v5014
    %v5075 = vpack.c.b16 %v5023, %v5019
    %v5076 = vpack.c.b16 %v5024, %v5020
    %v5077 = vpack.c.b16 %v5025, %v5021
    %v5078 = vpack.c.b16 %v5026, %v5022
    %v5079 = vpack.c.b16 %v5031, %v5027
    %v5080 = vpack.c.b16 %v5032, %v5028
    %v5081 = vpack.c.b16 %v5033, %v5029
    %v5082 = vpack.c.b16 %v5034, %v5030
    %v5083 = vpack.c.b16 %v5039, %v5035
    %v5084 = vpack.c.b16 %v5040, %v5036
    %v5085 = vpack.c.b16 %v5041, %v5037
    %v5086 = vpack.c.b16 %v5042, %v5038
    %v5087 = vpack.c.b16 %v5047, %v5043
    %v5088 = vpack.c.b16 %v5048, %v5044
    %v5089 = vpack.c.b16 %v5049, %v5045
    %v5090 = vpack.c.b16 %v5050, %v5046
    %v5091 = vpack.c.b16 %v5055, %v5051
    %v5092 = vpack.c.b16 %v5056, %v5052
    %v5093 = vpack.c.b16 %v5057, %v5053
    %v5094 = vpack.c.b16 %v5058, %v5054
    %v5095 = vpack.c.b16 %v5063, %v5059
    %v5096 = vpack.c.b16 %v5064, %v5060
    %v5097 = vpack.c.b16 %v5065, %v5061
    %v5098 = vpack.c.b16 %v5066, %v5062
    %5131 = vmatprep.subr.bf16.mxu0 %v5096
    %5132 = vmatpush1.bf16.msra.mxu0 %v5095
    %5133 = vmatprep.subr.bf16.mxu0 %v5092
    %5134 = vmatpush1.bf16.msra.mxu0 %v5091
    %5135 = vmatprep.subr.bf16.mxu0 %v5088
    %5136 = vmatpush1.bf16.msra.mxu0 %v5087
    %5137 = vmatprep.subr.bf16.mxu0 %v5084
    %5138 = vmatpush1.bf16.msra.mxu0 %v5083
    %5139 = vmatprep.subr.bf16.mxu0 %v5080
    %5140 = vmatpush1.bf16.msra.mxu0 %v5079
    %5141 = vmatprep.subr.bf16.mxu0 %v5076
    %5142 = vmatpush1.bf16.msra.mxu0 %v5075
    %5143 = vmatprep.subr.bf16.mxu0 %v5072
    %5144 = vmatpush1.bf16.msra.mxu0 %v5071
    %5145 = vmatprep.subr.bf16.mxu0 %v5068
    %5146 = vmatpush1.bf16.msra.mxu0 %v5067
    %5147 = vmatprep.subr.bf16.mxu0 0
    %5148 = vmatpush2.bf16.msra.mxu0 0
    %5149 = vmatprep.subr.bf16.mxu0 0
    %5150 = vmatpush2.bf16.msra.mxu0 0
    %5151 = vmatprep.subr.bf16.mxu0 0
    %5152 = vmatpush2.bf16.msra.mxu0 0
    %5153 = vmatprep.subr.bf16.mxu0 0
    %5154 = vmatpush2.bf16.msra.mxu0 0
    %5155 = vmatprep.subr.bf16.mxu0 0
    %5156 = vmatpush2.bf16.msra.mxu0 0
    %5157 = vmatprep.subr.bf16.mxu0 0
    %5158 = vmatpush2.bf16.msra.mxu0 0
    %5159 = vmatprep.subr.bf16.mxu0 0
    %5160 = vmatpush2.bf16.msra.mxu0 0
    %5161 = vmatprep.subr.bf16.mxu0 0
    %5162 = vmatpush2.bf16.msra.mxu0 0
    %5163 = vmatprep.mubr.bf16.mxu0 0
    %5164 = vmatmul.mubr.bf16.gmra.mxu0 %v4933
    %v5165 = vpop.f32.mrf.mxu0
    %v5166 = vadd.f32 0.0, %v5165
    %v5167 = vpop.f32.mrf.mxu0
    %v5168 = vadd.f32 0.0, %v5167
    %v5169 = vpop.f32.mrf.mxu0
    %v5170 = vpop.f32.mrf.mxu0
    %5171 = vdwg.mxu0
    %5172 = vmatprep.subr.bf16.mxu0 %v5098
    %5173 = vmatpush1.bf16.msra.mxu0 %v5097
    %5174 = vmatprep.subr.bf16.mxu0 %v5094
    %5175 = vmatpush1.bf16.msra.mxu0 %v5093
    %5176 = vmatprep.subr.bf16.mxu0 %v5090
    %5177 = vmatpush1.bf16.msra.mxu0 %v5089
    %5178 = vmatprep.subr.bf16.mxu0 %v5086
    %5179 = vmatpush1.bf16.msra.mxu0 %v5085
    %5180 = vmatprep.subr.bf16.mxu0 %v5082
    %5181 = vmatpush1.bf16.msra.mxu0 %v5081
    %5182 = vmatprep.subr.bf16.mxu0 %v5078
    %5183 = vmatpush1.bf16.msra.mxu0 %v5077
    %5184 = vmatprep.subr.bf16.mxu0 %v5074
    %5185 = vmatpush1.bf16.msra.mxu0 %v5073
    %5186 = vmatprep.subr.bf16.mxu0 %v5070
    %5187 = vmatpush1.bf16.msra.mxu0 %v5069
    %5188 = vmatprep.subr.bf16.mxu0 0
    %5189 = vmatpush2.bf16.msra.mxu0 0
    %5190 = vmatprep.subr.bf16.mxu0 0
    %5191 = vmatpush2.bf16.msra.mxu0 0
    %5192 = vmatprep.subr.bf16.mxu0 0
    %5193 = vmatpush2.bf16.msra.mxu0 0
    %5194 = vmatprep.subr.bf16.mxu0 0
    %5195 = vmatpush2.bf16.msra.mxu0 0
    %5196 = vmatprep.subr.bf16.mxu0 0
    %5197 = vmatpush2.bf16.msra.mxu0 0
    %5198 = vmatprep.subr.bf16.mxu0 0
    %5199 = vmatpush2.bf16.msra.mxu0 0
    %5200 = vmatprep.subr.bf16.mxu0 0
    %5201 = vmatpush2.bf16.msra.mxu0 0
    %5202 = vmatprep.subr.bf16.mxu0 0
    %5203 = vmatpush2.bf16.msra.mxu0 0
    %5204 = vmatprep.mubr.bf16.mxu0 0
    %5205 = vmatmul.mubr.bf16.gmra.mxu0 %v4933
    %v5206 = vpop.f32.mrf.mxu0
    %v5207 = vadd.f32 0.0, %v5206
    %v5208 = vpop.f32.mrf.mxu0
    %v5209 = vadd.f32 0.0, %v5208
    %v5210 = vpop.f32.mrf.mxu0
    %v5211 = vpop.f32.mrf.mxu0
    %5212 = vdwg.mxu0
    %v5213 = vadd.f32 %v4935, %v5166
    %v5214 = vadd.f32 %v4936, %v5168
    %v5215 = vadd.f32 %v4937, %v5207
    %v5216 = vadd.f32 %v4938, %v5209
    %v5217 = vxor.u32 %v5213, 2147483648
    %v5218 = vmul.f32 %v5217, 1.442695
    %v5219 = vpow.pop %v5218
    %v5220 = vadd.f32 %v5219, 1.0
    %v5221 = vrcp.pop %v5220
    %v5222 = vmul.f32 1.0, %v5221
    %v5223 = vxor.u32 %v5214, 2147483648
    %v5224 = vmul.f32 %v5223, 1.442695
    %v5225 = vpow.pop %v5224
    %v5226 = vadd.f32 %v5225, 1.0
    %v5227 = vrcp.pop %v5226
    %v5228 = vmul.f32 1.0, %v5227
    %v5229 = vtanh.pop %v5215
    %v5230 = vxor.u32 %v5216, 2147483648
    %v5231 = vmul.f32 %v5230, 1.442695
    %v5232 = vpow.pop %v5231
    %v5233 = vadd.f32 %v5232, 1.0
    %v5234 = vrcp.pop %v5233
    %v5235 = vmul.f32 1.0, %v5234
    %v5236 = vmul.f32 %v5228, %v4934
    %v5237 = vmul.f32 %v5222, %v5229
    %v5238 = vadd.f32 %v5236, %v5237
    %v5239 = vtanh.pop %v5238
    %v5240 = vmul.f32 %v5235, %v5239
    %v5241 = vpack.c.bf16 %v5240, %v5240
    %5242 = vst [vmem:[#allocation14] sm:$0xf] %v5241
    %v5243 = vld [vmem:[#allocation4 + $0x20] sm:$0xff]
    %v5244 = vld [vmem:[#allocation4 + $0x28] sm:$0xff]
    %v5245 = vld [vmem:[#allocation4 + $0x30] sm:$0xff]
    %v5246 = vld [vmem:[#allocation4 + $0x38] sm:$0xff]
    %v5247 = vld [vmem:[#allocation10] sm:$0xff]
    %v5248 = vld [vmem:[#allocation10 + $0x8] sm:$0xff]
    %v5249 = vld [vmem:[#allocation10 + $0x10] sm:$0xff]
    %v5250 = vld [vmem:[#allocation10 + $0x18] sm:$0xff]
    %v5251 = vld [vmem:[#allocation10 + $0x20] sm:$0xff]
    %v5252 = vld [vmem:[#allocation10 + $0x28] sm:$0xff]
    %v5253 = vld [vmem:[#allocation10 + $0x30] sm:$0xff]
    %v5254 = vld [vmem:[#allocation10 + $0x38] sm:$0xff]
    %v5255 = vld [vmem:[#allocation10 + $0x40] sm:$0xff]
    %v5256 = vld [vmem:[#allocation10 + $0x48] sm:$0xff]
    %v5257 = vld [vmem:[#allocation10 + $0x50] sm:$0xff]
    %v5258 = vld [vmem:[#allocation10 + $0x58] sm:$0xff]
    %v5259 = vld [vmem:[#allocation10 + $0x60] sm:$0xff]
    %v5260 = vld [vmem:[#allocation10 + $0x68] sm:$0xff]
    %v5261 = vld [vmem:[#allocation10 + $0x70] sm:$0xff]
    %v5262 = vld [vmem:[#allocation10 + $0x78] sm:$0xff]
    %v5263 = vld [vmem:[#allocation10 + $0x80] sm:$0xff]
    %v5264 = vld [vmem:[#allocation10 + $0x88] sm:$0xff]
    %v5265 = vld [vmem:[#allocation10 + $0x90] sm:$0xff]
    %v5266 = vld [vmem:[#allocation10 + $0x98] sm:$0xff]
    %v5267 = vld [vmem:[#allocation10 + $0xa0] sm:$0xff]
    %v5268 = vld [vmem:[#allocation10 + $0xa8] sm:$0xff]
    %v5269 = vld [vmem:[#allocation10 + $0xb0] sm:$0xff]
    %v5270 = vld [vmem:[#allocation10 + $0xb8] sm:$0xff]
    %v5271 = vld [vmem:[#allocation10 + $0xc0] sm:$0xff]
    %v5272 = vld [vmem:[#allocation10 + $0xc8] sm:$0xff]
    %v5273 = vld [vmem:[#allocation10 + $0xd0] sm:$0xff]
    %v5274 = vld [vmem:[#allocation10 + $0xd8] sm:$0xff]
    %v5275 = vld [vmem:[#allocation10 + $0xe0] sm:$0xff]
    %v5276 = vld [vmem:[#allocation10 + $0xe8] sm:$0xff]
    %v5277 = vld [vmem:[#allocation10 + $0xf0] sm:$0xff]
    %v5278 = vld [vmem:[#allocation10 + $0xf8] sm:$0xff]
    %v5311 = vunpack.c.l.b16 %v5247
    %v5312 = vunpack.c.h.b16 %v5247
    %v5313 = vunpack.c.l.b16 %v5248
    %v5314 = vunpack.c.h.b16 %v5248
    %v5315 = vunpack.c.l.b16 %v5249
    %v5316 = vunpack.c.h.b16 %v5249
    %v5317 = vunpack.c.l.b16 %v5250
    %v5318 = vunpack.c.h.b16 %v5250
    %v5319 = vunpack.c.l.b16 %v5251
    %v5320 = vunpack.c.h.b16 %v5251
    %v5321 = vunpack.c.l.b16 %v5252
    %v5322 = vunpack.c.h.b16 %v5252
    %v5323 = vunpack.c.l.b16 %v5253
    %v5324 = vunpack.c.h.b16 %v5253
    %v5325 = vunpack.c.l.b16 %v5254
    %v5326 = vunpack.c.h.b16 %v5254
    %v5327 = vunpack.c.l.b16 %v5255
    %v5328 = vunpack.c.h.b16 %v5255
    %v5329 = vunpack.c.l.b16 %v5256
    %v5330 = vunpack.c.h.b16 %v5256
    %v5331 = vunpack.c.l.b16 %v5257
    %v5332 = vunpack.c.h.b16 %v5257
    %v5333 = vunpack.c.l.b16 %v5258
    %v5334 = vunpack.c.h.b16 %v5258
    %v5335 = vunpack.c.l.b16 %v5259
    %v5336 = vunpack.c.h.b16 %v5259
    %v5337 = vunpack.c.l.b16 %v5260
    %v5338 = vunpack.c.h.b16 %v5260
    %v5339 = vunpack.c.l.b16 %v5261
    %v5340 = vunpack.c.h.b16 %v5261
    %v5341 = vunpack.c.l.b16 %v5262
    %v5342 = vunpack.c.h.b16 %v5262
    %v5343 = vunpack.c.l.b16 %v5263
    %v5344 = vunpack.c.h.b16 %v5263
    %v5345 = vunpack.c.l.b16 %v5264
    %v5346 = vunpack.c.h.b16 %v5264
    %v5347 = vunpack.c.l.b16 %v5265
    %v5348 = vunpack.c.h.b16 %v5265
    %v5349 = vunpack.c.l.b16 %v5266
    %v5350 = vunpack.c.h.b16 %v5266
    %v5351 = vunpack.c.l.b16 %v5267
    %v5352 = vunpack.c.h.b16 %v5267
    %v5353 = vunpack.c.l.b16 %v5268
    %v5354 = vunpack.c.h.b16 %v5268
    %v5355 = vunpack.c.l.b16 %v5269
    %v5356 = vunpack.c.h.b16 %v5269
    %v5357 = vunpack.c.l.b16 %v5270
    %v5358 = vunpack.c.h.b16 %v5270
    %v5359 = vunpack.c.l.b16 %v5271
    %v5360 = vunpack.c.h.b16 %v5271
    %v5361 = vunpack.c.l.b16 %v5272
    %v5362 = vunpack.c.h.b16 %v5272
    %v5363 = vunpack.c.l.b16 %v5273
    %v5364 = vunpack.c.h.b16 %v5273
    %v5365 = vunpack.c.l.b16 %v5274
    %v5366 = vunpack.c.h.b16 %v5274
    %v5367 = vunpack.c.l.b16 %v5275
    %v5368 = vunpack.c.h.b16 %v5275
    %v5369 = vunpack.c.l.b16 %v5276
    %v5370 = vunpack.c.h.b16 %v5276
    %v5371 = vunpack.c.l.b16 %v5277
    %v5372 = vunpack.c.h.b16 %v5277
    %v5373 = vunpack.c.l.b16 %v5278
    %v5374 = vunpack.c.h.b16 %v5278
    %v5375 = vpack.c.b16 %v5315, %v5311
    %v5376 = vpack.c.b16 %v5316, %v5312
    %v5377 = vpack.c.b16 %v5317, %v5313
    %v5378 = vpack.c.b16 %v5318, %v5314
    %v5379 = vpack.c.b16 %v5323, %v5319
    %v5380 = vpack.c.b16 %v5324, %v5320
    %v5381 = vpack.c.b16 %v5325, %v5321
    %v5382 = vpack.c.b16 %v5326, %v5322
    %v5383 = vpack.c.b16 %v5331, %v5327
    %v5384 = vpack.c.b16 %v5332, %v5328
    %v5385 = vpack.c.b16 %v5333, %v5329
    %v5386 = vpack.c.b16 %v5334, %v5330
    %v5387 = vpack.c.b16 %v5339, %v5335
    %v5388 = vpack.c.b16 %v5340, %v5336
    %v5389 = vpack.c.b16 %v5341, %v5337
    %v5390 = vpack.c.b16 %v5342, %v5338
    %v5391 = vpack.c.b16 %v5347, %v5343
    %v5392 = vpack.c.b16 %v5348, %v5344
    %v5393 = vpack.c.b16 %v5349, %v5345
    %v5394 = vpack.c.b16 %v5350, %v5346
    %v5395 = vpack.c.b16 %v5355, %v5351
    %v5396 = vpack.c.b16 %v5356, %v5352
    %v5397 = vpack.c.b16 %v5357, %v5353
    %v5398 = vpack.c.b16 %v5358, %v5354
    %v5399 = vpack.c.b16 %v5363, %v5359
    %v5400 = vpack.c.b16 %v5364, %v5360
    %v5401 = vpack.c.b16 %v5365, %v5361
    %v5402 = vpack.c.b16 %v5366, %v5362
    %v5403 = vpack.c.b16 %v5371, %v5367
    %v5404 = vpack.c.b16 %v5372, %v5368
    %v5405 = vpack.c.b16 %v5373, %v5369
    %v5406 = vpack.c.b16 %v5374, %v5370
    %5439 = vmatprep.subr.bf16.mxu0 %v5404
    %5440 = vmatpush1.bf16.msra.mxu0 %v5403
    %5441 = vmatprep.subr.bf16.mxu0 %v5400
    %5442 = vmatpush1.bf16.msra.mxu0 %v5399
    %5443 = vmatprep.subr.bf16.mxu0 %v5396
    %5444 = vmatpush1.bf16.msra.mxu0 %v5395
    %5445 = vmatprep.subr.bf16.mxu0 %v5392
    %5446 = vmatpush1.bf16.msra.mxu0 %v5391
    %5447 = vmatprep.subr.bf16.mxu0 %v5388
    %5448 = vmatpush1.bf16.msra.mxu0 %v5387
    %5449 = vmatprep.subr.bf16.mxu0 %v5384
    %5450 = vmatpush1.bf16.msra.mxu0 %v5383
    %5451 = vmatprep.subr.bf16.mxu0 %v5380
    %5452 = vmatpush1.bf16.msra.mxu0 %v5379
    %5453 = vmatprep.subr.bf16.mxu0 %v5376
    %5454 = vmatpush1.bf16.msra.mxu0 %v5375
    %5455 = vmatprep.subr.bf16.mxu0 0
    %5456 = vmatpush2.bf16.msra.mxu0 0
    %5457 = vmatprep.subr.bf16.mxu0 0
    %5458 = vmatpush2.bf16.msra.mxu0 0
    %5459 = vmatprep.subr.bf16.mxu0 0
    %5460 = vmatpush2.bf16.msra.mxu0 0
    %5461 = vmatprep.subr.bf16.mxu0 0
    %5462 = vmatpush2.bf16.msra.mxu0 0
    %5463 = vmatprep.subr.bf16.mxu0 0
    %5464 = vmatpush2.bf16.msra.mxu0 0
    %5465 = vmatprep.subr.bf16.mxu0 0
    %5466 = vmatpush2.bf16.msra.mxu0 0
    %5467 = vmatprep.subr.bf16.mxu0 0
    %5468 = vmatpush2.bf16.msra.mxu0 0
    %5469 = vmatprep.subr.bf16.mxu0 0
    %5470 = vmatpush2.bf16.msra.mxu0 0
    %5471 = vmatprep.mubr.bf16.mxu0 0
    %5472 = vmatmul.mubr.bf16.gmra.mxu0 %v5241
    %v5473 = vpop.f32.mrf.mxu0
    %v5474 = vadd.f32 0.0, %v5473
    %v5475 = vpop.f32.mrf.mxu0
    %v5476 = vadd.f32 0.0, %v5475
    %v5477 = vpop.f32.mrf.mxu0
    %v5478 = vpop.f32.mrf.mxu0
    %5479 = vdwg.mxu0
    %5480 = vmatprep.subr.bf16.mxu0 %v5406
    %5481 = vmatpush1.bf16.msra.mxu0 %v5405
    %5482 = vmatprep.subr.bf16.mxu0 %v5402
    %5483 = vmatpush1.bf16.msra.mxu0 %v5401
    %5484 = vmatprep.subr.bf16.mxu0 %v5398
    %5485 = vmatpush1.bf16.msra.mxu0 %v5397
    %5486 = vmatprep.subr.bf16.mxu0 %v5394
    %5487 = vmatpush1.bf16.msra.mxu0 %v5393
    %5488 = vmatprep.subr.bf16.mxu0 %v5390
    %5489 = vmatpush1.bf16.msra.mxu0 %v5389
    %5490 = vmatprep.subr.bf16.mxu0 %v5386
    %5491 = vmatpush1.bf16.msra.mxu0 %v5385
    %5492 = vmatprep.subr.bf16.mxu0 %v5382
    %5493 = vmatpush1.bf16.msra.mxu0 %v5381
    %5494 = vmatprep.subr.bf16.mxu0 %v5378
    %5495 = vmatpush1.bf16.msra.mxu0 %v5377
    %5496 = vmatprep.subr.bf16.mxu0 0
    %5497 = vmatpush2.bf16.msra.mxu0 0
    %5498 = vmatprep.subr.bf16.mxu0 0
    %5499 = vmatpush2.bf16.msra.mxu0 0
    %5500 = vmatprep.subr.bf16.mxu0 0
    %5501 = vmatpush2.bf16.msra.mxu0 0
    %5502 = vmatprep.subr.bf16.mxu0 0
    %5503 = vmatpush2.bf16.msra.mxu0 0
    %5504 = vmatprep.subr.bf16.mxu0 0
    %5505 = vmatpush2.bf16.msra.mxu0 0
    %5506 = vmatprep.subr.bf16.mxu0 0
    %5507 = vmatpush2.bf16.msra.mxu0 0
    %5508 = vmatprep.subr.bf16.mxu0 0
    %5509 = vmatpush2.bf16.msra.mxu0 0
    %5510 = vmatprep.subr.bf16.mxu0 0
    %5511 = vmatpush2.bf16.msra.mxu0 0
    %5512 = vmatprep.mubr.bf16.mxu0 0
    %5513 = vmatmul.mubr.bf16.gmra.mxu0 %v5241
    %v5514 = vpop.f32.mrf.mxu0
    %v5515 = vadd.f32 0.0, %v5514
    %v5516 = vpop.f32.mrf.mxu0
    %v5517 = vadd.f32 0.0, %v5516
    %v5518 = vpop.f32.mrf.mxu0
    %v5519 = vpop.f32.mrf.mxu0
    %5520 = vdwg.mxu0
    %v5521 = vadd.f32 %v5243, %v5474
    %v5522 = vadd.f32 %v5244, %v5476
    %v5523 = vadd.f32 %v5245, %v5515
    %v5524 = vadd.f32 %v5246, %v5517
    %v5525 = vxor.u32 %v5521, 2147483648
    %v5526 = vmul.f32 %v5525, 1.442695
    %v5527 = vpow.pop %v5526
    %v5528 = vadd.f32 %v5527, 1.0
    %v5529 = vrcp.pop %v5528
    %v5530 = vmul.f32 1.0, %v5529
    %v5531 = vxor.u32 %v5522, 2147483648
    %v5532 = vmul.f32 %v5531, 1.442695
    %v5533 = vpow.pop %v5532
    %v5534 = vadd.f32 %v5533, 1.0
    %v5535 = vrcp.pop %v5534
    %v5536 = vmul.f32 1.0, %v5535
    %v5537 = vtanh.pop %v5523
    %v5538 = vxor.u32 %v5524, 2147483648
    %v5539 = vmul.f32 %v5538, 1.442695
    %v5540 = vpow.pop %v5539
    %v5541 = vadd.f32 %v5540, 1.0
    %v5542 = vrcp.pop %v5541
    %v5543 = vmul.f32 1.0, %v5542
    %v5544 = vmul.f32 %v5536, %v5238
    %v5545 = vmul.f32 %v5530, %v5537
    %v5546 = vadd.f32 %v5544, %v5545
    %v5547 = vtanh.pop %v5546
    %v5548 = vmul.f32 %v5543, %v5547
    %v5549 = vpack.c.bf16 %v5548, %v5548
    %s5550 = scalar_lea.vmem [#allocation14], 4
    %5551 = vst [vmem:[%s5550] sm:$0xf] %v5549
    %v5552 = vld [vmem:[#allocation4 + $0x40] sm:$0xff]
    %v5553 = vld [vmem:[#allocation4 + $0x48] sm:$0xff]
    %v5554 = vld [vmem:[#allocation4 + $0x50] sm:$0xff]
    %v5555 = vld [vmem:[#allocation4 + $0x58] sm:$0xff]
    %v5556 = vld [vmem:[#allocation10] sm:$0xff]
    %v5557 = vld [vmem:[#allocation10 + $0x8] sm:$0xff]
    %v5558 = vld [vmem:[#allocation10 + $0x10] sm:$0xff]
    %v5559 = vld [vmem:[#allocation10 + $0x18] sm:$0xff]
    %v5560 = vld [vmem:[#allocation10 + $0x20] sm:$0xff]
    %v5561 = vld [vmem:[#allocation10 + $0x28] sm:$0xff]
    %v5562 = vld [vmem:[#allocation10 + $0x30] sm:$0xff]
    %v5563 = vld [vmem:[#allocation10 + $0x38] sm:$0xff]
    %v5564 = vld [vmem:[#allocation10 + $0x40] sm:$0xff]
    %v5565 = vld [vmem:[#allocation10 + $0x48] sm:$0xff]
    %v5566 = vld [vmem:[#allocation10 + $0x50] sm:$0xff]
    %v5567 = vld [vmem:[#allocation10 + $0x58] sm:$0xff]
    %v5568 = vld [vmem:[#allocation10 + $0x60] sm:$0xff]
    %v5569 = vld [vmem:[#allocation10 + $0x68] sm:$0xff]
    %v5570 = vld [vmem:[#allocation10 + $0x70] sm:$0xff]
    %v5571 = vld [vmem:[#allocation10 + $0x78] sm:$0xff]
    %v5572 = vld [vmem:[#allocation10 + $0x80] sm:$0xff]
    %v5573 = vld [vmem:[#allocation10 + $0x88] sm:$0xff]
    %v5574 = vld [vmem:[#allocation10 + $0x90] sm:$0xff]
    %v5575 = vld [vmem:[#allocation10 + $0x98] sm:$0xff]
    %v5576 = vld [vmem:[#allocation10 + $0xa0] sm:$0xff]
    %v5577 = vld [vmem:[#allocation10 + $0xa8] sm:$0xff]
    %v5578 = vld [vmem:[#allocation10 + $0xb0] sm:$0xff]
    %v5579 = vld [vmem:[#allocation10 + $0xb8] sm:$0xff]
    %v5580 = vld [vmem:[#allocation10 + $0xc0] sm:$0xff]
    %v5581 = vld [vmem:[#allocation10 + $0xc8] sm:$0xff]
    %v5582 = vld [vmem:[#allocation10 + $0xd0] sm:$0xff]
    %v5583 = vld [vmem:[#allocation10 + $0xd8] sm:$0xff]
    %v5584 = vld [vmem:[#allocation10 + $0xe0] sm:$0xff]
    %v5585 = vld [vmem:[#allocation10 + $0xe8] sm:$0xff]
    %v5586 = vld [vmem:[#allocation10 + $0xf0] sm:$0xff]
    %v5587 = vld [vmem:[#allocation10 + $0xf8] sm:$0xff]
    %v5620 = vunpack.c.l.b16 %v5556
    %v5621 = vunpack.c.h.b16 %v5556
    %v5622 = vunpack.c.l.b16 %v5557
    %v5623 = vunpack.c.h.b16 %v5557
    %v5624 = vunpack.c.l.b16 %v5558
    %v5625 = vunpack.c.h.b16 %v5558
    %v5626 = vunpack.c.l.b16 %v5559
    %v5627 = vunpack.c.h.b16 %v5559
    %v5628 = vunpack.c.l.b16 %v5560
    %v5629 = vunpack.c.h.b16 %v5560
    %v5630 = vunpack.c.l.b16 %v5561
    %v5631 = vunpack.c.h.b16 %v5561
    %v5632 = vunpack.c.l.b16 %v5562
    %v5633 = vunpack.c.h.b16 %v5562
    %v5634 = vunpack.c.l.b16 %v5563
    %v5635 = vunpack.c.h.b16 %v5563
    %v5636 = vunpack.c.l.b16 %v5564
    %v5637 = vunpack.c.h.b16 %v5564
    %v5638 = vunpack.c.l.b16 %v5565
    %v5639 = vunpack.c.h.b16 %v5565
    %v5640 = vunpack.c.l.b16 %v5566
    %v5641 = vunpack.c.h.b16 %v5566
    %v5642 = vunpack.c.l.b16 %v5567
    %v5643 = vunpack.c.h.b16 %v5567
    %v5644 = vunpack.c.l.b16 %v5568
    %v5645 = vunpack.c.h.b16 %v5568
    %v5646 = vunpack.c.l.b16 %v5569
    %v5647 = vunpack.c.h.b16 %v5569
    %v5648 = vunpack.c.l.b16 %v5570
    %v5649 = vunpack.c.h.b16 %v5570
    %v5650 = vunpack.c.l.b16 %v5571
    %v5651 = vunpack.c.h.b16 %v5571
    %v5652 = vunpack.c.l.b16 %v5572
    %v5653 = vunpack.c.h.b16 %v5572
    %v5654 = vunpack.c.l.b16 %v5573
    %v5655 = vunpack.c.h.b16 %v5573
    %v5656 = vunpack.c.l.b16 %v5574
    %v5657 = vunpack.c.h.b16 %v5574
    %v5658 = vunpack.c.l.b16 %v5575
    %v5659 = vunpack.c.h.b16 %v5575
    %v5660 = vunpack.c.l.b16 %v5576
    %v5661 = vunpack.c.h.b16 %v5576
    %v5662 = vunpack.c.l.b16 %v5577
    %v5663 = vunpack.c.h.b16 %v5577
    %v5664 = vunpack.c.l.b16 %v5578
    %v5665 = vunpack.c.h.b16 %v5578
    %v5666 = vunpack.c.l.b16 %v5579
    %v5667 = vunpack.c.h.b16 %v5579
    %v5668 = vunpack.c.l.b16 %v5580
    %v5669 = vunpack.c.h.b16 %v5580
    %v5670 = vunpack.c.l.b16 %v5581
    %v5671 = vunpack.c.h.b16 %v5581
    %v5672 = vunpack.c.l.b16 %v5582
    %v5673 = vunpack.c.h.b16 %v5582
    %v5674 = vunpack.c.l.b16 %v5583
    %v5675 = vunpack.c.h.b16 %v5583
    %v5676 = vunpack.c.l.b16 %v5584
    %v5677 = vunpack.c.h.b16 %v5584
    %v5678 = vunpack.c.l.b16 %v5585
    %v5679 = vunpack.c.h.b16 %v5585
    %v5680 = vunpack.c.l.b16 %v5586
    %v5681 = vunpack.c.h.b16 %v5586
    %v5682 = vunpack.c.l.b16 %v5587
    %v5683 = vunpack.c.h.b16 %v5587
    %v5684 = vpack.c.b16 %v5624, %v5620
    %v5685 = vpack.c.b16 %v5625, %v5621
    %v5686 = vpack.c.b16 %v5626, %v5622
    %v5687 = vpack.c.b16 %v5627, %v5623
    %v5688 = vpack.c.b16 %v5632, %v5628
    %v5689 = vpack.c.b16 %v5633, %v5629
    %v5690 = vpack.c.b16 %v5634, %v5630
    %v5691 = vpack.c.b16 %v5635, %v5631
    %v5692 = vpack.c.b16 %v5640, %v5636
    %v5693 = vpack.c.b16 %v5641, %v5637
    %v5694 = vpack.c.b16 %v5642, %v5638
    %v5695 = vpack.c.b16 %v5643, %v5639
    %v5696 = vpack.c.b16 %v5648, %v5644
    %v5697 = vpack.c.b16 %v5649, %v5645
    %v5698 = vpack.c.b16 %v5650, %v5646
    %v5699 = vpack.c.b16 %v5651, %v5647
    %v5700 = vpack.c.b16 %v5656, %v5652
    %v5701 = vpack.c.b16 %v5657, %v5653
    %v5702 = vpack.c.b16 %v5658, %v5654
    %v5703 = vpack.c.b16 %v5659, %v5655
    %v5704 = vpack.c.b16 %v5664, %v5660
    %v5705 = vpack.c.b16 %v5665, %v5661
    %v5706 = vpack.c.b16 %v5666, %v5662
    %v5707 = vpack.c.b16 %v5667, %v5663
    %v5708 = vpack.c.b16 %v5672, %v5668
    %v5709 = vpack.c.b16 %v5673, %v5669
    %v5710 = vpack.c.b16 %v5674, %v5670
    %v5711 = vpack.c.b16 %v5675, %v5671
    %v5712 = vpack.c.b16 %v5680, %v5676
    %v5713 = vpack.c.b16 %v5681, %v5677
    %v5714 = vpack.c.b16 %v5682, %v5678
    %v5715 = vpack.c.b16 %v5683, %v5679
    %5748 = vmatprep.subr.bf16.mxu0 %v5713
    %5749 = vmatpush1.bf16.msra.mxu0 %v5712
    %5750 = vmatprep.subr.bf16.mxu0 %v5709
    %5751 = vmatpush1.bf16.msra.mxu0 %v5708
    %5752 = vmatprep.subr.bf16.mxu0 %v5705
    %5753 = vmatpush1.bf16.msra.mxu0 %v5704
    %5754 = vmatprep.subr.bf16.mxu0 %v5701
    %5755 = vmatpush1.bf16.msra.mxu0 %v5700
    %5756 = vmatprep.subr.bf16.mxu0 %v5697
    %5757 = vmatpush1.bf16.msra.mxu0 %v5696
    %5758 = vmatprep.subr.bf16.mxu0 %v5693
    %5759 = vmatpush1.bf16.msra.mxu0 %v5692
    %5760 = vmatprep.subr.bf16.mxu0 %v5689
    %5761 = vmatpush1.bf16.msra.mxu0 %v5688
    %5762 = vmatprep.subr.bf16.mxu0 %v5685
    %5763 = vmatpush1.bf16.msra.mxu0 %v5684
    %5764 = vmatprep.subr.bf16.mxu0 0
    %5765 = vmatpush2.bf16.msra.mxu0 0
    %5766 = vmatprep.subr.bf16.mxu0 0
    %5767 = vmatpush2.bf16.msra.mxu0 0
    %5768 = vmatprep.subr.bf16.mxu0 0
    %5769 = vmatpush2.bf16.msra.mxu0 0
    %5770 = vmatprep.subr.bf16.mxu0 0
    %5771 = vmatpush2.bf16.msra.mxu0 0
    %5772 = vmatprep.subr.bf16.mxu0 0
    %5773 = vmatpush2.bf16.msra.mxu0 0
    %5774 = vmatprep.subr.bf16.mxu0 0
    %5775 = vmatpush2.bf16.msra.mxu0 0
    %5776 = vmatprep.subr.bf16.mxu0 0
    %5777 = vmatpush2.bf16.msra.mxu0 0
    %5778 = vmatprep.subr.bf16.mxu0 0
    %5779 = vmatpush2.bf16.msra.mxu0 0
    %5780 = vmatprep.mubr.bf16.mxu0 0
    %5781 = vmatmul.mubr.bf16.gmra.mxu0 %v5549
    %v5782 = vpop.f32.mrf.mxu0
    %v5783 = vadd.f32 0.0, %v5782
    %v5784 = vpop.f32.mrf.mxu0
    %v5785 = vadd.f32 0.0, %v5784
    %v5786 = vpop.f32.mrf.mxu0
    %v5787 = vpop.f32.mrf.mxu0
    %5788 = vdwg.mxu0
    %5789 = vmatprep.subr.bf16.mxu0 %v5715
    %5790 = vmatpush1.bf16.msra.mxu0 %v5714
    %5791 = vmatprep.subr.bf16.mxu0 %v5711
    %5792 = vmatpush1.bf16.msra.mxu0 %v5710
    %5793 = vmatprep.subr.bf16.mxu0 %v5707
    %5794 = vmatpush1.bf16.msra.mxu0 %v5706
    %5795 = vmatprep.subr.bf16.mxu0 %v5703
    %5796 = vmatpush1.bf16.msra.mxu0 %v5702
    %5797 = vmatprep.subr.bf16.mxu0 %v5699
    %5798 = vmatpush1.bf16.msra.mxu0 %v5698
    %5799 = vmatprep.subr.bf16.mxu0 %v5695
    %5800 = vmatpush1.bf16.msra.mxu0 %v5694
    %5801 = vmatprep.subr.bf16.mxu0 %v5691
    %5802 = vmatpush1.bf16.msra.mxu0 %v5690
    %5803 = vmatprep.subr.bf16.mxu0 %v5687
    %5804 = vmatpush1.bf16.msra.mxu0 %v5686
    %5805 = vmatprep.subr.bf16.mxu0 0
    %5806 = vmatpush2.bf16.msra.mxu0 0
    %5807 = vmatprep.subr.bf16.mxu0 0
    %5808 = vmatpush2.bf16.msra.mxu0 0
    %5809 = vmatprep.subr.bf16.mxu0 0
    %5810 = vmatpush2.bf16.msra.mxu0 0
    %5811 = vmatprep.subr.bf16.mxu0 0
    %5812 = vmatpush2.bf16.msra.mxu0 0
    %5813 = vmatprep.subr.bf16.mxu0 0
    %5814 = vmatpush2.bf16.msra.mxu0 0
    %5815 = vmatprep.subr.bf16.mxu0 0
    %5816 = vmatpush2.bf16.msra.mxu0 0
    %5817 = vmatprep.subr.bf16.mxu0 0
    %5818 = vmatpush2.bf16.msra.mxu0 0
    %5819 = vmatprep.subr.bf16.mxu0 0
    %5820 = vmatpush2.bf16.msra.mxu0 0
    %5821 = vmatprep.mubr.bf16.mxu0 0
    %5822 = vmatmul.mubr.bf16.gmra.mxu0 %v5549
    %v5823 = vpop.f32.mrf.mxu0
    %v5824 = vadd.f32 0.0, %v5823
    %v5825 = vpop.f32.mrf.mxu0
    %v5826 = vadd.f32 0.0, %v5825
    %v5827 = vpop.f32.mrf.mxu0
    %v5828 = vpop.f32.mrf.mxu0
    %5829 = vdwg.mxu0
    %v5830 = vadd.f32 %v5552, %v5783
    %v5831 = vadd.f32 %v5553, %v5785
    %v5832 = vadd.f32 %v5554, %v5824
    %v5833 = vadd.f32 %v5555, %v5826
    %v5834 = vxor.u32 %v5830, 2147483648
    %v5835 = vmul.f32 %v5834, 1.442695
    %v5836 = vpow.pop %v5835
    %v5837 = vadd.f32 %v5836, 1.0
    %v5838 = vrcp.pop %v5837
    %v5839 = vmul.f32 1.0, %v5838
    %v5840 = vxor.u32 %v5831, 2147483648
    %v5841 = vmul.f32 %v5840, 1.442695
    %v5842 = vpow.pop %v5841
    %v5843 = vadd.f32 %v5842, 1.0
    %v5844 = vrcp.pop %v5843
    %v5845 = vmul.f32 1.0, %v5844
    %v5846 = vtanh.pop %v5832
    %v5847 = vxor.u32 %v5833, 2147483648
    %v5848 = vmul.f32 %v5847, 1.442695
    %v5849 = vpow.pop %v5848
    %v5850 = vadd.f32 %v5849, 1.0
    %v5851 = vrcp.pop %v5850
    %v5852 = vmul.f32 1.0, %v5851
    %v5853 = vmul.f32 %v5845, %v5546
    %v5854 = vmul.f32 %v5839, %v5846
    %v5855 = vadd.f32 %v5853, %v5854
    %v5856 = vtanh.pop %v5855
    %v5857 = vmul.f32 %v5852, %v5856
    %v5858 = vpack.c.bf16 %v5857, %v5857
    %s5859 = scalar_lea.vmem [#allocation14], 8
    %5860 = vst [vmem:[%s5859] sm:$0xf] %v5858
    %v5861 = vld [vmem:[#allocation4 + $0x60] sm:$0xff]
    %v5862 = vld [vmem:[#allocation4 + $0x68] sm:$0xff]
    %v5863 = vld [vmem:[#allocation4 + $0x70] sm:$0xff]
    %v5864 = vld [vmem:[#allocation4 + $0x78] sm:$0xff]
    %v5865 = vld [vmem:[#allocation10] sm:$0xff]
    %v5866 = vld [vmem:[#allocation10 + $0x8] sm:$0xff]
    %v5867 = vld [vmem:[#allocation10 + $0x10] sm:$0xff]
    %v5868 = vld [vmem:[#allocation10 + $0x18] sm:$0xff]
    %v5869 = vld [vmem:[#allocation10 + $0x20] sm:$0xff]
    %v5870 = vld [vmem:[#allocation10 + $0x28] sm:$0xff]
    %v5871 = vld [vmem:[#allocation10 + $0x30] sm:$0xff]
    %v5872 = vld [vmem:[#allocation10 + $0x38] sm:$0xff]
    %v5873 = vld [vmem:[#allocation10 + $0x40] sm:$0xff]
    %v5874 = vld [vmem:[#allocation10 + $0x48] sm:$0xff]
    %v5875 = vld [vmem:[#allocation10 + $0x50] sm:$0xff]
    %v5876 = vld [vmem:[#allocation10 + $0x58] sm:$0xff]
    %v5877 = vld [vmem:[#allocation10 + $0x60] sm:$0xff]
    %v5878 = vld [vmem:[#allocation10 + $0x68] sm:$0xff]
    %v5879 = vld [vmem:[#allocation10 + $0x70] sm:$0xff]
    %v5880 = vld [vmem:[#allocation10 + $0x78] sm:$0xff]
    %v5881 = vld [vmem:[#allocation10 + $0x80] sm:$0xff]
    %v5882 = vld [vmem:[#allocation10 + $0x88] sm:$0xff]
    %v5883 = vld [vmem:[#allocation10 + $0x90] sm:$0xff]
    %v5884 = vld [vmem:[#allocation10 + $0x98] sm:$0xff]
    %v5885 = vld [vmem:[#allocation10 + $0xa0] sm:$0xff]
    %v5886 = vld [vmem:[#allocation10 + $0xa8] sm:$0xff]
    %v5887 = vld [vmem:[#allocation10 + $0xb0] sm:$0xff]
    %v5888 = vld [vmem:[#allocation10 + $0xb8] sm:$0xff]
    %v5889 = vld [vmem:[#allocation10 + $0xc0] sm:$0xff]
    %v5890 = vld [vmem:[#allocation10 + $0xc8] sm:$0xff]
    %v5891 = vld [vmem:[#allocation10 + $0xd0] sm:$0xff]
    %v5892 = vld [vmem:[#allocation10 + $0xd8] sm:$0xff]
    %v5893 = vld [vmem:[#allocation10 + $0xe0] sm:$0xff]
    %v5894 = vld [vmem:[#allocation10 + $0xe8] sm:$0xff]
    %v5895 = vld [vmem:[#allocation10 + $0xf0] sm:$0xff]
    %v5896 = vld [vmem:[#allocation10 + $0xf8] sm:$0xff]
    %v5929 = vunpack.c.l.b16 %v5865
    %v5930 = vunpack.c.h.b16 %v5865
    %v5931 = vunpack.c.l.b16 %v5866
    %v5932 = vunpack.c.h.b16 %v5866
    %v5933 = vunpack.c.l.b16 %v5867
    %v5934 = vunpack.c.h.b16 %v5867
    %v5935 = vunpack.c.l.b16 %v5868
    %v5936 = vunpack.c.h.b16 %v5868
    %v5937 = vunpack.c.l.b16 %v5869
    %v5938 = vunpack.c.h.b16 %v5869
    %v5939 = vunpack.c.l.b16 %v5870
    %v5940 = vunpack.c.h.b16 %v5870
    %v5941 = vunpack.c.l.b16 %v5871
    %v5942 = vunpack.c.h.b16 %v5871
    %v5943 = vunpack.c.l.b16 %v5872
    %v5944 = vunpack.c.h.b16 %v5872
    %v5945 = vunpack.c.l.b16 %v5873
    %v5946 = vunpack.c.h.b16 %v5873
    %v5947 = vunpack.c.l.b16 %v5874
    %v5948 = vunpack.c.h.b16 %v5874
    %v5949 = vunpack.c.l.b16 %v5875
    %v5950 = vunpack.c.h.b16 %v5875
    %v5951 = vunpack.c.l.b16 %v5876
    %v5952 = vunpack.c.h.b16 %v5876
    %v5953 = vunpack.c.l.b16 %v5877
    %v5954 = vunpack.c.h.b16 %v5877
    %v5955 = vunpack.c.l.b16 %v5878
    %v5956 = vunpack.c.h.b16 %v5878
    %v5957 = vunpack.c.l.b16 %v5879
    %v5958 = vunpack.c.h.b16 %v5879
    %v5959 = vunpack.c.l.b16 %v5880
    %v5960 = vunpack.c.h.b16 %v5880
    %v5961 = vunpack.c.l.b16 %v5881
    %v5962 = vunpack.c.h.b16 %v5881
    %v5963 = vunpack.c.l.b16 %v5882
    %v5964 = vunpack.c.h.b16 %v5882
    %v5965 = vunpack.c.l.b16 %v5883
    %v5966 = vunpack.c.h.b16 %v5883
    %v5967 = vunpack.c.l.b16 %v5884
    %v5968 = vunpack.c.h.b16 %v5884
    %v5969 = vunpack.c.l.b16 %v5885
    %v5970 = vunpack.c.h.b16 %v5885
    %v5971 = vunpack.c.l.b16 %v5886
    %v5972 = vunpack.c.h.b16 %v5886
    %v5973 = vunpack.c.l.b16 %v5887
    %v5974 = vunpack.c.h.b16 %v5887
    %v5975 = vunpack.c.l.b16 %v5888
    %v5976 = vunpack.c.h.b16 %v5888
    %v5977 = vunpack.c.l.b16 %v5889
    %v5978 = vunpack.c.h.b16 %v5889
    %v5979 = vunpack.c.l.b16 %v5890
    %v5980 = vunpack.c.h.b16 %v5890
    %v5981 = vunpack.c.l.b16 %v5891
    %v5982 = vunpack.c.h.b16 %v5891
    %v5983 = vunpack.c.l.b16 %v5892
    %v5984 = vunpack.c.h.b16 %v5892
    %v5985 = vunpack.c.l.b16 %v5893
    %v5986 = vunpack.c.h.b16 %v5893
    %v5987 = vunpack.c.l.b16 %v5894
    %v5988 = vunpack.c.h.b16 %v5894
    %v5989 = vunpack.c.l.b16 %v5895
    %v5990 = vunpack.c.h.b16 %v5895
    %v5991 = vunpack.c.l.b16 %v5896
    %v5992 = vunpack.c.h.b16 %v5896
    %v5993 = vpack.c.b16 %v5933, %v5929
    %v5994 = vpack.c.b16 %v5934, %v5930
    %v5995 = vpack.c.b16 %v5935, %v5931
    %v5996 = vpack.c.b16 %v5936, %v5932
    %v5997 = vpack.c.b16 %v5941, %v5937
    %v5998 = vpack.c.b16 %v5942, %v5938
    %v5999 = vpack.c.b16 %v5943, %v5939
    %v6000 = vpack.c.b16 %v5944, %v5940
    %v6001 = vpack.c.b16 %v5949, %v5945
    %v6002 = vpack.c.b16 %v5950, %v5946
    %v6003 = vpack.c.b16 %v5951, %v5947
    %v6004 = vpack.c.b16 %v5952, %v5948
    %v6005 = vpack.c.b16 %v5957, %v5953
    %v6006 = vpack.c.b16 %v5958, %v5954
    %v6007 = vpack.c.b16 %v5959, %v5955
    %v6008 = vpack.c.b16 %v5960, %v5956
    %v6009 = vpack.c.b16 %v5965, %v5961
    %v6010 = vpack.c.b16 %v5966, %v5962
    %v6011 = vpack.c.b16 %v5967, %v5963
    %v6012 = vpack.c.b16 %v5968, %v5964
    %v6013 = vpack.c.b16 %v5973, %v5969
    %v6014 = vpack.c.b16 %v5974, %v5970
    %v6015 = vpack.c.b16 %v5975, %v5971
    %v6016 = vpack.c.b16 %v5976, %v5972
    %v6017 = vpack.c.b16 %v5981, %v5977
    %v6018 = vpack.c.b16 %v5982, %v5978
    %v6019 = vpack.c.b16 %v5983, %v5979
    %v6020 = vpack.c.b16 %v5984, %v5980
    %v6021 = vpack.c.b16 %v5989, %v5985
    %v6022 = vpack.c.b16 %v5990, %v5986
    %v6023 = vpack.c.b16 %v5991, %v5987
    %v6024 = vpack.c.b16 %v5992, %v5988
    %6057 = vmatprep.subr.bf16.mxu0 %v6022
    %6058 = vmatpush1.bf16.msra.mxu0 %v6021
    %6059 = vmatprep.subr.bf16.mxu0 %v6018
    %6060 = vmatpush1.bf16.msra.mxu0 %v6017
    %6061 = vmatprep.subr.bf16.mxu0 %v6014
    %6062 = vmatpush1.bf16.msra.mxu0 %v6013
    %6063 = vmatprep.subr.bf16.mxu0 %v6010
    %6064 = vmatpush1.bf16.msra.mxu0 %v6009
    %6065 = vmatprep.subr.bf16.mxu0 %v6006
    %6066 = vmatpush1.bf16.msra.mxu0 %v6005
    %6067 = vmatprep.subr.bf16.mxu0 %v6002
    %6068 = vmatpush1.bf16.msra.mxu0 %v6001
    %6069 = vmatprep.subr.bf16.mxu0 %v5998
    %6070 = vmatpush1.bf16.msra.mxu0 %v5997
    %6071 = vmatprep.subr.bf16.mxu0 %v5994
    %6072 = vmatpush1.bf16.msra.mxu0 %v5993
    %6073 = vmatprep.subr.bf16.mxu0 0
    %6074 = vmatpush2.bf16.msra.mxu0 0
    %6075 = vmatprep.subr.bf16.mxu0 0
    %6076 = vmatpush2.bf16.msra.mxu0 0
    %6077 = vmatprep.subr.bf16.mxu0 0
    %6078 = vmatpush2.bf16.msra.mxu0 0
    %6079 = vmatprep.subr.bf16.mxu0 0
    %6080 = vmatpush2.bf16.msra.mxu0 0
    %6081 = vmatprep.subr.bf16.mxu0 0
    %6082 = vmatpush2.bf16.msra.mxu0 0
    %6083 = vmatprep.subr.bf16.mxu0 0
    %6084 = vmatpush2.bf16.msra.mxu0 0
    %6085 = vmatprep.subr.bf16.mxu0 0
    %6086 = vmatpush2.bf16.msra.mxu0 0
    %6087 = vmatprep.subr.bf16.mxu0 0
    %6088 = vmatpush2.bf16.msra.mxu0 0
    %6089 = vmatprep.mubr.bf16.mxu0 0
    %6090 = vmatmul.mubr.bf16.gmra.mxu0 %v5858
    %v6091 = vpop.f32.mrf.mxu0
    %v6092 = vadd.f32 0.0, %v6091
    %v6093 = vpop.f32.mrf.mxu0
    %v6094 = vadd.f32 0.0, %v6093
    %v6095 = vpop.f32.mrf.mxu0
    %v6096 = vpop.f32.mrf.mxu0
    %6097 = vdwg.mxu0
    %6098 = vmatprep.subr.bf16.mxu0 %v6024
    %6099 = vmatpush1.bf16.msra.mxu0 %v6023
    %6100 = vmatprep.subr.bf16.mxu0 %v6020
    %6101 = vmatpush1.bf16.msra.mxu0 %v6019
    %6102 = vmatprep.subr.bf16.mxu0 %v6016
    %6103 = vmatpush1.bf16.msra.mxu0 %v6015
    %6104 = vmatprep.subr.bf16.mxu0 %v6012
    %6105 = vmatpush1.bf16.msra.mxu0 %v6011
    %6106 = vmatprep.subr.bf16.mxu0 %v6008
    %6107 = vmatpush1.bf16.msra.mxu0 %v6007
    %6108 = vmatprep.subr.bf16.mxu0 %v6004
    %6109 = vmatpush1.bf16.msra.mxu0 %v6003
    %6110 = vmatprep.subr.bf16.mxu0 %v6000
    %6111 = vmatpush1.bf16.msra.mxu0 %v5999
    %6112 = vmatprep.subr.bf16.mxu0 %v5996
    %6113 = vmatpush1.bf16.msra.mxu0 %v5995
    %6114 = vmatprep.subr.bf16.mxu0 0
    %6115 = vmatpush2.bf16.msra.mxu0 0
    %6116 = vmatprep.subr.bf16.mxu0 0
    %6117 = vmatpush2.bf16.msra.mxu0 0
    %6118 = vmatprep.subr.bf16.mxu0 0
    %6119 = vmatpush2.bf16.msra.mxu0 0
    %6120 = vmatprep.subr.bf16.mxu0 0
    %6121 = vmatpush2.bf16.msra.mxu0 0
    %6122 = vmatprep.subr.bf16.mxu0 0
    %6123 = vmatpush2.bf16.msra.mxu0 0
    %6124 = vmatprep.subr.bf16.mxu0 0
    %6125 = vmatpush2.bf16.msra.mxu0 0
    %6126 = vmatprep.subr.bf16.mxu0 0
    %6127 = vmatpush2.bf16.msra.mxu0 0
    %6128 = vmatprep.subr.bf16.mxu0 0
    %6129 = vmatpush2.bf16.msra.mxu0 0
    %6130 = vmatprep.mubr.bf16.mxu0 0
    %6131 = vmatmul.mubr.bf16.gmra.mxu0 %v5858
    %v6132 = vpop.f32.mrf.mxu0
    %v6133 = vadd.f32 0.0, %v6132
    %v6134 = vpop.f32.mrf.mxu0
    %v6135 = vadd.f32 0.0, %v6134
    %v6136 = vpop.f32.mrf.mxu0
    %v6137 = vpop.f32.mrf.mxu0
    %6138 = vdwg.mxu0
    %v6139 = vadd.f32 %v5861, %v6092
    %v6140 = vadd.f32 %v5862, %v6094
    %v6141 = vadd.f32 %v5863, %v6133
    %v6142 = vadd.f32 %v5864, %v6135
    %v6143 = vxor.u32 %v6139, 2147483648
    %v6144 = vmul.f32 %v6143, 1.442695
    %v6145 = vpow.pop %v6144
    %v6146 = vadd.f32 %v6145, 1.0
    %v6147 = vrcp.pop %v6146
    %v6148 = vmul.f32 1.0, %v6147
    %v6149 = vxor.u32 %v6140, 2147483648
    %v6150 = vmul.f32 %v6149, 1.442695
    %v6151 = vpow.pop %v6150
    %v6152 = vadd.f32 %v6151, 1.0
    %v6153 = vrcp.pop %v6152
    %v6154 = vmul.f32 1.0, %v6153
    %v6155 = vtanh.pop %v6141
    %v6156 = vxor.u32 %v6142, 2147483648
    %v6157 = vmul.f32 %v6156, 1.442695
    %v6158 = vpow.pop %v6157
    %v6159 = vadd.f32 %v6158, 1.0
    %v6160 = vrcp.pop %v6159
    %v6161 = vmul.f32 1.0, %v6160
    %v6162 = vmul.f32 %v6154, %v5855
    %v6163 = vmul.f32 %v6148, %v6155
    %v6164 = vadd.f32 %v6162, %v6163
    %v6165 = vtanh.pop %v6164
    %v6166 = vmul.f32 %v6161, %v6165
    %v6167 = vpack.c.bf16 %v6166, %v6166
    %s6168 = scalar_lea.vmem [#allocation14], 12
    %6169 = vst [vmem:[%s6168] sm:$0xf] %v6167
    %v6170 = vld [vmem:[#allocation4 + $0x80] sm:$0xff]
    %v6171 = vld [vmem:[#allocation4 + $0x88] sm:$0xff]
    %v6172 = vld [vmem:[#allocation4 + $0x90] sm:$0xff]
    %v6173 = vld [vmem:[#allocation4 + $0x98] sm:$0xff]
    %v6174 = vld [vmem:[#allocation10] sm:$0xff]
    %v6175 = vld [vmem:[#allocation10 + $0x8] sm:$0xff]
    %v6176 = vld [vmem:[#allocation10 + $0x10] sm:$0xff]
    %v6177 = vld [vmem:[#allocation10 + $0x18] sm:$0xff]
    %v6178 = vld [vmem:[#allocation10 + $0x20] sm:$0xff]
    %v6179 = vld [vmem:[#allocation10 + $0x28] sm:$0xff]
    %v6180 = vld [vmem:[#allocation10 + $0x30] sm:$0xff]
    %v6181 = vld [vmem:[#allocation10 + $0x38] sm:$0xff]
    %v6182 = vld [vmem:[#allocation10 + $0x40] sm:$0xff]
    %v6183 = vld [vmem:[#allocation10 + $0x48] sm:$0xff]
    %v6184 = vld [vmem:[#allocation10 + $0x50] sm:$0xff]
    %v6185 = vld [vmem:[#allocation10 + $0x58] sm:$0xff]
    %v6186 = vld [vmem:[#allocation10 + $0x60] sm:$0xff]
    %v6187 = vld [vmem:[#allocation10 + $0x68] sm:$0xff]
    %v6188 = vld [vmem:[#allocation10 + $0x70] sm:$0xff]
    %v6189 = vld [vmem:[#allocation10 + $0x78] sm:$0xff]
    %v6190 = vld [vmem:[#allocation10 + $0x80] sm:$0xff]
    %v6191 = vld [vmem:[#allocation10 + $0x88] sm:$0xff]
    %v6192 = vld [vmem:[#allocation10 + $0x90] sm:$0xff]
    %v6193 = vld [vmem:[#allocation10 + $0x98] sm:$0xff]
    %v6194 = vld [vmem:[#allocation10 + $0xa0] sm:$0xff]
    %v6195 = vld [vmem:[#allocation10 + $0xa8] sm:$0xff]
    %v6196 = vld [vmem:[#allocation10 + $0xb0] sm:$0xff]
    %v6197 = vld [vmem:[#allocation10 + $0xb8] sm:$0xff]
    %v6198 = vld [vmem:[#allocation10 + $0xc0] sm:$0xff]
    %v6199 = vld [vmem:[#allocation10 + $0xc8] sm:$0xff]
    %v6200 = vld [vmem:[#allocation10 + $0xd0] sm:$0xff]
    %v6201 = vld [vmem:[#allocation10 + $0xd8] sm:$0xff]
    %v6202 = vld [vmem:[#allocation10 + $0xe0] sm:$0xff]
    %v6203 = vld [vmem:[#allocation10 + $0xe8] sm:$0xff]
    %v6204 = vld [vmem:[#allocation10 + $0xf0] sm:$0xff]
    %v6205 = vld [vmem:[#allocation10 + $0xf8] sm:$0xff]
    %v6238 = vunpack.c.l.b16 %v6174
    %v6239 = vunpack.c.h.b16 %v6174
    %v6240 = vunpack.c.l.b16 %v6175
    %v6241 = vunpack.c.h.b16 %v6175
    %v6242 = vunpack.c.l.b16 %v6176
    %v6243 = vunpack.c.h.b16 %v6176
    %v6244 = vunpack.c.l.b16 %v6177
    %v6245 = vunpack.c.h.b16 %v6177
    %v6246 = vunpack.c.l.b16 %v6178
    %v6247 = vunpack.c.h.b16 %v6178
    %v6248 = vunpack.c.l.b16 %v6179
    %v6249 = vunpack.c.h.b16 %v6179
    %v6250 = vunpack.c.l.b16 %v6180
    %v6251 = vunpack.c.h.b16 %v6180
    %v6252 = vunpack.c.l.b16 %v6181
    %v6253 = vunpack.c.h.b16 %v6181
    %v6254 = vunpack.c.l.b16 %v6182
    %v6255 = vunpack.c.h.b16 %v6182
    %v6256 = vunpack.c.l.b16 %v6183
    %v6257 = vunpack.c.h.b16 %v6183
    %v6258 = vunpack.c.l.b16 %v6184
    %v6259 = vunpack.c.h.b16 %v6184
    %v6260 = vunpack.c.l.b16 %v6185
    %v6261 = vunpack.c.h.b16 %v6185
    %v6262 = vunpack.c.l.b16 %v6186
    %v6263 = vunpack.c.h.b16 %v6186
    %v6264 = vunpack.c.l.b16 %v6187
    %v6265 = vunpack.c.h.b16 %v6187
    %v6266 = vunpack.c.l.b16 %v6188
    %v6267 = vunpack.c.h.b16 %v6188
    %v6268 = vunpack.c.l.b16 %v6189
    %v6269 = vunpack.c.h.b16 %v6189
    %v6270 = vunpack.c.l.b16 %v6190
    %v6271 = vunpack.c.h.b16 %v6190
    %v6272 = vunpack.c.l.b16 %v6191
    %v6273 = vunpack.c.h.b16 %v6191
    %v6274 = vunpack.c.l.b16 %v6192
    %v6275 = vunpack.c.h.b16 %v6192
    %v6276 = vunpack.c.l.b16 %v6193
    %v6277 = vunpack.c.h.b16 %v6193
    %v6278 = vunpack.c.l.b16 %v6194
    %v6279 = vunpack.c.h.b16 %v6194
    %v6280 = vunpack.c.l.b16 %v6195
    %v6281 = vunpack.c.h.b16 %v6195
    %v6282 = vunpack.c.l.b16 %v6196
    %v6283 = vunpack.c.h.b16 %v6196
    %v6284 = vunpack.c.l.b16 %v6197
    %v6285 = vunpack.c.h.b16 %v6197
    %v6286 = vunpack.c.l.b16 %v6198
    %v6287 = vunpack.c.h.b16 %v6198
    %v6288 = vunpack.c.l.b16 %v6199
    %v6289 = vunpack.c.h.b16 %v6199
    %v6290 = vunpack.c.l.b16 %v6200
    %v6291 = vunpack.c.h.b16 %v6200
    %v6292 = vunpack.c.l.b16 %v6201
    %v6293 = vunpack.c.h.b16 %v6201
    %v6294 = vunpack.c.l.b16 %v6202
    %v6295 = vunpack.c.h.b16 %v6202
    %v6296 = vunpack.c.l.b16 %v6203
    %v6297 = vunpack.c.h.b16 %v6203
    %v6298 = vunpack.c.l.b16 %v6204
    %v6299 = vunpack.c.h.b16 %v6204
    %v6300 = vunpack.c.l.b16 %v6205
    %v6301 = vunpack.c.h.b16 %v6205
    %v6302 = vpack.c.b16 %v6242, %v6238
    %v6303 = vpack.c.b16 %v6243, %v6239
    %v6304 = vpack.c.b16 %v6244, %v6240
    %v6305 = vpack.c.b16 %v6245, %v6241
    %v6306 = vpack.c.b16 %v6250, %v6246
    %v6307 = vpack.c.b16 %v6251, %v6247
    %v6308 = vpack.c.b16 %v6252, %v6248
    %v6309 = vpack.c.b16 %v6253, %v6249
    %v6310 = vpack.c.b16 %v6258, %v6254
    %v6311 = vpack.c.b16 %v6259, %v6255
    %v6312 = vpack.c.b16 %v6260, %v6256
    %v6313 = vpack.c.b16 %v6261, %v6257
    %v6314 = vpack.c.b16 %v6266, %v6262
    %v6315 = vpack.c.b16 %v6267, %v6263
    %v6316 = vpack.c.b16 %v6268, %v6264
    %v6317 = vpack.c.b16 %v6269, %v6265
    %v6318 = vpack.c.b16 %v6274, %v6270
    %v6319 = vpack.c.b16 %v6275, %v6271
    %v6320 = vpack.c.b16 %v6276, %v6272
    %v6321 = vpack.c.b16 %v6277, %v6273
    %v6322 = vpack.c.b16 %v6282, %v6278
    %v6323 = vpack.c.b16 %v6283, %v6279
    %v6324 = vpack.c.b16 %v6284, %v6280
    %v6325 = vpack.c.b16 %v6285, %v6281
    %v6326 = vpack.c.b16 %v6290, %v6286
    %v6327 = vpack.c.b16 %v6291, %v6287
    %v6328 = vpack.c.b16 %v6292, %v6288
    %v6329 = vpack.c.b16 %v6293, %v6289
    %v6330 = vpack.c.b16 %v6298, %v6294
    %v6331 = vpack.c.b16 %v6299, %v6295
    %v6332 = vpack.c.b16 %v6300, %v6296
    %v6333 = vpack.c.b16 %v6301, %v6297
    %6366 = vmatprep.subr.bf16.mxu0 %v6331
    %6367 = vmatpush1.bf16.msra.mxu0 %v6330
    %6368 = vmatprep.subr.bf16.mxu0 %v6327
    %6369 = vmatpush1.bf16.msra.mxu0 %v6326
    %6370 = vmatprep.subr.bf16.mxu0 %v6323
    %6371 = vmatpush1.bf16.msra.mxu0 %v6322
    %6372 = vmatprep.subr.bf16.mxu0 %v6319
    %6373 = vmatpush1.bf16.msra.mxu0 %v6318
    %6374 = vmatprep.subr.bf16.mxu0 %v6315
    %6375 = vmatpush1.bf16.msra.mxu0 %v6314
    %6376 = vmatprep.subr.bf16.mxu0 %v6311
    %6377 = vmatpush1.bf16.msra.mxu0 %v6310
    %6378 = vmatprep.subr.bf16.mxu0 %v6307
    %6379 = vmatpush1.bf16.msra.mxu0 %v6306
    %6380 = vmatprep.subr.bf16.mxu0 %v6303
    %6381 = vmatpush1.bf16.msra.mxu0 %v6302
    %6382 = vmatprep.subr.bf16.mxu0 0
    %6383 = vmatpush2.bf16.msra.mxu0 0
    %6384 = vmatprep.subr.bf16.mxu0 0
    %6385 = vmatpush2.bf16.msra.mxu0 0
    %6386 = vmatprep.subr.bf16.mxu0 0
    %6387 = vmatpush2.bf16.msra.mxu0 0
    %6388 = vmatprep.subr.bf16.mxu0 0
    %6389 = vmatpush2.bf16.msra.mxu0 0
    %6390 = vmatprep.subr.bf16.mxu0 0
    %6391 = vmatpush2.bf16.msra.mxu0 0
    %6392 = vmatprep.subr.bf16.mxu0 0
    %6393 = vmatpush2.bf16.msra.mxu0 0
    %6394 = vmatprep.subr.bf16.mxu0 0
    %6395 = vmatpush2.bf16.msra.mxu0 0
    %6396 = vmatprep.subr.bf16.mxu0 0
    %6397 = vmatpush2.bf16.msra.mxu0 0
    %6398 = vmatprep.mubr.bf16.mxu0 0
    %6399 = vmatmul.mubr.bf16.gmra.mxu0 %v6167
    %v6400 = vpop.f32.mrf.mxu0
    %v6401 = vadd.f32 0.0, %v6400
    %v6402 = vpop.f32.mrf.mxu0
    %v6403 = vadd.f32 0.0, %v6402
    %v6404 = vpop.f32.mrf.mxu0
    %v6405 = vpop.f32.mrf.mxu0
    %6406 = vdwg.mxu0
    %6407 = vmatprep.subr.bf16.mxu0 %v6333
    %6408 = vmatpush1.bf16.msra.mxu0 %v6332
    %6409 = vmatprep.subr.bf16.mxu0 %v6329
    %6410 = vmatpush1.bf16.msra.mxu0 %v6328
    %6411 = vmatprep.subr.bf16.mxu0 %v6325
    %6412 = vmatpush1.bf16.msra.mxu0 %v6324
    %6413 = vmatprep.subr.bf16.mxu0 %v6321
    %6414 = vmatpush1.bf16.msra.mxu0 %v6320
    %6415 = vmatprep.subr.bf16.mxu0 %v6317
    %6416 = vmatpush1.bf16.msra.mxu0 %v6316
    %6417 = vmatprep.subr.bf16.mxu0 %v6313
    %6418 = vmatpush1.bf16.msra.mxu0 %v6312
    %6419 = vmatprep.subr.bf16.mxu0 %v6309
    %6420 = vmatpush1.bf16.msra.mxu0 %v6308
    %6421 = vmatprep.subr.bf16.mxu0 %v6305
    %6422 = vmatpush1.bf16.msra.mxu0 %v6304
    %6423 = vmatprep.subr.bf16.mxu0 0
    %6424 = vmatpush2.bf16.msra.mxu0 0
    %6425 = vmatprep.subr.bf16.mxu0 0
    %6426 = vmatpush2.bf16.msra.mxu0 0
    %6427 = vmatprep.subr.bf16.mxu0 0
    %6428 = vmatpush2.bf16.msra.mxu0 0
    %6429 = vmatprep.subr.bf16.mxu0 0
    %6430 = vmatpush2.bf16.msra.mxu0 0
    %6431 = vmatprep.subr.bf16.mxu0 0
    %6432 = vmatpush2.bf16.msra.mxu0 0
    %6433 = vmatprep.subr.bf16.mxu0 0
    %6434 = vmatpush2.bf16.msra.mxu0 0
    %6435 = vmatprep.subr.bf16.mxu0 0
    %6436 = vmatpush2.bf16.msra.mxu0 0
    %6437 = vmatprep.subr.bf16.mxu0 0
    %6438 = vmatpush2.bf16.msra.mxu0 0
    %6439 = vmatprep.mubr.bf16.mxu0 0
    %6440 = vmatmul.mubr.bf16.gmra.mxu0 %v6167
    %v6441 = vpop.f32.mrf.mxu0
    %v6442 = vadd.f32 0.0, %v6441
    %v6443 = vpop.f32.mrf.mxu0
    %v6444 = vadd.f32 0.0, %v6443
    %v6445 = vpop.f32.mrf.mxu0
    %v6446 = vpop.f32.mrf.mxu0
    %6447 = vdwg.mxu0
    %v6448 = vadd.f32 %v6170, %v6401
    %v6449 = vadd.f32 %v6171, %v6403
    %v6450 = vadd.f32 %v6172, %v6442
    %v6451 = vadd.f32 %v6173, %v6444
    %v6452 = vxor.u32 %v6448, 2147483648
    %v6453 = vmul.f32 %v6452, 1.442695
    %v6454 = vpow.pop %v6453
    %v6455 = vadd.f32 %v6454, 1.0
    %v6456 = vrcp.pop %v6455
    %v6457 = vmul.f32 1.0, %v6456
    %v6458 = vxor.u32 %v6449, 2147483648
    %v6459 = vmul.f32 %v6458, 1.442695
    %v6460 = vpow.pop %v6459
    %v6461 = vadd.f32 %v6460, 1.0
    %v6462 = vrcp.pop %v6461
    %v6463 = vmul.f32 1.0, %v6462
    %v6464 = vtanh.pop %v6450
    %v6465 = vxor.u32 %v6451, 2147483648
    %v6466 = vmul.f32 %v6465, 1.442695
    %v6467 = vpow.pop %v6466
    %v6468 = vadd.f32 %v6467, 1.0
    %v6469 = vrcp.pop %v6468
    %v6470 = vmul.f32 1.0, %v6469
    %v6471 = vmul.f32 %v6463, %v6164
    %v6472 = vmul.f32 %v6457, %v6464
    %v6473 = vadd.f32 %v6471, %v6472
    %v6474 = vtanh.pop %v6473
    %v6475 = vmul.f32 %v6470, %v6474
    %v6476 = vpack.c.bf16 %v6475, %v6475
    %s6477 = scalar_lea.vmem [#allocation14], 16
    %6478 = vst [vmem:[%s6477] sm:$0xf] %v6476
    %v6479 = vld [vmem:[#allocation4 + $0xa0] sm:$0xff]
    %v6480 = vld [vmem:[#allocation4 + $0xa8] sm:$0xff]
    %v6481 = vld [vmem:[#allocation4 + $0xb0] sm:$0xff]
    %v6482 = vld [vmem:[#allocation4 + $0xb8] sm:$0xff]
    %v6483 = vld [vmem:[#allocation10] sm:$0xff]
    %v6484 = vld [vmem:[#allocation10 + $0x8] sm:$0xff]
    %v6485 = vld [vmem:[#allocation10 + $0x10] sm:$0xff]
    %v6486 = vld [vmem:[#allocation10 + $0x18] sm:$0xff]
    %v6487 = vld [vmem:[#allocation10 + $0x20] sm:$0xff]
    %v6488 = vld [vmem:[#allocation10 + $0x28] sm:$0xff]
    %v6489 = vld [vmem:[#allocation10 + $0x30] sm:$0xff]
    %v6490 = vld [vmem:[#allocation10 + $0x38] sm:$0xff]
    %v6491 = vld [vmem:[#allocation10 + $0x40] sm:$0xff]
    %v6492 = vld [vmem:[#allocation10 + $0x48] sm:$0xff]
    %v6493 = vld [vmem:[#allocation10 + $0x50] sm:$0xff]
    %v6494 = vld [vmem:[#allocation10 + $0x58] sm:$0xff]
    %v6495 = vld [vmem:[#allocation10 + $0x60] sm:$0xff]
    %v6496 = vld [vmem:[#allocation10 + $0x68] sm:$0xff]
    %v6497 = vld [vmem:[#allocation10 + $0x70] sm:$0xff]
    %v6498 = vld [vmem:[#allocation10 + $0x78] sm:$0xff]
    %v6499 = vld [vmem:[#allocation10 + $0x80] sm:$0xff]
    %v6500 = vld [vmem:[#allocation10 + $0x88] sm:$0xff]
    %v6501 = vld [vmem:[#allocation10 + $0x90] sm:$0xff]
    %v6502 = vld [vmem:[#allocation10 + $0x98] sm:$0xff]
    %v6503 = vld [vmem:[#allocation10 + $0xa0] sm:$0xff]
    %v6504 = vld [vmem:[#allocation10 + $0xa8] sm:$0xff]
    %v6505 = vld [vmem:[#allocation10 + $0xb0] sm:$0xff]
    %v6506 = vld [vmem:[#allocation10 + $0xb8] sm:$0xff]
    %v6507 = vld [vmem:[#allocation10 + $0xc0] sm:$0xff]
    %v6508 = vld [vmem:[#allocation10 + $0xc8] sm:$0xff]
    %v6509 = vld [vmem:[#allocation10 + $0xd0] sm:$0xff]
    %v6510 = vld [vmem:[#allocation10 + $0xd8] sm:$0xff]
    %v6511 = vld [vmem:[#allocation10 + $0xe0] sm:$0xff]
    %v6512 = vld [vmem:[#allocation10 + $0xe8] sm:$0xff]
    %v6513 = vld [vmem:[#allocation10 + $0xf0] sm:$0xff]
    %v6514 = vld [vmem:[#allocation10 + $0xf8] sm:$0xff]
    %v6547 = vunpack.c.l.b16 %v6483
    %v6548 = vunpack.c.h.b16 %v6483
    %v6549 = vunpack.c.l.b16 %v6484
    %v6550 = vunpack.c.h.b16 %v6484
    %v6551 = vunpack.c.l.b16 %v6485
    %v6552 = vunpack.c.h.b16 %v6485
    %v6553 = vunpack.c.l.b16 %v6486
    %v6554 = vunpack.c.h.b16 %v6486
    %v6555 = vunpack.c.l.b16 %v6487
    %v6556 = vunpack.c.h.b16 %v6487
    %v6557 = vunpack.c.l.b16 %v6488
    %v6558 = vunpack.c.h.b16 %v6488
    %v6559 = vunpack.c.l.b16 %v6489
    %v6560 = vunpack.c.h.b16 %v6489
    %v6561 = vunpack.c.l.b16 %v6490
    %v6562 = vunpack.c.h.b16 %v6490
    %v6563 = vunpack.c.l.b16 %v6491
    %v6564 = vunpack.c.h.b16 %v6491
    %v6565 = vunpack.c.l.b16 %v6492
    %v6566 = vunpack.c.h.b16 %v6492
    %v6567 = vunpack.c.l.b16 %v6493
    %v6568 = vunpack.c.h.b16 %v6493
    %v6569 = vunpack.c.l.b16 %v6494
    %v6570 = vunpack.c.h.b16 %v6494
    %v6571 = vunpack.c.l.b16 %v6495
    %v6572 = vunpack.c.h.b16 %v6495
    %v6573 = vunpack.c.l.b16 %v6496
    %v6574 = vunpack.c.h.b16 %v6496
    %v6575 = vunpack.c.l.b16 %v6497
    %v6576 = vunpack.c.h.b16 %v6497
    %v6577 = vunpack.c.l.b16 %v6498
    %v6578 = vunpack.c.h.b16 %v6498
    %v6579 = vunpack.c.l.b16 %v6499
    %v6580 = vunpack.c.h.b16 %v6499
    %v6581 = vunpack.c.l.b16 %v6500
    %v6582 = vunpack.c.h.b16 %v6500
    %v6583 = vunpack.c.l.b16 %v6501
    %v6584 = vunpack.c.h.b16 %v6501
    %v6585 = vunpack.c.l.b16 %v6502
    %v6586 = vunpack.c.h.b16 %v6502
    %v6587 = vunpack.c.l.b16 %v6503
    %v6588 = vunpack.c.h.b16 %v6503
    %v6589 = vunpack.c.l.b16 %v6504
    %v6590 = vunpack.c.h.b16 %v6504
    %v6591 = vunpack.c.l.b16 %v6505
    %v6592 = vunpack.c.h.b16 %v6505
    %v6593 = vunpack.c.l.b16 %v6506
    %v6594 = vunpack.c.h.b16 %v6506
    %v6595 = vunpack.c.l.b16 %v6507
    %v6596 = vunpack.c.h.b16 %v6507
    %v6597 = vunpack.c.l.b16 %v6508
    %v6598 = vunpack.c.h.b16 %v6508
    %v6599 = vunpack.c.l.b16 %v6509
    %v6600 = vunpack.c.h.b16 %v6509
    %v6601 = vunpack.c.l.b16 %v6510
    %v6602 = vunpack.c.h.b16 %v6510
    %v6603 = vunpack.c.l.b16 %v6511
    %v6604 = vunpack.c.h.b16 %v6511
    %v6605 = vunpack.c.l.b16 %v6512
    %v6606 = vunpack.c.h.b16 %v6512
    %v6607 = vunpack.c.l.b16 %v6513
    %v6608 = vunpack.c.h.b16 %v6513
    %v6609 = vunpack.c.l.b16 %v6514
    %v6610 = vunpack.c.h.b16 %v6514
    %v6611 = vpack.c.b16 %v6551, %v6547
    %v6612 = vpack.c.b16 %v6552, %v6548
    %v6613 = vpack.c.b16 %v6553, %v6549
    %v6614 = vpack.c.b16 %v6554, %v6550
    %v6615 = vpack.c.b16 %v6559, %v6555
    %v6616 = vpack.c.b16 %v6560, %v6556
    %v6617 = vpack.c.b16 %v6561, %v6557
    %v6618 = vpack.c.b16 %v6562, %v6558
    %v6619 = vpack.c.b16 %v6567, %v6563
    %v6620 = vpack.c.b16 %v6568, %v6564
    %v6621 = vpack.c.b16 %v6569, %v6565
    %v6622 = vpack.c.b16 %v6570, %v6566
    %v6623 = vpack.c.b16 %v6575, %v6571
    %v6624 = vpack.c.b16 %v6576, %v6572
    %v6625 = vpack.c.b16 %v6577, %v6573
    %v6626 = vpack.c.b16 %v6578, %v6574
    %v6627 = vpack.c.b16 %v6583, %v6579
    %v6628 = vpack.c.b16 %v6584, %v6580
    %v6629 = vpack.c.b16 %v6585, %v6581
    %v6630 = vpack.c.b16 %v6586, %v6582
    %v6631 = vpack.c.b16 %v6591, %v6587
    %v6632 = vpack.c.b16 %v6592, %v6588
    %v6633 = vpack.c.b16 %v6593, %v6589
    %v6634 = vpack.c.b16 %v6594, %v6590
    %v6635 = vpack.c.b16 %v6599, %v6595
    %v6636 = vpack.c.b16 %v6600, %v6596
    %v6637 = vpack.c.b16 %v6601, %v6597
    %v6638 = vpack.c.b16 %v6602, %v6598
    %v6639 = vpack.c.b16 %v6607, %v6603
    %v6640 = vpack.c.b16 %v6608, %v6604
    %v6641 = vpack.c.b16 %v6609, %v6605
    %v6642 = vpack.c.b16 %v6610, %v6606
    %6675 = vmatprep.subr.bf16.mxu0 %v6640
    %6676 = vmatpush1.bf16.msra.mxu0 %v6639
    %6677 = vmatprep.subr.bf16.mxu0 %v6636
    %6678 = vmatpush1.bf16.msra.mxu0 %v6635
    %6679 = vmatprep.subr.bf16.mxu0 %v6632
    %6680 = vmatpush1.bf16.msra.mxu0 %v6631
    %6681 = vmatprep.subr.bf16.mxu0 %v6628
    %6682 = vmatpush1.bf16.msra.mxu0 %v6627
    %6683 = vmatprep.subr.bf16.mxu0 %v6624
    %6684 = vmatpush1.bf16.msra.mxu0 %v6623
    %6685 = vmatprep.subr.bf16.mxu0 %v6620
    %6686 = vmatpush1.bf16.msra.mxu0 %v6619
    %6687 = vmatprep.subr.bf16.mxu0 %v6616
    %6688 = vmatpush1.bf16.msra.mxu0 %v6615
    %6689 = vmatprep.subr.bf16.mxu0 %v6612
    %6690 = vmatpush1.bf16.msra.mxu0 %v6611
    %6691 = vmatprep.subr.bf16.mxu0 0
    %6692 = vmatpush2.bf16.msra.mxu0 0
    %6693 = vmatprep.subr.bf16.mxu0 0
    %6694 = vmatpush2.bf16.msra.mxu0 0
    %6695 = vmatprep.subr.bf16.mxu0 0
    %6696 = vmatpush2.bf16.msra.mxu0 0
    %6697 = vmatprep.subr.bf16.mxu0 0
    %6698 = vmatpush2.bf16.msra.mxu0 0
    %6699 = vmatprep.subr.bf16.mxu0 0
    %6700 = vmatpush2.bf16.msra.mxu0 0
    %6701 = vmatprep.subr.bf16.mxu0 0
    %6702 = vmatpush2.bf16.msra.mxu0 0
    %6703 = vmatprep.subr.bf16.mxu0 0
    %6704 = vmatpush2.bf16.msra.mxu0 0
    %6705 = vmatprep.subr.bf16.mxu0 0
    %6706 = vmatpush2.bf16.msra.mxu0 0
    %6707 = vmatprep.mubr.bf16.mxu0 0
    %6708 = vmatmul.mubr.bf16.gmra.mxu0 %v6476
    %v6709 = vpop.f32.mrf.mxu0
    %v6710 = vadd.f32 0.0, %v6709
    %v6711 = vpop.f32.mrf.mxu0
    %v6712 = vadd.f32 0.0, %v6711
    %v6713 = vpop.f32.mrf.mxu0
    %v6714 = vpop.f32.mrf.mxu0
    %6715 = vdwg.mxu0
    %6716 = vmatprep.subr.bf16.mxu0 %v6642
    %6717 = vmatpush1.bf16.msra.mxu0 %v6641
    %6718 = vmatprep.subr.bf16.mxu0 %v6638
    %6719 = vmatpush1.bf16.msra.mxu0 %v6637
    %6720 = vmatprep.subr.bf16.mxu0 %v6634
    %6721 = vmatpush1.bf16.msra.mxu0 %v6633
    %6722 = vmatprep.subr.bf16.mxu0 %v6630
    %6723 = vmatpush1.bf16.msra.mxu0 %v6629
    %6724 = vmatprep.subr.bf16.mxu0 %v6626
    %6725 = vmatpush1.bf16.msra.mxu0 %v6625
    %6726 = vmatprep.subr.bf16.mxu0 %v6622
    %6727 = vmatpush1.bf16.msra.mxu0 %v6621
    %6728 = vmatprep.subr.bf16.mxu0 %v6618
    %6729 = vmatpush1.bf16.msra.mxu0 %v6617
    %6730 = vmatprep.subr.bf16.mxu0 %v6614
    %6731 = vmatpush1.bf16.msra.mxu0 %v6613
    %6732 = vmatprep.subr.bf16.mxu0 0
    %6733 = vmatpush2.bf16.msra.mxu0 0
    %6734 = vmatprep.subr.bf16.mxu0 0
    %6735 = vmatpush2.bf16.msra.mxu0 0
    %6736 = vmatprep.subr.bf16.mxu0 0
    %6737 = vmatpush2.bf16.msra.mxu0 0
    %6738 = vmatprep.subr.bf16.mxu0 0
    %6739 = vmatpush2.bf16.msra.mxu0 0
    %6740 = vmatprep.subr.bf16.mxu0 0
    %6741 = vmatpush2.bf16.msra.mxu0 0
    %6742 = vmatprep.subr.bf16.mxu0 0
    %6743 = vmatpush2.bf16.msra.mxu0 0
    %6744 = vmatprep.subr.bf16.mxu0 0
    %6745 = vmatpush2.bf16.msra.mxu0 0
    %6746 = vmatprep.subr.bf16.mxu0 0
    %6747 = vmatpush2.bf16.msra.mxu0 0
    %6748 = vmatprep.mubr.bf16.mxu0 0
    %6749 = vmatmul.mubr.bf16.gmra.mxu0 %v6476
    %v6750 = vpop.f32.mrf.mxu0
    %v6751 = vadd.f32 0.0, %v6750
    %v6752 = vpop.f32.mrf.mxu0
    %v6753 = vadd.f32 0.0, %v6752
    %v6754 = vpop.f32.mrf.mxu0
    %v6755 = vpop.f32.mrf.mxu0
    %6756 = vdwg.mxu0
    %v6757 = vadd.f32 %v6479, %v6710
    %v6758 = vadd.f32 %v6480, %v6712
    %v6759 = vadd.f32 %v6481, %v6751
    %v6760 = vadd.f32 %v6482, %v6753
    %v6761 = vxor.u32 %v6757, 2147483648
    %v6762 = vmul.f32 %v6761, 1.442695
    %v6763 = vpow.pop %v6762
    %v6764 = vadd.f32 %v6763, 1.0
    %v6765 = vrcp.pop %v6764
    %v6766 = vmul.f32 1.0, %v6765
    %v6767 = vxor.u32 %v6758, 2147483648
    %v6768 = vmul.f32 %v6767, 1.442695
    %v6769 = vpow.pop %v6768
    %v6770 = vadd.f32 %v6769, 1.0
    %v6771 = vrcp.pop %v6770
    %v6772 = vmul.f32 1.0, %v6771
    %v6773 = vtanh.pop %v6759
    %v6774 = vxor.u32 %v6760, 2147483648
    %v6775 = vmul.f32 %v6774, 1.442695
    %v6776 = vpow.pop %v6775
    %v6777 = vadd.f32 %v6776, 1.0
    %v6778 = vrcp.pop %v6777
    %v6779 = vmul.f32 1.0, %v6778
    %v6780 = vmul.f32 %v6772, %v6473
    %v6781 = vmul.f32 %v6766, %v6773
    %v6782 = vadd.f32 %v6780, %v6781
    %v6783 = vtanh.pop %v6782
    %v6784 = vmul.f32 %v6779, %v6783
    %v6785 = vpack.c.bf16 %v6784, %v6784
    %s6786 = scalar_lea.vmem [#allocation14], 20
    %6787 = vst [vmem:[%s6786] sm:$0xf] %v6785
    %v6788 = vld [vmem:[#allocation4 + $0xc0] sm:$0xff]
    %v6789 = vld [vmem:[#allocation4 + $0xc8] sm:$0xff]
    %v6790 = vld [vmem:[#allocation4 + $0xd0] sm:$0xff]
    %v6791 = vld [vmem:[#allocation4 + $0xd8] sm:$0xff]
    %v6792 = vld [vmem:[#allocation10] sm:$0xff]
    %v6793 = vld [vmem:[#allocation10 + $0x8] sm:$0xff]
    %v6794 = vld [vmem:[#allocation10 + $0x10] sm:$0xff]
    %v6795 = vld [vmem:[#allocation10 + $0x18] sm:$0xff]
    %v6796 = vld [vmem:[#allocation10 + $0x20] sm:$0xff]
    %v6797 = vld [vmem:[#allocation10 + $0x28] sm:$0xff]
    %v6798 = vld [vmem:[#allocation10 + $0x30] sm:$0xff]
    %v6799 = vld [vmem:[#allocation10 + $0x38] sm:$0xff]
    %v6800 = vld [vmem:[#allocation10 + $0x40] sm:$0xff]
    %v6801 = vld [vmem:[#allocation10 + $0x48] sm:$0xff]
    %v6802 = vld [vmem:[#allocation10 + $0x50] sm:$0xff]
    %v6803 = vld [vmem:[#allocation10 + $0x58] sm:$0xff]
    %v6804 = vld [vmem:[#allocation10 + $0x60] sm:$0xff]
    %v6805 = vld [vmem:[#allocation10 + $0x68] sm:$0xff]
    %v6806 = vld [vmem:[#allocation10 + $0x70] sm:$0xff]
    %v6807 = vld [vmem:[#allocation10 + $0x78] sm:$0xff]
    %v6808 = vld [vmem:[#allocation10 + $0x80] sm:$0xff]
    %v6809 = vld [vmem:[#allocation10 + $0x88] sm:$0xff]
    %v6810 = vld [vmem:[#allocation10 + $0x90] sm:$0xff]
    %v6811 = vld [vmem:[#allocation10 + $0x98] sm:$0xff]
    %v6812 = vld [vmem:[#allocation10 + $0xa0] sm:$0xff]
    %v6813 = vld [vmem:[#allocation10 + $0xa8] sm:$0xff]
    %v6814 = vld [vmem:[#allocation10 + $0xb0] sm:$0xff]
    %v6815 = vld [vmem:[#allocation10 + $0xb8] sm:$0xff]
    %v6816 = vld [vmem:[#allocation10 + $0xc0] sm:$0xff]
    %v6817 = vld [vmem:[#allocation10 + $0xc8] sm:$0xff]
    %v6818 = vld [vmem:[#allocation10 + $0xd0] sm:$0xff]
    %v6819 = vld [vmem:[#allocation10 + $0xd8] sm:$0xff]
    %v6820 = vld [vmem:[#allocation10 + $0xe0] sm:$0xff]
    %v6821 = vld [vmem:[#allocation10 + $0xe8] sm:$0xff]
    %v6822 = vld [vmem:[#allocation10 + $0xf0] sm:$0xff]
    %v6823 = vld [vmem:[#allocation10 + $0xf8] sm:$0xff]
    %v6856 = vunpack.c.l.b16 %v6792
    %v6857 = vunpack.c.h.b16 %v6792
    %v6858 = vunpack.c.l.b16 %v6793
    %v6859 = vunpack.c.h.b16 %v6793
    %v6860 = vunpack.c.l.b16 %v6794
    %v6861 = vunpack.c.h.b16 %v6794
    %v6862 = vunpack.c.l.b16 %v6795
    %v6863 = vunpack.c.h.b16 %v6795
    %v6864 = vunpack.c.l.b16 %v6796
    %v6865 = vunpack.c.h.b16 %v6796
    %v6866 = vunpack.c.l.b16 %v6797
    %v6867 = vunpack.c.h.b16 %v6797
    %v6868 = vunpack.c.l.b16 %v6798
    %v6869 = vunpack.c.h.b16 %v6798
    %v6870 = vunpack.c.l.b16 %v6799
    %v6871 = vunpack.c.h.b16 %v6799
    %v6872 = vunpack.c.l.b16 %v6800
    %v6873 = vunpack.c.h.b16 %v6800
    %v6874 = vunpack.c.l.b16 %v6801
    %v6875 = vunpack.c.h.b16 %v6801
    %v6876 = vunpack.c.l.b16 %v6802
    %v6877 = vunpack.c.h.b16 %v6802
    %v6878 = vunpack.c.l.b16 %v6803
    %v6879 = vunpack.c.h.b16 %v6803
    %v6880 = vunpack.c.l.b16 %v6804
    %v6881 = vunpack.c.h.b16 %v6804
    %v6882 = vunpack.c.l.b16 %v6805
    %v6883 = vunpack.c.h.b16 %v6805
    %v6884 = vunpack.c.l.b16 %v6806
    %v6885 = vunpack.c.h.b16 %v6806
    %v6886 = vunpack.c.l.b16 %v6807
    %v6887 = vunpack.c.h.b16 %v6807
    %v6888 = vunpack.c.l.b16 %v6808
    %v6889 = vunpack.c.h.b16 %v6808
    %v6890 = vunpack.c.l.b16 %v6809
    %v6891 = vunpack.c.h.b16 %v6809
    %v6892 = vunpack.c.l.b16 %v6810
    %v6893 = vunpack.c.h.b16 %v6810
    %v6894 = vunpack.c.l.b16 %v6811
    %v6895 = vunpack.c.h.b16 %v6811
    %v6896 = vunpack.c.l.b16 %v6812
    %v6897 = vunpack.c.h.b16 %v6812
    %v6898 = vunpack.c.l.b16 %v6813
    %v6899 = vunpack.c.h.b16 %v6813
    %v6900 = vunpack.c.l.b16 %v6814
    %v6901 = vunpack.c.h.b16 %v6814
    %v6902 = vunpack.c.l.b16 %v6815
    %v6903 = vunpack.c.h.b16 %v6815
    %v6904 = vunpack.c.l.b16 %v6816
    %v6905 = vunpack.c.h.b16 %v6816
    %v6906 = vunpack.c.l.b16 %v6817
    %v6907 = vunpack.c.h.b16 %v6817
    %v6908 = vunpack.c.l.b16 %v6818
    %v6909 = vunpack.c.h.b16 %v6818
    %v6910 = vunpack.c.l.b16 %v6819
    %v6911 = vunpack.c.h.b16 %v6819
    %v6912 = vunpack.c.l.b16 %v6820
    %v6913 = vunpack.c.h.b16 %v6820
    %v6914 = vunpack.c.l.b16 %v6821
    %v6915 = vunpack.c.h.b16 %v6821
    %v6916 = vunpack.c.l.b16 %v6822
    %v6917 = vunpack.c.h.b16 %v6822
    %v6918 = vunpack.c.l.b16 %v6823
    %v6919 = vunpack.c.h.b16 %v6823
    %v6920 = vpack.c.b16 %v6860, %v6856
    %v6921 = vpack.c.b16 %v6861, %v6857
    %v6922 = vpack.c.b16 %v6862, %v6858
    %v6923 = vpack.c.b16 %v6863, %v6859
    %v6924 = vpack.c.b16 %v6868, %v6864
    %v6925 = vpack.c.b16 %v6869, %v6865
    %v6926 = vpack.c.b16 %v6870, %v6866
    %v6927 = vpack.c.b16 %v6871, %v6867
    %v6928 = vpack.c.b16 %v6876, %v6872
    %v6929 = vpack.c.b16 %v6877, %v6873
    %v6930 = vpack.c.b16 %v6878, %v6874
    %v6931 = vpack.c.b16 %v6879, %v6875
    %v6932 = vpack.c.b16 %v6884, %v6880
    %v6933 = vpack.c.b16 %v6885, %v6881
    %v6934 = vpack.c.b16 %v6886, %v6882
    %v6935 = vpack.c.b16 %v6887, %v6883
    %v6936 = vpack.c.b16 %v6892, %v6888
    %v6937 = vpack.c.b16 %v6893, %v6889
    %v6938 = vpack.c.b16 %v6894, %v6890
    %v6939 = vpack.c.b16 %v6895, %v6891
    %v6940 = vpack.c.b16 %v6900, %v6896
    %v6941 = vpack.c.b16 %v6901, %v6897
    %v6942 = vpack.c.b16 %v6902, %v6898
    %v6943 = vpack.c.b16 %v6903, %v6899
    %v6944 = vpack.c.b16 %v6908, %v6904
    %v6945 = vpack.c.b16 %v6909, %v6905
    %v6946 = vpack.c.b16 %v6910, %v6906
    %v6947 = vpack.c.b16 %v6911, %v6907
    %v6948 = vpack.c.b16 %v6916, %v6912
    %v6949 = vpack.c.b16 %v6917, %v6913
    %v6950 = vpack.c.b16 %v6918, %v6914
    %v6951 = vpack.c.b16 %v6919, %v6915
    %6984 = vmatprep.subr.bf16.mxu0 %v6949
    %6985 = vmatpush1.bf16.msra.mxu0 %v6948
    %6986 = vmatprep.subr.bf16.mxu0 %v6945
    %6987 = vmatpush1.bf16.msra.mxu0 %v6944
    %6988 = vmatprep.subr.bf16.mxu0 %v6941
    %6989 = vmatpush1.bf16.msra.mxu0 %v6940
    %6990 = vmatprep.subr.bf16.mxu0 %v6937
    %6991 = vmatpush1.bf16.msra.mxu0 %v6936
    %6992 = vmatprep.subr.bf16.mxu0 %v6933
    %6993 = vmatpush1.bf16.msra.mxu0 %v6932
    %6994 = vmatprep.subr.bf16.mxu0 %v6929
    %6995 = vmatpush1.bf16.msra.mxu0 %v6928
    %6996 = vmatprep.subr.bf16.mxu0 %v6925
    %6997 = vmatpush1.bf16.msra.mxu0 %v6924
    %6998 = vmatprep.subr.bf16.mxu0 %v6921
    %6999 = vmatpush1.bf16.msra.mxu0 %v6920
    %7000 = vmatprep.subr.bf16.mxu0 0
    %7001 = vmatpush2.bf16.msra.mxu0 0
    %7002 = vmatprep.subr.bf16.mxu0 0
    %7003 = vmatpush2.bf16.msra.mxu0 0
    %7004 = vmatprep.subr.bf16.mxu0 0
    %7005 = vmatpush2.bf16.msra.mxu0 0
    %7006 = vmatprep.subr.bf16.mxu0 0
    %7007 = vmatpush2.bf16.msra.mxu0 0
    %7008 = vmatprep.subr.bf16.mxu0 0
    %7009 = vmatpush2.bf16.msra.mxu0 0
    %7010 = vmatprep.subr.bf16.mxu0 0
    %7011 = vmatpush2.bf16.msra.mxu0 0
    %7012 = vmatprep.subr.bf16.mxu0 0
    %7013 = vmatpush2.bf16.msra.mxu0 0
    %7014 = vmatprep.subr.bf16.mxu0 0
    %7015 = vmatpush2.bf16.msra.mxu0 0
    %7016 = vmatprep.mubr.bf16.mxu0 0
    %7017 = vmatmul.mubr.bf16.gmra.mxu0 %v6785
    %v7018 = vpop.f32.mrf.mxu0
    %v7019 = vadd.f32 0.0, %v7018
    %v7020 = vpop.f32.mrf.mxu0
    %v7021 = vadd.f32 0.0, %v7020
    %v7022 = vpop.f32.mrf.mxu0
    %v7023 = vpop.f32.mrf.mxu0
    %7024 = vdwg.mxu0
    %7025 = vmatprep.subr.bf16.mxu0 %v6951
    %7026 = vmatpush1.bf16.msra.mxu0 %v6950
    %7027 = vmatprep.subr.bf16.mxu0 %v6947
    %7028 = vmatpush1.bf16.msra.mxu0 %v6946
    %7029 = vmatprep.subr.bf16.mxu0 %v6943
    %7030 = vmatpush1.bf16.msra.mxu0 %v6942
    %7031 = vmatprep.subr.bf16.mxu0 %v6939
    %7032 = vmatpush1.bf16.msra.mxu0 %v6938
    %7033 = vmatprep.subr.bf16.mxu0 %v6935
    %7034 = vmatpush1.bf16.msra.mxu0 %v6934
    %7035 = vmatprep.subr.bf16.mxu0 %v6931
    %7036 = vmatpush1.bf16.msra.mxu0 %v6930
    %7037 = vmatprep.subr.bf16.mxu0 %v6927
    %7038 = vmatpush1.bf16.msra.mxu0 %v6926
    %7039 = vmatprep.subr.bf16.mxu0 %v6923
    %7040 = vmatpush1.bf16.msra.mxu0 %v6922
    %7041 = vmatprep.subr.bf16.mxu0 0
    %7042 = vmatpush2.bf16.msra.mxu0 0
    %7043 = vmatprep.subr.bf16.mxu0 0
    %7044 = vmatpush2.bf16.msra.mxu0 0
    %7045 = vmatprep.subr.bf16.mxu0 0
    %7046 = vmatpush2.bf16.msra.mxu0 0
    %7047 = vmatprep.subr.bf16.mxu0 0
    %7048 = vmatpush2.bf16.msra.mxu0 0
    %7049 = vmatprep.subr.bf16.mxu0 0
    %7050 = vmatpush2.bf16.msra.mxu0 0
    %7051 = vmatprep.subr.bf16.mxu0 0
    %7052 = vmatpush2.bf16.msra.mxu0 0
    %7053 = vmatprep.subr.bf16.mxu0 0
    %7054 = vmatpush2.bf16.msra.mxu0 0
    %7055 = vmatprep.subr.bf16.mxu0 0
    %7056 = vmatpush2.bf16.msra.mxu0 0
    %7057 = vmatprep.mubr.bf16.mxu0 0
    %7058 = vmatmul.mubr.bf16.gmra.mxu0 %v6785
    %v7059 = vpop.f32.mrf.mxu0
    %v7060 = vadd.f32 0.0, %v7059
    %v7061 = vpop.f32.mrf.mxu0
    %v7062 = vadd.f32 0.0, %v7061
    %v7063 = vpop.f32.mrf.mxu0
    %v7064 = vpop.f32.mrf.mxu0
    %7065 = vdwg.mxu0
    %v7066 = vadd.f32 %v6788, %v7019
    %v7067 = vadd.f32 %v6789, %v7021
    %v7068 = vadd.f32 %v6790, %v7060
    %v7069 = vadd.f32 %v6791, %v7062
    %v7070 = vxor.u32 %v7066, 2147483648
    %v7071 = vmul.f32 %v7070, 1.442695
    %v7072 = vpow.pop %v7071
    %v7073 = vadd.f32 %v7072, 1.0
    %v7074 = vrcp.pop %v7073
    %v7075 = vmul.f32 1.0, %v7074
    %v7076 = vxor.u32 %v7067, 2147483648
    %v7077 = vmul.f32 %v7076, 1.442695
    %v7078 = vpow.pop %v7077
    %v7079 = vadd.f32 %v7078, 1.0
    %v7080 = vrcp.pop %v7079
    %v7081 = vmul.f32 1.0, %v7080
    %v7082 = vtanh.pop %v7068
    %v7083 = vxor.u32 %v7069, 2147483648
    %v7084 = vmul.f32 %v7083, 1.442695
    %v7085 = vpow.pop %v7084
    %v7086 = vadd.f32 %v7085, 1.0
    %v7087 = vrcp.pop %v7086
    %v7088 = vmul.f32 1.0, %v7087
    %v7089 = vmul.f32 %v7081, %v6782
    %v7090 = vmul.f32 %v7075, %v7082
    %v7091 = vadd.f32 %v7089, %v7090
    %v7092 = vtanh.pop %v7091
    %v7093 = vmul.f32 %v7088, %v7092
    %v7094 = vpack.c.bf16 %v7093, %v7093
    %s7095 = scalar_lea.vmem [#allocation14], 24
    %7096 = vst [vmem:[%s7095] sm:$0xf] %v7094
    %v7097 = vld [vmem:[#allocation4 + $0xe0] sm:$0xff]
    %v7098 = vld [vmem:[#allocation4 + $0xe8] sm:$0xff]
    %v7099 = vld [vmem:[#allocation4 + $0xf0] sm:$0xff]
    %v7100 = vld [vmem:[#allocation4 + $0xf8] sm:$0xff]
    %v7101 = vld [vmem:[#allocation10] sm:$0xff]
    %v7102 = vld [vmem:[#allocation10 + $0x8] sm:$0xff]
    %v7103 = vld [vmem:[#allocation10 + $0x10] sm:$0xff]
    %v7104 = vld [vmem:[#allocation10 + $0x18] sm:$0xff]
    %v7105 = vld [vmem:[#allocation10 + $0x20] sm:$0xff]
    %v7106 = vld [vmem:[#allocation10 + $0x28] sm:$0xff]
    %v7107 = vld [vmem:[#allocation10 + $0x30] sm:$0xff]
    %v7108 = vld [vmem:[#allocation10 + $0x38] sm:$0xff]
    %v7109 = vld [vmem:[#allocation10 + $0x40] sm:$0xff]
    %v7110 = vld [vmem:[#allocation10 + $0x48] sm:$0xff]
    %v7111 = vld [vmem:[#allocation10 + $0x50] sm:$0xff]
    %v7112 = vld [vmem:[#allocation10 + $0x58] sm:$0xff]
    %v7113 = vld [vmem:[#allocation10 + $0x60] sm:$0xff]
    %v7114 = vld [vmem:[#allocation10 + $0x68] sm:$0xff]
    %v7115 = vld [vmem:[#allocation10 + $0x70] sm:$0xff]
    %v7116 = vld [vmem:[#allocation10 + $0x78] sm:$0xff]
    %v7117 = vld [vmem:[#allocation10 + $0x80] sm:$0xff]
    %v7118 = vld [vmem:[#allocation10 + $0x88] sm:$0xff]
    %v7119 = vld [vmem:[#allocation10 + $0x90] sm:$0xff]
    %v7120 = vld [vmem:[#allocation10 + $0x98] sm:$0xff]
    %v7121 = vld [vmem:[#allocation10 + $0xa0] sm:$0xff]
    %v7122 = vld [vmem:[#allocation10 + $0xa8] sm:$0xff]
    %v7123 = vld [vmem:[#allocation10 + $0xb0] sm:$0xff]
    %v7124 = vld [vmem:[#allocation10 + $0xb8] sm:$0xff]
    %v7125 = vld [vmem:[#allocation10 + $0xc0] sm:$0xff]
    %v7126 = vld [vmem:[#allocation10 + $0xc8] sm:$0xff]
    %v7127 = vld [vmem:[#allocation10 + $0xd0] sm:$0xff]
    %v7128 = vld [vmem:[#allocation10 + $0xd8] sm:$0xff]
    %v7129 = vld [vmem:[#allocation10 + $0xe0] sm:$0xff]
    %v7130 = vld [vmem:[#allocation10 + $0xe8] sm:$0xff]
    %v7131 = vld [vmem:[#allocation10 + $0xf0] sm:$0xff]
    %v7132 = vld [vmem:[#allocation10 + $0xf8] sm:$0xff]
    %v7165 = vunpack.c.l.b16 %v7101
    %v7166 = vunpack.c.h.b16 %v7101
    %v7167 = vunpack.c.l.b16 %v7102
    %v7168 = vunpack.c.h.b16 %v7102
    %v7169 = vunpack.c.l.b16 %v7103
    %v7170 = vunpack.c.h.b16 %v7103
    %v7171 = vunpack.c.l.b16 %v7104
    %v7172 = vunpack.c.h.b16 %v7104
    %v7173 = vunpack.c.l.b16 %v7105
    %v7174 = vunpack.c.h.b16 %v7105
    %v7175 = vunpack.c.l.b16 %v7106
    %v7176 = vunpack.c.h.b16 %v7106
    %v7177 = vunpack.c.l.b16 %v7107
    %v7178 = vunpack.c.h.b16 %v7107
    %v7179 = vunpack.c.l.b16 %v7108
    %v7180 = vunpack.c.h.b16 %v7108
    %v7181 = vunpack.c.l.b16 %v7109
    %v7182 = vunpack.c.h.b16 %v7109
    %v7183 = vunpack.c.l.b16 %v7110
    %v7184 = vunpack.c.h.b16 %v7110
    %v7185 = vunpack.c.l.b16 %v7111
    %v7186 = vunpack.c.h.b16 %v7111
    %v7187 = vunpack.c.l.b16 %v7112
    %v7188 = vunpack.c.h.b16 %v7112
    %v7189 = vunpack.c.l.b16 %v7113
    %v7190 = vunpack.c.h.b16 %v7113
    %v7191 = vunpack.c.l.b16 %v7114
    %v7192 = vunpack.c.h.b16 %v7114
    %v7193 = vunpack.c.l.b16 %v7115
    %v7194 = vunpack.c.h.b16 %v7115
    %v7195 = vunpack.c.l.b16 %v7116
    %v7196 = vunpack.c.h.b16 %v7116
    %v7197 = vunpack.c.l.b16 %v7117
    %v7198 = vunpack.c.h.b16 %v7117
    %v7199 = vunpack.c.l.b16 %v7118
    %v7200 = vunpack.c.h.b16 %v7118
    %v7201 = vunpack.c.l.b16 %v7119
    %v7202 = vunpack.c.h.b16 %v7119
    %v7203 = vunpack.c.l.b16 %v7120
    %v7204 = vunpack.c.h.b16 %v7120
    %v7205 = vunpack.c.l.b16 %v7121
    %v7206 = vunpack.c.h.b16 %v7121
    %v7207 = vunpack.c.l.b16 %v7122
    %v7208 = vunpack.c.h.b16 %v7122
    %v7209 = vunpack.c.l.b16 %v7123
    %v7210 = vunpack.c.h.b16 %v7123
    %v7211 = vunpack.c.l.b16 %v7124
    %v7212 = vunpack.c.h.b16 %v7124
    %v7213 = vunpack.c.l.b16 %v7125
    %v7214 = vunpack.c.h.b16 %v7125
    %v7215 = vunpack.c.l.b16 %v7126
    %v7216 = vunpack.c.h.b16 %v7126
    %v7217 = vunpack.c.l.b16 %v7127
    %v7218 = vunpack.c.h.b16 %v7127
    %v7219 = vunpack.c.l.b16 %v7128
    %v7220 = vunpack.c.h.b16 %v7128
    %v7221 = vunpack.c.l.b16 %v7129
    %v7222 = vunpack.c.h.b16 %v7129
    %v7223 = vunpack.c.l.b16 %v7130
    %v7224 = vunpack.c.h.b16 %v7130
    %v7225 = vunpack.c.l.b16 %v7131
    %v7226 = vunpack.c.h.b16 %v7131
    %v7227 = vunpack.c.l.b16 %v7132
    %v7228 = vunpack.c.h.b16 %v7132
    %v7229 = vpack.c.b16 %v7169, %v7165
    %v7230 = vpack.c.b16 %v7170, %v7166
    %v7231 = vpack.c.b16 %v7171, %v7167
    %v7232 = vpack.c.b16 %v7172, %v7168
    %v7233 = vpack.c.b16 %v7177, %v7173
    %v7234 = vpack.c.b16 %v7178, %v7174
    %v7235 = vpack.c.b16 %v7179, %v7175
    %v7236 = vpack.c.b16 %v7180, %v7176
    %v7237 = vpack.c.b16 %v7185, %v7181
    %v7238 = vpack.c.b16 %v7186, %v7182
    %v7239 = vpack.c.b16 %v7187, %v7183
    %v7240 = vpack.c.b16 %v7188, %v7184
    %v7241 = vpack.c.b16 %v7193, %v7189
    %v7242 = vpack.c.b16 %v7194, %v7190
    %v7243 = vpack.c.b16 %v7195, %v7191
    %v7244 = vpack.c.b16 %v7196, %v7192
    %v7245 = vpack.c.b16 %v7201, %v7197
    %v7246 = vpack.c.b16 %v7202, %v7198
    %v7247 = vpack.c.b16 %v7203, %v7199
    %v7248 = vpack.c.b16 %v7204, %v7200
    %v7249 = vpack.c.b16 %v7209, %v7205
    %v7250 = vpack.c.b16 %v7210, %v7206
    %v7251 = vpack.c.b16 %v7211, %v7207
    %v7252 = vpack.c.b16 %v7212, %v7208
    %v7253 = vpack.c.b16 %v7217, %v7213
    %v7254 = vpack.c.b16 %v7218, %v7214
    %v7255 = vpack.c.b16 %v7219, %v7215
    %v7256 = vpack.c.b16 %v7220, %v7216
    %v7257 = vpack.c.b16 %v7225, %v7221
    %v7258 = vpack.c.b16 %v7226, %v7222
    %v7259 = vpack.c.b16 %v7227, %v7223
    %v7260 = vpack.c.b16 %v7228, %v7224
    %7293 = vmatprep.subr.bf16.mxu0 %v7258
    %7294 = vmatpush1.bf16.msra.mxu0 %v7257
    %7295 = vmatprep.subr.bf16.mxu0 %v7254
    %7296 = vmatpush1.bf16.msra.mxu0 %v7253
    %7297 = vmatprep.subr.bf16.mxu0 %v7250
    %7298 = vmatpush1.bf16.msra.mxu0 %v7249
    %7299 = vmatprep.subr.bf16.mxu0 %v7246
    %7300 = vmatpush1.bf16.msra.mxu0 %v7245
    %7301 = vmatprep.subr.bf16.mxu0 %v7242
    %7302 = vmatpush1.bf16.msra.mxu0 %v7241
    %7303 = vmatprep.subr.bf16.mxu0 %v7238
    %7304 = vmatpush1.bf16.msra.mxu0 %v7237
    %7305 = vmatprep.subr.bf16.mxu0 %v7234
    %7306 = vmatpush1.bf16.msra.mxu0 %v7233
    %7307 = vmatprep.subr.bf16.mxu0 %v7230
    %7308 = vmatpush1.bf16.msra.mxu0 %v7229
    %7309 = vmatprep.subr.bf16.mxu0 0
    %7310 = vmatpush2.bf16.msra.mxu0 0
    %7311 = vmatprep.subr.bf16.mxu0 0
    %7312 = vmatpush2.bf16.msra.mxu0 0
    %7313 = vmatprep.subr.bf16.mxu0 0
    %7314 = vmatpush2.bf16.msra.mxu0 0
    %7315 = vmatprep.subr.bf16.mxu0 0
    %7316 = vmatpush2.bf16.msra.mxu0 0
    %7317 = vmatprep.subr.bf16.mxu0 0
    %7318 = vmatpush2.bf16.msra.mxu0 0
    %7319 = vmatprep.subr.bf16.mxu0 0
    %7320 = vmatpush2.bf16.msra.mxu0 0
    %7321 = vmatprep.subr.bf16.mxu0 0
    %7322 = vmatpush2.bf16.msra.mxu0 0
    %7323 = vmatprep.subr.bf16.mxu0 0
    %7324 = vmatpush2.bf16.msra.mxu0 0
    %7325 = vmatprep.mubr.bf16.mxu0 0
    %7326 = vmatmul.mubr.bf16.gmra.mxu0 %v7094
    %v7327 = vpop.f32.mrf.mxu0
    %v7328 = vadd.f32 0.0, %v7327
    %v7329 = vpop.f32.mrf.mxu0
    %v7330 = vadd.f32 0.0, %v7329
    %v7331 = vpop.f32.mrf.mxu0
    %v7332 = vpop.f32.mrf.mxu0
    %7333 = vdwg.mxu0
    %7334 = vmatprep.subr.bf16.mxu0 %v7260
    %7335 = vmatpush1.bf16.msra.mxu0 %v7259
    %7336 = vmatprep.subr.bf16.mxu0 %v7256
    %7337 = vmatpush1.bf16.msra.mxu0 %v7255
    %7338 = vmatprep.subr.bf16.mxu0 %v7252
    %7339 = vmatpush1.bf16.msra.mxu0 %v7251
    %7340 = vmatprep.subr.bf16.mxu0 %v7248
    %7341 = vmatpush1.bf16.msra.mxu0 %v7247
    %7342 = vmatprep.subr.bf16.mxu0 %v7244
    %7343 = vmatpush1.bf16.msra.mxu0 %v7243
    %7344 = vmatprep.subr.bf16.mxu0 %v7240
    %7345 = vmatpush1.bf16.msra.mxu0 %v7239
    %7346 = vmatprep.subr.bf16.mxu0 %v7236
    %7347 = vmatpush1.bf16.msra.mxu0 %v7235
    %7348 = vmatprep.subr.bf16.mxu0 %v7232
    %7349 = vmatpush1.bf16.msra.mxu0 %v7231
    %7350 = vmatprep.subr.bf16.mxu0 0
    %7351 = vmatpush2.bf16.msra.mxu0 0
    %7352 = vmatprep.subr.bf16.mxu0 0
    %7353 = vmatpush2.bf16.msra.mxu0 0
    %7354 = vmatprep.subr.bf16.mxu0 0
    %7355 = vmatpush2.bf16.msra.mxu0 0
    %7356 = vmatprep.subr.bf16.mxu0 0
    %7357 = vmatpush2.bf16.msra.mxu0 0
    %7358 = vmatprep.subr.bf16.mxu0 0
    %7359 = vmatpush2.bf16.msra.mxu0 0
    %7360 = vmatprep.subr.bf16.mxu0 0
    %7361 = vmatpush2.bf16.msra.mxu0 0
    %7362 = vmatprep.subr.bf16.mxu0 0
    %7363 = vmatpush2.bf16.msra.mxu0 0
    %7364 = vmatprep.subr.bf16.mxu0 0
    %7365 = vmatpush2.bf16.msra.mxu0 0
    %7366 = vmatprep.mubr.bf16.mxu0 0
    %7367 = vmatmul.mubr.bf16.gmra.mxu0 %v7094
    %v7368 = vpop.f32.mrf.mxu0
    %v7369 = vadd.f32 0.0, %v7368
    %v7370 = vpop.f32.mrf.mxu0
    %v7371 = vadd.f32 0.0, %v7370
    %v7372 = vpop.f32.mrf.mxu0
    %v7373 = vpop.f32.mrf.mxu0
    %7374 = vdwg.mxu0
    %v7375 = vadd.f32 %v7097, %v7328
    %v7376 = vadd.f32 %v7098, %v7330
    %v7377 = vadd.f32 %v7099, %v7369
    %v7378 = vadd.f32 %v7100, %v7371
    %v7379 = vxor.u32 %v7375, 2147483648
    %v7380 = vmul.f32 %v7379, 1.442695
    %v7381 = vpow.pop %v7380
    %v7382 = vadd.f32 %v7381, 1.0
    %v7383 = vrcp.pop %v7382
    %v7384 = vmul.f32 1.0, %v7383
    %v7385 = vxor.u32 %v7376, 2147483648
    %v7386 = vmul.f32 %v7385, 1.442695
    %v7387 = vpow.pop %v7386
    %v7388 = vadd.f32 %v7387, 1.0
    %v7389 = vrcp.pop %v7388
    %v7390 = vmul.f32 1.0, %v7389
    %v7391 = vtanh.pop %v7377
    %v7392 = vxor.u32 %v7378, 2147483648
    %v7393 = vmul.f32 %v7392, 1.442695
    %v7394 = vpow.pop %v7393
    %v7395 = vadd.f32 %v7394, 1.0
    %v7396 = vrcp.pop %v7395
    %v7397 = vmul.f32 1.0, %v7396
    %v7398 = vmul.f32 %v7390, %v7091
    %v7399 = vmul.f32 %v7384, %v7391
    %v7400 = vadd.f32 %v7398, %v7399
    %v7401 = vtanh.pop %v7400
    %v7402 = vmul.f32 %v7397, %v7401
    %v7403 = vpack.c.bf16 %v7402, %v7402
    %s7404 = scalar_lea.vmem [#allocation14], 28
    %7405 = vst [vmem:[%s7404] sm:$0xf] %v7403
    %v7406 = vld [vmem:[#allocation4 + $0x100] sm:$0xff]
    %v7407 = vld [vmem:[#allocation4 + $0x108] sm:$0xff]
    %v7408 = vld [vmem:[#allocation4 + $0x110] sm:$0xff]
    %v7409 = vld [vmem:[#allocation4 + $0x118] sm:$0xff]
    %v7410 = vld [vmem:[#allocation10] sm:$0xff]
    %v7411 = vld [vmem:[#allocation10 + $0x8] sm:$0xff]
    %v7412 = vld [vmem:[#allocation10 + $0x10] sm:$0xff]
    %v7413 = vld [vmem:[#allocation10 + $0x18] sm:$0xff]
    %v7414 = vld [vmem:[#allocation10 + $0x20] sm:$0xff]
    %v7415 = vld [vmem:[#allocation10 + $0x28] sm:$0xff]
    %v7416 = vld [vmem:[#allocation10 + $0x30] sm:$0xff]
    %v7417 = vld [vmem:[#allocation10 + $0x38] sm:$0xff]
    %v7418 = vld [vmem:[#allocation10 + $0x40] sm:$0xff]
    %v7419 = vld [vmem:[#allocation10 + $0x48] sm:$0xff]
    %v7420 = vld [vmem:[#allocation10 + $0x50] sm:$0xff]
    %v7421 = vld [vmem:[#allocation10 + $0x58] sm:$0xff]
    %v7422 = vld [vmem:[#allocation10 + $0x60] sm:$0xff]
    %v7423 = vld [vmem:[#allocation10 + $0x68] sm:$0xff]
    %v7424 = vld [vmem:[#allocation10 + $0x70] sm:$0xff]
    %v7425 = vld [vmem:[#allocation10 + $0x78] sm:$0xff]
    %v7426 = vld [vmem:[#allocation10 + $0x80] sm:$0xff]
    %v7427 = vld [vmem:[#allocation10 + $0x88] sm:$0xff]
    %v7428 = vld [vmem:[#allocation10 + $0x90] sm:$0xff]
    %v7429 = vld [vmem:[#allocation10 + $0x98] sm:$0xff]
    %v7430 = vld [vmem:[#allocation10 + $0xa0] sm:$0xff]
    %v7431 = vld [vmem:[#allocation10 + $0xa8] sm:$0xff]
    %v7432 = vld [vmem:[#allocation10 + $0xb0] sm:$0xff]
    %v7433 = vld [vmem:[#allocation10 + $0xb8] sm:$0xff]
    %v7434 = vld [vmem:[#allocation10 + $0xc0] sm:$0xff]
    %v7435 = vld [vmem:[#allocation10 + $0xc8] sm:$0xff]
    %v7436 = vld [vmem:[#allocation10 + $0xd0] sm:$0xff]
    %v7437 = vld [vmem:[#allocation10 + $0xd8] sm:$0xff]
    %v7438 = vld [vmem:[#allocation10 + $0xe0] sm:$0xff]
    %v7439 = vld [vmem:[#allocation10 + $0xe8] sm:$0xff]
    %v7440 = vld [vmem:[#allocation10 + $0xf0] sm:$0xff]
    %v7441 = vld [vmem:[#allocation10 + $0xf8] sm:$0xff]
    %v7474 = vunpack.c.l.b16 %v7410
    %v7475 = vunpack.c.h.b16 %v7410
    %v7476 = vunpack.c.l.b16 %v7411
    %v7477 = vunpack.c.h.b16 %v7411
    %v7478 = vunpack.c.l.b16 %v7412
    %v7479 = vunpack.c.h.b16 %v7412
    %v7480 = vunpack.c.l.b16 %v7413
    %v7481 = vunpack.c.h.b16 %v7413
    %v7482 = vunpack.c.l.b16 %v7414
    %v7483 = vunpack.c.h.b16 %v7414
    %v7484 = vunpack.c.l.b16 %v7415
    %v7485 = vunpack.c.h.b16 %v7415
    %v7486 = vunpack.c.l.b16 %v7416
    %v7487 = vunpack.c.h.b16 %v7416
    %v7488 = vunpack.c.l.b16 %v7417
    %v7489 = vunpack.c.h.b16 %v7417
    %v7490 = vunpack.c.l.b16 %v7418
    %v7491 = vunpack.c.h.b16 %v7418
    %v7492 = vunpack.c.l.b16 %v7419
    %v7493 = vunpack.c.h.b16 %v7419
    %v7494 = vunpack.c.l.b16 %v7420
    %v7495 = vunpack.c.h.b16 %v7420
    %v7496 = vunpack.c.l.b16 %v7421
    %v7497 = vunpack.c.h.b16 %v7421
    %v7498 = vunpack.c.l.b16 %v7422
    %v7499 = vunpack.c.h.b16 %v7422
    %v7500 = vunpack.c.l.b16 %v7423
    %v7501 = vunpack.c.h.b16 %v7423
    %v7502 = vunpack.c.l.b16 %v7424
    %v7503 = vunpack.c.h.b16 %v7424
    %v7504 = vunpack.c.l.b16 %v7425
    %v7505 = vunpack.c.h.b16 %v7425
    %v7506 = vunpack.c.l.b16 %v7426
    %v7507 = vunpack.c.h.b16 %v7426
    %v7508 = vunpack.c.l.b16 %v7427
    %v7509 = vunpack.c.h.b16 %v7427
    %v7510 = vunpack.c.l.b16 %v7428
    %v7511 = vunpack.c.h.b16 %v7428
    %v7512 = vunpack.c.l.b16 %v7429
    %v7513 = vunpack.c.h.b16 %v7429
    %v7514 = vunpack.c.l.b16 %v7430
    %v7515 = vunpack.c.h.b16 %v7430
    %v7516 = vunpack.c.l.b16 %v7431
    %v7517 = vunpack.c.h.b16 %v7431
    %v7518 = vunpack.c.l.b16 %v7432
    %v7519 = vunpack.c.h.b16 %v7432
    %v7520 = vunpack.c.l.b16 %v7433
    %v7521 = vunpack.c.h.b16 %v7433
    %v7522 = vunpack.c.l.b16 %v7434
    %v7523 = vunpack.c.h.b16 %v7434
    %v7524 = vunpack.c.l.b16 %v7435
    %v7525 = vunpack.c.h.b16 %v7435
    %v7526 = vunpack.c.l.b16 %v7436
    %v7527 = vunpack.c.h.b16 %v7436
    %v7528 = vunpack.c.l.b16 %v7437
    %v7529 = vunpack.c.h.b16 %v7437
    %v7530 = vunpack.c.l.b16 %v7438
    %v7531 = vunpack.c.h.b16 %v7438
    %v7532 = vunpack.c.l.b16 %v7439
    %v7533 = vunpack.c.h.b16 %v7439
    %v7534 = vunpack.c.l.b16 %v7440
    %v7535 = vunpack.c.h.b16 %v7440
    %v7536 = vunpack.c.l.b16 %v7441
    %v7537 = vunpack.c.h.b16 %v7441
    %v7538 = vpack.c.b16 %v7478, %v7474
    %v7539 = vpack.c.b16 %v7479, %v7475
    %v7540 = vpack.c.b16 %v7480, %v7476
    %v7541 = vpack.c.b16 %v7481, %v7477
    %v7542 = vpack.c.b16 %v7486, %v7482
    %v7543 = vpack.c.b16 %v7487, %v7483
    %v7544 = vpack.c.b16 %v7488, %v7484
    %v7545 = vpack.c.b16 %v7489, %v7485
    %v7546 = vpack.c.b16 %v7494, %v7490
    %v7547 = vpack.c.b16 %v7495, %v7491
    %v7548 = vpack.c.b16 %v7496, %v7492
    %v7549 = vpack.c.b16 %v7497, %v7493
    %v7550 = vpack.c.b16 %v7502, %v7498
    %v7551 = vpack.c.b16 %v7503, %v7499
    %v7552 = vpack.c.b16 %v7504, %v7500
    %v7553 = vpack.c.b16 %v7505, %v7501
    %v7554 = vpack.c.b16 %v7510, %v7506
    %v7555 = vpack.c.b16 %v7511, %v7507
    %v7556 = vpack.c.b16 %v7512, %v7508
    %v7557 = vpack.c.b16 %v7513, %v7509
    %v7558 = vpack.c.b16 %v7518, %v7514
    %v7559 = vpack.c.b16 %v7519, %v7515
    %v7560 = vpack.c.b16 %v7520, %v7516
    %v7561 = vpack.c.b16 %v7521, %v7517
    %v7562 = vpack.c.b16 %v7526, %v7522
    %v7563 = vpack.c.b16 %v7527, %v7523
    %v7564 = vpack.c.b16 %v7528, %v7524
    %v7565 = vpack.c.b16 %v7529, %v7525
    %v7566 = vpack.c.b16 %v7534, %v7530
    %v7567 = vpack.c.b16 %v7535, %v7531
    %v7568 = vpack.c.b16 %v7536, %v7532
    %v7569 = vpack.c.b16 %v7537, %v7533
    %7602 = vmatprep.subr.bf16.mxu0 %v7567
    %7603 = vmatpush1.bf16.msra.mxu0 %v7566
    %7604 = vmatprep.subr.bf16.mxu0 %v7563
    %7605 = vmatpush1.bf16.msra.mxu0 %v7562
    %7606 = vmatprep.subr.bf16.mxu0 %v7559
    %7607 = vmatpush1.bf16.msra.mxu0 %v7558
    %7608 = vmatprep.subr.bf16.mxu0 %v7555
    %7609 = vmatpush1.bf16.msra.mxu0 %v7554
    %7610 = vmatprep.subr.bf16.mxu0 %v7551
    %7611 = vmatpush1.bf16.msra.mxu0 %v7550
    %7612 = vmatprep.subr.bf16.mxu0 %v7547
    %7613 = vmatpush1.bf16.msra.mxu0 %v7546
    %7614 = vmatprep.subr.bf16.mxu0 %v7543
    %7615 = vmatpush1.bf16.msra.mxu0 %v7542
    %7616 = vmatprep.subr.bf16.mxu0 %v7539
    %7617 = vmatpush1.bf16.msra.mxu0 %v7538
    %7618 = vmatprep.subr.bf16.mxu0 0
    %7619 = vmatpush2.bf16.msra.mxu0 0
    %7620 = vmatprep.subr.bf16.mxu0 0
    %7621 = vmatpush2.bf16.msra.mxu0 0
    %7622 = vmatprep.subr.bf16.mxu0 0
    %7623 = vmatpush2.bf16.msra.mxu0 0
    %7624 = vmatprep.subr.bf16.mxu0 0
    %7625 = vmatpush2.bf16.msra.mxu0 0
    %7626 = vmatprep.subr.bf16.mxu0 0
    %7627 = vmatpush2.bf16.msra.mxu0 0
    %7628 = vmatprep.subr.bf16.mxu0 0
    %7629 = vmatpush2.bf16.msra.mxu0 0
    %7630 = vmatprep.subr.bf16.mxu0 0
    %7631 = vmatpush2.bf16.msra.mxu0 0
    %7632 = vmatprep.subr.bf16.mxu0 0
    %7633 = vmatpush2.bf16.msra.mxu0 0
    %7634 = vmatprep.mubr.bf16.mxu0 0
    %7635 = vmatmul.mubr.bf16.gmra.mxu0 %v7403
    %v7636 = vpop.f32.mrf.mxu0
    %v7637 = vadd.f32 0.0, %v7636
    %v7638 = vpop.f32.mrf.mxu0
    %v7639 = vadd.f32 0.0, %v7638
    %v7640 = vpop.f32.mrf.mxu0
    %v7641 = vpop.f32.mrf.mxu0
    %7642 = vdwg.mxu0
    %7643 = vmatprep.subr.bf16.mxu0 %v7569
    %7644 = vmatpush1.bf16.msra.mxu0 %v7568
    %7645 = vmatprep.subr.bf16.mxu0 %v7565
    %7646 = vmatpush1.bf16.msra.mxu0 %v7564
    %7647 = vmatprep.subr.bf16.mxu0 %v7561
    %7648 = vmatpush1.bf16.msra.mxu0 %v7560
    %7649 = vmatprep.subr.bf16.mxu0 %v7557
    %7650 = vmatpush1.bf16.msra.mxu0 %v7556
    %7651 = vmatprep.subr.bf16.mxu0 %v7553
    %7652 = vmatpush1.bf16.msra.mxu0 %v7552
    %7653 = vmatprep.subr.bf16.mxu0 %v7549
    %7654 = vmatpush1.bf16.msra.mxu0 %v7548
    %7655 = vmatprep.subr.bf16.mxu0 %v7545
    %7656 = vmatpush1.bf16.msra.mxu0 %v7544
    %7657 = vmatprep.subr.bf16.mxu0 %v7541
    %7658 = vmatpush1.bf16.msra.mxu0 %v7540
    %7659 = vmatprep.subr.bf16.mxu0 0
    %7660 = vmatpush2.bf16.msra.mxu0 0
    %7661 = vmatprep.subr.bf16.mxu0 0
    %7662 = vmatpush2.bf16.msra.mxu0 0
    %7663 = vmatprep.subr.bf16.mxu0 0
    %7664 = vmatpush2.bf16.msra.mxu0 0
    %7665 = vmatprep.subr.bf16.mxu0 0
    %7666 = vmatpush2.bf16.msra.mxu0 0
    %7667 = vmatprep.subr.bf16.mxu0 0
    %7668 = vmatpush2.bf16.msra.mxu0 0
    %7669 = vmatprep.subr.bf16.mxu0 0
    %7670 = vmatpush2.bf16.msra.mxu0 0
    %7671 = vmatprep.subr.bf16.mxu0 0
    %7672 = vmatpush2.bf16.msra.mxu0 0
    %7673 = vmatprep.subr.bf16.mxu0 0
    %7674 = vmatpush2.bf16.msra.mxu0 0
    %7675 = vmatprep.mubr.bf16.mxu0 0
    %7676 = vmatmul.mubr.bf16.gmra.mxu0 %v7403
    %v7677 = vpop.f32.mrf.mxu0
    %v7678 = vadd.f32 0.0, %v7677
    %v7679 = vpop.f32.mrf.mxu0
    %v7680 = vadd.f32 0.0, %v7679
    %v7681 = vpop.f32.mrf.mxu0
    %v7682 = vpop.f32.mrf.mxu0
    %7683 = vdwg.mxu0
    %v7684 = vadd.f32 %v7406, %v7637
    %v7685 = vadd.f32 %v7407, %v7639
    %v7686 = vadd.f32 %v7408, %v7678
    %v7687 = vadd.f32 %v7409, %v7680
    %v7688 = vxor.u32 %v7684, 2147483648
    %v7689 = vmul.f32 %v7688, 1.442695
    %v7690 = vpow.pop %v7689
    %v7691 = vadd.f32 %v7690, 1.0
    %v7692 = vrcp.pop %v7691
    %v7693 = vmul.f32 1.0, %v7692
    %v7694 = vxor.u32 %v7685, 2147483648
    %v7695 = vmul.f32 %v7694, 1.442695
    %v7696 = vpow.pop %v7695
    %v7697 = vadd.f32 %v7696, 1.0
    %v7698 = vrcp.pop %v7697
    %v7699 = vmul.f32 1.0, %v7698
    %v7700 = vtanh.pop %v7686
    %v7701 = vxor.u32 %v7687, 2147483648
    %v7702 = vmul.f32 %v7701, 1.442695
    %v7703 = vpow.pop %v7702
    %v7704 = vadd.f32 %v7703, 1.0
    %v7705 = vrcp.pop %v7704
    %v7706 = vmul.f32 1.0, %v7705
    %v7707 = vmul.f32 %v7699, %v7400
    %v7708 = vmul.f32 %v7693, %v7700
    %v7709 = vadd.f32 %v7707, %v7708
    %v7710 = vtanh.pop %v7709
    %v7711 = vmul.f32 %v7706, %v7710
    %v7712 = vpack.c.bf16 %v7711, %v7711
    %s7713 = scalar_lea.vmem [#allocation14], 32
    %7714 = vst [vmem:[%s7713] sm:$0xf] %v7712
    %v7715 = vld [vmem:[#allocation4 + $0x120] sm:$0xff]
    %v7716 = vld [vmem:[#allocation4 + $0x128] sm:$0xff]
    %v7717 = vld [vmem:[#allocation4 + $0x130] sm:$0xff]
    %v7718 = vld [vmem:[#allocation4 + $0x138] sm:$0xff]
    %v7719 = vld [vmem:[#allocation10] sm:$0xff]
    %v7720 = vld [vmem:[#allocation10 + $0x8] sm:$0xff]
    %v7721 = vld [vmem:[#allocation10 + $0x10] sm:$0xff]
    %v7722 = vld [vmem:[#allocation10 + $0x18] sm:$0xff]
    %v7723 = vld [vmem:[#allocation10 + $0x20] sm:$0xff]
    %v7724 = vld [vmem:[#allocation10 + $0x28] sm:$0xff]
    %v7725 = vld [vmem:[#allocation10 + $0x30] sm:$0xff]
    %v7726 = vld [vmem:[#allocation10 + $0x38] sm:$0xff]
    %v7727 = vld [vmem:[#allocation10 + $0x40] sm:$0xff]
    %v7728 = vld [vmem:[#allocation10 + $0x48] sm:$0xff]
    %v7729 = vld [vmem:[#allocation10 + $0x50] sm:$0xff]
    %v7730 = vld [vmem:[#allocation10 + $0x58] sm:$0xff]
    %v7731 = vld [vmem:[#allocation10 + $0x60] sm:$0xff]
    %v7732 = vld [vmem:[#allocation10 + $0x68] sm:$0xff]
    %v7733 = vld [vmem:[#allocation10 + $0x70] sm:$0xff]
    %v7734 = vld [vmem:[#allocation10 + $0x78] sm:$0xff]
    %v7735 = vld [vmem:[#allocation10 + $0x80] sm:$0xff]
    %v7736 = vld [vmem:[#allocation10 + $0x88] sm:$0xff]
    %v7737 = vld [vmem:[#allocation10 + $0x90] sm:$0xff]
    %v7738 = vld [vmem:[#allocation10 + $0x98] sm:$0xff]
    %v7739 = vld [vmem:[#allocation10 + $0xa0] sm:$0xff]
    %v7740 = vld [vmem:[#allocation10 + $0xa8] sm:$0xff]
    %v7741 = vld [vmem:[#allocation10 + $0xb0] sm:$0xff]
    %v7742 = vld [vmem:[#allocation10 + $0xb8] sm:$0xff]
    %v7743 = vld [vmem:[#allocation10 + $0xc0] sm:$0xff]
    %v7744 = vld [vmem:[#allocation10 + $0xc8] sm:$0xff]
    %v7745 = vld [vmem:[#allocation10 + $0xd0] sm:$0xff]
    %v7746 = vld [vmem:[#allocation10 + $0xd8] sm:$0xff]
    %v7747 = vld [vmem:[#allocation10 + $0xe0] sm:$0xff]
    %v7748 = vld [vmem:[#allocation10 + $0xe8] sm:$0xff]
    %v7749 = vld [vmem:[#allocation10 + $0xf0] sm:$0xff]
    %v7750 = vld [vmem:[#allocation10 + $0xf8] sm:$0xff]
    %v7783 = vunpack.c.l.b16 %v7719
    %v7784 = vunpack.c.h.b16 %v7719
    %v7785 = vunpack.c.l.b16 %v7720
    %v7786 = vunpack.c.h.b16 %v7720
    %v7787 = vunpack.c.l.b16 %v7721
    %v7788 = vunpack.c.h.b16 %v7721
    %v7789 = vunpack.c.l.b16 %v7722
    %v7790 = vunpack.c.h.b16 %v7722
    %v7791 = vunpack.c.l.b16 %v7723
    %v7792 = vunpack.c.h.b16 %v7723
    %v7793 = vunpack.c.l.b16 %v7724
    %v7794 = vunpack.c.h.b16 %v7724
    %v7795 = vunpack.c.l.b16 %v7725
    %v7796 = vunpack.c.h.b16 %v7725
    %v7797 = vunpack.c.l.b16 %v7726
    %v7798 = vunpack.c.h.b16 %v7726
    %v7799 = vunpack.c.l.b16 %v7727
    %v7800 = vunpack.c.h.b16 %v7727
    %v7801 = vunpack.c.l.b16 %v7728
    %v7802 = vunpack.c.h.b16 %v7728
    %v7803 = vunpack.c.l.b16 %v7729
    %v7804 = vunpack.c.h.b16 %v7729
    %v7805 = vunpack.c.l.b16 %v7730
    %v7806 = vunpack.c.h.b16 %v7730
    %v7807 = vunpack.c.l.b16 %v7731
    %v7808 = vunpack.c.h.b16 %v7731
    %v7809 = vunpack.c.l.b16 %v7732
    %v7810 = vunpack.c.h.b16 %v7732
    %v7811 = vunpack.c.l.b16 %v7733
    %v7812 = vunpack.c.h.b16 %v7733
    %v7813 = vunpack.c.l.b16 %v7734
    %v7814 = vunpack.c.h.b16 %v7734
    %v7815 = vunpack.c.l.b16 %v7735
    %v7816 = vunpack.c.h.b16 %v7735
    %v7817 = vunpack.c.l.b16 %v7736
    %v7818 = vunpack.c.h.b16 %v7736
    %v7819 = vunpack.c.l.b16 %v7737
    %v7820 = vunpack.c.h.b16 %v7737
    %v7821 = vunpack.c.l.b16 %v7738
    %v7822 = vunpack.c.h.b16 %v7738
    %v7823 = vunpack.c.l.b16 %v7739
    %v7824 = vunpack.c.h.b16 %v7739
    %v7825 = vunpack.c.l.b16 %v7740
    %v7826 = vunpack.c.h.b16 %v7740
    %v7827 = vunpack.c.l.b16 %v7741
    %v7828 = vunpack.c.h.b16 %v7741
    %v7829 = vunpack.c.l.b16 %v7742
    %v7830 = vunpack.c.h.b16 %v7742
    %v7831 = vunpack.c.l.b16 %v7743
    %v7832 = vunpack.c.h.b16 %v7743
    %v7833 = vunpack.c.l.b16 %v7744
    %v7834 = vunpack.c.h.b16 %v7744
    %v7835 = vunpack.c.l.b16 %v7745
    %v7836 = vunpack.c.h.b16 %v7745
    %v7837 = vunpack.c.l.b16 %v7746
    %v7838 = vunpack.c.h.b16 %v7746
    %v7839 = vunpack.c.l.b16 %v7747
    %v7840 = vunpack.c.h.b16 %v7747
    %v7841 = vunpack.c.l.b16 %v7748
    %v7842 = vunpack.c.h.b16 %v7748
    %v7843 = vunpack.c.l.b16 %v7749
    %v7844 = vunpack.c.h.b16 %v7749
    %v7845 = vunpack.c.l.b16 %v7750
    %v7846 = vunpack.c.h.b16 %v7750
    %v7847 = vpack.c.b16 %v7787, %v7783
    %v7848 = vpack.c.b16 %v7788, %v7784
    %v7849 = vpack.c.b16 %v7789, %v7785
    %v7850 = vpack.c.b16 %v7790, %v7786
    %v7851 = vpack.c.b16 %v7795, %v7791
    %v7852 = vpack.c.b16 %v7796, %v7792
    %v7853 = vpack.c.b16 %v7797, %v7793
    %v7854 = vpack.c.b16 %v7798, %v7794
    %v7855 = vpack.c.b16 %v7803, %v7799
    %v7856 = vpack.c.b16 %v7804, %v7800
    %v7857 = vpack.c.b16 %v7805, %v7801
    %v7858 = vpack.c.b16 %v7806, %v7802
    %v7859 = vpack.c.b16 %v7811, %v7807
    %v7860 = vpack.c.b16 %v7812, %v7808
    %v7861 = vpack.c.b16 %v7813, %v7809
    %v7862 = vpack.c.b16 %v7814, %v7810
    %v7863 = vpack.c.b16 %v7819, %v7815
    %v7864 = vpack.c.b16 %v7820, %v7816
    %v7865 = vpack.c.b16 %v7821, %v7817
    %v7866 = vpack.c.b16 %v7822, %v7818
    %v7867 = vpack.c.b16 %v7827, %v7823
    %v7868 = vpack.c.b16 %v7828, %v7824
    %v7869 = vpack.c.b16 %v7829, %v7825
    %v7870 = vpack.c.b16 %v7830, %v7826
    %v7871 = vpack.c.b16 %v7835, %v7831
    %v7872 = vpack.c.b16 %v7836, %v7832
    %v7873 = vpack.c.b16 %v7837, %v7833
    %v7874 = vpack.c.b16 %v7838, %v7834
    %v7875 = vpack.c.b16 %v7843, %v7839
    %v7876 = vpack.c.b16 %v7844, %v7840
    %v7877 = vpack.c.b16 %v7845, %v7841
    %v7878 = vpack.c.b16 %v7846, %v7842
    %7911 = vmatprep.subr.bf16.mxu0 %v7876
    %7912 = vmatpush1.bf16.msra.mxu0 %v7875
    %7913 = vmatprep.subr.bf16.mxu0 %v7872
    %7914 = vmatpush1.bf16.msra.mxu0 %v7871
    %7915 = vmatprep.subr.bf16.mxu0 %v7868
    %7916 = vmatpush1.bf16.msra.mxu0 %v7867
    %7917 = vmatprep.subr.bf16.mxu0 %v7864
    %7918 = vmatpush1.bf16.msra.mxu0 %v7863
    %7919 = vmatprep.subr.bf16.mxu0 %v7860
    %7920 = vmatpush1.bf16.msra.mxu0 %v7859
    %7921 = vmatprep.subr.bf16.mxu0 %v7856
    %7922 = vmatpush1.bf16.msra.mxu0 %v7855
    %7923 = vmatprep.subr.bf16.mxu0 %v7852
    %7924 = vmatpush1.bf16.msra.mxu0 %v7851
    %7925 = vmatprep.subr.bf16.mxu0 %v7848
    %7926 = vmatpush1.bf16.msra.mxu0 %v7847
    %7927 = vmatprep.subr.bf16.mxu0 0
    %7928 = vmatpush2.bf16.msra.mxu0 0
    %7929 = vmatprep.subr.bf16.mxu0 0
    %7930 = vmatpush2.bf16.msra.mxu0 0
    %7931 = vmatprep.subr.bf16.mxu0 0
    %7932 = vmatpush2.bf16.msra.mxu0 0
    %7933 = vmatprep.subr.bf16.mxu0 0
    %7934 = vmatpush2.bf16.msra.mxu0 0
    %7935 = vmatprep.subr.bf16.mxu0 0
    %7936 = vmatpush2.bf16.msra.mxu0 0
    %7937 = vmatprep.subr.bf16.mxu0 0
    %7938 = vmatpush2.bf16.msra.mxu0 0
    %7939 = vmatprep.subr.bf16.mxu0 0
    %7940 = vmatpush2.bf16.msra.mxu0 0
    %7941 = vmatprep.subr.bf16.mxu0 0
    %7942 = vmatpush2.bf16.msra.mxu0 0
    %7943 = vmatprep.mubr.bf16.mxu0 0
    %7944 = vmatmul.mubr.bf16.gmra.mxu0 %v7712
    %v7945 = vpop.f32.mrf.mxu0
    %v7946 = vadd.f32 0.0, %v7945
    %v7947 = vpop.f32.mrf.mxu0
    %v7948 = vadd.f32 0.0, %v7947
    %v7949 = vpop.f32.mrf.mxu0
    %v7950 = vpop.f32.mrf.mxu0
    %7951 = vdwg.mxu0
    %7952 = vmatprep.subr.bf16.mxu0 %v7878
    %7953 = vmatpush1.bf16.msra.mxu0 %v7877
    %7954 = vmatprep.subr.bf16.mxu0 %v7874
    %7955 = vmatpush1.bf16.msra.mxu0 %v7873
    %7956 = vmatprep.subr.bf16.mxu0 %v7870
    %7957 = vmatpush1.bf16.msra.mxu0 %v7869
    %7958 = vmatprep.subr.bf16.mxu0 %v7866
    %7959 = vmatpush1.bf16.msra.mxu0 %v7865
    %7960 = vmatprep.subr.bf16.mxu0 %v7862
    %7961 = vmatpush1.bf16.msra.mxu0 %v7861
    %7962 = vmatprep.subr.bf16.mxu0 %v7858
    %7963 = vmatpush1.bf16.msra.mxu0 %v7857
    %7964 = vmatprep.subr.bf16.mxu0 %v7854
    %7965 = vmatpush1.bf16.msra.mxu0 %v7853
    %7966 = vmatprep.subr.bf16.mxu0 %v7850
    %7967 = vmatpush1.bf16.msra.mxu0 %v7849
    %7968 = vmatprep.subr.bf16.mxu0 0
    %7969 = vmatpush2.bf16.msra.mxu0 0
    %7970 = vmatprep.subr.bf16.mxu0 0
    %7971 = vmatpush2.bf16.msra.mxu0 0
    %7972 = vmatprep.subr.bf16.mxu0 0
    %7973 = vmatpush2.bf16.msra.mxu0 0
    %7974 = vmatprep.subr.bf16.mxu0 0
    %7975 = vmatpush2.bf16.msra.mxu0 0
    %7976 = vmatprep.subr.bf16.mxu0 0
    %7977 = vmatpush2.bf16.msra.mxu0 0
    %7978 = vmatprep.subr.bf16.mxu0 0
    %7979 = vmatpush2.bf16.msra.mxu0 0
    %7980 = vmatprep.subr.bf16.mxu0 0
    %7981 = vmatpush2.bf16.msra.mxu0 0
    %7982 = vmatprep.subr.bf16.mxu0 0
    %7983 = vmatpush2.bf16.msra.mxu0 0
    %7984 = vmatprep.mubr.bf16.mxu0 0
    %7985 = vmatmul.mubr.bf16.gmra.mxu0 %v7712
    %v7986 = vpop.f32.mrf.mxu0
    %v7987 = vadd.f32 0.0, %v7986
    %v7988 = vpop.f32.mrf.mxu0
    %v7989 = vadd.f32 0.0, %v7988
    %v7990 = vpop.f32.mrf.mxu0
    %v7991 = vpop.f32.mrf.mxu0
    %7992 = vdwg.mxu0
    %v7993 = vadd.f32 %v7715, %v7946
    %v7994 = vadd.f32 %v7716, %v7948
    %v7995 = vadd.f32 %v7717, %v7987
    %v7996 = vadd.f32 %v7718, %v7989
    %v7997 = vxor.u32 %v7993, 2147483648
    %v7998 = vmul.f32 %v7997, 1.442695
    %v7999 = vpow.pop %v7998
    %v8000 = vadd.f32 %v7999, 1.0
    %v8001 = vrcp.pop %v8000
    %v8002 = vmul.f32 1.0, %v8001
    %v8003 = vxor.u32 %v7994, 2147483648
    %v8004 = vmul.f32 %v8003, 1.442695
    %v8005 = vpow.pop %v8004
    %v8006 = vadd.f32 %v8005, 1.0
    %v8007 = vrcp.pop %v8006
    %v8008 = vmul.f32 1.0, %v8007
    %v8009 = vtanh.pop %v7995
    %v8010 = vxor.u32 %v7996, 2147483648
    %v8011 = vmul.f32 %v8010, 1.442695
    %v8012 = vpow.pop %v8011
    %v8013 = vadd.f32 %v8012, 1.0
    %v8014 = vrcp.pop %v8013
    %v8015 = vmul.f32 1.0, %v8014
    %v8016 = vmul.f32 %v8008, %v7709
    %v8017 = vmul.f32 %v8002, %v8009
    %v8018 = vadd.f32 %v8016, %v8017
    %v8019 = vtanh.pop %v8018
    %v8020 = vmul.f32 %v8015, %v8019
    %v8021 = vpack.c.bf16 %v8020, %v8020
    %s8022 = scalar_lea.vmem [#allocation14], 36
    %8023 = vst [vmem:[%s8022] sm:$0xf] %v8021
    %v8024 = vld [vmem:[#allocation4 + $0x140] sm:$0xff]
    %v8025 = vld [vmem:[#allocation4 + $0x148] sm:$0xff]
    %v8026 = vld [vmem:[#allocation4 + $0x150] sm:$0xff]
    %v8027 = vld [vmem:[#allocation4 + $0x158] sm:$0xff]
    %v8028 = vld [vmem:[#allocation10] sm:$0xff]
    %v8029 = vld [vmem:[#allocation10 + $0x8] sm:$0xff]
    %v8030 = vld [vmem:[#allocation10 + $0x10] sm:$0xff]
    %v8031 = vld [vmem:[#allocation10 + $0x18] sm:$0xff]
    %v8032 = vld [vmem:[#allocation10 + $0x20] sm:$0xff]
    %v8033 = vld [vmem:[#allocation10 + $0x28] sm:$0xff]
    %v8034 = vld [vmem:[#allocation10 + $0x30] sm:$0xff]
    %v8035 = vld [vmem:[#allocation10 + $0x38] sm:$0xff]
    %v8036 = vld [vmem:[#allocation10 + $0x40] sm:$0xff]
    %v8037 = vld [vmem:[#allocation10 + $0x48] sm:$0xff]
    %v8038 = vld [vmem:[#allocation10 + $0x50] sm:$0xff]
    %v8039 = vld [vmem:[#allocation10 + $0x58] sm:$0xff]
    %v8040 = vld [vmem:[#allocation10 + $0x60] sm:$0xff]
    %v8041 = vld [vmem:[#allocation10 + $0x68] sm:$0xff]
    %v8042 = vld [vmem:[#allocation10 + $0x70] sm:$0xff]
    %v8043 = vld [vmem:[#allocation10 + $0x78] sm:$0xff]
    %v8044 = vld [vmem:[#allocation10 + $0x80] sm:$0xff]
    %v8045 = vld [vmem:[#allocation10 + $0x88] sm:$0xff]
    %v8046 = vld [vmem:[#allocation10 + $0x90] sm:$0xff]
    %v8047 = vld [vmem:[#allocation10 + $0x98] sm:$0xff]
    %v8048 = vld [vmem:[#allocation10 + $0xa0] sm:$0xff]
    %v8049 = vld [vmem:[#allocation10 + $0xa8] sm:$0xff]
    %v8050 = vld [vmem:[#allocation10 + $0xb0] sm:$0xff]
    %v8051 = vld [vmem:[#allocation10 + $0xb8] sm:$0xff]
    %v8052 = vld [vmem:[#allocation10 + $0xc0] sm:$0xff]
    %v8053 = vld [vmem:[#allocation10 + $0xc8] sm:$0xff]
    %v8054 = vld [vmem:[#allocation10 + $0xd0] sm:$0xff]
    %v8055 = vld [vmem:[#allocation10 + $0xd8] sm:$0xff]
    %v8056 = vld [vmem:[#allocation10 + $0xe0] sm:$0xff]
    %v8057 = vld [vmem:[#allocation10 + $0xe8] sm:$0xff]
    %v8058 = vld [vmem:[#allocation10 + $0xf0] sm:$0xff]
    %v8059 = vld [vmem:[#allocation10 + $0xf8] sm:$0xff]
    %v8092 = vunpack.c.l.b16 %v8028
    %v8093 = vunpack.c.h.b16 %v8028
    %v8094 = vunpack.c.l.b16 %v8029
    %v8095 = vunpack.c.h.b16 %v8029
    %v8096 = vunpack.c.l.b16 %v8030
    %v8097 = vunpack.c.h.b16 %v8030
    %v8098 = vunpack.c.l.b16 %v8031
    %v8099 = vunpack.c.h.b16 %v8031
    %v8100 = vunpack.c.l.b16 %v8032
    %v8101 = vunpack.c.h.b16 %v8032
    %v8102 = vunpack.c.l.b16 %v8033
    %v8103 = vunpack.c.h.b16 %v8033
    %v8104 = vunpack.c.l.b16 %v8034
    %v8105 = vunpack.c.h.b16 %v8034
    %v8106 = vunpack.c.l.b16 %v8035
    %v8107 = vunpack.c.h.b16 %v8035
    %v8108 = vunpack.c.l.b16 %v8036
    %v8109 = vunpack.c.h.b16 %v8036
    %v8110 = vunpack.c.l.b16 %v8037
    %v8111 = vunpack.c.h.b16 %v8037
    %v8112 = vunpack.c.l.b16 %v8038
    %v8113 = vunpack.c.h.b16 %v8038
    %v8114 = vunpack.c.l.b16 %v8039
    %v8115 = vunpack.c.h.b16 %v8039
    %v8116 = vunpack.c.l.b16 %v8040
    %v8117 = vunpack.c.h.b16 %v8040
    %v8118 = vunpack.c.l.b16 %v8041
    %v8119 = vunpack.c.h.b16 %v8041
    %v8120 = vunpack.c.l.b16 %v8042
    %v8121 = vunpack.c.h.b16 %v8042
    %v8122 = vunpack.c.l.b16 %v8043
    %v8123 = vunpack.c.h.b16 %v8043
    %v8124 = vunpack.c.l.b16 %v8044
    %v8125 = vunpack.c.h.b16 %v8044
    %v8126 = vunpack.c.l.b16 %v8045
    %v8127 = vunpack.c.h.b16 %v8045
    %v8128 = vunpack.c.l.b16 %v8046
    %v8129 = vunpack.c.h.b16 %v8046
    %v8130 = vunpack.c.l.b16 %v8047
    %v8131 = vunpack.c.h.b16 %v8047
    %v8132 = vunpack.c.l.b16 %v8048
    %v8133 = vunpack.c.h.b16 %v8048
    %v8134 = vunpack.c.l.b16 %v8049
    %v8135 = vunpack.c.h.b16 %v8049
    %v8136 = vunpack.c.l.b16 %v8050
    %v8137 = vunpack.c.h.b16 %v8050
    %v8138 = vunpack.c.l.b16 %v8051
    %v8139 = vunpack.c.h.b16 %v8051
    %v8140 = vunpack.c.l.b16 %v8052
    %v8141 = vunpack.c.h.b16 %v8052
    %v8142 = vunpack.c.l.b16 %v8053
    %v8143 = vunpack.c.h.b16 %v8053
    %v8144 = vunpack.c.l.b16 %v8054
    %v8145 = vunpack.c.h.b16 %v8054
    %v8146 = vunpack.c.l.b16 %v8055
    %v8147 = vunpack.c.h.b16 %v8055
    %v8148 = vunpack.c.l.b16 %v8056
    %v8149 = vunpack.c.h.b16 %v8056
    %v8150 = vunpack.c.l.b16 %v8057
    %v8151 = vunpack.c.h.b16 %v8057
    %v8152 = vunpack.c.l.b16 %v8058
    %v8153 = vunpack.c.h.b16 %v8058
    %v8154 = vunpack.c.l.b16 %v8059
    %v8155 = vunpack.c.h.b16 %v8059
    %v8156 = vpack.c.b16 %v8096, %v8092
    %v8157 = vpack.c.b16 %v8097, %v8093
    %v8158 = vpack.c.b16 %v8098, %v8094
    %v8159 = vpack.c.b16 %v8099, %v8095
    %v8160 = vpack.c.b16 %v8104, %v8100
    %v8161 = vpack.c.b16 %v8105, %v8101
    %v8162 = vpack.c.b16 %v8106, %v8102
    %v8163 = vpack.c.b16 %v8107, %v8103
    %v8164 = vpack.c.b16 %v8112, %v8108
    %v8165 = vpack.c.b16 %v8113, %v8109
    %v8166 = vpack.c.b16 %v8114, %v8110
    %v8167 = vpack.c.b16 %v8115, %v8111
    %v8168 = vpack.c.b16 %v8120, %v8116
    %v8169 = vpack.c.b16 %v8121, %v8117
    %v8170 = vpack.c.b16 %v8122, %v8118
    %v8171 = vpack.c.b16 %v8123, %v8119
    %v8172 = vpack.c.b16 %v8128, %v8124
    %v8173 = vpack.c.b16 %v8129, %v8125
    %v8174 = vpack.c.b16 %v8130, %v8126
    %v8175 = vpack.c.b16 %v8131, %v8127
    %v8176 = vpack.c.b16 %v8136, %v8132
    %v8177 = vpack.c.b16 %v8137, %v8133
    %v8178 = vpack.c.b16 %v8138, %v8134
    %v8179 = vpack.c.b16 %v8139, %v8135
    %v8180 = vpack.c.b16 %v8144, %v8140
    %v8181 = vpack.c.b16 %v8145, %v8141
    %v8182 = vpack.c.b16 %v8146, %v8142
    %v8183 = vpack.c.b16 %v8147, %v8143
    %v8184 = vpack.c.b16 %v8152, %v8148
    %v8185 = vpack.c.b16 %v8153, %v8149
    %v8186 = vpack.c.b16 %v8154, %v8150
    %v8187 = vpack.c.b16 %v8155, %v8151
    %8220 = vmatprep.subr.bf16.mxu0 %v8185
    %8221 = vmatpush1.bf16.msra.mxu0 %v8184
    %8222 = vmatprep.subr.bf16.mxu0 %v8181
    %8223 = vmatpush1.bf16.msra.mxu0 %v8180
    %8224 = vmatprep.subr.bf16.mxu0 %v8177
    %8225 = vmatpush1.bf16.msra.mxu0 %v8176
    %8226 = vmatprep.subr.bf16.mxu0 %v8173
    %8227 = vmatpush1.bf16.msra.mxu0 %v8172
    %8228 = vmatprep.subr.bf16.mxu0 %v8169
    %8229 = vmatpush1.bf16.msra.mxu0 %v8168
    %8230 = vmatprep.subr.bf16.mxu0 %v8165
    %8231 = vmatpush1.bf16.msra.mxu0 %v8164
    %8232 = vmatprep.subr.bf16.mxu0 %v8161
    %8233 = vmatpush1.bf16.msra.mxu0 %v8160
    %8234 = vmatprep.subr.bf16.mxu0 %v8157
    %8235 = vmatpush1.bf16.msra.mxu0 %v8156
    %8236 = vmatprep.subr.bf16.mxu0 0
    %8237 = vmatpush2.bf16.msra.mxu0 0
    %8238 = vmatprep.subr.bf16.mxu0 0
    %8239 = vmatpush2.bf16.msra.mxu0 0
    %8240 = vmatprep.subr.bf16.mxu0 0
    %8241 = vmatpush2.bf16.msra.mxu0 0
    %8242 = vmatprep.subr.bf16.mxu0 0
    %8243 = vmatpush2.bf16.msra.mxu0 0
    %8244 = vmatprep.subr.bf16.mxu0 0
    %8245 = vmatpush2.bf16.msra.mxu0 0
    %8246 = vmatprep.subr.bf16.mxu0 0
    %8247 = vmatpush2.bf16.msra.mxu0 0
    %8248 = vmatprep.subr.bf16.mxu0 0
    %8249 = vmatpush2.bf16.msra.mxu0 0
    %8250 = vmatprep.subr.bf16.mxu0 0
    %8251 = vmatpush2.bf16.msra.mxu0 0
    %8252 = vmatprep.mubr.bf16.mxu0 0
    %8253 = vmatmul.mubr.bf16.gmra.mxu0 %v8021
    %v8254 = vpop.f32.mrf.mxu0
    %v8255 = vadd.f32 0.0, %v8254
    %v8256 = vpop.f32.mrf.mxu0
    %v8257 = vadd.f32 0.0, %v8256
    %v8258 = vpop.f32.mrf.mxu0
    %v8259 = vpop.f32.mrf.mxu0
    %8260 = vdwg.mxu0
    %8261 = vmatprep.subr.bf16.mxu0 %v8187
    %8262 = vmatpush1.bf16.msra.mxu0 %v8186
    %8263 = vmatprep.subr.bf16.mxu0 %v8183
    %8264 = vmatpush1.bf16.msra.mxu0 %v8182
    %8265 = vmatprep.subr.bf16.mxu0 %v8179
    %8266 = vmatpush1.bf16.msra.mxu0 %v8178
    %8267 = vmatprep.subr.bf16.mxu0 %v8175
    %8268 = vmatpush1.bf16.msra.mxu0 %v8174
    %8269 = vmatprep.subr.bf16.mxu0 %v8171
    %8270 = vmatpush1.bf16.msra.mxu0 %v8170
    %8271 = vmatprep.subr.bf16.mxu0 %v8167
    %8272 = vmatpush1.bf16.msra.mxu0 %v8166
    %8273 = vmatprep.subr.bf16.mxu0 %v8163
    %8274 = vmatpush1.bf16.msra.mxu0 %v8162
    %8275 = vmatprep.subr.bf16.mxu0 %v8159
    %8276 = vmatpush1.bf16.msra.mxu0 %v8158
    %8277 = vmatprep.subr.bf16.mxu0 0
    %8278 = vmatpush2.bf16.msra.mxu0 0
    %8279 = vmatprep.subr.bf16.mxu0 0
    %8280 = vmatpush2.bf16.msra.mxu0 0
    %8281 = vmatprep.subr.bf16.mxu0 0
    %8282 = vmatpush2.bf16.msra.mxu0 0
    %8283 = vmatprep.subr.bf16.mxu0 0
    %8284 = vmatpush2.bf16.msra.mxu0 0
    %8285 = vmatprep.subr.bf16.mxu0 0
    %8286 = vmatpush2.bf16.msra.mxu0 0
    %8287 = vmatprep.subr.bf16.mxu0 0
    %8288 = vmatpush2.bf16.msra.mxu0 0
    %8289 = vmatprep.subr.bf16.mxu0 0
    %8290 = vmatpush2.bf16.msra.mxu0 0
    %8291 = vmatprep.subr.bf16.mxu0 0
    %8292 = vmatpush2.bf16.msra.mxu0 0
    %8293 = vmatprep.mubr.bf16.mxu0 0
    %8294 = vmatmul.mubr.bf16.gmra.mxu0 %v8021
    %v8295 = vpop.f32.mrf.mxu0
    %v8296 = vadd.f32 0.0, %v8295
    %v8297 = vpop.f32.mrf.mxu0
    %v8298 = vadd.f32 0.0, %v8297
    %v8299 = vpop.f32.mrf.mxu0
    %v8300 = vpop.f32.mrf.mxu0
    %8301 = vdwg.mxu0
    %v8302 = vadd.f32 %v8024, %v8255
    %v8303 = vadd.f32 %v8025, %v8257
    %v8304 = vadd.f32 %v8026, %v8296
    %v8305 = vadd.f32 %v8027, %v8298
    %v8306 = vxor.u32 %v8302, 2147483648
    %v8307 = vmul.f32 %v8306, 1.442695
    %v8308 = vpow.pop %v8307
    %v8309 = vadd.f32 %v8308, 1.0
    %v8310 = vrcp.pop %v8309
    %v8311 = vmul.f32 1.0, %v8310
    %v8312 = vxor.u32 %v8303, 2147483648
    %v8313 = vmul.f32 %v8312, 1.442695
    %v8314 = vpow.pop %v8313
    %v8315 = vadd.f32 %v8314, 1.0
    %v8316 = vrcp.pop %v8315
    %v8317 = vmul.f32 1.0, %v8316
    %v8318 = vtanh.pop %v8304
    %v8319 = vxor.u32 %v8305, 2147483648
    %v8320 = vmul.f32 %v8319, 1.442695
    %v8321 = vpow.pop %v8320
    %v8322 = vadd.f32 %v8321, 1.0
    %v8323 = vrcp.pop %v8322
    %v8324 = vmul.f32 1.0, %v8323
    %v8325 = vmul.f32 %v8317, %v8018
    %v8326 = vmul.f32 %v8311, %v8318
    %v8327 = vadd.f32 %v8325, %v8326
    %v8328 = vtanh.pop %v8327
    %v8329 = vmul.f32 %v8324, %v8328
    %v8330 = vpack.c.bf16 %v8329, %v8329
    %s8331 = scalar_lea.vmem [#allocation14], 40
    %8332 = vst [vmem:[%s8331] sm:$0xf] %v8330
    %v8333 = vld [vmem:[#allocation4 + $0x160] sm:$0xff]
    %v8334 = vld [vmem:[#allocation4 + $0x168] sm:$0xff]
    %v8335 = vld [vmem:[#allocation4 + $0x170] sm:$0xff]
    %v8336 = vld [vmem:[#allocation4 + $0x178] sm:$0xff]
    %v8337 = vld [vmem:[#allocation10] sm:$0xff]
    %v8338 = vld [vmem:[#allocation10 + $0x8] sm:$0xff]
    %v8339 = vld [vmem:[#allocation10 + $0x10] sm:$0xff]
    %v8340 = vld [vmem:[#allocation10 + $0x18] sm:$0xff]
    %v8341 = vld [vmem:[#allocation10 + $0x20] sm:$0xff]
    %v8342 = vld [vmem:[#allocation10 + $0x28] sm:$0xff]
    %v8343 = vld [vmem:[#allocation10 + $0x30] sm:$0xff]
    %v8344 = vld [vmem:[#allocation10 + $0x38] sm:$0xff]
    %v8345 = vld [vmem:[#allocation10 + $0x40] sm:$0xff]
    %v8346 = vld [vmem:[#allocation10 + $0x48] sm:$0xff]
    %v8347 = vld [vmem:[#allocation10 + $0x50] sm:$0xff]
    %v8348 = vld [vmem:[#allocation10 + $0x58] sm:$0xff]
    %v8349 = vld [vmem:[#allocation10 + $0x60] sm:$0xff]
    %v8350 = vld [vmem:[#allocation10 + $0x68] sm:$0xff]
    %v8351 = vld [vmem:[#allocation10 + $0x70] sm:$0xff]
    %v8352 = vld [vmem:[#allocation10 + $0x78] sm:$0xff]
    %v8353 = vld [vmem:[#allocation10 + $0x80] sm:$0xff]
    %v8354 = vld [vmem:[#allocation10 + $0x88] sm:$0xff]
    %v8355 = vld [vmem:[#allocation10 + $0x90] sm:$0xff]
    %v8356 = vld [vmem:[#allocation10 + $0x98] sm:$0xff]
    %v8357 = vld [vmem:[#allocation10 + $0xa0] sm:$0xff]
    %v8358 = vld [vmem:[#allocation10 + $0xa8] sm:$0xff]
    %v8359 = vld [vmem:[#allocation10 + $0xb0] sm:$0xff]
    %v8360 = vld [vmem:[#allocation10 + $0xb8] sm:$0xff]
    %v8361 = vld [vmem:[#allocation10 + $0xc0] sm:$0xff]
    %v8362 = vld [vmem:[#allocation10 + $0xc8] sm:$0xff]
    %v8363 = vld [vmem:[#allocation10 + $0xd0] sm:$0xff]
    %v8364 = vld [vmem:[#allocation10 + $0xd8] sm:$0xff]
    %v8365 = vld [vmem:[#allocation10 + $0xe0] sm:$0xff]
    %v8366 = vld [vmem:[#allocation10 + $0xe8] sm:$0xff]
    %v8367 = vld [vmem:[#allocation10 + $0xf0] sm:$0xff]
    %v8368 = vld [vmem:[#allocation10 + $0xf8] sm:$0xff]
    %v8401 = vunpack.c.l.b16 %v8337
    %v8402 = vunpack.c.h.b16 %v8337
    %v8403 = vunpack.c.l.b16 %v8338
    %v8404 = vunpack.c.h.b16 %v8338
    %v8405 = vunpack.c.l.b16 %v8339
    %v8406 = vunpack.c.h.b16 %v8339
    %v8407 = vunpack.c.l.b16 %v8340
    %v8408 = vunpack.c.h.b16 %v8340
    %v8409 = vunpack.c.l.b16 %v8341
    %v8410 = vunpack.c.h.b16 %v8341
    %v8411 = vunpack.c.l.b16 %v8342
    %v8412 = vunpack.c.h.b16 %v8342
    %v8413 = vunpack.c.l.b16 %v8343
    %v8414 = vunpack.c.h.b16 %v8343
    %v8415 = vunpack.c.l.b16 %v8344
    %v8416 = vunpack.c.h.b16 %v8344
    %v8417 = vunpack.c.l.b16 %v8345
    %v8418 = vunpack.c.h.b16 %v8345
    %v8419 = vunpack.c.l.b16 %v8346
    %v8420 = vunpack.c.h.b16 %v8346
    %v8421 = vunpack.c.l.b16 %v8347
    %v8422 = vunpack.c.h.b16 %v8347
    %v8423 = vunpack.c.l.b16 %v8348
    %v8424 = vunpack.c.h.b16 %v8348
    %v8425 = vunpack.c.l.b16 %v8349
    %v8426 = vunpack.c.h.b16 %v8349
    %v8427 = vunpack.c.l.b16 %v8350
    %v8428 = vunpack.c.h.b16 %v8350
    %v8429 = vunpack.c.l.b16 %v8351
    %v8430 = vunpack.c.h.b16 %v8351
    %v8431 = vunpack.c.l.b16 %v8352
    %v8432 = vunpack.c.h.b16 %v8352
    %v8433 = vunpack.c.l.b16 %v8353
    %v8434 = vunpack.c.h.b16 %v8353
    %v8435 = vunpack.c.l.b16 %v8354
    %v8436 = vunpack.c.h.b16 %v8354
    %v8437 = vunpack.c.l.b16 %v8355
    %v8438 = vunpack.c.h.b16 %v8355
    %v8439 = vunpack.c.l.b16 %v8356
    %v8440 = vunpack.c.h.b16 %v8356
    %v8441 = vunpack.c.l.b16 %v8357
    %v8442 = vunpack.c.h.b16 %v8357
    %v8443 = vunpack.c.l.b16 %v8358
    %v8444 = vunpack.c.h.b16 %v8358
    %v8445 = vunpack.c.l.b16 %v8359
    %v8446 = vunpack.c.h.b16 %v8359
    %v8447 = vunpack.c.l.b16 %v8360
    %v8448 = vunpack.c.h.b16 %v8360
    %v8449 = vunpack.c.l.b16 %v8361
    %v8450 = vunpack.c.h.b16 %v8361
    %v8451 = vunpack.c.l.b16 %v8362
    %v8452 = vunpack.c.h.b16 %v8362
    %v8453 = vunpack.c.l.b16 %v8363
    %v8454 = vunpack.c.h.b16 %v8363
    %v8455 = vunpack.c.l.b16 %v8364
    %v8456 = vunpack.c.h.b16 %v8364
    %v8457 = vunpack.c.l.b16 %v8365
    %v8458 = vunpack.c.h.b16 %v8365
    %v8459 = vunpack.c.l.b16 %v8366
    %v8460 = vunpack.c.h.b16 %v8366
    %v8461 = vunpack.c.l.b16 %v8367
    %v8462 = vunpack.c.h.b16 %v8367
    %v8463 = vunpack.c.l.b16 %v8368
    %v8464 = vunpack.c.h.b16 %v8368
    %v8465 = vpack.c.b16 %v8405, %v8401
    %v8466 = vpack.c.b16 %v8406, %v8402
    %v8467 = vpack.c.b16 %v8407, %v8403
    %v8468 = vpack.c.b16 %v8408, %v8404
    %v8469 = vpack.c.b16 %v8413, %v8409
    %v8470 = vpack.c.b16 %v8414, %v8410
    %v8471 = vpack.c.b16 %v8415, %v8411
    %v8472 = vpack.c.b16 %v8416, %v8412
    %v8473 = vpack.c.b16 %v8421, %v8417
    %v8474 = vpack.c.b16 %v8422, %v8418
    %v8475 = vpack.c.b16 %v8423, %v8419
    %v8476 = vpack.c.b16 %v8424, %v8420
    %v8477 = vpack.c.b16 %v8429, %v8425
    %v8478 = vpack.c.b16 %v8430, %v8426
    %v8479 = vpack.c.b16 %v8431, %v8427
    %v8480 = vpack.c.b16 %v8432, %v8428
    %v8481 = vpack.c.b16 %v8437, %v8433
    %v8482 = vpack.c.b16 %v8438, %v8434
    %v8483 = vpack.c.b16 %v8439, %v8435
    %v8484 = vpack.c.b16 %v8440, %v8436
    %v8485 = vpack.c.b16 %v8445, %v8441
    %v8486 = vpack.c.b16 %v8446, %v8442
    %v8487 = vpack.c.b16 %v8447, %v8443
    %v8488 = vpack.c.b16 %v8448, %v8444
    %v8489 = vpack.c.b16 %v8453, %v8449
    %v8490 = vpack.c.b16 %v8454, %v8450
    %v8491 = vpack.c.b16 %v8455, %v8451
    %v8492 = vpack.c.b16 %v8456, %v8452
    %v8493 = vpack.c.b16 %v8461, %v8457
    %v8494 = vpack.c.b16 %v8462, %v8458
    %v8495 = vpack.c.b16 %v8463, %v8459
    %v8496 = vpack.c.b16 %v8464, %v8460
    %8529 = vmatprep.subr.bf16.mxu0 %v8494
    %8530 = vmatpush1.bf16.msra.mxu0 %v8493
    %8531 = vmatprep.subr.bf16.mxu0 %v8490
    %8532 = vmatpush1.bf16.msra.mxu0 %v8489
    %8533 = vmatprep.subr.bf16.mxu0 %v8486
    %8534 = vmatpush1.bf16.msra.mxu0 %v8485
    %8535 = vmatprep.subr.bf16.mxu0 %v8482
    %8536 = vmatpush1.bf16.msra.mxu0 %v8481
    %8537 = vmatprep.subr.bf16.mxu0 %v8478
    %8538 = vmatpush1.bf16.msra.mxu0 %v8477
    %8539 = vmatprep.subr.bf16.mxu0 %v8474
    %8540 = vmatpush1.bf16.msra.mxu0 %v8473
    %8541 = vmatprep.subr.bf16.mxu0 %v8470
    %8542 = vmatpush1.bf16.msra.mxu0 %v8469
    %8543 = vmatprep.subr.bf16.mxu0 %v8466
    %8544 = vmatpush1.bf16.msra.mxu0 %v8465
    %8545 = vmatprep.subr.bf16.mxu0 0
    %8546 = vmatpush2.bf16.msra.mxu0 0
    %8547 = vmatprep.subr.bf16.mxu0 0
    %8548 = vmatpush2.bf16.msra.mxu0 0
    %8549 = vmatprep.subr.bf16.mxu0 0
    %8550 = vmatpush2.bf16.msra.mxu0 0
    %8551 = vmatprep.subr.bf16.mxu0 0
    %8552 = vmatpush2.bf16.msra.mxu0 0
    %8553 = vmatprep.subr.bf16.mxu0 0
    %8554 = vmatpush2.bf16.msra.mxu0 0
    %8555 = vmatprep.subr.bf16.mxu0 0
    %8556 = vmatpush2.bf16.msra.mxu0 0
    %8557 = vmatprep.subr.bf16.mxu0 0
    %8558 = vmatpush2.bf16.msra.mxu0 0
    %8559 = vmatprep.subr.bf16.mxu0 0
    %8560 = vmatpush2.bf16.msra.mxu0 0
    %8561 = vmatprep.mubr.bf16.mxu0 0
    %8562 = vmatmul.mubr.bf16.gmra.mxu0 %v8330
    %v8563 = vpop.f32.mrf.mxu0
    %v8564 = vadd.f32 0.0, %v8563
    %v8565 = vpop.f32.mrf.mxu0
    %v8566 = vadd.f32 0.0, %v8565
    %v8567 = vpop.f32.mrf.mxu0
    %v8568 = vpop.f32.mrf.mxu0
    %8569 = vdwg.mxu0
    %8570 = vmatprep.subr.bf16.mxu0 %v8496
    %8571 = vmatpush1.bf16.msra.mxu0 %v8495
    %8572 = vmatprep.subr.bf16.mxu0 %v8492
    %8573 = vmatpush1.bf16.msra.mxu0 %v8491
    %8574 = vmatprep.subr.bf16.mxu0 %v8488
    %8575 = vmatpush1.bf16.msra.mxu0 %v8487
    %8576 = vmatprep.subr.bf16.mxu0 %v8484
    %8577 = vmatpush1.bf16.msra.mxu0 %v8483
    %8578 = vmatprep.subr.bf16.mxu0 %v8480
    %8579 = vmatpush1.bf16.msra.mxu0 %v8479
    %8580 = vmatprep.subr.bf16.mxu0 %v8476
    %8581 = vmatpush1.bf16.msra.mxu0 %v8475
    %8582 = vmatprep.subr.bf16.mxu0 %v8472
    %8583 = vmatpush1.bf16.msra.mxu0 %v8471
    %8584 = vmatprep.subr.bf16.mxu0 %v8468
    %8585 = vmatpush1.bf16.msra.mxu0 %v8467
    %8586 = vmatprep.subr.bf16.mxu0 0
    %8587 = vmatpush2.bf16.msra.mxu0 0
    %8588 = vmatprep.subr.bf16.mxu0 0
    %8589 = vmatpush2.bf16.msra.mxu0 0
    %8590 = vmatprep.subr.bf16.mxu0 0
    %8591 = vmatpush2.bf16.msra.mxu0 0
    %8592 = vmatprep.subr.bf16.mxu0 0
    %8593 = vmatpush2.bf16.msra.mxu0 0
    %8594 = vmatprep.subr.bf16.mxu0 0
    %8595 = vmatpush2.bf16.msra.mxu0 0
    %8596 = vmatprep.subr.bf16.mxu0 0
    %8597 = vmatpush2.bf16.msra.mxu0 0
    %8598 = vmatprep.subr.bf16.mxu0 0
    %8599 = vmatpush2.bf16.msra.mxu0 0
    %8600 = vmatprep.subr.bf16.mxu0 0
    %8601 = vmatpush2.bf16.msra.mxu0 0
    %8602 = vmatprep.mubr.bf16.mxu0 0
    %8603 = vmatmul.mubr.bf16.gmra.mxu0 %v8330
    %v8604 = vpop.f32.mrf.mxu0
    %v8605 = vadd.f32 0.0, %v8604
    %v8606 = vpop.f32.mrf.mxu0
    %v8607 = vadd.f32 0.0, %v8606
    %v8608 = vpop.f32.mrf.mxu0
    %v8609 = vpop.f32.mrf.mxu0
    %8610 = vdwg.mxu0
    %v8611 = vadd.f32 %v8333, %v8564
    %v8612 = vadd.f32 %v8334, %v8566
    %v8613 = vadd.f32 %v8335, %v8605
    %v8614 = vadd.f32 %v8336, %v8607
    %v8615 = vxor.u32 %v8611, 2147483648
    %v8616 = vmul.f32 %v8615, 1.442695
    %v8617 = vpow.pop %v8616
    %v8618 = vadd.f32 %v8617, 1.0
    %v8619 = vrcp.pop %v8618
    %v8620 = vmul.f32 1.0, %v8619
    %v8621 = vxor.u32 %v8612, 2147483648
    %v8622 = vmul.f32 %v8621, 1.442695
    %v8623 = vpow.pop %v8622
    %v8624 = vadd.f32 %v8623, 1.0
    %v8625 = vrcp.pop %v8624
    %v8626 = vmul.f32 1.0, %v8625
    %v8627 = vtanh.pop %v8613
    %v8628 = vxor.u32 %v8614, 2147483648
    %v8629 = vmul.f32 %v8628, 1.442695
    %v8630 = vpow.pop %v8629
    %v8631 = vadd.f32 %v8630, 1.0
    %v8632 = vrcp.pop %v8631
    %v8633 = vmul.f32 1.0, %v8632
    %v8634 = vmul.f32 %v8626, %v8327
    %v8635 = vmul.f32 %v8620, %v8627
    %v8636 = vadd.f32 %v8634, %v8635
    %v8637 = vtanh.pop %v8636
    %v8638 = vmul.f32 %v8633, %v8637
    %v8639 = vpack.c.bf16 %v8638, %v8638
    %s8640 = scalar_lea.vmem [#allocation14], 44
    %8641 = vst [vmem:[%s8640] sm:$0xf] %v8639
    %v8642 = vld [vmem:[#allocation4 + $0x180] sm:$0xff]
    %v8643 = vld [vmem:[#allocation4 + $0x188] sm:$0xff]
    %v8644 = vld [vmem:[#allocation4 + $0x190] sm:$0xff]
    %v8645 = vld [vmem:[#allocation4 + $0x198] sm:$0xff]
    %v8646 = vld [vmem:[#allocation10] sm:$0xff]
    %v8647 = vld [vmem:[#allocation10 + $0x8] sm:$0xff]
    %v8648 = vld [vmem:[#allocation10 + $0x10] sm:$0xff]
    %v8649 = vld [vmem:[#allocation10 + $0x18] sm:$0xff]
    %v8650 = vld [vmem:[#allocation10 + $0x20] sm:$0xff]
    %v8651 = vld [vmem:[#allocation10 + $0x28] sm:$0xff]
    %v8652 = vld [vmem:[#allocation10 + $0x30] sm:$0xff]
    %v8653 = vld [vmem:[#allocation10 + $0x38] sm:$0xff]
    %v8654 = vld [vmem:[#allocation10 + $0x40] sm:$0xff]
    %v8655 = vld [vmem:[#allocation10 + $0x48] sm:$0xff]
    %v8656 = vld [vmem:[#allocation10 + $0x50] sm:$0xff]
    %v8657 = vld [vmem:[#allocation10 + $0x58] sm:$0xff]
    %v8658 = vld [vmem:[#allocation10 + $0x60] sm:$0xff]
    %v8659 = vld [vmem:[#allocation10 + $0x68] sm:$0xff]
    %v8660 = vld [vmem:[#allocation10 + $0x70] sm:$0xff]
    %v8661 = vld [vmem:[#allocation10 + $0x78] sm:$0xff]
    %v8662 = vld [vmem:[#allocation10 + $0x80] sm:$0xff]
    %v8663 = vld [vmem:[#allocation10 + $0x88] sm:$0xff]
    %v8664 = vld [vmem:[#allocation10 + $0x90] sm:$0xff]
    %v8665 = vld [vmem:[#allocation10 + $0x98] sm:$0xff]
    %v8666 = vld [vmem:[#allocation10 + $0xa0] sm:$0xff]
    %v8667 = vld [vmem:[#allocation10 + $0xa8] sm:$0xff]
    %v8668 = vld [vmem:[#allocation10 + $0xb0] sm:$0xff]
    %v8669 = vld [vmem:[#allocation10 + $0xb8] sm:$0xff]
    %v8670 = vld [vmem:[#allocation10 + $0xc0] sm:$0xff]
    %v8671 = vld [vmem:[#allocation10 + $0xc8] sm:$0xff]
    %v8672 = vld [vmem:[#allocation10 + $0xd0] sm:$0xff]
    %v8673 = vld [vmem:[#allocation10 + $0xd8] sm:$0xff]
    %v8674 = vld [vmem:[#allocation10 + $0xe0] sm:$0xff]
    %v8675 = vld [vmem:[#allocation10 + $0xe8] sm:$0xff]
    %v8676 = vld [vmem:[#allocation10 + $0xf0] sm:$0xff]
    %v8677 = vld [vmem:[#allocation10 + $0xf8] sm:$0xff]
    %v8710 = vunpack.c.l.b16 %v8646
    %v8711 = vunpack.c.h.b16 %v8646
    %v8712 = vunpack.c.l.b16 %v8647
    %v8713 = vunpack.c.h.b16 %v8647
    %v8714 = vunpack.c.l.b16 %v8648
    %v8715 = vunpack.c.h.b16 %v8648
    %v8716 = vunpack.c.l.b16 %v8649
    %v8717 = vunpack.c.h.b16 %v8649
    %v8718 = vunpack.c.l.b16 %v8650
    %v8719 = vunpack.c.h.b16 %v8650
    %v8720 = vunpack.c.l.b16 %v8651
    %v8721 = vunpack.c.h.b16 %v8651
    %v8722 = vunpack.c.l.b16 %v8652
    %v8723 = vunpack.c.h.b16 %v8652
    %v8724 = vunpack.c.l.b16 %v8653
    %v8725 = vunpack.c.h.b16 %v8653
    %v8726 = vunpack.c.l.b16 %v8654
    %v8727 = vunpack.c.h.b16 %v8654
    %v8728 = vunpack.c.l.b16 %v8655
    %v8729 = vunpack.c.h.b16 %v8655
    %v8730 = vunpack.c.l.b16 %v8656
    %v8731 = vunpack.c.h.b16 %v8656
    %v8732 = vunpack.c.l.b16 %v8657
    %v8733 = vunpack.c.h.b16 %v8657
    %v8734 = vunpack.c.l.b16 %v8658
    %v8735 = vunpack.c.h.b16 %v8658
    %v8736 = vunpack.c.l.b16 %v8659
    %v8737 = vunpack.c.h.b16 %v8659
    %v8738 = vunpack.c.l.b16 %v8660
    %v8739 = vunpack.c.h.b16 %v8660
    %v8740 = vunpack.c.l.b16 %v8661
    %v8741 = vunpack.c.h.b16 %v8661
    %v8742 = vunpack.c.l.b16 %v8662
    %v8743 = vunpack.c.h.b16 %v8662
    %v8744 = vunpack.c.l.b16 %v8663
    %v8745 = vunpack.c.h.b16 %v8663
    %v8746 = vunpack.c.l.b16 %v8664
    %v8747 = vunpack.c.h.b16 %v8664
    %v8748 = vunpack.c.l.b16 %v8665
    %v8749 = vunpack.c.h.b16 %v8665
    %v8750 = vunpack.c.l.b16 %v8666
    %v8751 = vunpack.c.h.b16 %v8666
    %v8752 = vunpack.c.l.b16 %v8667
    %v8753 = vunpack.c.h.b16 %v8667
    %v8754 = vunpack.c.l.b16 %v8668
    %v8755 = vunpack.c.h.b16 %v8668
    %v8756 = vunpack.c.l.b16 %v8669
    %v8757 = vunpack.c.h.b16 %v8669
    %v8758 = vunpack.c.l.b16 %v8670
    %v8759 = vunpack.c.h.b16 %v8670
    %v8760 = vunpack.c.l.b16 %v8671
    %v8761 = vunpack.c.h.b16 %v8671
    %v8762 = vunpack.c.l.b16 %v8672
    %v8763 = vunpack.c.h.b16 %v8672
    %v8764 = vunpack.c.l.b16 %v8673
    %v8765 = vunpack.c.h.b16 %v8673
    %v8766 = vunpack.c.l.b16 %v8674
    %v8767 = vunpack.c.h.b16 %v8674
    %v8768 = vunpack.c.l.b16 %v8675
    %v8769 = vunpack.c.h.b16 %v8675
    %v8770 = vunpack.c.l.b16 %v8676
    %v8771 = vunpack.c.h.b16 %v8676
    %v8772 = vunpack.c.l.b16 %v8677
    %v8773 = vunpack.c.h.b16 %v8677
    %v8774 = vpack.c.b16 %v8714, %v8710
    %v8775 = vpack.c.b16 %v8715, %v8711
    %v8776 = vpack.c.b16 %v8716, %v8712
    %v8777 = vpack.c.b16 %v8717, %v8713
    %v8778 = vpack.c.b16 %v8722, %v8718
    %v8779 = vpack.c.b16 %v8723, %v8719
    %v8780 = vpack.c.b16 %v8724, %v8720
    %v8781 = vpack.c.b16 %v8725, %v8721
    %v8782 = vpack.c.b16 %v8730, %v8726
    %v8783 = vpack.c.b16 %v8731, %v8727
    %v8784 = vpack.c.b16 %v8732, %v8728
    %v8785 = vpack.c.b16 %v8733, %v8729
    %v8786 = vpack.c.b16 %v8738, %v8734
    %v8787 = vpack.c.b16 %v8739, %v8735
    %v8788 = vpack.c.b16 %v8740, %v8736
    %v8789 = vpack.c.b16 %v8741, %v8737
    %v8790 = vpack.c.b16 %v8746, %v8742
    %v8791 = vpack.c.b16 %v8747, %v8743
    %v8792 = vpack.c.b16 %v8748, %v8744
    %v8793 = vpack.c.b16 %v8749, %v8745
    %v8794 = vpack.c.b16 %v8754, %v8750
    %v8795 = vpack.c.b16 %v8755, %v8751
    %v8796 = vpack.c.b16 %v8756, %v8752
    %v8797 = vpack.c.b16 %v8757, %v8753
    %v8798 = vpack.c.b16 %v8762, %v8758
    %v8799 = vpack.c.b16 %v8763, %v8759
    %v8800 = vpack.c.b16 %v8764, %v8760
    %v8801 = vpack.c.b16 %v8765, %v8761
    %v8802 = vpack.c.b16 %v8770, %v8766
    %v8803 = vpack.c.b16 %v8771, %v8767
    %v8804 = vpack.c.b16 %v8772, %v8768
    %v8805 = vpack.c.b16 %v8773, %v8769
    %8838 = vmatprep.subr.bf16.mxu0 %v8803
    %8839 = vmatpush1.bf16.msra.mxu0 %v8802
    %8840 = vmatprep.subr.bf16.mxu0 %v8799
    %8841 = vmatpush1.bf16.msra.mxu0 %v8798
    %8842 = vmatprep.subr.bf16.mxu0 %v8795
    %8843 = vmatpush1.bf16.msra.mxu0 %v8794
    %8844 = vmatprep.subr.bf16.mxu0 %v8791
    %8845 = vmatpush1.bf16.msra.mxu0 %v8790
    %8846 = vmatprep.subr.bf16.mxu0 %v8787
    %8847 = vmatpush1.bf16.msra.mxu0 %v8786
    %8848 = vmatprep.subr.bf16.mxu0 %v8783
    %8849 = vmatpush1.bf16.msra.mxu0 %v8782
    %8850 = vmatprep.subr.bf16.mxu0 %v8779
    %8851 = vmatpush1.bf16.msra.mxu0 %v8778
    %8852 = vmatprep.subr.bf16.mxu0 %v8775
    %8853 = vmatpush1.bf16.msra.mxu0 %v8774
    %8854 = vmatprep.subr.bf16.mxu0 0
    %8855 = vmatpush2.bf16.msra.mxu0 0
    %8856 = vmatprep.subr.bf16.mxu0 0
    %8857 = vmatpush2.bf16.msra.mxu0 0
    %8858 = vmatprep.subr.bf16.mxu0 0
    %8859 = vmatpush2.bf16.msra.mxu0 0
    %8860 = vmatprep.subr.bf16.mxu0 0
    %8861 = vmatpush2.bf16.msra.mxu0 0
    %8862 = vmatprep.subr.bf16.mxu0 0
    %8863 = vmatpush2.bf16.msra.mxu0 0
    %8864 = vmatprep.subr.bf16.mxu0 0
    %8865 = vmatpush2.bf16.msra.mxu0 0
    %8866 = vmatprep.subr.bf16.mxu0 0
    %8867 = vmatpush2.bf16.msra.mxu0 0
    %8868 = vmatprep.subr.bf16.mxu0 0
    %8869 = vmatpush2.bf16.msra.mxu0 0
    %8870 = vmatprep.mubr.bf16.mxu0 0
    %8871 = vmatmul.mubr.bf16.gmra.mxu0 %v8639
    %v8872 = vpop.f32.mrf.mxu0
    %v8873 = vadd.f32 0.0, %v8872
    %v8874 = vpop.f32.mrf.mxu0
    %v8875 = vadd.f32 0.0, %v8874
    %v8876 = vpop.f32.mrf.mxu0
    %v8877 = vpop.f32.mrf.mxu0
    %8878 = vdwg.mxu0
    %8879 = vmatprep.subr.bf16.mxu0 %v8805
    %8880 = vmatpush1.bf16.msra.mxu0 %v8804
    %8881 = vmatprep.subr.bf16.mxu0 %v8801
    %8882 = vmatpush1.bf16.msra.mxu0 %v8800
    %8883 = vmatprep.subr.bf16.mxu0 %v8797
    %8884 = vmatpush1.bf16.msra.mxu0 %v8796
    %8885 = vmatprep.subr.bf16.mxu0 %v8793
    %8886 = vmatpush1.bf16.msra.mxu0 %v8792
    %8887 = vmatprep.subr.bf16.mxu0 %v8789
    %8888 = vmatpush1.bf16.msra.mxu0 %v8788
    %8889 = vmatprep.subr.bf16.mxu0 %v8785
    %8890 = vmatpush1.bf16.msra.mxu0 %v8784
    %8891 = vmatprep.subr.bf16.mxu0 %v8781
    %8892 = vmatpush1.bf16.msra.mxu0 %v8780
    %8893 = vmatprep.subr.bf16.mxu0 %v8777
    %8894 = vmatpush1.bf16.msra.mxu0 %v8776
    %8895 = vmatprep.subr.bf16.mxu0 0
    %8896 = vmatpush2.bf16.msra.mxu0 0
    %8897 = vmatprep.subr.bf16.mxu0 0
    %8898 = vmatpush2.bf16.msra.mxu0 0
    %8899 = vmatprep.subr.bf16.mxu0 0
    %8900 = vmatpush2.bf16.msra.mxu0 0
    %8901 = vmatprep.subr.bf16.mxu0 0
    %8902 = vmatpush2.bf16.msra.mxu0 0
    %8903 = vmatprep.subr.bf16.mxu0 0
    %8904 = vmatpush2.bf16.msra.mxu0 0
    %8905 = vmatprep.subr.bf16.mxu0 0
    %8906 = vmatpush2.bf16.msra.mxu0 0
    %8907 = vmatprep.subr.bf16.mxu0 0
    %8908 = vmatpush2.bf16.msra.mxu0 0
    %8909 = vmatprep.subr.bf16.mxu0 0
    %8910 = vmatpush2.bf16.msra.mxu0 0
    %8911 = vmatprep.mubr.bf16.mxu0 0
    %8912 = vmatmul.mubr.bf16.gmra.mxu0 %v8639
    %v8913 = vpop.f32.mrf.mxu0
    %v8914 = vadd.f32 0.0, %v8913
    %v8915 = vpop.f32.mrf.mxu0
    %v8916 = vadd.f32 0.0, %v8915
    %v8917 = vpop.f32.mrf.mxu0
    %v8918 = vpop.f32.mrf.mxu0
    %8919 = vdwg.mxu0
    %v8920 = vadd.f32 %v8642, %v8873
    %v8921 = vadd.f32 %v8643, %v8875
    %v8922 = vadd.f32 %v8644, %v8914
    %v8923 = vadd.f32 %v8645, %v8916
    %v8924 = vxor.u32 %v8920, 2147483648
    %v8925 = vmul.f32 %v8924, 1.442695
    %v8926 = vpow.pop %v8925
    %v8927 = vadd.f32 %v8926, 1.0
    %v8928 = vrcp.pop %v8927
    %v8929 = vmul.f32 1.0, %v8928
    %v8930 = vxor.u32 %v8921, 2147483648
    %v8931 = vmul.f32 %v8930, 1.442695
    %v8932 = vpow.pop %v8931
    %v8933 = vadd.f32 %v8932, 1.0
    %v8934 = vrcp.pop %v8933
    %v8935 = vmul.f32 1.0, %v8934
    %v8936 = vtanh.pop %v8922
    %v8937 = vxor.u32 %v8923, 2147483648
    %v8938 = vmul.f32 %v8937, 1.442695
    %v8939 = vpow.pop %v8938
    %v8940 = vadd.f32 %v8939, 1.0
    %v8941 = vrcp.pop %v8940
    %v8942 = vmul.f32 1.0, %v8941
    %v8943 = vmul.f32 %v8935, %v8636
    %v8944 = vmul.f32 %v8929, %v8936
    %v8945 = vadd.f32 %v8943, %v8944
    %v8946 = vtanh.pop %v8945
    %v8947 = vmul.f32 %v8942, %v8946
    %v8948 = vpack.c.bf16 %v8947, %v8947
    %s8949 = scalar_lea.vmem [#allocation14], 48
    %8950 = vst [vmem:[%s8949] sm:$0xf] %v8948
    %v8951 = vld [vmem:[#allocation4 + $0x1a0] sm:$0xff]
    %v8952 = vld [vmem:[#allocation4 + $0x1a8] sm:$0xff]
    %v8953 = vld [vmem:[#allocation4 + $0x1b0] sm:$0xff]
    %v8954 = vld [vmem:[#allocation4 + $0x1b8] sm:$0xff]
    %v8955 = vld [vmem:[#allocation10] sm:$0xff]
    %v8956 = vld [vmem:[#allocation10 + $0x8] sm:$0xff]
    %v8957 = vld [vmem:[#allocation10 + $0x10] sm:$0xff]
    %v8958 = vld [vmem:[#allocation10 + $0x18] sm:$0xff]
    %v8959 = vld [vmem:[#allocation10 + $0x20] sm:$0xff]
    %v8960 = vld [vmem:[#allocation10 + $0x28] sm:$0xff]
    %v8961 = vld [vmem:[#allocation10 + $0x30] sm:$0xff]
    %v8962 = vld [vmem:[#allocation10 + $0x38] sm:$0xff]
    %v8963 = vld [vmem:[#allocation10 + $0x40] sm:$0xff]
    %v8964 = vld [vmem:[#allocation10 + $0x48] sm:$0xff]
    %v8965 = vld [vmem:[#allocation10 + $0x50] sm:$0xff]
    %v8966 = vld [vmem:[#allocation10 + $0x58] sm:$0xff]
    %v8967 = vld [vmem:[#allocation10 + $0x60] sm:$0xff]
    %v8968 = vld [vmem:[#allocation10 + $0x68] sm:$0xff]
    %v8969 = vld [vmem:[#allocation10 + $0x70] sm:$0xff]
    %v8970 = vld [vmem:[#allocation10 + $0x78] sm:$0xff]
    %v8971 = vld [vmem:[#allocation10 + $0x80] sm:$0xff]
    %v8972 = vld [vmem:[#allocation10 + $0x88] sm:$0xff]
    %v8973 = vld [vmem:[#allocation10 + $0x90] sm:$0xff]
    %v8974 = vld [vmem:[#allocation10 + $0x98] sm:$0xff]
    %v8975 = vld [vmem:[#allocation10 + $0xa0] sm:$0xff]
    %v8976 = vld [vmem:[#allocation10 + $0xa8] sm:$0xff]
    %v8977 = vld [vmem:[#allocation10 + $0xb0] sm:$0xff]
    %v8978 = vld [vmem:[#allocation10 + $0xb8] sm:$0xff]
    %v8979 = vld [vmem:[#allocation10 + $0xc0] sm:$0xff]
    %v8980 = vld [vmem:[#allocation10 + $0xc8] sm:$0xff]
    %v8981 = vld [vmem:[#allocation10 + $0xd0] sm:$0xff]
    %v8982 = vld [vmem:[#allocation10 + $0xd8] sm:$0xff]
    %v8983 = vld [vmem:[#allocation10 + $0xe0] sm:$0xff]
    %v8984 = vld [vmem:[#allocation10 + $0xe8] sm:$0xff]
    %v8985 = vld [vmem:[#allocation10 + $0xf0] sm:$0xff]
    %v8986 = vld [vmem:[#allocation10 + $0xf8] sm:$0xff]
    %v9019 = vunpack.c.l.b16 %v8955
    %v9020 = vunpack.c.h.b16 %v8955
    %v9021 = vunpack.c.l.b16 %v8956
    %v9022 = vunpack.c.h.b16 %v8956
    %v9023 = vunpack.c.l.b16 %v8957
    %v9024 = vunpack.c.h.b16 %v8957
    %v9025 = vunpack.c.l.b16 %v8958
    %v9026 = vunpack.c.h.b16 %v8958
    %v9027 = vunpack.c.l.b16 %v8959
    %v9028 = vunpack.c.h.b16 %v8959
    %v9029 = vunpack.c.l.b16 %v8960
    %v9030 = vunpack.c.h.b16 %v8960
    %v9031 = vunpack.c.l.b16 %v8961
    %v9032 = vunpack.c.h.b16 %v8961
    %v9033 = vunpack.c.l.b16 %v8962
    %v9034 = vunpack.c.h.b16 %v8962
    %v9035 = vunpack.c.l.b16 %v8963
    %v9036 = vunpack.c.h.b16 %v8963
    %v9037 = vunpack.c.l.b16 %v8964
    %v9038 = vunpack.c.h.b16 %v8964
    %v9039 = vunpack.c.l.b16 %v8965
    %v9040 = vunpack.c.h.b16 %v8965
    %v9041 = vunpack.c.l.b16 %v8966
    %v9042 = vunpack.c.h.b16 %v8966
    %v9043 = vunpack.c.l.b16 %v8967
    %v9044 = vunpack.c.h.b16 %v8967
    %v9045 = vunpack.c.l.b16 %v8968
    %v9046 = vunpack.c.h.b16 %v8968
    %v9047 = vunpack.c.l.b16 %v8969
    %v9048 = vunpack.c.h.b16 %v8969
    %v9049 = vunpack.c.l.b16 %v8970
    %v9050 = vunpack.c.h.b16 %v8970
    %v9051 = vunpack.c.l.b16 %v8971
    %v9052 = vunpack.c.h.b16 %v8971
    %v9053 = vunpack.c.l.b16 %v8972
    %v9054 = vunpack.c.h.b16 %v8972
    %v9055 = vunpack.c.l.b16 %v8973
    %v9056 = vunpack.c.h.b16 %v8973
    %v9057 = vunpack.c.l.b16 %v8974
    %v9058 = vunpack.c.h.b16 %v8974
    %v9059 = vunpack.c.l.b16 %v8975
    %v9060 = vunpack.c.h.b16 %v8975
    %v9061 = vunpack.c.l.b16 %v8976
    %v9062 = vunpack.c.h.b16 %v8976
    %v9063 = vunpack.c.l.b16 %v8977
    %v9064 = vunpack.c.h.b16 %v8977
    %v9065 = vunpack.c.l.b16 %v8978
    %v9066 = vunpack.c.h.b16 %v8978
    %v9067 = vunpack.c.l.b16 %v8979
    %v9068 = vunpack.c.h.b16 %v8979
    %v9069 = vunpack.c.l.b16 %v8980
    %v9070 = vunpack.c.h.b16 %v8980
    %v9071 = vunpack.c.l.b16 %v8981
    %v9072 = vunpack.c.h.b16 %v8981
    %v9073 = vunpack.c.l.b16 %v8982
    %v9074 = vunpack.c.h.b16 %v8982
    %v9075 = vunpack.c.l.b16 %v8983
    %v9076 = vunpack.c.h.b16 %v8983
    %v9077 = vunpack.c.l.b16 %v8984
    %v9078 = vunpack.c.h.b16 %v8984
    %v9079 = vunpack.c.l.b16 %v8985
    %v9080 = vunpack.c.h.b16 %v8985
    %v9081 = vunpack.c.l.b16 %v8986
    %v9082 = vunpack.c.h.b16 %v8986
    %v9083 = vpack.c.b16 %v9023, %v9019
    %v9084 = vpack.c.b16 %v9024, %v9020
    %v9085 = vpack.c.b16 %v9025, %v9021
    %v9086 = vpack.c.b16 %v9026, %v9022
    %v9087 = vpack.c.b16 %v9031, %v9027
    %v9088 = vpack.c.b16 %v9032, %v9028
    %v9089 = vpack.c.b16 %v9033, %v9029
    %v9090 = vpack.c.b16 %v9034, %v9030
    %v9091 = vpack.c.b16 %v9039, %v9035
    %v9092 = vpack.c.b16 %v9040, %v9036
    %v9093 = vpack.c.b16 %v9041, %v9037
    %v9094 = vpack.c.b16 %v9042, %v9038
    %v9095 = vpack.c.b16 %v9047, %v9043
    %v9096 = vpack.c.b16 %v9048, %v9044
    %v9097 = vpack.c.b16 %v9049, %v9045
    %v9098 = vpack.c.b16 %v9050, %v9046
    %v9099 = vpack.c.b16 %v9055, %v9051
    %v9100 = vpack.c.b16 %v9056, %v9052
    %v9101 = vpack.c.b16 %v9057, %v9053
    %v9102 = vpack.c.b16 %v9058, %v9054
    %v9103 = vpack.c.b16 %v9063, %v9059
    %v9104 = vpack.c.b16 %v9064, %v9060
    %v9105 = vpack.c.b16 %v9065, %v9061
    %v9106 = vpack.c.b16 %v9066, %v9062
    %v9107 = vpack.c.b16 %v9071, %v9067
    %v9108 = vpack.c.b16 %v9072, %v9068
    %v9109 = vpack.c.b16 %v9073, %v9069
    %v9110 = vpack.c.b16 %v9074, %v9070
    %v9111 = vpack.c.b16 %v9079, %v9075
    %v9112 = vpack.c.b16 %v9080, %v9076
    %v9113 = vpack.c.b16 %v9081, %v9077
    %v9114 = vpack.c.b16 %v9082, %v9078
    %9147 = vmatprep.subr.bf16.mxu0 %v9112
    %9148 = vmatpush1.bf16.msra.mxu0 %v9111
    %9149 = vmatprep.subr.bf16.mxu0 %v9108
    %9150 = vmatpush1.bf16.msra.mxu0 %v9107
    %9151 = vmatprep.subr.bf16.mxu0 %v9104
    %9152 = vmatpush1.bf16.msra.mxu0 %v9103
    %9153 = vmatprep.subr.bf16.mxu0 %v9100
    %9154 = vmatpush1.bf16.msra.mxu0 %v9099
    %9155 = vmatprep.subr.bf16.mxu0 %v9096
    %9156 = vmatpush1.bf16.msra.mxu0 %v9095
    %9157 = vmatprep.subr.bf16.mxu0 %v9092
    %9158 = vmatpush1.bf16.msra.mxu0 %v9091
    %9159 = vmatprep.subr.bf16.mxu0 %v9088
    %9160 = vmatpush1.bf16.msra.mxu0 %v9087
    %9161 = vmatprep.subr.bf16.mxu0 %v9084
    %9162 = vmatpush1.bf16.msra.mxu0 %v9083
    %9163 = vmatprep.subr.bf16.mxu0 0
    %9164 = vmatpush2.bf16.msra.mxu0 0
    %9165 = vmatprep.subr.bf16.mxu0 0
    %9166 = vmatpush2.bf16.msra.mxu0 0
    %9167 = vmatprep.subr.bf16.mxu0 0
    %9168 = vmatpush2.bf16.msra.mxu0 0
    %9169 = vmatprep.subr.bf16.mxu0 0
    %9170 = vmatpush2.bf16.msra.mxu0 0
    %9171 = vmatprep.subr.bf16.mxu0 0
    %9172 = vmatpush2.bf16.msra.mxu0 0
    %9173 = vmatprep.subr.bf16.mxu0 0
    %9174 = vmatpush2.bf16.msra.mxu0 0
    %9175 = vmatprep.subr.bf16.mxu0 0
    %9176 = vmatpush2.bf16.msra.mxu0 0
    %9177 = vmatprep.subr.bf16.mxu0 0
    %9178 = vmatpush2.bf16.msra.mxu0 0
    %9179 = vmatprep.mubr.bf16.mxu0 0
    %9180 = vmatmul.mubr.bf16.gmra.mxu0 %v8948
    %v9181 = vpop.f32.mrf.mxu0
    %v9182 = vadd.f32 0.0, %v9181
    %v9183 = vpop.f32.mrf.mxu0
    %v9184 = vadd.f32 0.0, %v9183
    %v9185 = vpop.f32.mrf.mxu0
    %v9186 = vpop.f32.mrf.mxu0
    %9187 = vdwg.mxu0
    %9188 = vmatprep.subr.bf16.mxu0 %v9114
    %9189 = vmatpush1.bf16.msra.mxu0 %v9113
    %9190 = vmatprep.subr.bf16.mxu0 %v9110
    %9191 = vmatpush1.bf16.msra.mxu0 %v9109
    %9192 = vmatprep.subr.bf16.mxu0 %v9106
    %9193 = vmatpush1.bf16.msra.mxu0 %v9105
    %9194 = vmatprep.subr.bf16.mxu0 %v9102
    %9195 = vmatpush1.bf16.msra.mxu0 %v9101
    %9196 = vmatprep.subr.bf16.mxu0 %v9098
    %9197 = vmatpush1.bf16.msra.mxu0 %v9097
    %9198 = vmatprep.subr.bf16.mxu0 %v9094
    %9199 = vmatpush1.bf16.msra.mxu0 %v9093
    %9200 = vmatprep.subr.bf16.mxu0 %v9090
    %9201 = vmatpush1.bf16.msra.mxu0 %v9089
    %9202 = vmatprep.subr.bf16.mxu0 %v9086
    %9203 = vmatpush1.bf16.msra.mxu0 %v9085
    %9204 = vmatprep.subr.bf16.mxu0 0
    %9205 = vmatpush2.bf16.msra.mxu0 0
    %9206 = vmatprep.subr.bf16.mxu0 0
    %9207 = vmatpush2.bf16.msra.mxu0 0
    %9208 = vmatprep.subr.bf16.mxu0 0
    %9209 = vmatpush2.bf16.msra.mxu0 0
    %9210 = vmatprep.subr.bf16.mxu0 0
    %9211 = vmatpush2.bf16.msra.mxu0 0
    %9212 = vmatprep.subr.bf16.mxu0 0
    %9213 = vmatpush2.bf16.msra.mxu0 0
    %9214 = vmatprep.subr.bf16.mxu0 0
    %9215 = vmatpush2.bf16.msra.mxu0 0
    %9216 = vmatprep.subr.bf16.mxu0 0
    %9217 = vmatpush2.bf16.msra.mxu0 0
    %9218 = vmatprep.subr.bf16.mxu0 0
    %9219 = vmatpush2.bf16.msra.mxu0 0
    %9220 = vmatprep.mubr.bf16.mxu0 0
    %9221 = vmatmul.mubr.bf16.gmra.mxu0 %v8948
    %v9222 = vpop.f32.mrf.mxu0
    %v9223 = vadd.f32 0.0, %v9222
    %v9224 = vpop.f32.mrf.mxu0
    %v9225 = vadd.f32 0.0, %v9224
    %v9226 = vpop.f32.mrf.mxu0
    %v9227 = vpop.f32.mrf.mxu0
    %9228 = vdwg.mxu0
    %v9229 = vadd.f32 %v8951, %v9182
    %v9230 = vadd.f32 %v8952, %v9184
    %v9231 = vadd.f32 %v8953, %v9223
    %v9232 = vadd.f32 %v8954, %v9225
    %v9233 = vxor.u32 %v9229, 2147483648
    %v9234 = vmul.f32 %v9233, 1.442695
    %v9235 = vpow.pop %v9234
    %v9236 = vadd.f32 %v9235, 1.0
    %v9237 = vrcp.pop %v9236
    %v9238 = vmul.f32 1.0, %v9237
    %v9239 = vxor.u32 %v9230, 2147483648
    %v9240 = vmul.f32 %v9239, 1.442695
    %v9241 = vpow.pop %v9240
    %v9242 = vadd.f32 %v9241, 1.0
    %v9243 = vrcp.pop %v9242
    %v9244 = vmul.f32 1.0, %v9243
    %v9245 = vtanh.pop %v9231
    %v9246 = vxor.u32 %v9232, 2147483648
    %v9247 = vmul.f32 %v9246, 1.442695
    %v9248 = vpow.pop %v9247
    %v9249 = vadd.f32 %v9248, 1.0
    %v9250 = vrcp.pop %v9249
    %v9251 = vmul.f32 1.0, %v9250
    %v9252 = vmul.f32 %v9244, %v8945
    %v9253 = vmul.f32 %v9238, %v9245
    %v9254 = vadd.f32 %v9252, %v9253
    %v9255 = vtanh.pop %v9254
    %v9256 = vmul.f32 %v9251, %v9255
    %v9257 = vpack.c.bf16 %v9256, %v9256
    %s9258 = scalar_lea.vmem [#allocation14], 52
    %9259 = vst [vmem:[%s9258] sm:$0xf] %v9257
    %v9260 = vld [vmem:[#allocation4 + $0x1c0] sm:$0xff]
    %v9261 = vld [vmem:[#allocation4 + $0x1c8] sm:$0xff]
    %v9262 = vld [vmem:[#allocation4 + $0x1d0] sm:$0xff]
    %v9263 = vld [vmem:[#allocation4 + $0x1d8] sm:$0xff]
    %v9264 = vld [vmem:[#allocation10] sm:$0xff]
    %v9265 = vld [vmem:[#allocation10 + $0x8] sm:$0xff]
    %v9266 = vld [vmem:[#allocation10 + $0x10] sm:$0xff]
    %v9267 = vld [vmem:[#allocation10 + $0x18] sm:$0xff]
    %v9268 = vld [vmem:[#allocation10 + $0x20] sm:$0xff]
    %v9269 = vld [vmem:[#allocation10 + $0x28] sm:$0xff]
    %v9270 = vld [vmem:[#allocation10 + $0x30] sm:$0xff]
    %v9271 = vld [vmem:[#allocation10 + $0x38] sm:$0xff]
    %v9272 = vld [vmem:[#allocation10 + $0x40] sm:$0xff]
    %v9273 = vld [vmem:[#allocation10 + $0x48] sm:$0xff]
    %v9274 = vld [vmem:[#allocation10 + $0x50] sm:$0xff]
    %v9275 = vld [vmem:[#allocation10 + $0x58] sm:$0xff]
    %v9276 = vld [vmem:[#allocation10 + $0x60] sm:$0xff]
    %v9277 = vld [vmem:[#allocation10 + $0x68] sm:$0xff]
    %v9278 = vld [vmem:[#allocation10 + $0x70] sm:$0xff]
    %v9279 = vld [vmem:[#allocation10 + $0x78] sm:$0xff]
    %v9280 = vld [vmem:[#allocation10 + $0x80] sm:$0xff]
    %v9281 = vld [vmem:[#allocation10 + $0x88] sm:$0xff]
    %v9282 = vld [vmem:[#allocation10 + $0x90] sm:$0xff]
    %v9283 = vld [vmem:[#allocation10 + $0x98] sm:$0xff]
    %v9284 = vld [vmem:[#allocation10 + $0xa0] sm:$0xff]
    %v9285 = vld [vmem:[#allocation10 + $0xa8] sm:$0xff]
    %v9286 = vld [vmem:[#allocation10 + $0xb0] sm:$0xff]
    %v9287 = vld [vmem:[#allocation10 + $0xb8] sm:$0xff]
    %v9288 = vld [vmem:[#allocation10 + $0xc0] sm:$0xff]
    %v9289 = vld [vmem:[#allocation10 + $0xc8] sm:$0xff]
    %v9290 = vld [vmem:[#allocation10 + $0xd0] sm:$0xff]
    %v9291 = vld [vmem:[#allocation10 + $0xd8] sm:$0xff]
    %v9292 = vld [vmem:[#allocation10 + $0xe0] sm:$0xff]
    %v9293 = vld [vmem:[#allocation10 + $0xe8] sm:$0xff]
    %v9294 = vld [vmem:[#allocation10 + $0xf0] sm:$0xff]
    %v9295 = vld [vmem:[#allocation10 + $0xf8] sm:$0xff]
    %v9328 = vunpack.c.l.b16 %v9264
    %v9329 = vunpack.c.h.b16 %v9264
    %v9330 = vunpack.c.l.b16 %v9265
    %v9331 = vunpack.c.h.b16 %v9265
    %v9332 = vunpack.c.l.b16 %v9266
    %v9333 = vunpack.c.h.b16 %v9266
    %v9334 = vunpack.c.l.b16 %v9267
    %v9335 = vunpack.c.h.b16 %v9267
    %v9336 = vunpack.c.l.b16 %v9268
    %v9337 = vunpack.c.h.b16 %v9268
    %v9338 = vunpack.c.l.b16 %v9269
    %v9339 = vunpack.c.h.b16 %v9269
    %v9340 = vunpack.c.l.b16 %v9270
    %v9341 = vunpack.c.h.b16 %v9270
    %v9342 = vunpack.c.l.b16 %v9271
    %v9343 = vunpack.c.h.b16 %v9271
    %v9344 = vunpack.c.l.b16 %v9272
    %v9345 = vunpack.c.h.b16 %v9272
    %v9346 = vunpack.c.l.b16 %v9273
    %v9347 = vunpack.c.h.b16 %v9273
    %v9348 = vunpack.c.l.b16 %v9274
    %v9349 = vunpack.c.h.b16 %v9274
    %v9350 = vunpack.c.l.b16 %v9275
    %v9351 = vunpack.c.h.b16 %v9275
    %v9352 = vunpack.c.l.b16 %v9276
    %v9353 = vunpack.c.h.b16 %v9276
    %v9354 = vunpack.c.l.b16 %v9277
    %v9355 = vunpack.c.h.b16 %v9277
    %v9356 = vunpack.c.l.b16 %v9278
    %v9357 = vunpack.c.h.b16 %v9278
    %v9358 = vunpack.c.l.b16 %v9279
    %v9359 = vunpack.c.h.b16 %v9279
    %v9360 = vunpack.c.l.b16 %v9280
    %v9361 = vunpack.c.h.b16 %v9280
    %v9362 = vunpack.c.l.b16 %v9281
    %v9363 = vunpack.c.h.b16 %v9281
    %v9364 = vunpack.c.l.b16 %v9282
    %v9365 = vunpack.c.h.b16 %v9282
    %v9366 = vunpack.c.l.b16 %v9283
    %v9367 = vunpack.c.h.b16 %v9283
    %v9368 = vunpack.c.l.b16 %v9284
    %v9369 = vunpack.c.h.b16 %v9284
    %v9370 = vunpack.c.l.b16 %v9285
    %v9371 = vunpack.c.h.b16 %v9285
    %v9372 = vunpack.c.l.b16 %v9286
    %v9373 = vunpack.c.h.b16 %v9286
    %v9374 = vunpack.c.l.b16 %v9287
    %v9375 = vunpack.c.h.b16 %v9287
    %v9376 = vunpack.c.l.b16 %v9288
    %v9377 = vunpack.c.h.b16 %v9288
    %v9378 = vunpack.c.l.b16 %v9289
    %v9379 = vunpack.c.h.b16 %v9289
    %v9380 = vunpack.c.l.b16 %v9290
    %v9381 = vunpack.c.h.b16 %v9290
    %v9382 = vunpack.c.l.b16 %v9291
    %v9383 = vunpack.c.h.b16 %v9291
    %v9384 = vunpack.c.l.b16 %v9292
    %v9385 = vunpack.c.h.b16 %v9292
    %v9386 = vunpack.c.l.b16 %v9293
    %v9387 = vunpack.c.h.b16 %v9293
    %v9388 = vunpack.c.l.b16 %v9294
    %v9389 = vunpack.c.h.b16 %v9294
    %v9390 = vunpack.c.l.b16 %v9295
    %v9391 = vunpack.c.h.b16 %v9295
    %v9392 = vpack.c.b16 %v9332, %v9328
    %v9393 = vpack.c.b16 %v9333, %v9329
    %v9394 = vpack.c.b16 %v9334, %v9330
    %v9395 = vpack.c.b16 %v9335, %v9331
    %v9396 = vpack.c.b16 %v9340, %v9336
    %v9397 = vpack.c.b16 %v9341, %v9337
    %v9398 = vpack.c.b16 %v9342, %v9338
    %v9399 = vpack.c.b16 %v9343, %v9339
    %v9400 = vpack.c.b16 %v9348, %v9344
    %v9401 = vpack.c.b16 %v9349, %v9345
    %v9402 = vpack.c.b16 %v9350, %v9346
    %v9403 = vpack.c.b16 %v9351, %v9347
    %v9404 = vpack.c.b16 %v9356, %v9352
    %v9405 = vpack.c.b16 %v9357, %v9353
    %v9406 = vpack.c.b16 %v9358, %v9354
    %v9407 = vpack.c.b16 %v9359, %v9355
    %v9408 = vpack.c.b16 %v9364, %v9360
    %v9409 = vpack.c.b16 %v9365, %v9361
    %v9410 = vpack.c.b16 %v9366, %v9362
    %v9411 = vpack.c.b16 %v9367, %v9363
    %v9412 = vpack.c.b16 %v9372, %v9368
    %v9413 = vpack.c.b16 %v9373, %v9369
    %v9414 = vpack.c.b16 %v9374, %v9370
    %v9415 = vpack.c.b16 %v9375, %v9371
    %v9416 = vpack.c.b16 %v9380, %v9376
    %v9417 = vpack.c.b16 %v9381, %v9377
    %v9418 = vpack.c.b16 %v9382, %v9378
    %v9419 = vpack.c.b16 %v9383, %v9379
    %v9420 = vpack.c.b16 %v9388, %v9384
    %v9421 = vpack.c.b16 %v9389, %v9385
    %v9422 = vpack.c.b16 %v9390, %v9386
    %v9423 = vpack.c.b16 %v9391, %v9387
    %9456 = vmatprep.subr.bf16.mxu0 %v9421
    %9457 = vmatpush1.bf16.msra.mxu0 %v9420
    %9458 = vmatprep.subr.bf16.mxu0 %v9417
    %9459 = vmatpush1.bf16.msra.mxu0 %v9416
    %9460 = vmatprep.subr.bf16.mxu0 %v9413
    %9461 = vmatpush1.bf16.msra.mxu0 %v9412
    %9462 = vmatprep.subr.bf16.mxu0 %v9409
    %9463 = vmatpush1.bf16.msra.mxu0 %v9408
    %9464 = vmatprep.subr.bf16.mxu0 %v9405
    %9465 = vmatpush1.bf16.msra.mxu0 %v9404
    %9466 = vmatprep.subr.bf16.mxu0 %v9401
    %9467 = vmatpush1.bf16.msra.mxu0 %v9400
    %9468 = vmatprep.subr.bf16.mxu0 %v9397
    %9469 = vmatpush1.bf16.msra.mxu0 %v9396
    %9470 = vmatprep.subr.bf16.mxu0 %v9393
    %9471 = vmatpush1.bf16.msra.mxu0 %v9392
    %9472 = vmatprep.subr.bf16.mxu0 0
    %9473 = vmatpush2.bf16.msra.mxu0 0
    %9474 = vmatprep.subr.bf16.mxu0 0
    %9475 = vmatpush2.bf16.msra.mxu0 0
    %9476 = vmatprep.subr.bf16.mxu0 0
    %9477 = vmatpush2.bf16.msra.mxu0 0
    %9478 = vmatprep.subr.bf16.mxu0 0
    %9479 = vmatpush2.bf16.msra.mxu0 0
    %9480 = vmatprep.subr.bf16.mxu0 0
    %9481 = vmatpush2.bf16.msra.mxu0 0
    %9482 = vmatprep.subr.bf16.mxu0 0
    %9483 = vmatpush2.bf16.msra.mxu0 0
    %9484 = vmatprep.subr.bf16.mxu0 0
    %9485 = vmatpush2.bf16.msra.mxu0 0
    %9486 = vmatprep.subr.bf16.mxu0 0
    %9487 = vmatpush2.bf16.msra.mxu0 0
    %9488 = vmatprep.mubr.bf16.mxu0 0
    %9489 = vmatmul.mubr.bf16.gmra.mxu0 %v9257
    %v9490 = vpop.f32.mrf.mxu0
    %v9491 = vadd.f32 0.0, %v9490
    %v9492 = vpop.f32.mrf.mxu0
    %v9493 = vadd.f32 0.0, %v9492
    %v9494 = vpop.f32.mrf.mxu0
    %v9495 = vpop.f32.mrf.mxu0
    %9496 = vdwg.mxu0
    %9497 = vmatprep.subr.bf16.mxu0 %v9423
    %9498 = vmatpush1.bf16.msra.mxu0 %v9422
    %9499 = vmatprep.subr.bf16.mxu0 %v9419
    %9500 = vmatpush1.bf16.msra.mxu0 %v9418
    %9501 = vmatprep.subr.bf16.mxu0 %v9415
    %9502 = vmatpush1.bf16.msra.mxu0 %v9414
    %9503 = vmatprep.subr.bf16.mxu0 %v9411
    %9504 = vmatpush1.bf16.msra.mxu0 %v9410
    %9505 = vmatprep.subr.bf16.mxu0 %v9407
    %9506 = vmatpush1.bf16.msra.mxu0 %v9406
    %9507 = vmatprep.subr.bf16.mxu0 %v9403
    %9508 = vmatpush1.bf16.msra.mxu0 %v9402
    %9509 = vmatprep.subr.bf16.mxu0 %v9399
    %9510 = vmatpush1.bf16.msra.mxu0 %v9398
    %9511 = vmatprep.subr.bf16.mxu0 %v9395
    %9512 = vmatpush1.bf16.msra.mxu0 %v9394
    %9513 = vmatprep.subr.bf16.mxu0 0
    %9514 = vmatpush2.bf16.msra.mxu0 0
    %9515 = vmatprep.subr.bf16.mxu0 0
    %9516 = vmatpush2.bf16.msra.mxu0 0
    %9517 = vmatprep.subr.bf16.mxu0 0
    %9518 = vmatpush2.bf16.msra.mxu0 0
    %9519 = vmatprep.subr.bf16.mxu0 0
    %9520 = vmatpush2.bf16.msra.mxu0 0
    %9521 = vmatprep.subr.bf16.mxu0 0
    %9522 = vmatpush2.bf16.msra.mxu0 0
    %9523 = vmatprep.subr.bf16.mxu0 0
    %9524 = vmatpush2.bf16.msra.mxu0 0
    %9525 = vmatprep.subr.bf16.mxu0 0
    %9526 = vmatpush2.bf16.msra.mxu0 0
    %9527 = vmatprep.subr.bf16.mxu0 0
    %9528 = vmatpush2.bf16.msra.mxu0 0
    %9529 = vmatprep.mubr.bf16.mxu0 0
    %9530 = vmatmul.mubr.bf16.gmra.mxu0 %v9257
    %v9531 = vpop.f32.mrf.mxu0
    %v9532 = vadd.f32 0.0, %v9531
    %v9533 = vpop.f32.mrf.mxu0
    %v9534 = vadd.f32 0.0, %v9533
    %v9535 = vpop.f32.mrf.mxu0
    %v9536 = vpop.f32.mrf.mxu0
    %9537 = vdwg.mxu0
    %v9538 = vadd.f32 %v9260, %v9491
    %v9539 = vadd.f32 %v9261, %v9493
    %v9540 = vadd.f32 %v9262, %v9532
    %v9541 = vadd.f32 %v9263, %v9534
    %v9542 = vxor.u32 %v9538, 2147483648
    %v9543 = vmul.f32 %v9542, 1.442695
    %v9544 = vpow.pop %v9543
    %v9545 = vadd.f32 %v9544, 1.0
    %v9546 = vrcp.pop %v9545
    %v9547 = vmul.f32 1.0, %v9546
    %v9548 = vxor.u32 %v9539, 2147483648
    %v9549 = vmul.f32 %v9548, 1.442695
    %v9550 = vpow.pop %v9549
    %v9551 = vadd.f32 %v9550, 1.0
    %v9552 = vrcp.pop %v9551
    %v9553 = vmul.f32 1.0, %v9552
    %v9554 = vtanh.pop %v9540
    %v9555 = vxor.u32 %v9541, 2147483648
    %v9556 = vmul.f32 %v9555, 1.442695
    %v9557 = vpow.pop %v9556
    %v9558 = vadd.f32 %v9557, 1.0
    %v9559 = vrcp.pop %v9558
    %v9560 = vmul.f32 1.0, %v9559
    %v9561 = vmul.f32 %v9553, %v9254
    %v9562 = vmul.f32 %v9547, %v9554
    %v9563 = vadd.f32 %v9561, %v9562
    %v9564 = vtanh.pop %v9563
    %v9565 = vmul.f32 %v9560, %v9564
    %v9566 = vpack.c.bf16 %v9565, %v9565
    %s9567 = scalar_lea.vmem [#allocation14], 56
    %9568 = vst [vmem:[%s9567] sm:$0xf] %v9566
    %v9569 = vld [vmem:[#allocation4 + $0x1e0] sm:$0xff]
    %v9570 = vld [vmem:[#allocation4 + $0x1e8] sm:$0xff]
    %v9571 = vld [vmem:[#allocation4 + $0x1f0] sm:$0xff]
    %v9572 = vld [vmem:[#allocation4 + $0x1f8] sm:$0xff]
    %v9573 = vld [vmem:[#allocation10] sm:$0xff]
    %v9574 = vld [vmem:[#allocation10 + $0x8] sm:$0xff]
    %v9575 = vld [vmem:[#allocation10 + $0x10] sm:$0xff]
    %v9576 = vld [vmem:[#allocation10 + $0x18] sm:$0xff]
    %v9577 = vld [vmem:[#allocation10 + $0x20] sm:$0xff]
    %v9578 = vld [vmem:[#allocation10 + $0x28] sm:$0xff]
    %v9579 = vld [vmem:[#allocation10 + $0x30] sm:$0xff]
    %v9580 = vld [vmem:[#allocation10 + $0x38] sm:$0xff]
    %v9581 = vld [vmem:[#allocation10 + $0x40] sm:$0xff]
    %v9582 = vld [vmem:[#allocation10 + $0x48] sm:$0xff]
    %v9583 = vld [vmem:[#allocation10 + $0x50] sm:$0xff]
    %v9584 = vld [vmem:[#allocation10 + $0x58] sm:$0xff]
    %v9585 = vld [vmem:[#allocation10 + $0x60] sm:$0xff]
    %v9586 = vld [vmem:[#allocation10 + $0x68] sm:$0xff]
    %v9587 = vld [vmem:[#allocation10 + $0x70] sm:$0xff]
    %v9588 = vld [vmem:[#allocation10 + $0x78] sm:$0xff]
    %v9589 = vld [vmem:[#allocation10 + $0x80] sm:$0xff]
    %v9590 = vld [vmem:[#allocation10 + $0x88] sm:$0xff]
    %v9591 = vld [vmem:[#allocation10 + $0x90] sm:$0xff]
    %v9592 = vld [vmem:[#allocation10 + $0x98] sm:$0xff]
    %v9593 = vld [vmem:[#allocation10 + $0xa0] sm:$0xff]
    %v9594 = vld [vmem:[#allocation10 + $0xa8] sm:$0xff]
    %v9595 = vld [vmem:[#allocation10 + $0xb0] sm:$0xff]
    %v9596 = vld [vmem:[#allocation10 + $0xb8] sm:$0xff]
    %v9597 = vld [vmem:[#allocation10 + $0xc0] sm:$0xff]
    %v9598 = vld [vmem:[#allocation10 + $0xc8] sm:$0xff]
    %v9599 = vld [vmem:[#allocation10 + $0xd0] sm:$0xff]
    %v9600 = vld [vmem:[#allocation10 + $0xd8] sm:$0xff]
    %v9601 = vld [vmem:[#allocation10 + $0xe0] sm:$0xff]
    %v9602 = vld [vmem:[#allocation10 + $0xe8] sm:$0xff]
    %v9603 = vld [vmem:[#allocation10 + $0xf0] sm:$0xff]
    %v9604 = vld [vmem:[#allocation10 + $0xf8] sm:$0xff]
    %v9637 = vunpack.c.l.b16 %v9573
    %v9638 = vunpack.c.h.b16 %v9573
    %v9639 = vunpack.c.l.b16 %v9574
    %v9640 = vunpack.c.h.b16 %v9574
    %v9641 = vunpack.c.l.b16 %v9575
    %v9642 = vunpack.c.h.b16 %v9575
    %v9643 = vunpack.c.l.b16 %v9576
    %v9644 = vunpack.c.h.b16 %v9576
    %v9645 = vunpack.c.l.b16 %v9577
    %v9646 = vunpack.c.h.b16 %v9577
    %v9647 = vunpack.c.l.b16 %v9578
    %v9648 = vunpack.c.h.b16 %v9578
    %v9649 = vunpack.c.l.b16 %v9579
    %v9650 = vunpack.c.h.b16 %v9579
    %v9651 = vunpack.c.l.b16 %v9580
    %v9652 = vunpack.c.h.b16 %v9580
    %v9653 = vunpack.c.l.b16 %v9581
    %v9654 = vunpack.c.h.b16 %v9581
    %v9655 = vunpack.c.l.b16 %v9582
    %v9656 = vunpack.c.h.b16 %v9582
    %v9657 = vunpack.c.l.b16 %v9583
    %v9658 = vunpack.c.h.b16 %v9583
    %v9659 = vunpack.c.l.b16 %v9584
    %v9660 = vunpack.c.h.b16 %v9584
    %v9661 = vunpack.c.l.b16 %v9585
    %v9662 = vunpack.c.h.b16 %v9585
    %v9663 = vunpack.c.l.b16 %v9586
    %v9664 = vunpack.c.h.b16 %v9586
    %v9665 = vunpack.c.l.b16 %v9587
    %v9666 = vunpack.c.h.b16 %v9587
    %v9667 = vunpack.c.l.b16 %v9588
    %v9668 = vunpack.c.h.b16 %v9588
    %v9669 = vunpack.c.l.b16 %v9589
    %v9670 = vunpack.c.h.b16 %v9589
    %v9671 = vunpack.c.l.b16 %v9590
    %v9672 = vunpack.c.h.b16 %v9590
    %v9673 = vunpack.c.l.b16 %v9591
    %v9674 = vunpack.c.h.b16 %v9591
    %v9675 = vunpack.c.l.b16 %v9592
    %v9676 = vunpack.c.h.b16 %v9592
    %v9677 = vunpack.c.l.b16 %v9593
    %v9678 = vunpack.c.h.b16 %v9593
    %v9679 = vunpack.c.l.b16 %v9594
    %v9680 = vunpack.c.h.b16 %v9594
    %v9681 = vunpack.c.l.b16 %v9595
    %v9682 = vunpack.c.h.b16 %v9595
    %v9683 = vunpack.c.l.b16 %v9596
    %v9684 = vunpack.c.h.b16 %v9596
    %v9685 = vunpack.c.l.b16 %v9597
    %v9686 = vunpack.c.h.b16 %v9597
    %v9687 = vunpack.c.l.b16 %v9598
    %v9688 = vunpack.c.h.b16 %v9598
    %v9689 = vunpack.c.l.b16 %v9599
    %v9690 = vunpack.c.h.b16 %v9599
    %v9691 = vunpack.c.l.b16 %v9600
    %v9692 = vunpack.c.h.b16 %v9600
    %v9693 = vunpack.c.l.b16 %v9601
    %v9694 = vunpack.c.h.b16 %v9601
    %v9695 = vunpack.c.l.b16 %v9602
    %v9696 = vunpack.c.h.b16 %v9602
    %v9697 = vunpack.c.l.b16 %v9603
    %v9698 = vunpack.c.h.b16 %v9603
    %v9699 = vunpack.c.l.b16 %v9604
    %v9700 = vunpack.c.h.b16 %v9604
    %v9701 = vpack.c.b16 %v9641, %v9637
    %v9702 = vpack.c.b16 %v9642, %v9638
    %v9703 = vpack.c.b16 %v9643, %v9639
    %v9704 = vpack.c.b16 %v9644, %v9640
    %v9705 = vpack.c.b16 %v9649, %v9645
    %v9706 = vpack.c.b16 %v9650, %v9646
    %v9707 = vpack.c.b16 %v9651, %v9647
    %v9708 = vpack.c.b16 %v9652, %v9648
    %v9709 = vpack.c.b16 %v9657, %v9653
    %v9710 = vpack.c.b16 %v9658, %v9654
    %v9711 = vpack.c.b16 %v9659, %v9655
    %v9712 = vpack.c.b16 %v9660, %v9656
    %v9713 = vpack.c.b16 %v9665, %v9661
    %v9714 = vpack.c.b16 %v9666, %v9662
    %v9715 = vpack.c.b16 %v9667, %v9663
    %v9716 = vpack.c.b16 %v9668, %v9664
    %v9717 = vpack.c.b16 %v9673, %v9669
    %v9718 = vpack.c.b16 %v9674, %v9670
    %v9719 = vpack.c.b16 %v9675, %v9671
    %v9720 = vpack.c.b16 %v9676, %v9672
    %v9721 = vpack.c.b16 %v9681, %v9677
    %v9722 = vpack.c.b16 %v9682, %v9678
    %v9723 = vpack.c.b16 %v9683, %v9679
    %v9724 = vpack.c.b16 %v9684, %v9680
    %v9725 = vpack.c.b16 %v9689, %v9685
    %v9726 = vpack.c.b16 %v9690, %v9686
    %v9727 = vpack.c.b16 %v9691, %v9687
    %v9728 = vpack.c.b16 %v9692, %v9688
    %v9729 = vpack.c.b16 %v9697, %v9693
    %v9730 = vpack.c.b16 %v9698, %v9694
    %v9731 = vpack.c.b16 %v9699, %v9695
    %v9732 = vpack.c.b16 %v9700, %v9696
    %9765 = vmatprep.subr.bf16.mxu0 %v9730
    %9766 = vmatpush1.bf16.msra.mxu0 %v9729
    %9767 = vmatprep.subr.bf16.mxu0 %v9726
    %9768 = vmatpush1.bf16.msra.mxu0 %v9725
    %9769 = vmatprep.subr.bf16.mxu0 %v9722
    %9770 = vmatpush1.bf16.msra.mxu0 %v9721
    %9771 = vmatprep.subr.bf16.mxu0 %v9718
    %9772 = vmatpush1.bf16.msra.mxu0 %v9717
    %9773 = vmatprep.subr.bf16.mxu0 %v9714
    %9774 = vmatpush1.bf16.msra.mxu0 %v9713
    %9775 = vmatprep.subr.bf16.mxu0 %v9710
    %9776 = vmatpush1.bf16.msra.mxu0 %v9709
    %9777 = vmatprep.subr.bf16.mxu0 %v9706
    %9778 = vmatpush1.bf16.msra.mxu0 %v9705
    %9779 = vmatprep.subr.bf16.mxu0 %v9702
    %9780 = vmatpush1.bf16.msra.mxu0 %v9701
    %9781 = vmatprep.subr.bf16.mxu0 0
    %9782 = vmatpush2.bf16.msra.mxu0 0
    %9783 = vmatprep.subr.bf16.mxu0 0
    %9784 = vmatpush2.bf16.msra.mxu0 0
    %9785 = vmatprep.subr.bf16.mxu0 0
    %9786 = vmatpush2.bf16.msra.mxu0 0
    %9787 = vmatprep.subr.bf16.mxu0 0
    %9788 = vmatpush2.bf16.msra.mxu0 0
    %9789 = vmatprep.subr.bf16.mxu0 0
    %9790 = vmatpush2.bf16.msra.mxu0 0
    %9791 = vmatprep.subr.bf16.mxu0 0
    %9792 = vmatpush2.bf16.msra.mxu0 0
    %9793 = vmatprep.subr.bf16.mxu0 0
    %9794 = vmatpush2.bf16.msra.mxu0 0
    %9795 = vmatprep.subr.bf16.mxu0 0
    %9796 = vmatpush2.bf16.msra.mxu0 0
    %9797 = vmatprep.mubr.bf16.mxu0 0
    %9798 = vmatmul.mubr.bf16.gmra.mxu0 %v9566
    %v9799 = vpop.f32.mrf.mxu0
    %v9800 = vadd.f32 0.0, %v9799
    %v9801 = vpop.f32.mrf.mxu0
    %v9802 = vadd.f32 0.0, %v9801
    %v9803 = vpop.f32.mrf.mxu0
    %v9804 = vpop.f32.mrf.mxu0
    %9805 = vdwg.mxu0
    %9806 = vmatprep.subr.bf16.mxu0 %v9732
    %9807 = vmatpush1.bf16.msra.mxu0 %v9731
    %9808 = vmatprep.subr.bf16.mxu0 %v9728
    %9809 = vmatpush1.bf16.msra.mxu0 %v9727
    %9810 = vmatprep.subr.bf16.mxu0 %v9724
    %9811 = vmatpush1.bf16.msra.mxu0 %v9723
    %9812 = vmatprep.subr.bf16.mxu0 %v9720
    %9813 = vmatpush1.bf16.msra.mxu0 %v9719
    %9814 = vmatprep.subr.bf16.mxu0 %v9716
    %9815 = vmatpush1.bf16.msra.mxu0 %v9715
    %9816 = vmatprep.subr.bf16.mxu0 %v9712
    %9817 = vmatpush1.bf16.msra.mxu0 %v9711
    %9818 = vmatprep.subr.bf16.mxu0 %v9708
    %9819 = vmatpush1.bf16.msra.mxu0 %v9707
    %9820 = vmatprep.subr.bf16.mxu0 %v9704
    %9821 = vmatpush1.bf16.msra.mxu0 %v9703
    %9822 = vmatprep.subr.bf16.mxu0 0
    %9823 = vmatpush2.bf16.msra.mxu0 0
    %9824 = vmatprep.subr.bf16.mxu0 0
    %9825 = vmatpush2.bf16.msra.mxu0 0
    %9826 = vmatprep.subr.bf16.mxu0 0
    %9827 = vmatpush2.bf16.msra.mxu0 0
    %9828 = vmatprep.subr.bf16.mxu0 0
    %9829 = vmatpush2.bf16.msra.mxu0 0
    %9830 = vmatprep.subr.bf16.mxu0 0
    %9831 = vmatpush2.bf16.msra.mxu0 0
    %9832 = vmatprep.subr.bf16.mxu0 0
    %9833 = vmatpush2.bf16.msra.mxu0 0
    %9834 = vmatprep.subr.bf16.mxu0 0
    %9835 = vmatpush2.bf16.msra.mxu0 0
    %9836 = vmatprep.subr.bf16.mxu0 0
    %9837 = vmatpush2.bf16.msra.mxu0 0
    %9838 = vmatprep.mubr.bf16.mxu0 0
    %9839 = vmatmul.mubr.bf16.gmra.mxu0 %v9566
    %v9840 = vpop.f32.mrf.mxu0
    %v9841 = vadd.f32 0.0, %v9840
    %v9842 = vpop.f32.mrf.mxu0
    %v9843 = vadd.f32 0.0, %v9842
    %v9844 = vpop.f32.mrf.mxu0
    %v9845 = vpop.f32.mrf.mxu0
    %9846 = vdwg.mxu0
    %v9847 = vadd.f32 %v9569, %v9800
    %v9848 = vadd.f32 %v9570, %v9802
    %v9849 = vadd.f32 %v9571, %v9841
    %v9850 = vadd.f32 %v9572, %v9843
    %v9851 = vxor.u32 %v9847, 2147483648
    %v9852 = vmul.f32 %v9851, 1.442695
    %v9853 = vpow.pop %v9852
    %v9854 = vadd.f32 %v9853, 1.0
    %v9855 = vrcp.pop %v9854
    %v9856 = vmul.f32 1.0, %v9855
    %v9857 = vxor.u32 %v9848, 2147483648
    %v9858 = vmul.f32 %v9857, 1.442695
    %v9859 = vpow.pop %v9858
    %v9860 = vadd.f32 %v9859, 1.0
    %v9861 = vrcp.pop %v9860
    %v9862 = vmul.f32 1.0, %v9861
    %v9863 = vtanh.pop %v9849
    %v9864 = vxor.u32 %v9850, 2147483648
    %v9865 = vmul.f32 %v9864, 1.442695
    %v9866 = vpow.pop %v9865
    %v9867 = vadd.f32 %v9866, 1.0
    %v9868 = vrcp.pop %v9867
    %v9869 = vmul.f32 1.0, %v9868
    %v9870 = vmul.f32 %v9862, %v9563
    %v9871 = vmul.f32 %v9856, %v9863
    %v9872 = vadd.f32 %v9870, %v9871
    %v9873 = vtanh.pop %v9872
    %v9874 = vmul.f32 %v9869, %v9873
    %v9875 = vpack.c.bf16 %v9874, %v9874
    %s9876 = scalar_lea.vmem [#allocation14], 60
    %9877 = vst [vmem:[%s9876] sm:$0xf] %v9875
    %9878 = vst [vmem:[#allocation2] sm:$0xf] %v9875
    %9879 = vst [vmem:[#allocation3] sm:$0xff] %v9872
    // Predicated region
    $region50: #{tpu_custom_call.1} parent=1 // pred_check
      %p9880 = pneg %p93
    $region51: #{tpu_custom_call.1} parent=1 // pred_check_branch
      %9882 = sbr.rel (%p9880) target = $region53
    $region52: #{tpu_custom_call.1} parent=1 // pred_region
      %v9883 = vld [vmem:[#allocation2] sm:$0xf]
      %v9884 = vunpack.c.l.bf16 %v9883
      %9885 = vst [vmem:[#allocation15] sm:$0xff] %v9884
      %v9886 = vld [vmem:[#allocation3] sm:$0xff]
      %9887 = vst [vmem:[#allocation17] sm:$0xff] %v9886
    $region53: #{tpu_custom_call.1} parent=1 // pred_fallthru
      _
    // Predicated region
    $region54: #{tpu_custom_call.1} parent=1 // pred_check
      _
    $region55: #{tpu_custom_call.1} parent=1 // pred_check_branch
      %9889 = sbr.rel (0) target = $region57
    $region56: #{tpu_custom_call.1} parent=1 // pred_region
      %s9891 = ssub.s32 1024, 1024
      %9892 = vsyncadd [#allocation7], %s9891
      %s9893 = sshll.u32 [#allocation14], 4
      %s9894 = int_to_ptr.vmem [resolvable:$true] %s9893
      %9899 = dma.vmem_to_hbm [thread:$0]  %s9894, 1024, %s6, [#allocation7], 64, 64, 4
    $region57: #{tpu_custom_call.1} parent=1 // pred_fallthru
      _
    // Predicated region
    $region58: #{tpu_custom_call.1} parent=1 // pred_check
      _
    $region59: #{tpu_custom_call.1} parent=1 // pred_check_branch
      %9901 = sbr.rel (0) target = $region61
    $region60: #{tpu_custom_call.1} parent=1 // pred_region
      %s9903 = ssub.s32 128, 128
      %9904 = vsyncadd [#allocation16], %s9903
      %s9906 = sshll.u32 [#allocation15], 4
      %s9907 = int_to_ptr.vmem [resolvable:$true] %s9906
      %9909 = dma.vmem_to_hbm [thread:$0]  %s9907, 128, %s7, [#allocation16]
    $region61: #{tpu_custom_call.1} parent=1 // pred_fallthru
      _
    // Predicated region
    $region62: #{tpu_custom_call.1} parent=1 // pred_check
      _
    $region63: #{tpu_custom_call.1} parent=1 // pred_check_branch
      %9911 = sbr.rel (0) target = $region65
    $region64: #{tpu_custom_call.1} parent=1 // pred_region
      %s9913 = ssub.s32 128, 128
      %9914 = vsyncadd [#allocation16], %s9913
      %s9916 = sshll.u32 [#allocation17], 4
      %s9917 = int_to_ptr.vmem [resolvable:$true] %s9916
      %9919 = dma.vmem_to_hbm [thread:$0]  %s9917, 128, %s8, [#allocation16]
    $region65: #{tpu_custom_call.1} parent=1 // pred_fallthru
      _
    // Predicated region
    $region66: #{tpu_custom_call.1} parent=1 // pred_check
      _
    $region67: #{tpu_custom_call.1} parent=1 // pred_check_branch
      %9921 = sbr.rel (0) target = $region69
    $region68: #{tpu_custom_call.1} parent=1 // pred_region
      %9922 = dma.done [#allocation7], 1024
    $region69: #{tpu_custom_call.1} parent=1 // pred_fallthru
      _
    // Predicated region
    $region70: #{tpu_custom_call.1} parent=1 // pred_check
      _
    $region71: #{tpu_custom_call.1} parent=1 // pred_check_branch
      %9924 = sbr.rel (0) target = $region73
    $region72: #{tpu_custom_call.1} parent=1 // pred_region
      %9925 = dma.done [#allocation16], 128
    $region73: #{tpu_custom_call.1} parent=1 // pred_fallthru
      _
    // Predicated region
    $region74: #{tpu_custom_call.1} parent=1 // pred_check
      _
    $region75: #{tpu_custom_call.1} parent=1 // pred_check_branch
      %9927 = sbr.rel (0) target = $region77
    $region76: #{tpu_custom_call.1} parent=1 // pred_region
      %9928 = dma.done [#allocation16], 128
    $region77: #{tpu_custom_call.1} parent=1 // pred_fallthru
      _
    %9929 = vsyncpa [#allocation6], 1
    %9930 = vsyncpa [#allocation9], 1
    %9931 = vsyncpa [#allocation12], 1
    %9932 = vsyncpa [#allocation7], 1
    %9933 = vsyncpa [#allocation16], 1

</llo_original>
